<compile_context>
chip_gen: v7x
topology: tpu7x:2x2x1
jax: 0.10.0
libtpu: 0.0.40
codegen_flags: <defaults>
</compile_context>

<pallas_src>
import jax
import jax.numpy as jnp
from jax.experimental import pallas as pl
from jax.experimental.pallas import tpu as pltpu

IMAGE_SIZE = 16       # small test size consistent with the module (divisible by 8)
EPS = 1e-5


# ---------------------------------------------------------------------------
# In-kernel building blocks (traced into one kernel)
# ---------------------------------------------------------------------------
def _zero_halo(ref):
    """Zero only the 1-wide padding halo of a (1, H+2, W+2, C) VMEM buffer."""
    _, hp, wp, c = ref.shape
    ref[:, 0:1, :, :] = jnp.zeros((1, 1, wp, c), jnp.float32)
    ref[:, hp - 1:hp, :, :] = jnp.zeros((1, 1, wp, c), jnp.float32)
    ref[:, 1:hp - 1, 0:1, :] = jnp.zeros((1, hp - 2, 1, c), jnp.float32)
    ref[:, 1:hp - 1, wp - 1:wp, :] = jnp.zeros((1, hp - 2, 1, c), jnp.float32)


def _conv3x3_bn_relu(pad_ref, w_ref, s_ref, b_ref):
    """3x3 'same' conv as ONE im2col matmul (K = 9*Cin) + folded BN + ReLU.

    pad_ref : (1, H+2, W+2, Cin) f32 VMEM scratch (zero-padded input)
    w_ref   : (9*Cin, Cout) bf16, row index = (dy*3+dx)*Cin + cin
    s_ref, b_ref : (1, Cout) f32 folded BatchNorm scale / bias
    returns : (1, H, W, Cout) f32 value
    """
    n, hp, wp, cin = pad_ref.shape
    h, w = hp - 2, wp - 2
    cout = w_ref.shape[1]
    # Lane-concatenate the 9 shifted taps -> in-VMEM im2col patch matrix.
    taps = [pad_ref[:, dy:dy + h, dx:dx + w, :]
            for dy in range(3) for dx in range(3)]
    patch = jnp.concatenate(taps, axis=-1)                       # (1, H, W, 9*Cin)
    patch = patch.reshape(n * h * w, 9 * cin).astype(jnp.bfloat16)
    y = jnp.dot(patch, w_ref[...], preferred_element_type=jnp.float32)
    y = jnp.maximum(y * s_ref[...] + b_ref[...], 0.0)            # folded BN + ReLU
    return y.reshape(n, h, w, cout)


def _maxpool2x2(v):
    """Vectorized 2x2 / stride-2 max pool over a (1, H, W, C) value."""
    n, h, w, c = v.shape
    v = jnp.max(v.reshape(n, h // 2, 2, w, c), axis=2)           # pool H
    v = jnp.max(v.reshape(n, h // 2, w // 2, 2, c), axis=3)      # pool W
    return v


# ---------------------------------------------------------------------------
# The fused whole-model kernel (one batch element per grid step)
# ---------------------------------------------------------------------------
def _model_kernel(
    x_ref,
    w1a, s1a, b1a, w1b, s1b, b1b,
    w2a, s2a, b2a, w2b, s2b, b2b,
    w3a, s3a, b3a, w3b, s3b, b3b,
    fw1, fs1, fb1, fw2, fb2,
    o_ref,
    pad1a, pad1b, pad2a, pad2b, pad3a, pad3b,
):
    s0 = x_ref.shape[1]
    s1_, s2_, s3_ = s0 // 2, s0 // 4, s0 // 8

    # ---------------- block 1: conv -> conv -> maxpool (Dropout = id) -------
    _zero_halo(pad1a)
    pad1a[:, 1:s0 + 1, 1:s0 + 1, :] = x_ref[...]
    c = _conv3x3_bn_relu(pad1a, w1a, s1a, b1a)
    _zero_halo(pad1b)
    pad1b[:, 1:s0 + 1, 1:s0 + 1, :] = c
    c = _conv3x3_bn_relu(pad1b, w1b, s1b, b1b)
    p = _maxpool2x2(c)                                           # (1, s1, s1, 32)

    # ---------------- block 2 -----------------------------------------------
    _zero_halo(pad2a)
    pad2a[:, 1:s1_ + 1, 1:s1_ + 1, :] = p
    c = _conv3x3_bn_relu(pad2a, w2a, s2a, b2a)
    _zero_halo(pad2b)
    pad2b[:, 1:s1_ + 1, 1:s1_ + 1, :] = c
    c = _conv3x3_bn_relu(pad2b, w2b, s2b, b2b)
    p = _maxpool2x2(c)                                           # (1, s2, s2, 64)

    # ---------------- block 3 -----------------------------------------------
    _zero_halo(pad3a)
    pad3a[:, 1:s2_ + 1, 1:s2_ + 1, :] = p
    c = _conv3x3_bn_relu(pad3a, w3a, s3a, b3a)
    _zero_halo(pad3b)
    pad3b[:, 1:s2_ + 1, 1:s2_ + 1, :] = c
    c = _conv3x3_bn_relu(pad3b, w3b, s3b, b3b)
    p = _maxpool2x2(c)                                           # (1, s3, s3, 128)

    # ---- fc: Flatten -> Linear(512) -> BN1d -> ReLU -> Dropout(id) -> Linear(1) -> Sigmoid
    # Lane-concatenate the pooled map into a (1, 512) row; the NCHW flatten
    # permutation is folded into fw1 at init time, so this feeds fc1 directly.
    f = jnp.concatenate(
        [p[:, i, j, :] for i in range(s3_) for j in range(s3_)], axis=-1)
    hid = jnp.dot(f.astype(jnp.bfloat16), fw1[...],
                  preferred_element_type=jnp.float32)            # (1, 512)
    hid = jnp.maximum(hid * fs1[...] + fb1[...], 0.0)
    z = jnp.sum(hid * fw2[...], axis=1, keepdims=True) + fb2[...]
    o_ref[...] = (1.0 / (1.0 + jnp.exp(-z))).reshape(o_ref.shape)


# ---------------------------------------------------------------------------
# Wrapper
# ---------------------------------------------------------------------------
def meningioma_forward(x_nchw, params):
    n_imgs, cin, s0, s0w = x_nchw.shape
    assert cin == 3 and s0 == s0w and s0 % 8 == 0
    x = jnp.transpose(x_nchw, (0, 2, 3, 1)).astype(jnp.float32)  # NCHW -> NHWC (tiny)

    args = [x]
    for blk in ("c1a", "c1b", "c2a", "c2b", "c3a", "c3b"):
        p = params[blk]
        args += [p["w"], p["scale"], p["bias"]]
    fc = params["fc"]
    args += [fc["w1"], fc["s1"], fc["b1"], fc["w2"], fc["b2"]]

    def rep_spec(a):
        # Whole-array VMEM block; same block index every grid step -> DMA'd once.
        nd = a.ndim
        return pl.BlockSpec(a.shape, lambda i, _nd=nd: (0,) * _nd)

    in_specs = [pl.BlockSpec((1, s0, s0, 3), lambda i: (i, 0, 0, 0))]
    in_specs += [rep_spec(a) for a in args[1:]]

    s1, s2, s3 = s0 // 2, s0 // 4, s0 // 8
    scratch = [
        pltpu.VMEM((1, s0 + 2, s0 + 2, 3), jnp.float32),    # pad1a (padded input)
        pltpu.VMEM((1, s0 + 2, s0 + 2, 32), jnp.float32),   # pad1b
        pltpu.VMEM((1, s1 + 2, s1 + 2, 32), jnp.float32),   # pad2a
        pltpu.VMEM((1, s1 + 2, s1 + 2, 64), jnp.float32),   # pad2b
        pltpu.VMEM((1, s2 + 2, s2 + 2, 64), jnp.float32),   # pad3a
        pltpu.VMEM((1, s2 + 2, s2 + 2, 128), jnp.float32),  # pad3b
    ]

    # Advisory cost estimate for XLA scheduling around the fused call.
    macs_per_img = (
        s0 * s0 * 9 * (3 * 32 + 32 * 32)
        + s1 * s1 * 9 * (32 * 64 + 64 * 64)
        + s2 * s2 * 9 * (64 * 128 + 128 * 128)
        + (128 * s3 * s3) * 512 + 512)
    bytes_accessed = int(sum(a.size * a.dtype.itemsize for a in args)) + n_imgs * 4

    out = pl.pallas_call(
        _model_kernel,
        grid=(n_imgs,),
        out_shape=jax.ShapeDtypeStruct((n_imgs, 1, 1), jnp.float32),
        in_specs=in_specs,
        out_specs=pl.BlockSpec((1, 1, 1), lambda i: (i, 0, 0)),
        scratch_shapes=scratch,
        compiler_params=pltpu.CompilerParams(dimension_semantics=("parallel",)),
        cost_estimate=pl.CostEstimate(flops=2 * macs_per_img * n_imgs,
                                      transcendentals=n_imgs,
                                      bytes_accessed=bytes_accessed),
    )(*args)
    return out[:, :, 0]                                          # (N, 1)


# ---------------------------------------------------------------------------
# Deterministic parameter construction (BN folded; matmul weights in bf16)
# ---------------------------------------------------------------------------
def _fold_bn(gamma, beta, mean, var, lin_bias):
    scale = gamma / jnp.sqrt(var + EPS)
    bias = scale * (lin_bias - mean) + beta
    return scale, bias


def _conv_layer(key, cin, cout):
    k = jax.random.split(key, 6)
    w = 0.05 * jax.random.normal(k[0], (cout, cin, 3, 3), jnp.float32)   # torch OIHW
    b = 0.05 * jax.random.normal(k[1], (cout,), jnp.float32)
    gamma = 1.0 + 0.1 * jax.random.normal(k[2], (cout,), jnp.float32)
    beta = 0.1 * jax.random.normal(k[3], (cout,), jnp.float32)
    mean = 0.1 * jax.random.normal(k[4], (cout,), jnp.float32)
    var = 0.5 + jax.random.uniform(k[5], (cout,), jnp.float32)
    scale, bias = _fold_bn(gamma, beta, mean, var, b)
    # OIHW -> (kh, kw, Cin, Cout) -> (9*Cin, Cout): row = (dy*3+dx)*Cin + cin,
    # matching the kernel's lane-concatenated im2col column order.
    w_mat = jnp.transpose(w, (2, 3, 1, 0)).reshape(9 * cin, cout)
    return {"w": w_mat.astype(jnp.bfloat16),
            "scale": scale.reshape(1, cout),
            "bias": bias.reshape(1, cout)}


def init_params(key):
    ks = jax.random.split(key, 7)
    params = {
        "c1a": _conv_layer(ks[0], 3, 32),   "c1b": _conv_layer(ks[1], 32, 32),
        "c2a": _conv_layer(ks[2], 32, 64),  "c2b": _conv_layer(ks[3], 64, 64),
        "c3a": _conv_layer(ks[4], 64, 128), "c3b": _conv_layer(ks[5], 128, 128),
    }
    s3 = IMAGE_SIZE // 8
    fin = 128 * s3 * s3
    k = jax.random.split(ks[6], 8)
    w1 = 0.02 * jax.random.normal(k[0], (512, fin), jnp.float32)   # torch (out, in)
    b1 = 0.02 * jax.random.normal(k[1], (512,), jnp.float32)
    gamma1 = 1.0 + 0.1 * jax.random.normal(k[2], (512,), jnp.float32)
    beta1 = 0.1 * jax.random.normal(k[3], (512,), jnp.float32)
    mean1 = 0.1 * jax.random.normal(k[4], (512,), jnp.float32)
    var1 = 0.5 + jax.random.uniform(k[5], (512,), jnp.float32)
    sc1, bi1 = _fold_bn(gamma1, beta1, mean1, var1, b1)
    w2 = 0.02 * jax.random.normal(k[6], (1, 512), jnp.float32)     # torch (out, in)
    b2 = 0.02 * jax.random.normal(k[7], (1,), jnp.float32)
    # Fold the NCHW nn.Flatten permutation into w1:
    # torch flat index = c*s3*s3 + h*s3 + w  ->  kernel fcin index = (h*s3+w)*128 + c.
    w1_k = (w1.T.reshape(128, s3, s3, 512)
                .transpose(1, 2, 0, 3)
                .reshape(s3 * s3 * 128, 512))
    params["fc"] = {
        "w1": w1_k.astype(jnp.bfloat16),
        "s1": sc1.reshape(1, 512), "b1": bi1.reshape(1, 512),
        "w2": w2,                        # (1, 512) f32, used as a lane-reduction
        "b2": b2.reshape(1, 1),
    }
    return params


if __name__ == "__main__":
    key = jax.random.PRNGKey(0)
    kx, kp = jax.random.split(key)
    x = jax.random.normal(kx, (2, 3, IMAGE_SIZE, IMAGE_SIZE), jnp.float32)  # NCHW input
    params = init_params(kp)

    fwd = jax.jit(meningioma_forward)
    out = jax.block_until_ready(fwd(x, params))

    assert out.shape == (2, 1), out.shape
    assert bool(jnp.all((out >= 0.0) & (out <= 1.0))), out
    print("KERNEL_OK")
</pallas_src>

<mosaic_0001>
module attributes {stable_mosaic.version = 11 : i64} {
  func.func @_model_kernel(%arg0: i32, %arg1: memref<1x16x16x3xf32, #tpu.memory_space<vmem>>, %arg2: memref<27x32xbf16, #tpu.memory_space<vmem>>, %arg3: memref<1x32xf32, #tpu.memory_space<vmem>>, %arg4: memref<1x32xf32, #tpu.memory_space<vmem>>, %arg5: memref<288x32xbf16, #tpu.memory_space<vmem>>, %arg6: memref<1x32xf32, #tpu.memory_space<vmem>>, %arg7: memref<1x32xf32, #tpu.memory_space<vmem>>, %arg8: memref<288x64xbf16, #tpu.memory_space<vmem>>, %arg9: memref<1x64xf32, #tpu.memory_space<vmem>>, %arg10: memref<1x64xf32, #tpu.memory_space<vmem>>, %arg11: memref<576x64xbf16, #tpu.memory_space<vmem>>, %arg12: memref<1x64xf32, #tpu.memory_space<vmem>>, %arg13: memref<1x64xf32, #tpu.memory_space<vmem>>, %arg14: memref<576x128xbf16, #tpu.memory_space<vmem>>, %arg15: memref<1x128xf32, #tpu.memory_space<vmem>>, %arg16: memref<1x128xf32, #tpu.memory_space<vmem>>, %arg17: memref<1152x128xbf16, #tpu.memory_space<vmem>>, %arg18: memref<1x128xf32, #tpu.memory_space<vmem>>, %arg19: memref<1x128xf32, #tpu.memory_space<vmem>>, %arg20: memref<512x512xbf16, #tpu.memory_space<vmem>>, %arg21: memref<1x512xf32, #tpu.memory_space<vmem>>, %arg22: memref<1x512xf32, #tpu.memory_space<vmem>>, %arg23: memref<1x512xf32, #tpu.memory_space<vmem>>, %arg24: memref<1x1xf32, #tpu.memory_space<vmem>>, %arg25: memref<1x1x1xf32, #tpu.memory_space<vmem>>, %arg26: memref<1x18x18x3xf32, #tpu.memory_space<vmem>>, %arg27: memref<1x18x18x32xf32, #tpu.memory_space<vmem>>, %arg28: memref<1x10x10x32xf32, #tpu.memory_space<vmem>>, %arg29: memref<1x10x10x64xf32, #tpu.memory_space<vmem>>, %arg30: memref<1x6x6x64xf32, #tpu.memory_space<vmem>>, %arg31: memref<1x6x6x128xf32, #tpu.memory_space<vmem>>) attributes {dimension_semantics = [#tpu.dimension_semantics<parallel>], iteration_bounds = array<i64: 2>, scalar_prefetch = 0 : i64, scratch_operands = 6 : i64, tpu.core_type = #tpu.core_type<tc>, window_params = [{transform_indices = @transform_0, window_bounds = array<i64: 1, 16, 16, 3>}, {pipeline_mode = #tpu.pipeline_mode<synchronous>, transform_indices = @transform_1, window_bounds = array<i64: 27, 32>}, {pipeline_mode = #tpu.pipeline_mode<synchronous>, transform_indices = @transform_2, window_bounds = array<i64: 1, 32>}, {pipeline_mode = #tpu.pipeline_mode<synchronous>, transform_indices = @transform_3, window_bounds = array<i64: 1, 32>}, {pipeline_mode = #tpu.pipeline_mode<synchronous>, transform_indices = @transform_4, window_bounds = array<i64: 288, 32>}, {pipeline_mode = #tpu.pipeline_mode<synchronous>, transform_indices = @transform_5, window_bounds = array<i64: 1, 32>}, {pipeline_mode = #tpu.pipeline_mode<synchronous>, transform_indices = @transform_6, window_bounds = array<i64: 1, 32>}, {pipeline_mode = #tpu.pipeline_mode<synchronous>, transform_indices = @transform_7, window_bounds = array<i64: 288, 64>}, {pipeline_mode = #tpu.pipeline_mode<synchronous>, transform_indices = @transform_8, window_bounds = array<i64: 1, 64>}, {pipeline_mode = #tpu.pipeline_mode<synchronous>, transform_indices = @transform_9, window_bounds = array<i64: 1, 64>}, {pipeline_mode = #tpu.pipeline_mode<synchronous>, transform_indices = @transform_10, window_bounds = array<i64: 576, 64>}, {pipeline_mode = #tpu.pipeline_mode<synchronous>, transform_indices = @transform_11, window_bounds = array<i64: 1, 64>}, {pipeline_mode = #tpu.pipeline_mode<synchronous>, transform_indices = @transform_12, window_bounds = array<i64: 1, 64>}, {pipeline_mode = #tpu.pipeline_mode<synchronous>, transform_indices = @transform_13, window_bounds = array<i64: 576, 128>}, {pipeline_mode = #tpu.pipeline_mode<synchronous>, transform_indices = @transform_14, window_bounds = array<i64: 1, 128>}, {pipeline_mode = #tpu.pipeline_mode<synchronous>, transform_indices = @transform_15, window_bounds = array<i64: 1, 128>}, {pipeline_mode = #tpu.pipeline_mode<synchronous>, transform_indices = @transform_16, window_bounds = array<i64: 1152, 128>}, {pipeline_mode = #tpu.pipeline_mode<synchronous>, transform_indices = @transform_17, window_bounds = array<i64: 1, 128>}, {pipeline_mode = #tpu.pipeline_mode<synchronous>, transform_indices = @transform_18, window_bounds = array<i64: 1, 128>}, {pipeline_mode = #tpu.pipeline_mode<synchronous>, transform_indices = @transform_19, window_bounds = array<i64: 512, 512>}, {pipeline_mode = #tpu.pipeline_mode<synchronous>, transform_indices = @transform_20, window_bounds = array<i64: 1, 512>}, {pipeline_mode = #tpu.pipeline_mode<synchronous>, transform_indices = @transform_21, window_bounds = array<i64: 1, 512>}, {pipeline_mode = #tpu.pipeline_mode<synchronous>, transform_indices = @transform_22, window_bounds = array<i64: 1, 512>}, {pipeline_mode = #tpu.pipeline_mode<synchronous>, transform_indices = @transform_23, window_bounds = array<i64: 1, 1>}, {transform_indices = @transform_24, window_bounds = array<i64: 1, 1, 1>}]} {
    %cst = arith.constant 0.000000e+00 : f32
    %0 = vector.broadcast %cst : f32 to vector<1x1x18x3xf32>
    %c0 = arith.constant 0 : index
    %c0_0 = arith.constant 0 : index
    %c0_1 = arith.constant 0 : index
    %c0_2 = arith.constant 0 : index
    %1 = vector.load %arg26[%c0, %c0_0, %c0_1, %c0_2] : memref<1x18x18x3xf32, #tpu.memory_space<vmem>>, vector<1x1x18x3xf32>
    tpu.vector_store %arg26[%c0, %c0_0, %c0_1, %c0_2], %0 {strides = array<i32>} : memref<1x18x18x3xf32, #tpu.memory_space<vmem>>, vector<1x1x18x3xf32>,
    %cst_3 = arith.constant 0.000000e+00 : f32
    %2 = vector.broadcast %cst_3 : f32 to vector<1x1x18x3xf32>
    %c0_4 = arith.constant 0 : index
    %c17 = arith.constant 17 : index
    %c0_5 = arith.constant 0 : index
    %c0_6 = arith.constant 0 : index
    %3 = vector.load %arg26[%c0_4, %c17, %c0_5, %c0_6] : memref<1x18x18x3xf32, #tpu.memory_space<vmem>>, vector<1x1x18x3xf32>
    tpu.vector_store %arg26[%c0_4, %c17, %c0_5, %c0_6], %2 {strides = array<i32>} : memref<1x18x18x3xf32, #tpu.memory_space<vmem>>, vector<1x1x18x3xf32>,
    %cst_7 = arith.constant 0.000000e+00 : f32
    %4 = vector.broadcast %cst_7 : f32 to vector<1x16x1x3xf32>
    %c0_8 = arith.constant 0 : index
    %c1 = arith.constant 1 : index
    %c0_9 = arith.constant 0 : index
    %c0_10 = arith.constant 0 : index
    %5 = vector.load %arg26[%c0_8, %c1, %c0_9, %c0_10] : memref<1x18x18x3xf32, #tpu.memory_space<vmem>>, vector<1x16x1x3xf32>
    tpu.vector_store %arg26[%c0_8, %c1, %c0_9, %c0_10], %4 {strides = array<i32>} : memref<1x18x18x3xf32, #tpu.memory_space<vmem>>, vector<1x16x1x3xf32>,
    %cst_11 = arith.constant 0.000000e+00 : f32
    %6 = vector.broadcast %cst_11 : f32 to vector<1x16x1x3xf32>
    %c0_12 = arith.constant 0 : index
    %c1_13 = arith.constant 1 : index
    %c17_14 = arith.constant 17 : index
    %c0_15 = arith.constant 0 : index
    %7 = vector.load %arg26[%c0_12, %c1_13, %c17_14, %c0_15] : memref<1x18x18x3xf32, #tpu.memory_space<vmem>>, vector<1x16x1x3xf32>
    tpu.vector_store %arg26[%c0_12, %c1_13, %c17_14, %c0_15], %6 {strides = array<i32>} : memref<1x18x18x3xf32, #tpu.memory_space<vmem>>, vector<1x16x1x3xf32>,
    %c0_16 = arith.constant 0 : index
    %c0_17 = arith.constant 0 : index
    %c0_18 = arith.constant 0 : index
    %c0_19 = arith.constant 0 : index
    %8 = vector.load %arg1[%c0_16, %c0_17, %c0_18, %c0_19] : memref<1x16x16x3xf32, #tpu.memory_space<vmem>>, vector<1x16x16x3xf32>
    %c0_20 = arith.constant 0 : index
    %c1_21 = arith.constant 1 : index
    %c1_22 = arith.constant 1 : index
    %c0_23 = arith.constant 0 : index
    %9 = vector.load %arg26[%c0_20, %c1_21, %c1_22, %c0_23] : memref<1x18x18x3xf32, #tpu.memory_space<vmem>>, vector<1x16x16x3xf32>
    tpu.vector_store %arg26[%c0_20, %c1_21, %c1_22, %c0_23], %8 {strides = array<i32>} : memref<1x18x18x3xf32, #tpu.memory_space<vmem>>, vector<1x16x16x3xf32>,
    %c0_24 = arith.constant 0 : index
    %c0_25 = arith.constant 0 : index
    %c0_26 = arith.constant 0 : index
    %c0_27 = arith.constant 0 : index
    %10 = vector.load %arg26[%c0_24, %c0_25, %c0_26, %c0_27] : memref<1x18x18x3xf32, #tpu.memory_space<vmem>>, vector<1x16x16x3xf32>
    %c0_28 = arith.constant 0 : index
    %c0_29 = arith.constant 0 : index
    %c1_30 = arith.constant 1 : index
    %c0_31 = arith.constant 0 : index
    %11 = vector.load %arg26[%c0_28, %c0_29, %c1_30, %c0_31] : memref<1x18x18x3xf32, #tpu.memory_space<vmem>>, vector<1x16x16x3xf32>
    %c0_32 = arith.constant 0 : index
    %c0_33 = arith.constant 0 : index
    %c2 = arith.constant 2 : index
    %c0_34 = arith.constant 0 : index
    %12 = vector.load %arg26[%c0_32, %c0_33, %c2, %c0_34] : memref<1x18x18x3xf32, #tpu.memory_space<vmem>>, vector<1x16x16x3xf32>
    %c0_35 = arith.constant 0 : index
    %c1_36 = arith.constant 1 : index
    %c0_37 = arith.constant 0 : index
    %c0_38 = arith.constant 0 : index
    %13 = vector.load %arg26[%c0_35, %c1_36, %c0_37, %c0_38] : memref<1x18x18x3xf32, #tpu.memory_space<vmem>>, vector<1x16x16x3xf32>
    %c0_39 = arith.constant 0 : index
    %c1_40 = arith.constant 1 : index
    %c1_41 = arith.constant 1 : index
    %c0_42 = arith.constant 0 : index
    %14 = vector.load %arg26[%c0_39, %c1_40, %c1_41, %c0_42] : memref<1x18x18x3xf32, #tpu.memory_space<vmem>>, vector<1x16x16x3xf32>
    %c0_43 = arith.constant 0 : index
    %c1_44 = arith.constant 1 : index
    %c2_45 = arith.constant 2 : index
    %c0_46 = arith.constant 0 : index
    %15 = vector.load %arg26[%c0_43, %c1_44, %c2_45, %c0_46] : memref<1x18x18x3xf32, #tpu.memory_space<vmem>>, vector<1x16x16x3xf32>
    %c0_47 = arith.constant 0 : index
    %c2_48 = arith.constant 2 : index
    %c0_49 = arith.constant 0 : index
    %c0_50 = arith.constant 0 : index
    %16 = vector.load %arg26[%c0_47, %c2_48, %c0_49, %c0_50] : memref<1x18x18x3xf32, #tpu.memory_space<vmem>>, vector<1x16x16x3xf32>
    %c0_51 = arith.constant 0 : index
    %c2_52 = arith.constant 2 : index
    %c1_53 = arith.constant 1 : index
    %c0_54 = arith.constant 0 : index
    %17 = vector.load %arg26[%c0_51, %c2_52, %c1_53, %c0_54] : memref<1x18x18x3xf32, #tpu.memory_space<vmem>>, vector<1x16x16x3xf32>
    %c0_55 = arith.constant 0 : index
    %c2_56 = arith.constant 2 : index
    %c2_57 = arith.constant 2 : index
    %c0_58 = arith.constant 0 : index
    %18 = vector.load %arg26[%c0_55, %c2_56, %c2_57, %c0_58] : memref<1x18x18x3xf32, #tpu.memory_space<vmem>>, vector<1x16x16x3xf32>
    %19 = tpu.concatenate %10, %11, %12, %13, %14, %15, %16, %17, %18 in 3 : vector<1x16x16x3xf32>, vector<1x16x16x3xf32>, vector<1x16x16x3xf32>, vector<1x16x16x3xf32>, vector<1x16x16x3xf32>, vector<1x16x16x3xf32>, vector<1x16x16x3xf32>, vector<1x16x16x3xf32>, vector<1x16x16x3xf32> -> vector<1x16x16x27xf32>
    %20 = vector.shape_cast %19 : vector<1x16x16x27xf32> to vector<256x27xf32>
    %21 = arith.truncf %20 : vector<256x27xf32> to vector<256x27xbf16>
    %c0_59 = arith.constant 0 : index
    %c0_60 = arith.constant 0 : index
    %22 = vector.load %arg2[%c0_59, %c0_60] : memref<27x32xbf16, #tpu.memory_space<vmem>>, vector<27x32xbf16>
    %cst_61 = arith.constant dense<0.000000e+00> : vector<256x32xf32>
    %23 = tpu.matmul %21, %22, %cst_61 {dimension_numbers = #tpu.dot_dimension_numbers<[1], [0], [0], [1], [0, 0, 1, 1], [], []>} : vector<256x27xbf16>, vector<27x32xbf16>, vector<256x32xf32> -> vector<256x32xf32>
    %c0_62 = arith.constant 0 : index
    %c0_63 = arith.constant 0 : index
    %24 = vector.load %arg3[%c0_62, %c0_63] : memref<1x32xf32, #tpu.memory_space<vmem>>, vector<1x32xf32>
    %25 = vector.broadcast %24 : vector<1x32xf32> to vector<256x32xf32>
    %26 = arith.mulf %23, %25 : vector<256x32xf32>
    %c0_64 = arith.constant 0 : index
    %c0_65 = arith.constant 0 : index
    %27 = vector.load %arg4[%c0_64, %c0_65] : memref<1x32xf32, #tpu.memory_space<vmem>>, vector<1x32xf32>
    %28 = vector.broadcast %27 : vector<1x32xf32> to vector<256x32xf32>
    %29 = arith.addf %26, %28 : vector<256x32xf32>
    %cst_66 = arith.constant 0.000000e+00 : f32
    %30 = vector.broadcast %cst_66 : f32 to vector<256x32xf32>
    %31 = arith.maximumf %29, %30 : vector<256x32xf32>
    %32 = vector.shape_cast %31 : vector<256x32xf32> to vector<1x16x16x32xf32>
    %cst_67 = arith.constant 0.000000e+00 : f32
    %33 = vector.broadcast %cst_67 : f32 to vector<1x1x18x32xf32>
    %c0_68 = arith.constant 0 : index
    %c0_69 = arith.constant 0 : index
    %c0_70 = arith.constant 0 : index
    %c0_71 = arith.constant 0 : index
    %34 = vector.load %arg27[%c0_68, %c0_69, %c0_70, %c0_71] : memref<1x18x18x32xf32, #tpu.memory_space<vmem>>, vector<1x1x18x32xf32>
    tpu.vector_store %arg27[%c0_68, %c0_69, %c0_70, %c0_71], %33 {strides = array<i32>} : memref<1x18x18x32xf32, #tpu.memory_space<vmem>>, vector<1x1x18x32xf32>,
    %cst_72 = arith.constant 0.000000e+00 : f32
    %35 = vector.broadcast %cst_72 : f32 to vector<1x1x18x32xf32>
    %c0_73 = arith.constant 0 : index
    %c17_74 = arith.constant 17 : index
    %c0_75 = arith.constant 0 : index
    %c0_76 = arith.constant 0 : index
    %36 = vector.load %arg27[%c0_73, %c17_74, %c0_75, %c0_76] : memref<1x18x18x32xf32, #tpu.memory_space<vmem>>, vector<1x1x18x32xf32>
    tpu.vector_store %arg27[%c0_73, %c17_74, %c0_75, %c0_76], %35 {strides = array<i32>} : memref<1x18x18x32xf32, #tpu.memory_space<vmem>>, vector<1x1x18x32xf32>,
    %cst_77 = arith.constant 0.000000e+00 : f32
    %37 = vector.broadcast %cst_77 : f32 to vector<1x16x1x32xf32>
    %c0_78 = arith.constant 0 : index
    %c1_79 = arith.constant 1 : index
    %c0_80 = arith.constant 0 : index
    %c0_81 = arith.constant 0 : index
    %38 = vector.load %arg27[%c0_78, %c1_79, %c0_80, %c0_81] : memref<1x18x18x32xf32, #tpu.memory_space<vmem>>, vector<1x16x1x32xf32>
    tpu.vector_store %arg27[%c0_78, %c1_79, %c0_80, %c0_81], %37 {strides = array<i32>} : memref<1x18x18x32xf32, #tpu.memory_space<vmem>>, vector<1x16x1x32xf32>,
    %cst_82 = arith.constant 0.000000e+00 : f32
    %39 = vector.broadcast %cst_82 : f32 to vector<1x16x1x32xf32>
    %c0_83 = arith.constant 0 : index
    %c1_84 = arith.constant 1 : index
    %c17_85 = arith.constant 17 : index
    %c0_86 = arith.constant 0 : index
    %40 = vector.load %arg27[%c0_83, %c1_84, %c17_85, %c0_86] : memref<1x18x18x32xf32, #tpu.memory_space<vmem>>, vector<1x16x1x32xf32>
    tpu.vector_store %arg27[%c0_83, %c1_84, %c17_85, %c0_86], %39 {strides = array<i32>} : memref<1x18x18x32xf32, #tpu.memory_space<vmem>>, vector<1x16x1x32xf32>,
    %c0_87 = arith.constant 0 : index
    %c1_88 = arith.constant 1 : index
    %c1_89 = arith.constant 1 : index
    %c0_90 = arith.constant 0 : index
    %41 = vector.load %arg27[%c0_87, %c1_88, %c1_89, %c0_90] : memref<1x18x18x32xf32, #tpu.memory_space<vmem>>, vector<1x16x16x32xf32>
    tpu.vector_store %arg27[%c0_87, %c1_88, %c1_89, %c0_90], %32 {strides = array<i32>} : memref<1x18x18x32xf32, #tpu.memory_space<vmem>>, vector<1x16x16x32xf32>,
    %c0_91 = arith.constant 0 : index
    %c0_92 = arith.constant 0 : index
    %c0_93 = arith.constant 0 : index
    %c0_94 = arith.constant 0 : index
    %42 = vector.load %arg27[%c0_91, %c0_92, %c0_93, %c0_94] : memref<1x18x18x32xf32, #tpu.memory_space<vmem>>, vector<1x16x16x32xf32>
    %c0_95 = arith.constant 0 : index
    %c0_96 = arith.constant 0 : index
    %c1_97 = arith.constant 1 : index
    %c0_98 = arith.constant 0 : index
    %43 = vector.load %arg27[%c0_95, %c0_96, %c1_97, %c0_98] : memref<1x18x18x32xf32, #tpu.memory_space<vmem>>, vector<1x16x16x32xf32>
    %c0_99 = arith.constant 0 : index
    %c0_100 = arith.constant 0 : index
    %c2_101 = arith.constant 2 : index
    %c0_102 = arith.constant 0 : index
    %44 = vector.load %arg27[%c0_99, %c0_100, %c2_101, %c0_102] : memref<1x18x18x32xf32, #tpu.memory_space<vmem>>, vector<1x16x16x32xf32>
    %c0_103 = arith.constant 0 : index
    %c1_104 = arith.constant 1 : index
    %c0_105 = arith.constant 0 : index
    %c0_106 = arith.constant 0 : index
    %45 = vector.load %arg27[%c0_103, %c1_104, %c0_105, %c0_106] : memref<1x18x18x32xf32, #tpu.memory_space<vmem>>, vector<1x16x16x32xf32>
    %c0_107 = arith.constant 0 : index
    %c1_108 = arith.constant 1 : index
    %c1_109 = arith.constant 1 : index
    %c0_110 = arith.constant 0 : index
    %46 = vector.load %arg27[%c0_107, %c1_108, %c1_109, %c0_110] : memref<1x18x18x32xf32, #tpu.memory_space<vmem>>, vector<1x16x16x32xf32>
    %c0_111 = arith.constant 0 : index
    %c1_112 = arith.constant 1 : index
    %c2_113 = arith.constant 2 : index
    %c0_114 = arith.constant 0 : index
    %47 = vector.load %arg27[%c0_111, %c1_112, %c2_113, %c0_114] : memref<1x18x18x32xf32, #tpu.memory_space<vmem>>, vector<1x16x16x32xf32>
    %c0_115 = arith.constant 0 : index
    %c2_116 = arith.constant 2 : index
    %c0_117 = arith.constant 0 : index
    %c0_118 = arith.constant 0 : index
    %48 = vector.load %arg27[%c0_115, %c2_116, %c0_117, %c0_118] : memref<1x18x18x32xf32, #tpu.memory_space<vmem>>, vector<1x16x16x32xf32>
    %c0_119 = arith.constant 0 : index
    %c2_120 = arith.constant 2 : index
    %c1_121 = arith.constant 1 : index
    %c0_122 = arith.constant 0 : index
    %49 = vector.load %arg27[%c0_119, %c2_120, %c1_121, %c0_122] : memref<1x18x18x32xf32, #tpu.memory_space<vmem>>, vector<1x16x16x32xf32>
    %c0_123 = arith.constant 0 : index
    %c2_124 = arith.constant 2 : index
    %c2_125 = arith.constant 2 : index
    %c0_126 = arith.constant 0 : index
    %50 = vector.load %arg27[%c0_123, %c2_124, %c2_125, %c0_126] : memref<1x18x18x32xf32, #tpu.memory_space<vmem>>, vector<1x16x16x32xf32>
    %51 = tpu.concatenate %42, %43, %44, %45, %46, %47, %48, %49, %50 in 3 : vector<1x16x16x32xf32>, vector<1x16x16x32xf32>, vector<1x16x16x32xf32>, vector<1x16x16x32xf32>, vector<1x16x16x32xf32>, vector<1x16x16x32xf32>, vector<1x16x16x32xf32>, vector<1x16x16x32xf32>, vector<1x16x16x32xf32> -> vector<1x16x16x288xf32>
    %52 = vector.shape_cast %51 : vector<1x16x16x288xf32> to vector<256x288xf32>
    %53 = arith.truncf %52 : vector<256x288xf32> to vector<256x288xbf16>
    %c0_127 = arith.constant 0 : index
    %c0_128 = arith.constant 0 : index
    %54 = vector.load %arg5[%c0_127, %c0_128] : memref<288x32xbf16, #tpu.memory_space<vmem>>, vector<288x32xbf16>
    %cst_129 = arith.constant dense<0.000000e+00> : vector<256x32xf32>
    %55 = tpu.matmul %53, %54, %cst_129 {dimension_numbers = #tpu.dot_dimension_numbers<[1], [0], [0], [1], [0, 0, 1, 1], [], []>} : vector<256x288xbf16>, vector<288x32xbf16>, vector<256x32xf32> -> vector<256x32xf32>
    %c0_130 = arith.constant 0 : index
    %c0_131 = arith.constant 0 : index
    %56 = vector.load %arg6[%c0_130, %c0_131] : memref<1x32xf32, #tpu.memory_space<vmem>>, vector<1x32xf32>
    %57 = vector.broadcast %56 : vector<1x32xf32> to vector<256x32xf32>
    %58 = arith.mulf %55, %57 : vector<256x32xf32>
    %c0_132 = arith.constant 0 : index
    %c0_133 = arith.constant 0 : index
    %59 = vector.load %arg7[%c0_132, %c0_133] : memref<1x32xf32, #tpu.memory_space<vmem>>, vector<1x32xf32>
    %60 = vector.broadcast %59 : vector<1x32xf32> to vector<256x32xf32>
    %61 = arith.addf %58, %60 : vector<256x32xf32>
    %cst_134 = arith.constant 0.000000e+00 : f32
    %62 = vector.broadcast %cst_134 : f32 to vector<256x32xf32>
    %63 = arith.maximumf %61, %62 : vector<256x32xf32>
    %64 = vector.shape_cast %63 : vector<256x32xf32> to vector<1x16x16x32xf32>
    %65 = vector.shape_cast %64 : vector<1x16x16x32xf32> to vector<1x8x2x16x32xf32>
    %cst_135 = arith.constant dense<0xFF800000> : vector<1x8x16x32xf32>
    %66 = vector.multi_reduction <maximumf>, %65, %cst_135 [2] : vector<1x8x2x16x32xf32> to vector<1x8x16x32xf32>
    %67 = vector.shape_cast %66 : vector<1x8x16x32xf32> to vector<1x8x8x2x32xf32>
    %cst_136 = arith.constant dense<0xFF800000> : vector<1x8x8x32xf32>
    %68 = vector.multi_reduction <maximumf>, %67, %cst_136 [3] : vector<1x8x8x2x32xf32> to vector<1x8x8x32xf32>
    %cst_137 = arith.constant 0.000000e+00 : f32
    %69 = vector.broadcast %cst_137 : f32 to vector<1x1x10x32xf32>
    %c0_138 = arith.constant 0 : index
    %c0_139 = arith.constant 0 : index
    %c0_140 = arith.constant 0 : index
    %c0_141 = arith.constant 0 : index
    %70 = vector.load %arg28[%c0_138, %c0_139, %c0_140, %c0_141] : memref<1x10x10x32xf32, #tpu.memory_space<vmem>>, vector<1x1x10x32xf32>
    tpu.vector_store %arg28[%c0_138, %c0_139, %c0_140, %c0_141], %69 {strides = array<i32>} : memref<1x10x10x32xf32, #tpu.memory_space<vmem>>, vector<1x1x10x32xf32>,
    %cst_142 = arith.constant 0.000000e+00 : f32
    %71 = vector.broadcast %cst_142 : f32 to vector<1x1x10x32xf32>
    %c0_143 = arith.constant 0 : index
    %c9 = arith.constant 9 : index
    %c0_144 = arith.constant 0 : index
    %c0_145 = arith.constant 0 : index
    %72 = vector.load %arg28[%c0_143, %c9, %c0_144, %c0_145] : memref<1x10x10x32xf32, #tpu.memory_space<vmem>>, vector<1x1x10x32xf32>
    tpu.vector_store %arg28[%c0_143, %c9, %c0_144, %c0_145], %71 {strides = array<i32>} : memref<1x10x10x32xf32, #tpu.memory_space<vmem>>, vector<1x1x10x32xf32>,
    %cst_146 = arith.constant 0.000000e+00 : f32
    %73 = vector.broadcast %cst_146 : f32 to vector<1x8x1x32xf32>
    %c0_147 = arith.constant 0 : index
    %c1_148 = arith.constant 1 : index
    %c0_149 = arith.constant 0 : index
    %c0_150 = arith.constant 0 : index
    %74 = vector.load %arg28[%c0_147, %c1_148, %c0_149, %c0_150] : memref<1x10x10x32xf32, #tpu.memory_space<vmem>>, vector<1x8x1x32xf32>
    tpu.vector_store %arg28[%c0_147, %c1_148, %c0_149, %c0_150], %73 {strides = array<i32>} : memref<1x10x10x32xf32, #tpu.memory_space<vmem>>, vector<1x8x1x32xf32>,
    %cst_151 = arith.constant 0.000000e+00 : f32
    %75 = vector.broadcast %cst_151 : f32 to vector<1x8x1x32xf32>
    %c0_152 = arith.constant 0 : index
    %c1_153 = arith.constant 1 : index
    %c9_154 = arith.constant 9 : index
    %c0_155 = arith.constant 0 : index
    %76 = vector.load %arg28[%c0_152, %c1_153, %c9_154, %c0_155] : memref<1x10x10x32xf32, #tpu.memory_space<vmem>>, vector<1x8x1x32xf32>
    tpu.vector_store %arg28[%c0_152, %c1_153, %c9_154, %c0_155], %75 {strides = array<i32>} : memref<1x10x10x32xf32, #tpu.memory_space<vmem>>, vector<1x8x1x32xf32>,
    %c0_156 = arith.constant 0 : index
    %c1_157 = arith.constant 1 : index
    %c1_158 = arith.constant 1 : index
    %c0_159 = arith.constant 0 : index
    %77 = vector.load %arg28[%c0_156, %c1_157, %c1_158, %c0_159] : memref<1x10x10x32xf32, #tpu.memory_space<vmem>>, vector<1x8x8x32xf32>
    tpu.vector_store %arg28[%c0_156, %c1_157, %c1_158, %c0_159], %68 {strides = array<i32>} : memref<1x10x10x32xf32, #tpu.memory_space<vmem>>, vector<1x8x8x32xf32>,
    %c0_160 = arith.constant 0 : index
    %c0_161 = arith.constant 0 : index
    %c0_162 = arith.constant 0 : index
    %c0_163 = arith.constant 0 : index
    %78 = vector.load %arg28[%c0_160, %c0_161, %c0_162, %c0_163] : memref<1x10x10x32xf32, #tpu.memory_space<vmem>>, vector<1x8x8x32xf32>
    %c0_164 = arith.constant 0 : index
    %c0_165 = arith.constant 0 : index
    %c1_166 = arith.constant 1 : index
    %c0_167 = arith.constant 0 : index
    %79 = vector.load %arg28[%c0_164, %c0_165, %c1_166, %c0_167] : memref<1x10x10x32xf32, #tpu.memory_space<vmem>>, vector<1x8x8x32xf32>
    %c0_168 = arith.constant 0 : index
    %c0_169 = arith.constant 0 : index
    %c2_170 = arith.constant 2 : index
    %c0_171 = arith.constant 0 : index
    %80 = vector.load %arg28[%c0_168, %c0_169, %c2_170, %c0_171] : memref<1x10x10x32xf32, #tpu.memory_space<vmem>>, vector<1x8x8x32xf32>
    %c0_172 = arith.constant 0 : index
    %c1_173 = arith.constant 1 : index
    %c0_174 = arith.constant 0 : index
    %c0_175 = arith.constant 0 : index
    %81 = vector.load %arg28[%c0_172, %c1_173, %c0_174, %c0_175] : memref<1x10x10x32xf32, #tpu.memory_space<vmem>>, vector<1x8x8x32xf32>
    %c0_176 = arith.constant 0 : index
    %c1_177 = arith.constant 1 : index
    %c1_178 = arith.constant 1 : index
    %c0_179 = arith.constant 0 : index
    %82 = vector.load %arg28[%c0_176, %c1_177, %c1_178, %c0_179] : memref<1x10x10x32xf32, #tpu.memory_space<vmem>>, vector<1x8x8x32xf32>
    %c0_180 = arith.constant 0 : index
    %c1_181 = arith.constant 1 : index
    %c2_182 = arith.constant 2 : index
    %c0_183 = arith.constant 0 : index
    %83 = vector.load %arg28[%c0_180, %c1_181, %c2_182, %c0_183] : memref<1x10x10x32xf32, #tpu.memory_space<vmem>>, vector<1x8x8x32xf32>
    %c0_184 = arith.constant 0 : index
    %c2_185 = arith.constant 2 : index
    %c0_186 = arith.constant 0 : index
    %c0_187 = arith.constant 0 : index
    %84 = vector.load %arg28[%c0_184, %c2_185, %c0_186, %c0_187] : memref<1x10x10x32xf32, #tpu.memory_space<vmem>>, vector<1x8x8x32xf32>
    %c0_188 = arith.constant 0 : index
    %c2_189 = arith.constant 2 : index
    %c1_190 = arith.constant 1 : index
    %c0_191 = arith.constant 0 : index
    %85 = vector.load %arg28[%c0_188, %c2_189, %c1_190, %c0_191] : memref<1x10x10x32xf32, #tpu.memory_space<vmem>>, vector<1x8x8x32xf32>
    %c0_192 = arith.constant 0 : index
    %c2_193 = arith.constant 2 : index
    %c2_194 = arith.constant 2 : index
    %c0_195 = arith.constant 0 : index
    %86 = vector.load %arg28[%c0_192, %c2_193, %c2_194, %c0_195] : memref<1x10x10x32xf32, #tpu.memory_space<vmem>>, vector<1x8x8x32xf32>
    %87 = tpu.concatenate %78, %79, %80, %81, %82, %83, %84, %85, %86 in 3 : vector<1x8x8x32xf32>, vector<1x8x8x32xf32>, vector<1x8x8x32xf32>, vector<1x8x8x32xf32>, vector<1x8x8x32xf32>, vector<1x8x8x32xf32>, vector<1x8x8x32xf32>, vector<1x8x8x32xf32>, vector<1x8x8x32xf32> -> vector<1x8x8x288xf32>
    %88 = vector.shape_cast %87 : vector<1x8x8x288xf32> to vector<64x288xf32>
    %89 = arith.truncf %88 : vector<64x288xf32> to vector<64x288xbf16>
    %c0_196 = arith.constant 0 : index
    %c0_197 = arith.constant 0 : index
    %90 = vector.load %arg8[%c0_196, %c0_197] : memref<288x64xbf16, #tpu.memory_space<vmem>>, vector<288x64xbf16>
    %cst_198 = arith.constant dense<0.000000e+00> : vector<64x64xf32>
    %91 = tpu.matmul %89, %90, %cst_198 {dimension_numbers = #tpu.dot_dimension_numbers<[1], [0], [0], [1], [0, 0, 1, 1], [], []>} : vector<64x288xbf16>, vector<288x64xbf16>, vector<64x64xf32> -> vector<64x64xf32>
    %c0_199 = arith.constant 0 : index
    %c0_200 = arith.constant 0 : index
    %92 = vector.load %arg9[%c0_199, %c0_200] : memref<1x64xf32, #tpu.memory_space<vmem>>, vector<1x64xf32>
    %93 = vector.broadcast %92 : vector<1x64xf32> to vector<64x64xf32>
    %94 = arith.mulf %91, %93 : vector<64x64xf32>
    %c0_201 = arith.constant 0 : index
    %c0_202 = arith.constant 0 : index
    %95 = vector.load %arg10[%c0_201, %c0_202] : memref<1x64xf32, #tpu.memory_space<vmem>>, vector<1x64xf32>
    %96 = vector.broadcast %95 : vector<1x64xf32> to vector<64x64xf32>
    %97 = arith.addf %94, %96 : vector<64x64xf32>
    %cst_203 = arith.constant 0.000000e+00 : f32
    %98 = vector.broadcast %cst_203 : f32 to vector<64x64xf32>
    %99 = arith.maximumf %97, %98 : vector<64x64xf32>
    %100 = vector.shape_cast %99 : vector<64x64xf32> to vector<1x8x8x64xf32>
    %cst_204 = arith.constant 0.000000e+00 : f32
    %101 = vector.broadcast %cst_204 : f32 to vector<1x1x10x64xf32>
    %c0_205 = arith.constant 0 : index
    %c0_206 = arith.constant 0 : index
    %c0_207 = arith.constant 0 : index
    %c0_208 = arith.constant 0 : index
    %102 = vector.load %arg29[%c0_205, %c0_206, %c0_207, %c0_208] : memref<1x10x10x64xf32, #tpu.memory_space<vmem>>, vector<1x1x10x64xf32>
    tpu.vector_store %arg29[%c0_205, %c0_206, %c0_207, %c0_208], %101 {strides = array<i32>} : memref<1x10x10x64xf32, #tpu.memory_space<vmem>>, vector<1x1x10x64xf32>,
    %cst_209 = arith.constant 0.000000e+00 : f32
    %103 = vector.broadcast %cst_209 : f32 to vector<1x1x10x64xf32>
    %c0_210 = arith.constant 0 : index
    %c9_211 = arith.constant 9 : index
    %c0_212 = arith.constant 0 : index
    %c0_213 = arith.constant 0 : index
    %104 = vector.load %arg29[%c0_210, %c9_211, %c0_212, %c0_213] : memref<1x10x10x64xf32, #tpu.memory_space<vmem>>, vector<1x1x10x64xf32>
    tpu.vector_store %arg29[%c0_210, %c9_211, %c0_212, %c0_213], %103 {strides = array<i32>} : memref<1x10x10x64xf32, #tpu.memory_space<vmem>>, vector<1x1x10x64xf32>,
    %cst_214 = arith.constant 0.000000e+00 : f32
    %105 = vector.broadcast %cst_214 : f32 to vector<1x8x1x64xf32>
    %c0_215 = arith.constant 0 : index
    %c1_216 = arith.constant 1 : index
    %c0_217 = arith.constant 0 : index
    %c0_218 = arith.constant 0 : index
    %106 = vector.load %arg29[%c0_215, %c1_216, %c0_217, %c0_218] : memref<1x10x10x64xf32, #tpu.memory_space<vmem>>, vector<1x8x1x64xf32>
    tpu.vector_store %arg29[%c0_215, %c1_216, %c0_217, %c0_218], %105 {strides = array<i32>} : memref<1x10x10x64xf32, #tpu.memory_space<vmem>>, vector<1x8x1x64xf32>,
    %cst_219 = arith.constant 0.000000e+00 : f32
    %107 = vector.broadcast %cst_219 : f32 to vector<1x8x1x64xf32>
    %c0_220 = arith.constant 0 : index
    %c1_221 = arith.constant 1 : index
    %c9_222 = arith.constant 9 : index
    %c0_223 = arith.constant 0 : index
    %108 = vector.load %arg29[%c0_220, %c1_221, %c9_222, %c0_223] : memref<1x10x10x64xf32, #tpu.memory_space<vmem>>, vector<1x8x1x64xf32>
    tpu.vector_store %arg29[%c0_220, %c1_221, %c9_222, %c0_223], %107 {strides = array<i32>} : memref<1x10x10x64xf32, #tpu.memory_space<vmem>>, vector<1x8x1x64xf32>,
    %c0_224 = arith.constant 0 : index
    %c1_225 = arith.constant 1 : index
    %c1_226 = arith.constant 1 : index
    %c0_227 = arith.constant 0 : index
    %109 = vector.load %arg29[%c0_224, %c1_225, %c1_226, %c0_227] : memref<1x10x10x64xf32, #tpu.memory_space<vmem>>, vector<1x8x8x64xf32>
    tpu.vector_store %arg29[%c0_224, %c1_225, %c1_226, %c0_227], %100 {strides = array<i32>} : memref<1x10x10x64xf32, #tpu.memory_space<vmem>>, vector<1x8x8x64xf32>,
    %c0_228 = arith.constant 0 : index
    %c0_229 = arith.constant 0 : index
    %c0_230 = arith.constant 0 : index
    %c0_231 = arith.constant 0 : index
    %110 = vector.load %arg29[%c0_228, %c0_229, %c0_230, %c0_231] : memref<1x10x10x64xf32, #tpu.memory_space<vmem>>, vector<1x8x8x64xf32>
    %c0_232 = arith.constant 0 : index
    %c0_233 = arith.constant 0 : index
    %c1_234 = arith.constant 1 : index
    %c0_235 = arith.constant 0 : index
    %111 = vector.load %arg29[%c0_232, %c0_233, %c1_234, %c0_235] : memref<1x10x10x64xf32, #tpu.memory_space<vmem>>, vector<1x8x8x64xf32>
    %c0_236 = arith.constant 0 : index
    %c0_237 = arith.constant 0 : index
    %c2_238 = arith.constant 2 : index
    %c0_239 = arith.constant 0 : index
    %112 = vector.load %arg29[%c0_236, %c0_237, %c2_238, %c0_239] : memref<1x10x10x64xf32, #tpu.memory_space<vmem>>, vector<1x8x8x64xf32>
    %c0_240 = arith.constant 0 : index
    %c1_241 = arith.constant 1 : index
    %c0_242 = arith.constant 0 : index
    %c0_243 = arith.constant 0 : index
    %113 = vector.load %arg29[%c0_240, %c1_241, %c0_242, %c0_243] : memref<1x10x10x64xf32, #tpu.memory_space<vmem>>, vector<1x8x8x64xf32>
    %c0_244 = arith.constant 0 : index
    %c1_245 = arith.constant 1 : index
    %c1_246 = arith.constant 1 : index
    %c0_247 = arith.constant 0 : index
    %114 = vector.load %arg29[%c0_244, %c1_245, %c1_246, %c0_247] : memref<1x10x10x64xf32, #tpu.memory_space<vmem>>, vector<1x8x8x64xf32>
    %c0_248 = arith.constant 0 : index
    %c1_249 = arith.constant 1 : index
    %c2_250 = arith.constant 2 : index
    %c0_251 = arith.constant 0 : index
    %115 = vector.load %arg29[%c0_248, %c1_249, %c2_250, %c0_251] : memref<1x10x10x64xf32, #tpu.memory_space<vmem>>, vector<1x8x8x64xf32>
    %c0_252 = arith.constant 0 : index
    %c2_253 = arith.constant 2 : index
    %c0_254 = arith.constant 0 : index
    %c0_255 = arith.constant 0 : index
    %116 = vector.load %arg29[%c0_252, %c2_253, %c0_254, %c0_255] : memref<1x10x10x64xf32, #tpu.memory_space<vmem>>, vector<1x8x8x64xf32>
    %c0_256 = arith.constant 0 : index
    %c2_257 = arith.constant 2 : index
    %c1_258 = arith.constant 1 : index
    %c0_259 = arith.constant 0 : index
    %117 = vector.load %arg29[%c0_256, %c2_257, %c1_258, %c0_259] : memref<1x10x10x64xf32, #tpu.memory_space<vmem>>, vector<1x8x8x64xf32>
    %c0_260 = arith.constant 0 : index
    %c2_261 = arith.constant 2 : index
    %c2_262 = arith.constant 2 : index
    %c0_263 = arith.constant 0 : index
    %118 = vector.load %arg29[%c0_260, %c2_261, %c2_262, %c0_263] : memref<1x10x10x64xf32, #tpu.memory_space<vmem>>, vector<1x8x8x64xf32>
    %119 = tpu.concatenate %110, %111, %112, %113, %114, %115, %116, %117, %118 in 3 : vector<1x8x8x64xf32>, vector<1x8x8x64xf32>, vector<1x8x8x64xf32>, vector<1x8x8x64xf32>, vector<1x8x8x64xf32>, vector<1x8x8x64xf32>, vector<1x8x8x64xf32>, vector<1x8x8x64xf32>, vector<1x8x8x64xf32> -> vector<1x8x8x576xf32>
    %120 = vector.shape_cast %119 : vector<1x8x8x576xf32> to vector<64x576xf32>
    %121 = arith.truncf %120 : vector<64x576xf32> to vector<64x576xbf16>
    %c0_264 = arith.constant 0 : index
    %c0_265 = arith.constant 0 : index
    %122 = vector.load %arg11[%c0_264, %c0_265] : memref<576x64xbf16, #tpu.memory_space<vmem>>, vector<576x64xbf16>
    %cst_266 = arith.constant dense<0.000000e+00> : vector<64x64xf32>
    %123 = tpu.matmul %121, %122, %cst_266 {dimension_numbers = #tpu.dot_dimension_numbers<[1], [0], [0], [1], [0, 0, 1, 1], [], []>} : vector<64x576xbf16>, vector<576x64xbf16>, vector<64x64xf32> -> vector<64x64xf32>
    %c0_267 = arith.constant 0 : index
    %c0_268 = arith.constant 0 : index
    %124 = vector.load %arg12[%c0_267, %c0_268] : memref<1x64xf32, #tpu.memory_space<vmem>>, vector<1x64xf32>
    %125 = vector.broadcast %124 : vector<1x64xf32> to vector<64x64xf32>
    %126 = arith.mulf %123, %125 : vector<64x64xf32>
    %c0_269 = arith.constant 0 : index
    %c0_270 = arith.constant 0 : index
    %127 = vector.load %arg13[%c0_269, %c0_270] : memref<1x64xf32, #tpu.memory_space<vmem>>, vector<1x64xf32>
    %128 = vector.broadcast %127 : vector<1x64xf32> to vector<64x64xf32>
    %129 = arith.addf %126, %128 : vector<64x64xf32>
    %cst_271 = arith.constant 0.000000e+00 : f32
    %130 = vector.broadcast %cst_271 : f32 to vector<64x64xf32>
    %131 = arith.maximumf %129, %130 : vector<64x64xf32>
    %132 = vector.shape_cast %131 : vector<64x64xf32> to vector<1x8x8x64xf32>
    %133 = vector.shape_cast %132 : vector<1x8x8x64xf32> to vector<1x4x2x8x64xf32>
    %cst_272 = arith.constant dense<0xFF800000> : vector<1x4x8x64xf32>
    %134 = vector.multi_reduction <maximumf>, %133, %cst_272 [2] : vector<1x4x2x8x64xf32> to vector<1x4x8x64xf32>
    %135 = vector.shape_cast %134 : vector<1x4x8x64xf32> to vector<1x4x4x2x64xf32>
    %cst_273 = arith.constant dense<0xFF800000> : vector<1x4x4x64xf32>
    %136 = vector.multi_reduction <maximumf>, %135, %cst_273 [3] : vector<1x4x4x2x64xf32> to vector<1x4x4x64xf32>
    %cst_274 = arith.constant 0.000000e+00 : f32
    %137 = vector.broadcast %cst_274 : f32 to vector<1x1x6x64xf32>
    %c0_275 = arith.constant 0 : index
    %c0_276 = arith.constant 0 : index
    %c0_277 = arith.constant 0 : index
    %c0_278 = arith.constant 0 : index
    %138 = vector.load %arg30[%c0_275, %c0_276, %c0_277, %c0_278] : memref<1x6x6x64xf32, #tpu.memory_space<vmem>>, vector<1x1x6x64xf32>
    tpu.vector_store %arg30[%c0_275, %c0_276, %c0_277, %c0_278], %137 {strides = array<i32>} : memref<1x6x6x64xf32, #tpu.memory_space<vmem>>, vector<1x1x6x64xf32>,
    %cst_279 = arith.constant 0.000000e+00 : f32
    %139 = vector.broadcast %cst_279 : f32 to vector<1x1x6x64xf32>
    %c0_280 = arith.constant 0 : index
    %c5 = arith.constant 5 : index
    %c0_281 = arith.constant 0 : index
    %c0_282 = arith.constant 0 : index
    %140 = vector.load %arg30[%c0_280, %c5, %c0_281, %c0_282] : memref<1x6x6x64xf32, #tpu.memory_space<vmem>>, vector<1x1x6x64xf32>
    tpu.vector_store %arg30[%c0_280, %c5, %c0_281, %c0_282], %139 {strides = array<i32>} : memref<1x6x6x64xf32, #tpu.memory_space<vmem>>, vector<1x1x6x64xf32>,
    %cst_283 = arith.constant 0.000000e+00 : f32
    %141 = vector.broadcast %cst_283 : f32 to vector<1x4x1x64xf32>
    %c0_284 = arith.constant 0 : index
    %c1_285 = arith.constant 1 : index
    %c0_286 = arith.constant 0 : index
    %c0_287 = arith.constant 0 : index
    %142 = vector.load %arg30[%c0_284, %c1_285, %c0_286, %c0_287] : memref<1x6x6x64xf32, #tpu.memory_space<vmem>>, vector<1x4x1x64xf32>
    tpu.vector_store %arg30[%c0_284, %c1_285, %c0_286, %c0_287], %141 {strides = array<i32>} : memref<1x6x6x64xf32, #tpu.memory_space<vmem>>, vector<1x4x1x64xf32>,
    %cst_288 = arith.constant 0.000000e+00 : f32
    %143 = vector.broadcast %cst_288 : f32 to vector<1x4x1x64xf32>
    %c0_289 = arith.constant 0 : index
    %c1_290 = arith.constant 1 : index
    %c5_291 = arith.constant 5 : index
    %c0_292 = arith.constant 0 : index
    %144 = vector.load %arg30[%c0_289, %c1_290, %c5_291, %c0_292] : memref<1x6x6x64xf32, #tpu.memory_space<vmem>>, vector<1x4x1x64xf32>
    tpu.vector_store %arg30[%c0_289, %c1_290, %c5_291, %c0_292], %143 {strides = array<i32>} : memref<1x6x6x64xf32, #tpu.memory_space<vmem>>, vector<1x4x1x64xf32>,
    %c0_293 = arith.constant 0 : index
    %c1_294 = arith.constant 1 : index
    %c1_295 = arith.constant 1 : index
    %c0_296 = arith.constant 0 : index
    %145 = vector.load %arg30[%c0_293, %c1_294, %c1_295, %c0_296] : memref<1x6x6x64xf32, #tpu.memory_space<vmem>>, vector<1x4x4x64xf32>
    tpu.vector_store %arg30[%c0_293, %c1_294, %c1_295, %c0_296], %136 {strides = array<i32>} : memref<1x6x6x64xf32, #tpu.memory_space<vmem>>, vector<1x4x4x64xf32>,
    %c0_297 = arith.constant 0 : index
    %c0_298 = arith.constant 0 : index
    %c0_299 = arith.constant 0 : index
    %c0_300 = arith.constant 0 : index
    %146 = vector.load %arg30[%c0_297, %c0_298, %c0_299, %c0_300] : memref<1x6x6x64xf32, #tpu.memory_space<vmem>>, vector<1x4x4x64xf32>
    %c0_301 = arith.constant 0 : index
    %c0_302 = arith.constant 0 : index
    %c1_303 = arith.constant 1 : index
    %c0_304 = arith.constant 0 : index
    %147 = vector.load %arg30[%c0_301, %c0_302, %c1_303, %c0_304] : memref<1x6x6x64xf32, #tpu.memory_space<vmem>>, vector<1x4x4x64xf32>
    %c0_305 = arith.constant 0 : index
    %c0_306 = arith.constant 0 : index
    %c2_307 = arith.constant 2 : index
    %c0_308 = arith.constant 0 : index
    %148 = vector.load %arg30[%c0_305, %c0_306, %c2_307, %c0_308] : memref<1x6x6x64xf32, #tpu.memory_space<vmem>>, vector<1x4x4x64xf32>
    %c0_309 = arith.constant 0 : index
    %c1_310 = arith.constant 1 : index
    %c0_311 = arith.constant 0 : index
    %c0_312 = arith.constant 0 : index
    %149 = vector.load %arg30[%c0_309, %c1_310, %c0_311, %c0_312] : memref<1x6x6x64xf32, #tpu.memory_space<vmem>>, vector<1x4x4x64xf32>
    %c0_313 = arith.constant 0 : index
    %c1_314 = arith.constant 1 : index
    %c1_315 = arith.constant 1 : index
    %c0_316 = arith.constant 0 : index
    %150 = vector.load %arg30[%c0_313, %c1_314, %c1_315, %c0_316] : memref<1x6x6x64xf32, #tpu.memory_space<vmem>>, vector<1x4x4x64xf32>
    %c0_317 = arith.constant 0 : index
    %c1_318 = arith.constant 1 : index
    %c2_319 = arith.constant 2 : index
    %c0_320 = arith.constant 0 : index
    %151 = vector.load %arg30[%c0_317, %c1_318, %c2_319, %c0_320] : memref<1x6x6x64xf32, #tpu.memory_space<vmem>>, vector<1x4x4x64xf32>
    %c0_321 = arith.constant 0 : index
    %c2_322 = arith.constant 2 : index
    %c0_323 = arith.constant 0 : index
    %c0_324 = arith.constant 0 : index
    %152 = vector.load %arg30[%c0_321, %c2_322, %c0_323, %c0_324] : memref<1x6x6x64xf32, #tpu.memory_space<vmem>>, vector<1x4x4x64xf32>
    %c0_325 = arith.constant 0 : index
    %c2_326 = arith.constant 2 : index
    %c1_327 = arith.constant 1 : index
    %c0_328 = arith.constant 0 : index
    %153 = vector.load %arg30[%c0_325, %c2_326, %c1_327, %c0_328] : memref<1x6x6x64xf32, #tpu.memory_space<vmem>>, vector<1x4x4x64xf32>
    %c0_329 = arith.constant 0 : index
    %c2_330 = arith.constant 2 : index
    %c2_331 = arith.constant 2 : index
    %c0_332 = arith.constant 0 : index
    %154 = vector.load %arg30[%c0_329, %c2_330, %c2_331, %c0_332] : memref<1x6x6x64xf32, #tpu.memory_space<vmem>>, vector<1x4x4x64xf32>
    %155 = tpu.concatenate %146, %147, %148, %149, %150, %151, %152, %153, %154 in 3 : vector<1x4x4x64xf32>, vector<1x4x4x64xf32>, vector<1x4x4x64xf32>, vector<1x4x4x64xf32>, vector<1x4x4x64xf32>, vector<1x4x4x64xf32>, vector<1x4x4x64xf32>, vector<1x4x4x64xf32>, vector<1x4x4x64xf32> -> vector<1x4x4x576xf32>
    %156 = vector.shape_cast %155 : vector<1x4x4x576xf32> to vector<16x576xf32>
    %157 = arith.truncf %156 : vector<16x576xf32> to vector<16x576xbf16>
    %c0_333 = arith.constant 0 : index
    %c0_334 = arith.constant 0 : index
    %158 = vector.load %arg14[%c0_333, %c0_334] : memref<576x128xbf16, #tpu.memory_space<vmem>>, vector<576x128xbf16>
    %cst_335 = arith.constant dense<0.000000e+00> : vector<16x128xf32>
    %159 = tpu.matmul %157, %158, %cst_335 {dimension_numbers = #tpu.dot_dimension_numbers<[1], [0], [0], [1], [0, 0, 1, 1], [], []>} : vector<16x576xbf16>, vector<576x128xbf16>, vector<16x128xf32> -> vector<16x128xf32>
    %c0_336 = arith.constant 0 : index
    %c0_337 = arith.constant 0 : index
    %160 = vector.load %arg15[%c0_336, %c0_337] : memref<1x128xf32, #tpu.memory_space<vmem>>, vector<1x128xf32>
    %161 = vector.broadcast %160 : vector<1x128xf32> to vector<16x128xf32>
    %162 = arith.mulf %159, %161 : vector<16x128xf32>
    %c0_338 = arith.constant 0 : index
    %c0_339 = arith.constant 0 : index
    %163 = vector.load %arg16[%c0_338, %c0_339] : memref<1x128xf32, #tpu.memory_space<vmem>>, vector<1x128xf32>
    %164 = vector.broadcast %163 : vector<1x128xf32> to vector<16x128xf32>
    %165 = arith.addf %162, %164 : vector<16x128xf32>
    %cst_340 = arith.constant 0.000000e+00 : f32
    %166 = vector.broadcast %cst_340 : f32 to vector<16x128xf32>
    %167 = arith.maximumf %165, %166 : vector<16x128xf32>
    %168 = vector.shape_cast %167 : vector<16x128xf32> to vector<1x4x4x128xf32>
    %cst_341 = arith.constant 0.000000e+00 : f32
    %169 = vector.broadcast %cst_341 : f32 to vector<1x1x6x128xf32>
    %c0_342 = arith.constant 0 : index
    %c0_343 = arith.constant 0 : index
    %c0_344 = arith.constant 0 : index
    %c0_345 = arith.constant 0 : index
    %170 = vector.load %arg31[%c0_342, %c0_343, %c0_344, %c0_345] : memref<1x6x6x128xf32, #tpu.memory_space<vmem>>, vector<1x1x6x128xf32>
    tpu.vector_store %arg31[%c0_342, %c0_343, %c0_344, %c0_345], %169 {strides = array<i32>} : memref<1x6x6x128xf32, #tpu.memory_space<vmem>>, vector<1x1x6x128xf32>,
    %cst_346 = arith.constant 0.000000e+00 : f32
    %171 = vector.broadcast %cst_346 : f32 to vector<1x1x6x128xf32>
    %c0_347 = arith.constant 0 : index
    %c5_348 = arith.constant 5 : index
    %c0_349 = arith.constant 0 : index
    %c0_350 = arith.constant 0 : index
    %172 = vector.load %arg31[%c0_347, %c5_348, %c0_349, %c0_350] : memref<1x6x6x128xf32, #tpu.memory_space<vmem>>, vector<1x1x6x128xf32>
    tpu.vector_store %arg31[%c0_347, %c5_348, %c0_349, %c0_350], %171 {strides = array<i32>} : memref<1x6x6x128xf32, #tpu.memory_space<vmem>>, vector<1x1x6x128xf32>,
    %cst_351 = arith.constant 0.000000e+00 : f32
    %173 = vector.broadcast %cst_351 : f32 to vector<1x4x1x128xf32>
    %c0_352 = arith.constant 0 : index
    %c1_353 = arith.constant 1 : index
    %c0_354 = arith.constant 0 : index
    %c0_355 = arith.constant 0 : index
    %174 = vector.load %arg31[%c0_352, %c1_353, %c0_354, %c0_355] : memref<1x6x6x128xf32, #tpu.memory_space<vmem>>, vector<1x4x1x128xf32>
    tpu.vector_store %arg31[%c0_352, %c1_353, %c0_354, %c0_355], %173 {strides = array<i32>} : memref<1x6x6x128xf32, #tpu.memory_space<vmem>>, vector<1x4x1x128xf32>,
    %cst_356 = arith.constant 0.000000e+00 : f32
    %175 = vector.broadcast %cst_356 : f32 to vector<1x4x1x128xf32>
    %c0_357 = arith.constant 0 : index
    %c1_358 = arith.constant 1 : index
    %c5_359 = arith.constant 5 : index
    %c0_360 = arith.constant 0 : index
    %176 = vector.load %arg31[%c0_357, %c1_358, %c5_359, %c0_360] : memref<1x6x6x128xf32, #tpu.memory_space<vmem>>, vector<1x4x1x128xf32>
    tpu.vector_store %arg31[%c0_357, %c1_358, %c5_359, %c0_360], %175 {strides = array<i32>} : memref<1x6x6x128xf32, #tpu.memory_space<vmem>>, vector<1x4x1x128xf32>,
    %c0_361 = arith.constant 0 : index
    %c1_362 = arith.constant 1 : index
    %c1_363 = arith.constant 1 : index
    %c0_364 = arith.constant 0 : index
    %177 = vector.load %arg31[%c0_361, %c1_362, %c1_363, %c0_364] : memref<1x6x6x128xf32, #tpu.memory_space<vmem>>, vector<1x4x4x128xf32>
    tpu.vector_store %arg31[%c0_361, %c1_362, %c1_363, %c0_364], %168 {strides = array<i32>} : memref<1x6x6x128xf32, #tpu.memory_space<vmem>>, vector<1x4x4x128xf32>,
    %c0_365 = arith.constant 0 : index
    %c0_366 = arith.constant 0 : index
    %c0_367 = arith.constant 0 : index
    %c0_368 = arith.constant 0 : index
    %178 = vector.load %arg31[%c0_365, %c0_366, %c0_367, %c0_368] : memref<1x6x6x128xf32, #tpu.memory_space<vmem>>, vector<1x4x4x128xf32>
    %c0_369 = arith.constant 0 : index
    %c0_370 = arith.constant 0 : index
    %c1_371 = arith.constant 1 : index
    %c0_372 = arith.constant 0 : index
    %179 = vector.load %arg31[%c0_369, %c0_370, %c1_371, %c0_372] : memref<1x6x6x128xf32, #tpu.memory_space<vmem>>, vector<1x4x4x128xf32>
    %c0_373 = arith.constant 0 : index
    %c0_374 = arith.constant 0 : index
    %c2_375 = arith.constant 2 : index
    %c0_376 = arith.constant 0 : index
    %180 = vector.load %arg31[%c0_373, %c0_374, %c2_375, %c0_376] : memref<1x6x6x128xf32, #tpu.memory_space<vmem>>, vector<1x4x4x128xf32>
    %c0_377 = arith.constant 0 : index
    %c1_378 = arith.constant 1 : index
    %c0_379 = arith.constant 0 : index
    %c0_380 = arith.constant 0 : index
    %181 = vector.load %arg31[%c0_377, %c1_378, %c0_379, %c0_380] : memref<1x6x6x128xf32, #tpu.memory_space<vmem>>, vector<1x4x4x128xf32>
    %c0_381 = arith.constant 0 : index
    %c1_382 = arith.constant 1 : index
    %c1_383 = arith.constant 1 : index
    %c0_384 = arith.constant 0 : index
    %182 = vector.load %arg31[%c0_381, %c1_382, %c1_383, %c0_384] : memref<1x6x6x128xf32, #tpu.memory_space<vmem>>, vector<1x4x4x128xf32>
    %c0_385 = arith.constant 0 : index
    %c1_386 = arith.constant 1 : index
    %c2_387 = arith.constant 2 : index
    %c0_388 = arith.constant 0 : index
    %183 = vector.load %arg31[%c0_385, %c1_386, %c2_387, %c0_388] : memref<1x6x6x128xf32, #tpu.memory_space<vmem>>, vector<1x4x4x128xf32>
    %c0_389 = arith.constant 0 : index
    %c2_390 = arith.constant 2 : index
    %c0_391 = arith.constant 0 : index
    %c0_392 = arith.constant 0 : index
    %184 = vector.load %arg31[%c0_389, %c2_390, %c0_391, %c0_392] : memref<1x6x6x128xf32, #tpu.memory_space<vmem>>, vector<1x4x4x128xf32>
    %c0_393 = arith.constant 0 : index
    %c2_394 = arith.constant 2 : index
    %c1_395 = arith.constant 1 : index
    %c0_396 = arith.constant 0 : index
    %185 = vector.load %arg31[%c0_393, %c2_394, %c1_395, %c0_396] : memref<1x6x6x128xf32, #tpu.memory_space<vmem>>, vector<1x4x4x128xf32>
    %c0_397 = arith.constant 0 : index
    %c2_398 = arith.constant 2 : index
    %c2_399 = arith.constant 2 : index
    %c0_400 = arith.constant 0 : index
    %186 = vector.load %arg31[%c0_397, %c2_398, %c2_399, %c0_400] : memref<1x6x6x128xf32, #tpu.memory_space<vmem>>, vector<1x4x4x128xf32>
    %187 = tpu.concatenate %178, %179, %180, %181, %182, %183, %184, %185, %186 in 3 : vector<1x4x4x128xf32>, vector<1x4x4x128xf32>, vector<1x4x4x128xf32>, vector<1x4x4x128xf32>, vector<1x4x4x128xf32>, vector<1x4x4x128xf32>, vector<1x4x4x128xf32>, vector<1x4x4x128xf32>, vector<1x4x4x128xf32> -> vector<1x4x4x1152xf32>
    %188 = vector.shape_cast %187 : vector<1x4x4x1152xf32> to vector<16x1152xf32>
    %189 = arith.truncf %188 : vector<16x1152xf32> to vector<16x1152xbf16>
    %c0_401 = arith.constant 0 : index
    %c0_402 = arith.constant 0 : index
    %190 = vector.load %arg17[%c0_401, %c0_402] : memref<1152x128xbf16, #tpu.memory_space<vmem>>, vector<1152x128xbf16>
    %cst_403 = arith.constant dense<0.000000e+00> : vector<16x128xf32>
    %191 = tpu.matmul %189, %190, %cst_403 {dimension_numbers = #tpu.dot_dimension_numbers<[1], [0], [0], [1], [0, 0, 1, 1], [], []>} : vector<16x1152xbf16>, vector<1152x128xbf16>, vector<16x128xf32> -> vector<16x128xf32>
    %c0_404 = arith.constant 0 : index
    %c0_405 = arith.constant 0 : index
    %192 = vector.load %arg18[%c0_404, %c0_405] : memref<1x128xf32, #tpu.memory_space<vmem>>, vector<1x128xf32>
    %193 = vector.broadcast %192 : vector<1x128xf32> to vector<16x128xf32>
    %194 = arith.mulf %191, %193 : vector<16x128xf32>
    %c0_406 = arith.constant 0 : index
    %c0_407 = arith.constant 0 : index
    %195 = vector.load %arg19[%c0_406, %c0_407] : memref<1x128xf32, #tpu.memory_space<vmem>>, vector<1x128xf32>
    %196 = vector.broadcast %195 : vector<1x128xf32> to vector<16x128xf32>
    %197 = arith.addf %194, %196 : vector<16x128xf32>
    %cst_408 = arith.constant 0.000000e+00 : f32
    %198 = vector.broadcast %cst_408 : f32 to vector<16x128xf32>
    %199 = arith.maximumf %197, %198 : vector<16x128xf32>
    %200 = vector.shape_cast %199 : vector<16x128xf32> to vector<1x4x4x128xf32>
    %201 = vector.shape_cast %200 : vector<1x4x4x128xf32> to vector<1x2x2x4x128xf32>
    %cst_409 = arith.constant dense<0xFF800000> : vector<1x2x4x128xf32>
    %202 = vector.multi_reduction <maximumf>, %201, %cst_409 [2] : vector<1x2x2x4x128xf32> to vector<1x2x4x128xf32>
    %203 = vector.shape_cast %202 : vector<1x2x4x128xf32> to vector<1x2x2x2x128xf32>
    %cst_410 = arith.constant dense<0xFF800000> : vector<1x2x2x128xf32>
    %204 = vector.multi_reduction <maximumf>, %203, %cst_410 [3] : vector<1x2x2x2x128xf32> to vector<1x2x2x128xf32>
    %205 = vector.extract_strided_slice %204 {offsets = [0, 0, 0, 0], sizes = [1, 1, 1, 128], strides = [1, 1, 1, 1]} : vector<1x2x2x128xf32> to vector<1x1x1x128xf32>
    %206 = vector.shape_cast %205 : vector<1x1x1x128xf32> to vector<1x128xf32>
    %207 = vector.extract_strided_slice %204 {offsets = [0, 0, 1, 0], sizes = [1, 1, 1, 128], strides = [1, 1, 1, 1]} : vector<1x2x2x128xf32> to vector<1x1x1x128xf32>
    %208 = vector.shape_cast %207 : vector<1x1x1x128xf32> to vector<1x128xf32>
    %209 = vector.extract_strided_slice %204 {offsets = [0, 1, 0, 0], sizes = [1, 1, 1, 128], strides = [1, 1, 1, 1]} : vector<1x2x2x128xf32> to vector<1x1x1x128xf32>
    %210 = vector.shape_cast %209 : vector<1x1x1x128xf32> to vector<1x128xf32>
    %211 = vector.extract_strided_slice %204 {offsets = [0, 1, 1, 0], sizes = [1, 1, 1, 128], strides = [1, 1, 1, 1]} : vector<1x2x2x128xf32> to vector<1x1x1x128xf32>
    %212 = vector.shape_cast %211 : vector<1x1x1x128xf32> to vector<1x128xf32>
    %213 = tpu.concatenate %206, %208, %210, %212 in 1 : vector<1x128xf32>, vector<1x128xf32>, vector<1x128xf32>, vector<1x128xf32> -> vector<1x512xf32>
    %214 = arith.truncf %213 : vector<1x512xf32> to vector<1x512xbf16>
    %c0_411 = arith.constant 0 : index
    %c0_412 = arith.constant 0 : index
    %215 = vector.load %arg20[%c0_411, %c0_412] : memref<512x512xbf16, #tpu.memory_space<vmem>>, vector<512x512xbf16>
    %cst_413 = arith.constant dense<0.000000e+00> : vector<1x512xf32>
    %216 = tpu.matmul %214, %215, %cst_413 {dimension_numbers = #tpu.dot_dimension_numbers<[1], [0], [0], [1], [0, 0, 1, 1], [], []>} : vector<1x512xbf16>, vector<512x512xbf16>, vector<1x512xf32> -> vector<1x512xf32>
    %c0_414 = arith.constant 0 : index
    %c0_415 = arith.constant 0 : index
    %217 = vector.load %arg21[%c0_414, %c0_415] : memref<1x512xf32, #tpu.memory_space<vmem>>, vector<1x512xf32>
    %218 = arith.mulf %216, %217 : vector<1x512xf32>
    %c0_416 = arith.constant 0 : index
    %c0_417 = arith.constant 0 : index
    %219 = vector.load %arg22[%c0_416, %c0_417] : memref<1x512xf32, #tpu.memory_space<vmem>>, vector<1x512xf32>
    %220 = arith.addf %218, %219 : vector<1x512xf32>
    %cst_418 = arith.constant 0.000000e+00 : f32
    %221 = vector.broadcast %cst_418 : f32 to vector<1x512xf32>
    %222 = arith.maximumf %220, %221 : vector<1x512xf32>
    %c0_419 = arith.constant 0 : index
    %c0_420 = arith.constant 0 : index
    %223 = vector.load %arg23[%c0_419, %c0_420] : memref<1x512xf32, #tpu.memory_space<vmem>>, vector<1x512xf32>
    %224 = arith.mulf %222, %223 : vector<1x512xf32>
    %cst_421 = arith.constant dense<0.000000e+00> : vector<1xf32>
    %225 = vector.multi_reduction <add>, %224, %cst_421 [1] : vector<1x512xf32> to vector<1xf32>
    %226 = vector.shape_cast %225 : vector<1xf32> to vector<1x1xf32>
    %c0_422 = arith.constant 0 : index
    %c0_423 = arith.constant 0 : index
    %227 = vector.load %arg24[%c0_422, %c0_423] : memref<1x1xf32, #tpu.memory_space<vmem>>, vector<1x1xf32>
    %228 = arith.addf %226, %227 : vector<1x1xf32>
    %cst_424 = arith.constant 0.000000e+00 : f32
    %229 = vector.broadcast %cst_424 : f32 to vector<1x1xf32>
    %230 = arith.subf %229, %228 : vector<1x1xf32>
    %231 = math.exp %230 : vector<1x1xf32>
    %cst_425 = arith.constant 1.000000e+00 : f32
    %232 = vector.broadcast %cst_425 : f32 to vector<1x1xf32>
    %233 = arith.addf %232, %231 : vector<1x1xf32>
    %cst_426 = arith.constant 1.000000e+00 : f32
    %234 = vector.broadcast %cst_426 : f32 to vector<1x1xf32>
    %235 = arith.divf %234, %233 : vector<1x1xf32>
    %236 = vector.shape_cast %235 : vector<1x1xf32> to vector<1x1x1xf32>
    %c0_427 = arith.constant 0 : index
    %c0_428 = arith.constant 0 : index
    %c0_429 = arith.constant 0 : index
    %237 = vector.load %arg25[%c0_427, %c0_428, %c0_429] : memref<1x1x1xf32, #tpu.memory_space<vmem>>, vector<1x1x1xf32>
    tpu.vector_store %arg25[%c0_427, %c0_428, %c0_429], %236 {strides = array<i32>} : memref<1x1x1xf32, #tpu.memory_space<vmem>>, vector<1x1x1xf32>,
    return
  }
  func.func @transform_0(%arg0: i32) -> (i32, i32, i32, i32) {
    %c0_i32 = arith.constant 0 : i32
    %c0_i32_0 = arith.constant 0 : i32
    %c0_i32_1 = arith.constant 0 : i32
    %c0_i32_2 = arith.constant 0 : i32
    return %arg0, %c0_i32, %c0_i32_0, %c0_i32_1 : i32, i32, i32, i32
  }
  func.func @transform_1(%arg0: i32) -> (i32, i32) {
    %c0_i32 = arith.constant 0 : i32
    %c0_i32_0 = arith.constant 0 : i32
    %c0_i32_1 = arith.constant 0 : i32
    return %c0_i32, %c0_i32_0 : i32, i32
  }
  func.func @transform_2(%arg0: i32) -> (i32, i32) {
    %c0_i32 = arith.constant 0 : i32
    %c0_i32_0 = arith.constant 0 : i32
    %c0_i32_1 = arith.constant 0 : i32
    return %c0_i32, %c0_i32_0 : i32, i32
  }
  func.func @transform_3(%arg0: i32) -> (i32, i32) {
    %c0_i32 = arith.constant 0 : i32
    %c0_i32_0 = arith.constant 0 : i32
    %c0_i32_1 = arith.constant 0 : i32
    return %c0_i32, %c0_i32_0 : i32, i32
  }
  func.func @transform_4(%arg0: i32) -> (i32, i32) {
    %c0_i32 = arith.constant 0 : i32
    %c0_i32_0 = arith.constant 0 : i32
    %c0_i32_1 = arith.constant 0 : i32
    return %c0_i32, %c0_i32_0 : i32, i32
  }
  func.func @transform_5(%arg0: i32) -> (i32, i32) {
    %c0_i32 = arith.constant 0 : i32
    %c0_i32_0 = arith.constant 0 : i32
    %c0_i32_1 = arith.constant 0 : i32
    return %c0_i32, %c0_i32_0 : i32, i32
  }
  func.func @transform_6(%arg0: i32) -> (i32, i32) {
    %c0_i32 = arith.constant 0 : i32
    %c0_i32_0 = arith.constant 0 : i32
    %c0_i32_1 = arith.constant 0 : i32
    return %c0_i32, %c0_i32_0 : i32, i32
  }
  func.func @transform_7(%arg0: i32) -> (i32, i32) {
    %c0_i32 = arith.constant 0 : i32
    %c0_i32_0 = arith.constant 0 : i32
    %c0_i32_1 = arith.constant 0 : i32
    return %c0_i32, %c0_i32_0 : i32, i32
  }
  func.func @transform_8(%arg0: i32) -> (i32, i32) {
    %c0_i32 = arith.constant 0 : i32
    %c0_i32_0 = arith.constant 0 : i32
    %c0_i32_1 = arith.constant 0 : i32
    return %c0_i32, %c0_i32_0 : i32, i32
  }
  func.func @transform_9(%arg0: i32) -> (i32, i32) {
    %c0_i32 = arith.constant 0 : i32
    %c0_i32_0 = arith.constant 0 : i32
    %c0_i32_1 = arith.constant 0 : i32
    return %c0_i32, %c0_i32_0 : i32, i32
  }
  func.func @transform_10(%arg0: i32) -> (i32, i32) {
    %c0_i32 = arith.constant 0 : i32
    %c0_i32_0 = arith.constant 0 : i32
    %c0_i32_1 = arith.constant 0 : i32
    return %c0_i32, %c0_i32_0 : i32, i32
  }
  func.func @transform_11(%arg0: i32) -> (i32, i32) {
    %c0_i32 = arith.constant 0 : i32
    %c0_i32_0 = arith.constant 0 : i32
    %c0_i32_1 = arith.constant 0 : i32
    return %c0_i32, %c0_i32_0 : i32, i32
  }
  func.func @transform_12(%arg0: i32) -> (i32, i32) {
    %c0_i32 = arith.constant 0 : i32
    %c0_i32_0 = arith.constant 0 : i32
    %c0_i32_1 = arith.constant 0 : i32
    return %c0_i32, %c0_i32_0 : i32, i32
  }
  func.func @transform_13(%arg0: i32) -> (i32, i32) {
    %c0_i32 = arith.constant 0 : i32
    %c0_i32_0 = arith.constant 0 : i32
    %c0_i32_1 = arith.constant 0 : i32
    return %c0_i32, %c0_i32_0 : i32, i32
  }
  func.func @transform_14(%arg0: i32) -> (i32, i32) {
    %c0_i32 = arith.constant 0 : i32
    %c0_i32_0 = arith.constant 0 : i32
    %c0_i32_1 = arith.constant 0 : i32
    return %c0_i32, %c0_i32_0 : i32, i32
  }
  func.func @transform_15(%arg0: i32) -> (i32, i32) {
    %c0_i32 = arith.constant 0 : i32
    %c0_i32_0 = arith.constant 0 : i32
    %c0_i32_1 = arith.constant 0 : i32
    return %c0_i32, %c0_i32_0 : i32, i32
  }
  func.func @transform_16(%arg0: i32) -> (i32, i32) {
    %c0_i32 = arith.constant 0 : i32
    %c0_i32_0 = arith.constant 0 : i32
    %c0_i32_1 = arith.constant 0 : i32
    return %c0_i32, %c0_i32_0 : i32, i32
  }
  func.func @transform_17(%arg0: i32) -> (i32, i32) {
    %c0_i32 = arith.constant 0 : i32
    %c0_i32_0 = arith.constant 0 : i32
    %c0_i32_1 = arith.constant 0 : i32
    return %c0_i32, %c0_i32_0 : i32, i32
  }
  func.func @transform_18(%arg0: i32) -> (i32, i32) {
    %c0_i32 = arith.constant 0 : i32
    %c0_i32_0 = arith.constant 0 : i32
    %c0_i32_1 = arith.constant 0 : i32
    return %c0_i32, %c0_i32_0 : i32, i32
  }
  func.func @transform_19(%arg0: i32) -> (i32, i32) {
    %c0_i32 = arith.constant 0 : i32
    %c0_i32_0 = arith.constant 0 : i32
    %c0_i32_1 = arith.constant 0 : i32
    return %c0_i32, %c0_i32_0 : i32, i32
  }
  func.func @transform_20(%arg0: i32) -> (i32, i32) {
    %c0_i32 = arith.constant 0 : i32
    %c0_i32_0 = arith.constant 0 : i32
    %c0_i32_1 = arith.constant 0 : i32
    return %c0_i32, %c0_i32_0 : i32, i32
  }
  func.func @transform_21(%arg0: i32) -> (i32, i32) {
    %c0_i32 = arith.constant 0 : i32
    %c0_i32_0 = arith.constant 0 : i32
    %c0_i32_1 = arith.constant 0 : i32
    return %c0_i32, %c0_i32_0 : i32, i32
  }
  func.func @transform_22(%arg0: i32) -> (i32, i32) {
    %c0_i32 = arith.constant 0 : i32
    %c0_i32_0 = arith.constant 0 : i32
    %c0_i32_1 = arith.constant 0 : i32
    return %c0_i32, %c0_i32_0 : i32, i32
  }
  func.func @transform_23(%arg0: i32) -> (i32, i32) {
    %c0_i32 = arith.constant 0 : i32
    %c0_i32_0 = arith.constant 0 : i32
    %c0_i32_1 = arith.constant 0 : i32
    return %c0_i32, %c0_i32_0 : i32, i32
  }
  func.func @transform_24(%arg0: i32) -> (i32, i32, i32) {
    %c0_i32 = arith.constant 0 : i32
    %c0_i32_0 = arith.constant 0 : i32
    %c0_i32_1 = arith.constant 0 : i32
    return %arg0, %c0_i32, %c0_i32_0 : i32, i32, i32
  }
}

</mosaic_0001>

<llo_original>
// kernel: meningioma_forward.1
$region0: #{meningioma_forward.1}
  #allocation0 [shape = 'u32[]', space=smem, size = 0x4, offset = 0x4, fixed_abs, tag = 'smem constant byte address 0x4 - core index']
  #allocation1 [shape = 'u32[144,128]{1,0:T(1,128)}', space=vmem, size = 0x12000, scoped, tag = 'internal scratch']
  #allocation2 [shape = 'f32[1,18,18,3]{3,2,1,0:T(8,128)}', space=vmem, size = 0x36000, scoped, tag = 'scratch operand']
  #allocation3 [shape = 'f32[1,18,18,32]{3,2,1,0:T(8,128)}', space=vmem, size = 0x36000, scoped, tag = 'scratch operand']
  #allocation4 [shape = 'f32[1,10,10,32]{3,2,1,0:T(8,128)}', space=vmem, size = 0x14000, scoped, tag = 'scratch operand']
  #allocation5 [shape = 'f32[1,10,10,64]{3,2,1,0:T(8,128)}', space=vmem, size = 0x14000, scoped, tag = 'scratch operand']
  #allocation6 [shape = 'f32[1,6,6,64]{3,2,1,0:T(8,128)}', space=vmem, size = 0x6000, scoped, tag = 'scratch operand']
  #allocation7 [shape = 'f32[1,6,6,128]{3,2,1,0:T(8,128)}', space=vmem, size = 0x6000, scoped, tag = 'scratch operand']
  #allocation8 [shape = 'f32[1,1]{1,0:T(1,128)S(1)}', space=vmem, size = 0x200, scoped, tag = 'scoped memory for meningioma_forward.1']
  %s0 = inlined_call_operand.vmem [shape: f32[2,16,16,3], index: 0, kind: input, shape index: {}]
  %s1 = inlined_call_operand.vmem [shape: bf16[27,32], index: 1, kind: input, shape index: {}]
  %s2 = inlined_call_operand.vmem [shape: f32[1,32], index: 2, kind: input, shape index: {}]
  %s3 = inlined_call_operand.vmem [shape: f32[1,32], index: 3, kind: input, shape index: {}]
  %s4 = inlined_call_operand.vmem [shape: bf16[288,32], index: 4, kind: input, shape index: {}]
  %s5 = inlined_call_operand.vmem [shape: f32[1,32], index: 5, kind: input, shape index: {}]
  %s6 = inlined_call_operand.vmem [shape: f32[1,32], index: 6, kind: input, shape index: {}]
  %s7 = inlined_call_operand.vmem [shape: bf16[288,64], index: 7, kind: input, shape index: {}]
  %s8 = inlined_call_operand.vmem [shape: f32[1,64], index: 8, kind: input, shape index: {}]
  %s9 = inlined_call_operand.vmem [shape: f32[1,64], index: 9, kind: input, shape index: {}]
  %s10 = inlined_call_operand.vmem [shape: bf16[576,64], index: 10, kind: input, shape index: {}]
  %s11 = inlined_call_operand.vmem [shape: f32[1,64], index: 11, kind: input, shape index: {}]
  %s12 = inlined_call_operand.vmem [shape: f32[1,64], index: 12, kind: input, shape index: {}]
  %s13 = inlined_call_operand.vmem [shape: bf16[576,128], index: 13, kind: input, shape index: {}]
  %s14 = inlined_call_operand.vmem [shape: f32[1,128], index: 14, kind: input, shape index: {}]
  %s15 = inlined_call_operand.vmem [shape: f32[1,128], index: 15, kind: input, shape index: {}]
  %s16 = inlined_call_operand.hbm [shape: bf16[1152,128], index: 16, kind: input, shape index: {}]
  %s17 = inlined_call_operand.vmem [shape: f32[1,128], index: 17, kind: input, shape index: {}]
  %s18 = inlined_call_operand.vmem [shape: f32[1,128], index: 18, kind: input, shape index: {}]
  %s19 = inlined_call_operand.vmem [shape: bf16[512,512], index: 19, kind: input, shape index: {}]
  %s20 = inlined_call_operand.vmem [shape: f32[1,512], index: 20, kind: input, shape index: {}]
  %s21 = inlined_call_operand.vmem [shape: f32[1,512], index: 21, kind: input, shape index: {}]
  %s22 = inlined_call_operand.vmem [shape: f32[1,512], index: 22, kind: input, shape index: {}]
  %s23 = inlined_call_operand.<no memory space> [shape: f32[1,1], index: 23, kind: input, shape index: {}]
  %s24 = inlined_call_operand.vmem [shape: f32[2,1,1], index: 24, kind: output, shape index: {}]
  %s25 = sld [smem:[#allocation0]]
  $region133: #{meningioma_forward.1} parent=0
    _
  %s27 = ssub.s32 1, %s25
  %s28 = scalar_select 0, %s27, %s25
  %v29 = vstv %s23
  %30 = vst [vmem:[#allocation8] sm:$0x1] %v29
  $region1: #{meningioma_forward.1} parent=0
    #allocation9 [shape = 'u8[294912]{0}', space=vmem, size = 0x48000, scoped, tag = 'input window, operand 16, single buffered']
    #allocation10 [shape = 's32[2]{0}', space=sflag, size = 0x8, scoped, tag = 'scoped memory for meningioma_forward.1']
    %31 = vsyncpa [#allocation10], 0
    loop: start=0, step=1, limit=4
    $region2: #{meningioma_forward.1} parent=1 // loop_pre_header
      _
    $region3: #{meningioma_forward.1} parent=1 // loop_header
      %s33 = sphi 0, %s37
      %p34 = scmp.ge.s32.totalorder %s33, 4
      %s43 = sphi 0, %s45
      %s46 = sphi 0, %s43
      %s47 = sphi 0, %s46
      %s63 = sphi 0, %s47
      %s67 = sphi 0, %s67
      %s69 = sphi 0, %s67
      %s70 = sphi 0, %s69
      %s84 = sphi 0, %s70
      %s88 = sphi 0, %s88
      %s90 = sphi 0, %s88
      %s91 = sphi 0, %s90
      %s105 = sphi 0, %s91
      %s109 = sphi 0, %s109
      %s111 = sphi 0, %s109
      %s112 = sphi 0, %s111
      %s126 = sphi 0, %s112
      %s130 = sphi 0, %s130
      %s132 = sphi 0, %s130
      %s133 = sphi 0, %s132
      %s147 = sphi 0, %s133
      %s151 = sphi 0, %s151
      %s153 = sphi 0, %s151
      %s154 = sphi 0, %s153
      %s168 = sphi 0, %s154
      %s172 = sphi 0, %s172
      %s174 = sphi 0, %s172
      %s175 = sphi 0, %s174
      %s189 = sphi 0, %s175
      %s193 = sphi 0, %s193
      %s195 = sphi 0, %s193
      %s196 = sphi 0, %s195
      %s210 = sphi 0, %s196
      %s214 = sphi 0, %s214
      %s216 = sphi 0, %s214
      %s217 = sphi 0, %s216
      %s231 = sphi 0, %s217
      %s235 = sphi 0, %s235
      %s237 = sphi 0, %s235
      %s238 = sphi 0, %s237
      %s252 = sphi 0, %s238
      %s256 = sphi 0, %s256
      %s258 = sphi 0, %s256
      %s259 = sphi 0, %s258
      %s273 = sphi 0, %s259
      %s277 = sphi 0, %s277
      %s279 = sphi 0, %s277
      %s280 = sphi 0, %s279
      %s294 = sphi 0, %s280
      %s298 = sphi 0, %s298
      %s300 = sphi 0, %s298
      %s301 = sphi 0, %s300
      %s315 = sphi 0, %s301
      %s319 = sphi 0, %s319
      %s321 = sphi 0, %s319
      %s322 = sphi 0, %s321
      %s336 = sphi 0, %s322
      %s340 = sphi 0, %s340
      %s342 = sphi 0, %s340
      %s343 = sphi 0, %s342
      %s357 = sphi 0, %s343
      %s361 = sphi 0, %s361
      %s363 = sphi 0, %s361
      %s364 = sphi 0, %s363
      %s378 = sphi 0, %s364
      %s382 = sphi 0, %s382
      %s384 = sphi 0, %s382
      %s385 = sphi 0, %s384
      %s399 = sphi 0, %s385
      %s403 = sphi 0, %s403
      %s405 = sphi 0, %s403
      %s406 = sphi 0, %s405
      %s420 = sphi 0, %s406
      %s424 = sphi 0, %s424
      %s426 = sphi 0, %s424
      %s427 = sphi 0, %s426
      %s441 = sphi 0, %s427
      %s445 = sphi 0, %s445
      %s447 = sphi 0, %s445
      %s448 = sphi 0, %s447
      %s462 = sphi 0, %s448
      %s466 = sphi 0, %s466
      %s468 = sphi 0, %s466
      %s469 = sphi 0, %s468
      %s483 = sphi 0, %s469
      %s487 = sphi 0, %s487
      %s489 = sphi 0, %s487
      %s490 = sphi 0, %s489
      %s504 = sphi 0, %s490
      %s508 = sphi 0, %s508
      %s510 = sphi 0, %s508
      %s511 = sphi 0, %s510
      %s525 = sphi 0, %s511
      %s529 = sphi 0, %s529
      %s531 = sphi 0, %s529
      %s532 = sphi 0, %s531
      %s546 = sphi 0, %s532
      %s552 = sphi 0, %s554
      %s555 = sphi 0, %s552
      %s556 = sphi 0, %s555
      %s572 = sphi 0, %s556
    $region4: #{meningioma_forward.1} parent=1 // loop_header_branch
      %36 = sbr.rel (%p34) target = $region8
    $region5: #{meningioma_forward.1} parent=1 // loop_body
      %s38 = ssub.s32 %s33, 1
      %s39 = ssub.s32 %s33, 2
      %s40 = sadd.s32 %s33, 1
      %s41 = ssub.s32 %s33, %s40
      %p42 = scmp.eq.s32.totalorder %s41, 0
      %s44 = sadd.s32 %s43, 1
      %s45 = scalar_select %p42, %s43, %s44
      %p48 = pneg %p42
      %p49 = scmp.eq.s32.totalorder %s33, 1
      %p50 = por %p48, %p49
      %p51 = scmp.ne.s32.totalorder %s43, %s46
      %p52 = scmp.eq.s32.totalorder %s33, 0
      %p53 = por %p51, %p52
      %p54 = scmp.ne.s32.totalorder %s43, %s46
      %p55 = scmp.eq.s32.totalorder %s38, 1
      %p56 = por %p54, %p55
      %p57 = scmp.ne.s32.totalorder %s46, %s47
      %p58 = scmp.eq.s32.totalorder %s38, 0
      %p59 = por %p57, %p58
      %p60 = scmp.ne.s32.totalorder %s46, %s47
      %p61 = scmp.eq.s32.totalorder %s39, 1
      %p62 = por %p60, %p61
      %p64 = scmp.ne.s32.totalorder %s47, %s63
      %p65 = scmp.eq.s32.totalorder %s39, 0
      %p66 = por %p64, %p65
      %s68 = sadd.s32 %s67, 1
      %p71 = scmp.eq.s32.totalorder %s33, 1
      %p72 = scmp.ne.s32.totalorder %s67, %s69
      %p73 = scmp.eq.s32.totalorder %s33, 0
      %p74 = por %p72, %p73
      %p75 = scmp.ne.s32.totalorder %s67, %s69
      %p76 = scmp.eq.s32.totalorder %s38, 1
      %p77 = por %p75, %p76
      %p78 = scmp.ne.s32.totalorder %s69, %s70
      %p79 = scmp.eq.s32.totalorder %s38, 0
      %p80 = por %p78, %p79
      %p81 = scmp.ne.s32.totalorder %s69, %s70
      %p82 = scmp.eq.s32.totalorder %s39, 1
      %p83 = por %p81, %p82
      %p85 = scmp.ne.s32.totalorder %s70, %s84
      %p86 = scmp.eq.s32.totalorder %s39, 0
      %p87 = por %p85, %p86
      %s89 = sadd.s32 %s88, 1
      %p92 = scmp.eq.s32.totalorder %s33, 1
      %p93 = scmp.ne.s32.totalorder %s88, %s90
      %p94 = scmp.eq.s32.totalorder %s33, 0
      %p95 = por %p93, %p94
      %p96 = scmp.ne.s32.totalorder %s88, %s90
      %p97 = scmp.eq.s32.totalorder %s38, 1
      %p98 = por %p96, %p97
      %p99 = scmp.ne.s32.totalorder %s90, %s91
      %p100 = scmp.eq.s32.totalorder %s38, 0
      %p101 = por %p99, %p100
      %p102 = scmp.ne.s32.totalorder %s90, %s91
      %p103 = scmp.eq.s32.totalorder %s39, 1
      %p104 = por %p102, %p103
      %p106 = scmp.ne.s32.totalorder %s91, %s105
      %p107 = scmp.eq.s32.totalorder %s39, 0
      %p108 = por %p106, %p107
      %s110 = sadd.s32 %s109, 1
      %p113 = scmp.eq.s32.totalorder %s33, 1
      %p114 = scmp.ne.s32.totalorder %s109, %s111
      %p115 = scmp.eq.s32.totalorder %s33, 0
      %p116 = por %p114, %p115
      %p117 = scmp.ne.s32.totalorder %s109, %s111
      %p118 = scmp.eq.s32.totalorder %s38, 1
      %p119 = por %p117, %p118
      %p120 = scmp.ne.s32.totalorder %s111, %s112
      %p121 = scmp.eq.s32.totalorder %s38, 0
      %p122 = por %p120, %p121
      %p123 = scmp.ne.s32.totalorder %s111, %s112
      %p124 = scmp.eq.s32.totalorder %s39, 1
      %p125 = por %p123, %p124
      %p127 = scmp.ne.s32.totalorder %s112, %s126
      %p128 = scmp.eq.s32.totalorder %s39, 0
      %p129 = por %p127, %p128
      %s131 = sadd.s32 %s130, 1
      %p134 = scmp.eq.s32.totalorder %s33, 1
      %p135 = scmp.ne.s32.totalorder %s130, %s132
      %p136 = scmp.eq.s32.totalorder %s33, 0
      %p137 = por %p135, %p136
      %p138 = scmp.ne.s32.totalorder %s130, %s132
      %p139 = scmp.eq.s32.totalorder %s38, 1
      %p140 = por %p138, %p139
      %p141 = scmp.ne.s32.totalorder %s132, %s133
      %p142 = scmp.eq.s32.totalorder %s38, 0
      %p143 = por %p141, %p142
      %p144 = scmp.ne.s32.totalorder %s132, %s133
      %p145 = scmp.eq.s32.totalorder %s39, 1
      %p146 = por %p144, %p145
      %p148 = scmp.ne.s32.totalorder %s133, %s147
      %p149 = scmp.eq.s32.totalorder %s39, 0
      %p150 = por %p148, %p149
      %s152 = sadd.s32 %s151, 1
      %p155 = scmp.eq.s32.totalorder %s33, 1
      %p156 = scmp.ne.s32.totalorder %s151, %s153
      %p157 = scmp.eq.s32.totalorder %s33, 0
      %p158 = por %p156, %p157
      %p159 = scmp.ne.s32.totalorder %s151, %s153
      %p160 = scmp.eq.s32.totalorder %s38, 1
      %p161 = por %p159, %p160
      %p162 = scmp.ne.s32.totalorder %s153, %s154
      %p163 = scmp.eq.s32.totalorder %s38, 0
      %p164 = por %p162, %p163
      %p165 = scmp.ne.s32.totalorder %s153, %s154
      %p166 = scmp.eq.s32.totalorder %s39, 1
      %p167 = por %p165, %p166
      %p169 = scmp.ne.s32.totalorder %s154, %s168
      %p170 = scmp.eq.s32.totalorder %s39, 0
      %p171 = por %p169, %p170
      %s173 = sadd.s32 %s172, 1
      %p176 = scmp.eq.s32.totalorder %s33, 1
      %p177 = scmp.ne.s32.totalorder %s172, %s174
      %p178 = scmp.eq.s32.totalorder %s33, 0
      %p179 = por %p177, %p178
      %p180 = scmp.ne.s32.totalorder %s172, %s174
      %p181 = scmp.eq.s32.totalorder %s38, 1
      %p182 = por %p180, %p181
      %p183 = scmp.ne.s32.totalorder %s174, %s175
      %p184 = scmp.eq.s32.totalorder %s38, 0
      %p185 = por %p183, %p184
      %p186 = scmp.ne.s32.totalorder %s174, %s175
      %p187 = scmp.eq.s32.totalorder %s39, 1
      %p188 = por %p186, %p187
      %p190 = scmp.ne.s32.totalorder %s175, %s189
      %p191 = scmp.eq.s32.totalorder %s39, 0
      %p192 = por %p190, %p191
      %s194 = sadd.s32 %s193, 1
      %p197 = scmp.eq.s32.totalorder %s33, 1
      %p198 = scmp.ne.s32.totalorder %s193, %s195
      %p199 = scmp.eq.s32.totalorder %s33, 0
      %p200 = por %p198, %p199
      %p201 = scmp.ne.s32.totalorder %s193, %s195
      %p202 = scmp.eq.s32.totalorder %s38, 1
      %p203 = por %p201, %p202
      %p204 = scmp.ne.s32.totalorder %s195, %s196
      %p205 = scmp.eq.s32.totalorder %s38, 0
      %p206 = por %p204, %p205
      %p207 = scmp.ne.s32.totalorder %s195, %s196
      %p208 = scmp.eq.s32.totalorder %s39, 1
      %p209 = por %p207, %p208
      %p211 = scmp.ne.s32.totalorder %s196, %s210
      %p212 = scmp.eq.s32.totalorder %s39, 0
      %p213 = por %p211, %p212
      %s215 = sadd.s32 %s214, 1
      %p218 = scmp.eq.s32.totalorder %s33, 1
      %p219 = scmp.ne.s32.totalorder %s214, %s216
      %p220 = scmp.eq.s32.totalorder %s33, 0
      %p221 = por %p219, %p220
      %p222 = scmp.ne.s32.totalorder %s214, %s216
      %p223 = scmp.eq.s32.totalorder %s38, 1
      %p224 = por %p222, %p223
      %p225 = scmp.ne.s32.totalorder %s216, %s217
      %p226 = scmp.eq.s32.totalorder %s38, 0
      %p227 = por %p225, %p226
      %p228 = scmp.ne.s32.totalorder %s216, %s217
      %p229 = scmp.eq.s32.totalorder %s39, 1
      %p230 = por %p228, %p229
      %p232 = scmp.ne.s32.totalorder %s217, %s231
      %p233 = scmp.eq.s32.totalorder %s39, 0
      %p234 = por %p232, %p233
      %s236 = sadd.s32 %s235, 1
      %p239 = scmp.eq.s32.totalorder %s33, 1
      %p240 = scmp.ne.s32.totalorder %s235, %s237
      %p241 = scmp.eq.s32.totalorder %s33, 0
      %p242 = por %p240, %p241
      %p243 = scmp.ne.s32.totalorder %s235, %s237
      %p244 = scmp.eq.s32.totalorder %s38, 1
      %p245 = por %p243, %p244
      %p246 = scmp.ne.s32.totalorder %s237, %s238
      %p247 = scmp.eq.s32.totalorder %s38, 0
      %p248 = por %p246, %p247
      %p249 = scmp.ne.s32.totalorder %s237, %s238
      %p250 = scmp.eq.s32.totalorder %s39, 1
      %p251 = por %p249, %p250
      %p253 = scmp.ne.s32.totalorder %s238, %s252
      %p254 = scmp.eq.s32.totalorder %s39, 0
      %p255 = por %p253, %p254
      %s257 = sadd.s32 %s256, 1
      %p260 = scmp.eq.s32.totalorder %s33, 1
      %p261 = scmp.ne.s32.totalorder %s256, %s258
      %p262 = scmp.eq.s32.totalorder %s33, 0
      %p263 = por %p261, %p262
      %p264 = scmp.ne.s32.totalorder %s256, %s258
      %p265 = scmp.eq.s32.totalorder %s38, 1
      %p266 = por %p264, %p265
      %p267 = scmp.ne.s32.totalorder %s258, %s259
      %p268 = scmp.eq.s32.totalorder %s38, 0
      %p269 = por %p267, %p268
      %p270 = scmp.ne.s32.totalorder %s258, %s259
      %p271 = scmp.eq.s32.totalorder %s39, 1
      %p272 = por %p270, %p271
      %p274 = scmp.ne.s32.totalorder %s259, %s273
      %p275 = scmp.eq.s32.totalorder %s39, 0
      %p276 = por %p274, %p275
      %s278 = sadd.s32 %s277, 1
      %p281 = scmp.eq.s32.totalorder %s33, 1
      %p282 = scmp.ne.s32.totalorder %s277, %s279
      %p283 = scmp.eq.s32.totalorder %s33, 0
      %p284 = por %p282, %p283
      %p285 = scmp.ne.s32.totalorder %s277, %s279
      %p286 = scmp.eq.s32.totalorder %s38, 1
      %p287 = por %p285, %p286
      %p288 = scmp.ne.s32.totalorder %s279, %s280
      %p289 = scmp.eq.s32.totalorder %s38, 0
      %p290 = por %p288, %p289
      %p291 = scmp.ne.s32.totalorder %s279, %s280
      %p292 = scmp.eq.s32.totalorder %s39, 1
      %p293 = por %p291, %p292
      %p295 = scmp.ne.s32.totalorder %s280, %s294
      %p296 = scmp.eq.s32.totalorder %s39, 0
      %p297 = por %p295, %p296
      %s299 = sadd.s32 %s298, 1
      %p302 = scmp.eq.s32.totalorder %s33, 1
      %p303 = scmp.ne.s32.totalorder %s298, %s300
      %p304 = scmp.eq.s32.totalorder %s33, 0
      %p305 = por %p303, %p304
      %p306 = scmp.ne.s32.totalorder %s298, %s300
      %p307 = scmp.eq.s32.totalorder %s38, 1
      %p308 = por %p306, %p307
      %p309 = scmp.ne.s32.totalorder %s300, %s301
      %p310 = scmp.eq.s32.totalorder %s38, 0
      %p311 = por %p309, %p310
      %p312 = scmp.ne.s32.totalorder %s300, %s301
      %p313 = scmp.eq.s32.totalorder %s39, 1
      %p314 = por %p312, %p313
      %p316 = scmp.ne.s32.totalorder %s301, %s315
      %p317 = scmp.eq.s32.totalorder %s39, 0
      %p318 = por %p316, %p317
      %s320 = sadd.s32 %s319, 1
      %p323 = scmp.eq.s32.totalorder %s33, 1
      %p324 = scmp.ne.s32.totalorder %s319, %s321
      %p325 = scmp.eq.s32.totalorder %s33, 0
      %p326 = por %p324, %p325
      %p327 = scmp.ne.s32.totalorder %s319, %s321
      %p328 = scmp.eq.s32.totalorder %s38, 1
      %p329 = por %p327, %p328
      %p330 = scmp.ne.s32.totalorder %s321, %s322
      %p331 = scmp.eq.s32.totalorder %s38, 0
      %p332 = por %p330, %p331
      %p333 = scmp.ne.s32.totalorder %s321, %s322
      %p334 = scmp.eq.s32.totalorder %s39, 1
      %p335 = por %p333, %p334
      %p337 = scmp.ne.s32.totalorder %s322, %s336
      %p338 = scmp.eq.s32.totalorder %s39, 0
      %p339 = por %p337, %p338
      %s341 = sadd.s32 %s340, 1
      %p344 = scmp.eq.s32.totalorder %s33, 1
      %p345 = scmp.ne.s32.totalorder %s340, %s342
      %p346 = scmp.eq.s32.totalorder %s33, 0
      %p347 = por %p345, %p346
      %p348 = scmp.ne.s32.totalorder %s340, %s342
      %p349 = scmp.eq.s32.totalorder %s38, 1
      %p350 = por %p348, %p349
      %p351 = scmp.ne.s32.totalorder %s342, %s343
      %p352 = scmp.eq.s32.totalorder %s38, 0
      %p353 = por %p351, %p352
      %p354 = scmp.ne.s32.totalorder %s342, %s343
      %p355 = scmp.eq.s32.totalorder %s39, 1
      %p356 = por %p354, %p355
      %p358 = scmp.ne.s32.totalorder %s343, %s357
      %p359 = scmp.eq.s32.totalorder %s39, 0
      %p360 = por %p358, %p359
      %s362 = sadd.s32 %s361, 1
      %p365 = scmp.eq.s32.totalorder %s33, 1
      %p366 = scmp.ne.s32.totalorder %s361, %s363
      %p367 = scmp.eq.s32.totalorder %s33, 0
      %p368 = por %p366, %p367
      %p369 = scmp.ne.s32.totalorder %s361, %s363
      %p370 = scmp.eq.s32.totalorder %s38, 1
      %p371 = por %p369, %p370
      %p372 = scmp.ne.s32.totalorder %s363, %s364
      %p373 = scmp.eq.s32.totalorder %s38, 0
      %p374 = por %p372, %p373
      %p375 = scmp.ne.s32.totalorder %s363, %s364
      %p376 = scmp.eq.s32.totalorder %s39, 1
      %p377 = por %p375, %p376
      %p379 = scmp.ne.s32.totalorder %s364, %s378
      %p380 = scmp.eq.s32.totalorder %s39, 0
      %p381 = por %p379, %p380
      %s383 = sadd.s32 %s382, 1
      %p386 = scmp.eq.s32.totalorder %s33, 1
      %p387 = scmp.ne.s32.totalorder %s382, %s384
      %p388 = scmp.eq.s32.totalorder %s33, 0
      %p389 = por %p387, %p388
      %p390 = scmp.ne.s32.totalorder %s382, %s384
      %p391 = scmp.eq.s32.totalorder %s38, 1
      %p392 = por %p390, %p391
      %p393 = scmp.ne.s32.totalorder %s384, %s385
      %p394 = scmp.eq.s32.totalorder %s38, 0
      %p395 = por %p393, %p394
      %p396 = scmp.ne.s32.totalorder %s384, %s385
      %p397 = scmp.eq.s32.totalorder %s39, 1
      %p398 = por %p396, %p397
      %p400 = scmp.ne.s32.totalorder %s385, %s399
      %p401 = scmp.eq.s32.totalorder %s39, 0
      %p402 = por %p400, %p401
      %s404 = sadd.s32 %s403, 1
      %p407 = scmp.eq.s32.totalorder %s33, 1
      %p408 = scmp.ne.s32.totalorder %s403, %s405
      %p409 = scmp.eq.s32.totalorder %s33, 0
      %p410 = por %p408, %p409
      %p411 = scmp.ne.s32.totalorder %s403, %s405
      %p412 = scmp.eq.s32.totalorder %s38, 1
      %p413 = por %p411, %p412
      %p414 = scmp.ne.s32.totalorder %s405, %s406
      %p415 = scmp.eq.s32.totalorder %s38, 0
      %p416 = por %p414, %p415
      %p417 = scmp.ne.s32.totalorder %s405, %s406
      %p418 = scmp.eq.s32.totalorder %s39, 1
      %p419 = por %p417, %p418
      %p421 = scmp.ne.s32.totalorder %s406, %s420
      %p422 = scmp.eq.s32.totalorder %s39, 0
      %p423 = por %p421, %p422
      %s425 = sadd.s32 %s424, 1
      %p428 = scmp.eq.s32.totalorder %s33, 1
      %p429 = scmp.ne.s32.totalorder %s424, %s426
      %p430 = scmp.eq.s32.totalorder %s33, 0
      %p431 = por %p429, %p430
      %p432 = scmp.ne.s32.totalorder %s424, %s426
      %p433 = scmp.eq.s32.totalorder %s38, 1
      %p434 = por %p432, %p433
      %p435 = scmp.ne.s32.totalorder %s426, %s427
      %p436 = scmp.eq.s32.totalorder %s38, 0
      %p437 = por %p435, %p436
      %p438 = scmp.ne.s32.totalorder %s426, %s427
      %p439 = scmp.eq.s32.totalorder %s39, 1
      %p440 = por %p438, %p439
      %p442 = scmp.ne.s32.totalorder %s427, %s441
      %p443 = scmp.eq.s32.totalorder %s39, 0
      %p444 = por %p442, %p443
      %s446 = sadd.s32 %s445, 1
      %p449 = scmp.eq.s32.totalorder %s33, 1
      %p450 = scmp.ne.s32.totalorder %s445, %s447
      %p451 = scmp.eq.s32.totalorder %s33, 0
      %p452 = por %p450, %p451
      %p453 = scmp.ne.s32.totalorder %s445, %s447
      %p454 = scmp.eq.s32.totalorder %s38, 1
      %p455 = por %p453, %p454
      %p456 = scmp.ne.s32.totalorder %s447, %s448
      %p457 = scmp.eq.s32.totalorder %s38, 0
      %p458 = por %p456, %p457
      %p459 = scmp.ne.s32.totalorder %s447, %s448
      %p460 = scmp.eq.s32.totalorder %s39, 1
      %p461 = por %p459, %p460
      %p463 = scmp.ne.s32.totalorder %s448, %s462
      %p464 = scmp.eq.s32.totalorder %s39, 0
      %p465 = por %p463, %p464
      %s467 = sadd.s32 %s466, 1
      %p470 = scmp.eq.s32.totalorder %s33, 1
      %p471 = scmp.ne.s32.totalorder %s466, %s468
      %p472 = scmp.eq.s32.totalorder %s33, 0
      %p473 = por %p471, %p472
      %p474 = scmp.ne.s32.totalorder %s466, %s468
      %p475 = scmp.eq.s32.totalorder %s38, 1
      %p476 = por %p474, %p475
      %p477 = scmp.ne.s32.totalorder %s468, %s469
      %p478 = scmp.eq.s32.totalorder %s38, 0
      %p479 = por %p477, %p478
      %p480 = scmp.ne.s32.totalorder %s468, %s469
      %p481 = scmp.eq.s32.totalorder %s39, 1
      %p482 = por %p480, %p481
      %p484 = scmp.ne.s32.totalorder %s469, %s483
      %p485 = scmp.eq.s32.totalorder %s39, 0
      %p486 = por %p484, %p485
      %s488 = sadd.s32 %s487, 1
      %p491 = scmp.eq.s32.totalorder %s33, 1
      %p492 = scmp.ne.s32.totalorder %s487, %s489
      %p493 = scmp.eq.s32.totalorder %s33, 0
      %p494 = por %p492, %p493
      %p495 = scmp.ne.s32.totalorder %s487, %s489
      %p496 = scmp.eq.s32.totalorder %s38, 1
      %p497 = por %p495, %p496
      %p498 = scmp.ne.s32.totalorder %s489, %s490
      %p499 = scmp.eq.s32.totalorder %s38, 0
      %p500 = por %p498, %p499
      %p501 = scmp.ne.s32.totalorder %s489, %s490
      %p502 = scmp.eq.s32.totalorder %s39, 1
      %p503 = por %p501, %p502
      %p505 = scmp.ne.s32.totalorder %s490, %s504
      %p506 = scmp.eq.s32.totalorder %s39, 0
      %p507 = por %p505, %p506
      %s509 = sadd.s32 %s508, 1
      %p512 = scmp.eq.s32.totalorder %s33, 1
      %p513 = scmp.ne.s32.totalorder %s508, %s510
      %p514 = scmp.eq.s32.totalorder %s33, 0
      %p515 = por %p513, %p514
      %p516 = scmp.ne.s32.totalorder %s508, %s510
      %p517 = scmp.eq.s32.totalorder %s38, 1
      %p518 = por %p516, %p517
      %p519 = scmp.ne.s32.totalorder %s510, %s511
      %p520 = scmp.eq.s32.totalorder %s38, 0
      %p521 = por %p519, %p520
      %p522 = scmp.ne.s32.totalorder %s510, %s511
      %p523 = scmp.eq.s32.totalorder %s39, 1
      %p524 = por %p522, %p523
      %p526 = scmp.ne.s32.totalorder %s511, %s525
      %p527 = scmp.eq.s32.totalorder %s39, 0
      %p528 = por %p526, %p527
      %s530 = sadd.s32 %s529, 1
      %p533 = scmp.eq.s32.totalorder %s33, 1
      %p534 = scmp.ne.s32.totalorder %s529, %s531
      %p535 = scmp.eq.s32.totalorder %s33, 0
      %p536 = por %p534, %p535
      %p537 = scmp.ne.s32.totalorder %s529, %s531
      %p538 = scmp.eq.s32.totalorder %s38, 1
      %p539 = por %p537, %p538
      %p540 = scmp.ne.s32.totalorder %s531, %s532
      %p541 = scmp.eq.s32.totalorder %s38, 0
      %p542 = por %p540, %p541
      %p543 = scmp.ne.s32.totalorder %s531, %s532
      %p544 = scmp.eq.s32.totalorder %s39, 1
      %p545 = por %p543, %p544
      %p547 = scmp.ne.s32.totalorder %s532, %s546
      %p548 = scmp.eq.s32.totalorder %s39, 0
      %p549 = por %p547, %p548
      %s550 = ssub.s32 %s33, %s40
      %p551 = scmp.eq.s32.totalorder %s550, 0
      %s553 = sadd.s32 %s552, 1
      %s554 = scalar_select %p551, %s552, %s553
      %p557 = pneg %p551
      %p558 = scmp.eq.s32.totalorder %s33, 1
      %p559 = por %p557, %p558
      %p560 = scmp.ne.s32.totalorder %s552, %s555
      %p561 = scmp.eq.s32.totalorder %s33, 0
      %p562 = por %p560, %p561
      %p563 = scmp.ne.s32.totalorder %s552, %s555
      %p564 = scmp.eq.s32.totalorder %s38, 1
      %p565 = por %p563, %p564
      %p566 = scmp.ne.s32.totalorder %s555, %s556
      %p567 = scmp.eq.s32.totalorder %s38, 0
      %p568 = por %p566, %p567
      %p569 = scmp.ne.s32.totalorder %s555, %s556
      %p570 = scmp.eq.s32.totalorder %s39, 1
      %p571 = por %p569, %p570
      %p573 = scmp.ne.s32.totalorder %s556, %s572
      %p574 = scmp.eq.s32.totalorder %s39, 0
      %p575 = por %p573, %p574
      %p576 = scmp.le.s32.totalorder 1, %s33
      %p577 = scmp.lt.s32.totalorder %s33, 3
      %p578 = pnand %p576, %p577
      %p579 = pneg %p578
      // Predicated region
      $region9: #{meningioma_forward.1} parent=5 // pred_check
        _
      $region10: #{meningioma_forward.1} parent=5 // pred_check_branch
        %581 = sbr.rel (%p578) target = $region12
      $region11: #{meningioma_forward.1} parent=5 // pred_region
        %s582 = ssub.s32 %s33, 1
        // Predicated region
        $region13: #{meningioma_forward.1} parent=11 // pred_check
          %p583 = pneg %p80
        $region14: #{meningioma_forward.1} parent=11 // pred_check_branch
          %585 = sbr.rel (%p583) target = $region16
        $region15: #{meningioma_forward.1} parent=11 // pred_region
          _
        $region16: #{meningioma_forward.1} parent=11 // pred_fallthru
          _
        // Predicated region
        $region17: #{meningioma_forward.1} parent=11 // pred_check
          %p586 = pneg %p101
        $region18: #{meningioma_forward.1} parent=11 // pred_check_branch
          %588 = sbr.rel (%p586) target = $region20
        $region19: #{meningioma_forward.1} parent=11 // pred_region
          _
        $region20: #{meningioma_forward.1} parent=11 // pred_fallthru
          _
        // Predicated region
        $region21: #{meningioma_forward.1} parent=11 // pred_check
          %p589 = pneg %p122
        $region22: #{meningioma_forward.1} parent=11 // pred_check_branch
          %591 = sbr.rel (%p589) target = $region24
        $region23: #{meningioma_forward.1} parent=11 // pred_region
          _
        $region24: #{meningioma_forward.1} parent=11 // pred_fallthru
          _
        // Predicated region
        $region25: #{meningioma_forward.1} parent=11 // pred_check
          %p592 = pneg %p143
        $region26: #{meningioma_forward.1} parent=11 // pred_check_branch
          %594 = sbr.rel (%p592) target = $region28
        $region27: #{meningioma_forward.1} parent=11 // pred_region
          _
        $region28: #{meningioma_forward.1} parent=11 // pred_fallthru
          _
        // Predicated region
        $region29: #{meningioma_forward.1} parent=11 // pred_check
          %p595 = pneg %p164
        $region30: #{meningioma_forward.1} parent=11 // pred_check_branch
          %597 = sbr.rel (%p595) target = $region32
        $region31: #{meningioma_forward.1} parent=11 // pred_region
          _
        $region32: #{meningioma_forward.1} parent=11 // pred_fallthru
          _
        // Predicated region
        $region33: #{meningioma_forward.1} parent=11 // pred_check
          %p598 = pneg %p185
        $region34: #{meningioma_forward.1} parent=11 // pred_check_branch
          %600 = sbr.rel (%p598) target = $region36
        $region35: #{meningioma_forward.1} parent=11 // pred_region
          _
        $region36: #{meningioma_forward.1} parent=11 // pred_fallthru
          _
        // Predicated region
        $region37: #{meningioma_forward.1} parent=11 // pred_check
          %p601 = pneg %p206
        $region38: #{meningioma_forward.1} parent=11 // pred_check_branch
          %603 = sbr.rel (%p601) target = $region40
        $region39: #{meningioma_forward.1} parent=11 // pred_region
          _
        $region40: #{meningioma_forward.1} parent=11 // pred_fallthru
          _
        // Predicated region
        $region41: #{meningioma_forward.1} parent=11 // pred_check
          %p604 = pneg %p227
        $region42: #{meningioma_forward.1} parent=11 // pred_check_branch
          %606 = sbr.rel (%p604) target = $region44
        $region43: #{meningioma_forward.1} parent=11 // pred_region
          _
        $region44: #{meningioma_forward.1} parent=11 // pred_fallthru
          _
        // Predicated region
        $region45: #{meningioma_forward.1} parent=11 // pred_check
          %p607 = pneg %p248
        $region46: #{meningioma_forward.1} parent=11 // pred_check_branch
          %609 = sbr.rel (%p607) target = $region48
        $region47: #{meningioma_forward.1} parent=11 // pred_region
          _
        $region48: #{meningioma_forward.1} parent=11 // pred_fallthru
          _
        // Predicated region
        $region49: #{meningioma_forward.1} parent=11 // pred_check
          %p610 = pneg %p269
        $region50: #{meningioma_forward.1} parent=11 // pred_check_branch
          %612 = sbr.rel (%p610) target = $region52
        $region51: #{meningioma_forward.1} parent=11 // pred_region
          _
        $region52: #{meningioma_forward.1} parent=11 // pred_fallthru
          _
        // Predicated region
        $region53: #{meningioma_forward.1} parent=11 // pred_check
          %p613 = pneg %p290
        $region54: #{meningioma_forward.1} parent=11 // pred_check_branch
          %615 = sbr.rel (%p613) target = $region56
        $region55: #{meningioma_forward.1} parent=11 // pred_region
          _
        $region56: #{meningioma_forward.1} parent=11 // pred_fallthru
          _
        // Predicated region
        $region57: #{meningioma_forward.1} parent=11 // pred_check
          %p616 = pneg %p311
        $region58: #{meningioma_forward.1} parent=11 // pred_check_branch
          %618 = sbr.rel (%p616) target = $region60
        $region59: #{meningioma_forward.1} parent=11 // pred_region
          _
        $region60: #{meningioma_forward.1} parent=11 // pred_fallthru
          _
        // Predicated region
        $region61: #{meningioma_forward.1} parent=11 // pred_check
          %p619 = pneg %p332
        $region62: #{meningioma_forward.1} parent=11 // pred_check_branch
          %621 = sbr.rel (%p619) target = $region64
        $region63: #{meningioma_forward.1} parent=11 // pred_region
          _
        $region64: #{meningioma_forward.1} parent=11 // pred_fallthru
          _
        // Predicated region
        $region65: #{meningioma_forward.1} parent=11 // pred_check
          %p622 = pneg %p353
        $region66: #{meningioma_forward.1} parent=11 // pred_check_branch
          %624 = sbr.rel (%p622) target = $region68
        $region67: #{meningioma_forward.1} parent=11 // pred_region
          _
        $region68: #{meningioma_forward.1} parent=11 // pred_fallthru
          _
        // Predicated region
        $region69: #{meningioma_forward.1} parent=11 // pred_check
          %p625 = pneg %p374
        $region70: #{meningioma_forward.1} parent=11 // pred_check_branch
          %627 = sbr.rel (%p625) target = $region72
        $region71: #{meningioma_forward.1} parent=11 // pred_region
          _
        $region72: #{meningioma_forward.1} parent=11 // pred_fallthru
          _
        // Predicated region
        $region73: #{meningioma_forward.1} parent=11 // pred_check
          %p628 = pneg %p395
        $region74: #{meningioma_forward.1} parent=11 // pred_check_branch
          %630 = sbr.rel (%p628) target = $region76
        $region75: #{meningioma_forward.1} parent=11 // pred_region
          %s632 = ssub.s32 9216, 9216
          %633 = vsyncadd [#allocation10], %s632
          %s634 = sshll.u32 [#allocation9], 4
          %s635 = int_to_ptr.vmem [resolvable:$true] %s634
          %640 = dma.hbm_to_vmem [thread:$0]  %s16, 9216, %s635, [#allocation10], 64, 64, 4
        $region76: #{meningioma_forward.1} parent=11 // pred_fallthru
          _
        // Predicated region
        $region77: #{meningioma_forward.1} parent=11 // pred_check
          %p641 = pneg %p416
        $region78: #{meningioma_forward.1} parent=11 // pred_check_branch
          %643 = sbr.rel (%p641) target = $region80
        $region79: #{meningioma_forward.1} parent=11 // pred_region
          _
        $region80: #{meningioma_forward.1} parent=11 // pred_fallthru
          _
        // Predicated region
        $region81: #{meningioma_forward.1} parent=11 // pred_check
          %p644 = pneg %p437
        $region82: #{meningioma_forward.1} parent=11 // pred_check_branch
          %646 = sbr.rel (%p644) target = $region84
        $region83: #{meningioma_forward.1} parent=11 // pred_region
          _
        $region84: #{meningioma_forward.1} parent=11 // pred_fallthru
          _
        // Predicated region
        $region85: #{meningioma_forward.1} parent=11 // pred_check
          %p647 = pneg %p458
        $region86: #{meningioma_forward.1} parent=11 // pred_check_branch
          %649 = sbr.rel (%p647) target = $region88
        $region87: #{meningioma_forward.1} parent=11 // pred_region
          _
        $region88: #{meningioma_forward.1} parent=11 // pred_fallthru
          _
        // Predicated region
        $region89: #{meningioma_forward.1} parent=11 // pred_check
          %p650 = pneg %p479
        $region90: #{meningioma_forward.1} parent=11 // pred_check_branch
          %652 = sbr.rel (%p650) target = $region92
        $region91: #{meningioma_forward.1} parent=11 // pred_region
          _
        $region92: #{meningioma_forward.1} parent=11 // pred_fallthru
          _
        // Predicated region
        $region93: #{meningioma_forward.1} parent=11 // pred_check
          %p653 = pneg %p500
        $region94: #{meningioma_forward.1} parent=11 // pred_check_branch
          %655 = sbr.rel (%p653) target = $region96
        $region95: #{meningioma_forward.1} parent=11 // pred_region
          _
        $region96: #{meningioma_forward.1} parent=11 // pred_fallthru
          _
        // Predicated region
        $region97: #{meningioma_forward.1} parent=11 // pred_check
          %p656 = pneg %p521
        $region98: #{meningioma_forward.1} parent=11 // pred_check_branch
          %658 = sbr.rel (%p656) target = $region100
        $region99: #{meningioma_forward.1} parent=11 // pred_region
          _
        $region100: #{meningioma_forward.1} parent=11 // pred_fallthru
          _
        // Predicated region
        $region101: #{meningioma_forward.1} parent=11 // pred_check
          %p659 = pneg %p542
        $region102: #{meningioma_forward.1} parent=11 // pred_check_branch
          %661 = sbr.rel (%p659) target = $region104
        $region103: #{meningioma_forward.1} parent=11 // pred_region
          _
        $region104: #{meningioma_forward.1} parent=11 // pred_fallthru
          _
      $region12: #{meningioma_forward.1} parent=5 // pred_fallthru
        _
      %p662 = scmp.lt.s32.totalorder %s33, 2
      // Predicated region
      $region105: #{meningioma_forward.1} parent=5 // pred_check
        %p663 = pneg %p662
      $region106: #{meningioma_forward.1} parent=5 // pred_check_branch
        %665 = sbr.rel (%p663) target = $region108
      $region107: #{meningioma_forward.1} parent=5 // pred_region
        // Predicated region
        $region109: #{meningioma_forward.1} parent=107 // pred_check
          %p666 = pneg %p53
        $region110: #{meningioma_forward.1} parent=107 // pred_check_branch
          %668 = sbr.rel (%p666) target = $region112
        $region111: #{meningioma_forward.1} parent=107 // pred_region
          %p669 = scmp.lt.s32.totalorder %s33, 1
          %s670 = scalar_select %p669, %s33, 1
          %s671 = smul.addr %s670, 32
          %s672 = smul.addr %s671, 8
          %s673 = scalar_lea.vmem %s0, %s672
        $region112: #{meningioma_forward.1} parent=107 // pred_fallthru
          _
      $region108: #{meningioma_forward.1} parent=5 // pred_fallthru
        _
      %p674 = scmp.le.s32.totalorder 1, %s33
      %p675 = scmp.lt.s32.totalorder %s33, 3
      %p676 = pnand %p674, %p675
      %p677 = pneg %p676
      // Predicated region
      $region113: #{meningioma_forward.1} parent=5 // pred_check
        _
      $region114: #{meningioma_forward.1} parent=5 // pred_check_branch
        %679 = sbr.rel (%p676) target = $region116
      $region115: #{meningioma_forward.1} parent=5 // pred_region
        %s680 = ssub.s32 %s33, 1
        // Predicated region
        $region117: #{meningioma_forward.1} parent=115 // pred_check
          %p681 = pneg %p395
        $region118: #{meningioma_forward.1} parent=115 // pred_check_branch
          %683 = sbr.rel (%p681) target = $region120
        $region119: #{meningioma_forward.1} parent=115 // pred_region
          %684 = dma.done [#allocation10], 9216
        $region120: #{meningioma_forward.1} parent=115 // pred_fallthru
          _
        %p685 = scmp.lt.s32.totalorder %s38, 1
        %s686 = scalar_select %p685, %s38, 1
        %s687 = smul.addr %s686, 32
        %s688 = smul.addr %s687, 8
        %s689 = scalar_lea.vmem %s0, %s688
        %p690 = pneg %p59
        %p691 = pneg %p56
        %p692 = pneg %p80
        %p693 = pneg %p77
        %p694 = pneg %p101
        %p695 = pneg %p98
        %p696 = pneg %p122
        %p697 = pneg %p119
        %p698 = pneg %p143
        %p699 = pneg %p140
        %p700 = pneg %p164
        %p701 = pneg %p161
        %p702 = pneg %p185
        %p703 = pneg %p182
        %p704 = pneg %p206
        %p705 = pneg %p203
        %p706 = pneg %p227
        %p707 = pneg %p224
        %p708 = pneg %p248
        %p709 = pneg %p245
        %p710 = pneg %p269
        %p711 = pneg %p266
        %p712 = pneg %p290
        %p713 = pneg %p287
        %p714 = pneg %p311
        %p715 = pneg %p308
        %p716 = pneg %p332
        %p717 = pneg %p329
        %p718 = pneg %p353
        %p719 = pneg %p350
        %p720 = pneg %p374
        %p721 = pneg %p371
        %p722 = pneg %p395
        %p723 = pneg %p392
        %p724 = pneg %p416
        %p725 = pneg %p413
        %p726 = pneg %p437
        %p727 = pneg %p434
        %p728 = pneg %p458
        %p729 = pneg %p455
        %p730 = pneg %p479
        %p731 = pneg %p476
        %p732 = pneg %p500
        %p733 = pneg %p497
        %p734 = pneg %p521
        %p735 = pneg %p518
        %p736 = pneg %p542
        %p737 = pneg %p539
        %p738 = pneg %p568
        %p739 = pneg %p565
        %p740 = scmp.lt.s32.totalorder %s38, 1
        %s741 = scalar_select %p740, %s38, 1
        %s742 = scalar_lea.vmem %s24, %s741
        %p743 = scmp.lt.s32.totalorder %s38, 1
        %s744 = scalar_select %p743, %s38, 1
        %s745 = smul.addr %s744, 32
        %s746 = smul.addr %s745, 8
        %s747 = scalar_lea.vmem %s0, %s746
        %p748 = scmp.lt.s32.totalorder %s38, 1
        %s749 = scalar_select %p748, %s38, 1
        %s750 = scalar_lea.vmem %s24, %s749
        %vm752 = vcmask 23552
        %753 = vst.msk [vmem:[#allocation2] sm:$0xff] %vm752, 0.0
        %754 = vst.msk [vmem:[#allocation2 + $0x8] sm:$0xff] %vm752, 0.0
        %vm755 = vcmask 17408
        %756 = vst.msk [vmem:[#allocation2 + $0x10] sm:$0x3] %vm755, 0.0
        %s757 = scalar_lea.vmem [#allocation2], 408
        %758 = vst.msk [vmem:[%s757] sm:$0xff] %vm752, 0.0
        %759 = vst.msk [vmem:[%s757 + $0x8] sm:$0xff] %vm752, 0.0
        %760 = vst.msk [vmem:[%s757 + $0x10] sm:$0x3] %vm755, 0.0
        %s761 = scalar_lea.vmem [#allocation2], 24
        %vm762 = vcmask 16384
        %763 = vst.msk [vmem:[%s761] sm:$0x1] %vm762, 0.0
        %764 = vst.msk [vmem:[%s761 + $0x18] sm:$0x1] %vm762, 0.0
        %765 = vst.msk [vmem:[%s761 + $0x30] sm:$0x1] %vm762, 0.0
        %766 = vst.msk [vmem:[%s761 + $0x48] sm:$0x1] %vm762, 0.0
        %767 = vst.msk [vmem:[%s761 + $0x60] sm:$0x1] %vm762, 0.0
        %768 = vst.msk [vmem:[%s761 + $0x78] sm:$0x1] %vm762, 0.0
        %769 = vst.msk [vmem:[%s761 + $0x90] sm:$0x1] %vm762, 0.0
        %770 = vst.msk [vmem:[%s761 + $0xa8] sm:$0x1] %vm762, 0.0
        %771 = vst.msk [vmem:[%s761 + $0xc0] sm:$0x1] %vm762, 0.0
        %772 = vst.msk [vmem:[%s761 + $0xd8] sm:$0x1] %vm762, 0.0
        %773 = vst.msk [vmem:[%s761 + $0xf0] sm:$0x1] %vm762, 0.0
        %774 = vst.msk [vmem:[%s761 + $0x108] sm:$0x1] %vm762, 0.0
        %775 = vst.msk [vmem:[%s761 + $0x120] sm:$0x1] %vm762, 0.0
        %776 = vst.msk [vmem:[%s761 + $0x138] sm:$0x1] %vm762, 0.0
        %777 = vst.msk [vmem:[%s761 + $0x150] sm:$0x1] %vm762, 0.0
        %778 = vst.msk [vmem:[%s761 + $0x168] sm:$0x1] %vm762, 0.0
        %779 = vst.msk [vmem:[%s761 + $0x11] sm:$0x1] %vm762, 0.0
        %780 = vst.msk [vmem:[%s761 + $0x29] sm:$0x1] %vm762, 0.0
        %781 = vst.msk [vmem:[%s761 + $0x41] sm:$0x1] %vm762, 0.0
        %782 = vst.msk [vmem:[%s761 + $0x59] sm:$0x1] %vm762, 0.0
        %783 = vst.msk [vmem:[%s761 + $0x71] sm:$0x1] %vm762, 0.0
        %784 = vst.msk [vmem:[%s761 + $0x89] sm:$0x1] %vm762, 0.0
        %785 = vst.msk [vmem:[%s761 + $0xa1] sm:$0x1] %vm762, 0.0
        %786 = vst.msk [vmem:[%s761 + $0xb9] sm:$0x1] %vm762, 0.0
        %787 = vst.msk [vmem:[%s761 + $0xd1] sm:$0x1] %vm762, 0.0
        %788 = vst.msk [vmem:[%s761 + $0xe9] sm:$0x1] %vm762, 0.0
        %789 = vst.msk [vmem:[%s761 + $0x101] sm:$0x1] %vm762, 0.0
        %790 = vst.msk [vmem:[%s761 + $0x119] sm:$0x1] %vm762, 0.0
        %791 = vst.msk [vmem:[%s761 + $0x131] sm:$0x1] %vm762, 0.0
        %792 = vst.msk [vmem:[%s761 + $0x149] sm:$0x1] %vm762, 0.0
        %793 = vst.msk [vmem:[%s761 + $0x161] sm:$0x1] %vm762, 0.0
        %794 = vst.msk [vmem:[%s761 + $0x179] sm:$0x1] %vm762, 0.0
        %v795 = vld [vmem:[%s747] sm:$0xff]
        %v796 = vld [vmem:[%s747 + $0x8] sm:$0xff]
        %v797 = vld [vmem:[%s747 + $0x10] sm:$0xff]
        %v798 = vld [vmem:[%s747 + $0x18] sm:$0xff]
        %v799 = vld [vmem:[%s747 + $0x20] sm:$0xff]
        %v800 = vld [vmem:[%s747 + $0x28] sm:$0xff]
        %v801 = vld [vmem:[%s747 + $0x30] sm:$0xff]
        %v802 = vld [vmem:[%s747 + $0x38] sm:$0xff]
        %v803 = vld [vmem:[%s747 + $0x40] sm:$0xff]
        %v804 = vld [vmem:[%s747 + $0x48] sm:$0xff]
        %v805 = vld [vmem:[%s747 + $0x50] sm:$0xff]
        %v806 = vld [vmem:[%s747 + $0x58] sm:$0xff]
        %v807 = vld [vmem:[%s747 + $0x60] sm:$0xff]
        %v808 = vld [vmem:[%s747 + $0x68] sm:$0xff]
        %v809 = vld [vmem:[%s747 + $0x70] sm:$0xff]
        %v810 = vld [vmem:[%s747 + $0x78] sm:$0xff]
        %v811 = vld [vmem:[%s747 + $0x80] sm:$0xff]
        %v812 = vld [vmem:[%s747 + $0x88] sm:$0xff]
        %v813 = vld [vmem:[%s747 + $0x90] sm:$0xff]
        %v814 = vld [vmem:[%s747 + $0x98] sm:$0xff]
        %v815 = vld [vmem:[%s747 + $0xa0] sm:$0xff]
        %v816 = vld [vmem:[%s747 + $0xa8] sm:$0xff]
        %v817 = vld [vmem:[%s747 + $0xb0] sm:$0xff]
        %v818 = vld [vmem:[%s747 + $0xb8] sm:$0xff]
        %v819 = vld [vmem:[%s747 + $0xc0] sm:$0xff]
        %v820 = vld [vmem:[%s747 + $0xc8] sm:$0xff]
        %v821 = vld [vmem:[%s747 + $0xd0] sm:$0xff]
        %v822 = vld [vmem:[%s747 + $0xd8] sm:$0xff]
        %v823 = vld [vmem:[%s747 + $0xe0] sm:$0xff]
        %v824 = vld [vmem:[%s747 + $0xe8] sm:$0xff]
        %v825 = vld [vmem:[%s747 + $0xf0] sm:$0xff]
        %v826 = vld [vmem:[%s747 + $0xf8] sm:$0xff]
        %827 = vst.msk [vmem:[%s761 + $0x1] sm:$0xff] %vm752, %v795
        %828 = vst.msk [vmem:[%s761 + $0x9] sm:$0xff] %vm752, %v796
        %829 = vst.msk [vmem:[%s761 + $0x19] sm:$0xff] %vm752, %v797
        %830 = vst.msk [vmem:[%s761 + $0x21] sm:$0xff] %vm752, %v798
        %831 = vst.msk [vmem:[%s761 + $0x31] sm:$0xff] %vm752, %v799
        %832 = vst.msk [vmem:[%s761 + $0x39] sm:$0xff] %vm752, %v800
        %833 = vst.msk [vmem:[%s761 + $0x49] sm:$0xff] %vm752, %v801
        %834 = vst.msk [vmem:[%s761 + $0x51] sm:$0xff] %vm752, %v802
        %835 = vst.msk [vmem:[%s761 + $0x61] sm:$0xff] %vm752, %v803
        %836 = vst.msk [vmem:[%s761 + $0x69] sm:$0xff] %vm752, %v804
        %837 = vst.msk [vmem:[%s761 + $0x79] sm:$0xff] %vm752, %v805
        %838 = vst.msk [vmem:[%s761 + $0x81] sm:$0xff] %vm752, %v806
        %839 = vst.msk [vmem:[%s761 + $0x91] sm:$0xff] %vm752, %v807
        %840 = vst.msk [vmem:[%s761 + $0x99] sm:$0xff] %vm752, %v808
        %841 = vst.msk [vmem:[%s761 + $0xa9] sm:$0xff] %vm752, %v809
        %842 = vst.msk [vmem:[%s761 + $0xb1] sm:$0xff] %vm752, %v810
        %843 = vst.msk [vmem:[%s761 + $0xc1] sm:$0xff] %vm752, %v811
        %844 = vst.msk [vmem:[%s761 + $0xc9] sm:$0xff] %vm752, %v812
        %845 = vst.msk [vmem:[%s761 + $0xd9] sm:$0xff] %vm752, %v813
        %846 = vst.msk [vmem:[%s761 + $0xe1] sm:$0xff] %vm752, %v814
        %847 = vst.msk [vmem:[%s761 + $0xf1] sm:$0xff] %vm752, %v815
        %848 = vst.msk [vmem:[%s761 + $0xf9] sm:$0xff] %vm752, %v816
        %849 = vst.msk [vmem:[%s761 + $0x109] sm:$0xff] %vm752, %v817
        %850 = vst.msk [vmem:[%s761 + $0x111] sm:$0xff] %vm752, %v818
        %851 = vst.msk [vmem:[%s761 + $0x121] sm:$0xff] %vm752, %v819
        %852 = vst.msk [vmem:[%s761 + $0x129] sm:$0xff] %vm752, %v820
        %853 = vst.msk [vmem:[%s761 + $0x139] sm:$0xff] %vm752, %v821
        %854 = vst.msk [vmem:[%s761 + $0x141] sm:$0xff] %vm752, %v822
        %855 = vst.msk [vmem:[%s761 + $0x151] sm:$0xff] %vm752, %v823
        %856 = vst.msk [vmem:[%s761 + $0x159] sm:$0xff] %vm752, %v824
        %857 = vst.msk [vmem:[%s761 + $0x169] sm:$0xff] %vm752, %v825
        %858 = vst.msk [vmem:[%s761 + $0x171] sm:$0xff] %vm752, %v826
        %v859 = vld [vmem:[#allocation2] sm:$0xff]
        %v860 = vld [vmem:[#allocation2 + $0x8] sm:$0xff]
        %v861 = vld [vmem:[#allocation2 + $0x18] sm:$0xff]
        %v862 = vld [vmem:[#allocation2 + $0x20] sm:$0xff]
        %v863 = vld [vmem:[#allocation2 + $0x30] sm:$0xff]
        %v864 = vld [vmem:[#allocation2 + $0x38] sm:$0xff]
        %v865 = vld [vmem:[#allocation2 + $0x48] sm:$0xff]
        %v866 = vld [vmem:[#allocation2 + $0x50] sm:$0xff]
        %v867 = vld [vmem:[#allocation2 + $0x60] sm:$0xff]
        %v868 = vld [vmem:[#allocation2 + $0x68] sm:$0xff]
        %v869 = vld [vmem:[#allocation2 + $0x78] sm:$0xff]
        %v870 = vld [vmem:[#allocation2 + $0x80] sm:$0xff]
        %v871 = vld [vmem:[#allocation2 + $0x90] sm:$0xff]
        %v872 = vld [vmem:[#allocation2 + $0x98] sm:$0xff]
        %v873 = vld [vmem:[#allocation2 + $0xa8] sm:$0xff]
        %v874 = vld [vmem:[#allocation2 + $0xb0] sm:$0xff]
        %v875 = vld [vmem:[#allocation2 + $0xc0] sm:$0xff]
        %v876 = vld [vmem:[#allocation2 + $0xc8] sm:$0xff]
        %v877 = vld [vmem:[#allocation2 + $0xd8] sm:$0xff]
        %v878 = vld [vmem:[#allocation2 + $0xe0] sm:$0xff]
        %v879 = vld [vmem:[#allocation2 + $0xf0] sm:$0xff]
        %v880 = vld [vmem:[#allocation2 + $0xf8] sm:$0xff]
        %v881 = vld [vmem:[#allocation2 + $0x108] sm:$0xff]
        %v882 = vld [vmem:[#allocation2 + $0x110] sm:$0xff]
        %v883 = vld [vmem:[#allocation2 + $0x120] sm:$0xff]
        %v884 = vld [vmem:[#allocation2 + $0x128] sm:$0xff]
        %v885 = vld [vmem:[#allocation2 + $0x138] sm:$0xff]
        %v886 = vld [vmem:[#allocation2 + $0x140] sm:$0xff]
        %v887 = vld [vmem:[#allocation2 + $0x150] sm:$0xff]
        %v888 = vld [vmem:[#allocation2 + $0x158] sm:$0xff]
        %v889 = vld [vmem:[#allocation2 + $0x168] sm:$0xff]
        %v890 = vld [vmem:[#allocation2 + $0x170] sm:$0xff]
        %v891 = vld [vmem:[#allocation2 + $0x1] sm:$0xff]
        %v892 = vld [vmem:[#allocation2 + $0x9] sm:$0xff]
        %v893 = vld [vmem:[#allocation2 + $0x19] sm:$0xff]
        %v894 = vld [vmem:[#allocation2 + $0x21] sm:$0xff]
        %v895 = vld [vmem:[#allocation2 + $0x31] sm:$0xff]
        %v896 = vld [vmem:[#allocation2 + $0x39] sm:$0xff]
        %v897 = vld [vmem:[#allocation2 + $0x49] sm:$0xff]
        %v898 = vld [vmem:[#allocation2 + $0x51] sm:$0xff]
        %v899 = vld [vmem:[#allocation2 + $0x61] sm:$0xff]
        %v900 = vld [vmem:[#allocation2 + $0x69] sm:$0xff]
        %v901 = vld [vmem:[#allocation2 + $0x79] sm:$0xff]
        %v902 = vld [vmem:[#allocation2 + $0x81] sm:$0xff]
        %v903 = vld [vmem:[#allocation2 + $0x91] sm:$0xff]
        %v904 = vld [vmem:[#allocation2 + $0x99] sm:$0xff]
        %v905 = vld [vmem:[#allocation2 + $0xa9] sm:$0xff]
        %v906 = vld [vmem:[#allocation2 + $0xb1] sm:$0xff]
        %v907 = vld [vmem:[#allocation2 + $0xc1] sm:$0xff]
        %v908 = vld [vmem:[#allocation2 + $0xc9] sm:$0xff]
        %v909 = vld [vmem:[#allocation2 + $0xd9] sm:$0xff]
        %v910 = vld [vmem:[#allocation2 + $0xe1] sm:$0xff]
        %v911 = vld [vmem:[#allocation2 + $0xf1] sm:$0xff]
        %v912 = vld [vmem:[#allocation2 + $0xf9] sm:$0xff]
        %v913 = vld [vmem:[#allocation2 + $0x109] sm:$0xff]
        %v914 = vld [vmem:[#allocation2 + $0x111] sm:$0xff]
        %v915 = vld [vmem:[#allocation2 + $0x121] sm:$0xff]
        %v916 = vld [vmem:[#allocation2 + $0x129] sm:$0xff]
        %v917 = vld [vmem:[#allocation2 + $0x139] sm:$0xff]
        %v918 = vld [vmem:[#allocation2 + $0x141] sm:$0xff]
        %v919 = vld [vmem:[#allocation2 + $0x151] sm:$0xff]
        %v920 = vld [vmem:[#allocation2 + $0x159] sm:$0xff]
        %v921 = vld [vmem:[#allocation2 + $0x169] sm:$0xff]
        %v922 = vld [vmem:[#allocation2 + $0x171] sm:$0xff]
        %v923 = vld [vmem:[#allocation2 + $0x2] sm:$0xff]
        %v924 = vld [vmem:[#allocation2 + $0xa] sm:$0xff]
        %v925 = vld [vmem:[#allocation2 + $0x1a] sm:$0xff]
        %v926 = vld [vmem:[#allocation2 + $0x22] sm:$0xff]
        %v927 = vld [vmem:[#allocation2 + $0x32] sm:$0xff]
        %v928 = vld [vmem:[#allocation2 + $0x3a] sm:$0xff]
        %v929 = vld [vmem:[#allocation2 + $0x4a] sm:$0xff]
        %v930 = vld [vmem:[#allocation2 + $0x52] sm:$0xff]
        %v931 = vld [vmem:[#allocation2 + $0x62] sm:$0xff]
        %v932 = vld [vmem:[#allocation2 + $0x6a] sm:$0xff]
        %v933 = vld [vmem:[#allocation2 + $0x7a] sm:$0xff]
        %v934 = vld [vmem:[#allocation2 + $0x82] sm:$0xff]
        %v935 = vld [vmem:[#allocation2 + $0x92] sm:$0xff]
        %v936 = vld [vmem:[#allocation2 + $0x9a] sm:$0xff]
        %v937 = vld [vmem:[#allocation2 + $0xaa] sm:$0xff]
        %v938 = vld [vmem:[#allocation2 + $0xb2] sm:$0xff]
        %v939 = vld [vmem:[#allocation2 + $0xc2] sm:$0xff]
        %v940 = vld [vmem:[#allocation2 + $0xca] sm:$0xff]
        %v941 = vld [vmem:[#allocation2 + $0xda] sm:$0xff]
        %v942 = vld [vmem:[#allocation2 + $0xe2] sm:$0xff]
        %v943 = vld [vmem:[#allocation2 + $0xf2] sm:$0xff]
        %v944 = vld [vmem:[#allocation2 + $0xfa] sm:$0xff]
        %v945 = vld [vmem:[#allocation2 + $0x10a] sm:$0xff]
        %v946 = vld [vmem:[#allocation2 + $0x112] sm:$0xff]
        %v947 = vld [vmem:[#allocation2 + $0x122] sm:$0xff]
        %v948 = vld [vmem:[#allocation2 + $0x12a] sm:$0xff]
        %v949 = vld [vmem:[#allocation2 + $0x13a] sm:$0xff]
        %v950 = vld [vmem:[#allocation2 + $0x142] sm:$0xff]
        %v951 = vld [vmem:[#allocation2 + $0x152] sm:$0xff]
        %v952 = vld [vmem:[#allocation2 + $0x15a] sm:$0xff]
        %v953 = vld [vmem:[#allocation2 + $0x16a] sm:$0xff]
        %v954 = vld [vmem:[#allocation2 + $0x172] sm:$0xff]
        %v955 = vld [vmem:[%s761] sm:$0xff]
        %v956 = vld [vmem:[%s761 + $0x8] sm:$0xff]
        %v957 = vld [vmem:[%s761 + $0x18] sm:$0xff]
        %v958 = vld [vmem:[%s761 + $0x20] sm:$0xff]
        %v959 = vld [vmem:[%s761 + $0x30] sm:$0xff]
        %v960 = vld [vmem:[%s761 + $0x38] sm:$0xff]
        %v961 = vld [vmem:[%s761 + $0x48] sm:$0xff]
        %v962 = vld [vmem:[%s761 + $0x50] sm:$0xff]
        %v963 = vld [vmem:[%s761 + $0x60] sm:$0xff]
        %v964 = vld [vmem:[%s761 + $0x68] sm:$0xff]
        %v965 = vld [vmem:[%s761 + $0x78] sm:$0xff]
        %v966 = vld [vmem:[%s761 + $0x80] sm:$0xff]
        %v967 = vld [vmem:[%s761 + $0x90] sm:$0xff]
        %v968 = vld [vmem:[%s761 + $0x98] sm:$0xff]
        %v969 = vld [vmem:[%s761 + $0xa8] sm:$0xff]
        %v970 = vld [vmem:[%s761 + $0xb0] sm:$0xff]
        %v971 = vld [vmem:[%s761 + $0xc0] sm:$0xff]
        %v972 = vld [vmem:[%s761 + $0xc8] sm:$0xff]
        %v973 = vld [vmem:[%s761 + $0xd8] sm:$0xff]
        %v974 = vld [vmem:[%s761 + $0xe0] sm:$0xff]
        %v975 = vld [vmem:[%s761 + $0xf0] sm:$0xff]
        %v976 = vld [vmem:[%s761 + $0xf8] sm:$0xff]
        %v977 = vld [vmem:[%s761 + $0x108] sm:$0xff]
        %v978 = vld [vmem:[%s761 + $0x110] sm:$0xff]
        %v979 = vld [vmem:[%s761 + $0x120] sm:$0xff]
        %v980 = vld [vmem:[%s761 + $0x128] sm:$0xff]
        %v981 = vld [vmem:[%s761 + $0x138] sm:$0xff]
        %v982 = vld [vmem:[%s761 + $0x140] sm:$0xff]
        %v983 = vld [vmem:[%s761 + $0x150] sm:$0xff]
        %v984 = vld [vmem:[%s761 + $0x158] sm:$0xff]
        %v985 = vld [vmem:[%s761 + $0x168] sm:$0xff]
        %v986 = vld [vmem:[%s761 + $0x170] sm:$0xff]
        %v987 = vld [vmem:[%s761 + $0x1] sm:$0xff]
        %v988 = vld [vmem:[%s761 + $0x9] sm:$0xff]
        %v989 = vld [vmem:[%s761 + $0x19] sm:$0xff]
        %v990 = vld [vmem:[%s761 + $0x21] sm:$0xff]
        %v991 = vld [vmem:[%s761 + $0x31] sm:$0xff]
        %v992 = vld [vmem:[%s761 + $0x39] sm:$0xff]
        %v993 = vld [vmem:[%s761 + $0x49] sm:$0xff]
        %v994 = vld [vmem:[%s761 + $0x51] sm:$0xff]
        %v995 = vld [vmem:[%s761 + $0x61] sm:$0xff]
        %v996 = vld [vmem:[%s761 + $0x69] sm:$0xff]
        %v997 = vld [vmem:[%s761 + $0x79] sm:$0xff]
        %v998 = vld [vmem:[%s761 + $0x81] sm:$0xff]
        %v999 = vld [vmem:[%s761 + $0x91] sm:$0xff]
        %v1000 = vld [vmem:[%s761 + $0x99] sm:$0xff]
        %v1001 = vld [vmem:[%s761 + $0xa9] sm:$0xff]
        %v1002 = vld [vmem:[%s761 + $0xb1] sm:$0xff]
        %v1003 = vld [vmem:[%s761 + $0xc1] sm:$0xff]
        %v1004 = vld [vmem:[%s761 + $0xc9] sm:$0xff]
        %v1005 = vld [vmem:[%s761 + $0xd9] sm:$0xff]
        %v1006 = vld [vmem:[%s761 + $0xe1] sm:$0xff]
        %v1007 = vld [vmem:[%s761 + $0xf1] sm:$0xff]
        %v1008 = vld [vmem:[%s761 + $0xf9] sm:$0xff]
        %v1009 = vld [vmem:[%s761 + $0x109] sm:$0xff]
        %v1010 = vld [vmem:[%s761 + $0x111] sm:$0xff]
        %v1011 = vld [vmem:[%s761 + $0x121] sm:$0xff]
        %v1012 = vld [vmem:[%s761 + $0x129] sm:$0xff]
        %v1013 = vld [vmem:[%s761 + $0x139] sm:$0xff]
        %v1014 = vld [vmem:[%s761 + $0x141] sm:$0xff]
        %v1015 = vld [vmem:[%s761 + $0x151] sm:$0xff]
        %v1016 = vld [vmem:[%s761 + $0x159] sm:$0xff]
        %v1017 = vld [vmem:[%s761 + $0x169] sm:$0xff]
        %v1018 = vld [vmem:[%s761 + $0x171] sm:$0xff]
        %v1019 = vld [vmem:[%s761 + $0x2] sm:$0xff]
        %v1020 = vld [vmem:[%s761 + $0xa] sm:$0xff]
        %v1021 = vld [vmem:[%s761 + $0x1a] sm:$0xff]
        %v1022 = vld [vmem:[%s761 + $0x22] sm:$0xff]
        %v1023 = vld [vmem:[%s761 + $0x32] sm:$0xff]
        %v1024 = vld [vmem:[%s761 + $0x3a] sm:$0xff]
        %v1025 = vld [vmem:[%s761 + $0x4a] sm:$0xff]
        %v1026 = vld [vmem:[%s761 + $0x52] sm:$0xff]
        %v1027 = vld [vmem:[%s761 + $0x62] sm:$0xff]
        %v1028 = vld [vmem:[%s761 + $0x6a] sm:$0xff]
        %v1029 = vld [vmem:[%s761 + $0x7a] sm:$0xff]
        %v1030 = vld [vmem:[%s761 + $0x82] sm:$0xff]
        %v1031 = vld [vmem:[%s761 + $0x92] sm:$0xff]
        %v1032 = vld [vmem:[%s761 + $0x9a] sm:$0xff]
        %v1033 = vld [vmem:[%s761 + $0xaa] sm:$0xff]
        %v1034 = vld [vmem:[%s761 + $0xb2] sm:$0xff]
        %v1035 = vld [vmem:[%s761 + $0xc2] sm:$0xff]
        %v1036 = vld [vmem:[%s761 + $0xca] sm:$0xff]
        %v1037 = vld [vmem:[%s761 + $0xda] sm:$0xff]
        %v1038 = vld [vmem:[%s761 + $0xe2] sm:$0xff]
        %v1039 = vld [vmem:[%s761 + $0xf2] sm:$0xff]
        %v1040 = vld [vmem:[%s761 + $0xfa] sm:$0xff]
        %v1041 = vld [vmem:[%s761 + $0x10a] sm:$0xff]
        %v1042 = vld [vmem:[%s761 + $0x112] sm:$0xff]
        %v1043 = vld [vmem:[%s761 + $0x122] sm:$0xff]
        %v1044 = vld [vmem:[%s761 + $0x12a] sm:$0xff]
        %v1045 = vld [vmem:[%s761 + $0x13a] sm:$0xff]
        %v1046 = vld [vmem:[%s761 + $0x142] sm:$0xff]
        %v1047 = vld [vmem:[%s761 + $0x152] sm:$0xff]
        %v1048 = vld [vmem:[%s761 + $0x15a] sm:$0xff]
        %v1049 = vld [vmem:[%s761 + $0x16a] sm:$0xff]
        %v1050 = vld [vmem:[%s761 + $0x172] sm:$0xff]
        %s1051 = scalar_lea.vmem [#allocation2], 48
        %v1052 = vld [vmem:[%s1051] sm:$0xff]
        %v1053 = vld [vmem:[%s1051 + $0x8] sm:$0xff]
        %v1054 = vld [vmem:[%s1051 + $0x18] sm:$0xff]
        %v1055 = vld [vmem:[%s1051 + $0x20] sm:$0xff]
        %v1056 = vld [vmem:[%s1051 + $0x30] sm:$0xff]
        %v1057 = vld [vmem:[%s1051 + $0x38] sm:$0xff]
        %v1058 = vld [vmem:[%s1051 + $0x48] sm:$0xff]
        %v1059 = vld [vmem:[%s1051 + $0x50] sm:$0xff]
        %v1060 = vld [vmem:[%s1051 + $0x60] sm:$0xff]
        %v1061 = vld [vmem:[%s1051 + $0x68] sm:$0xff]
        %v1062 = vld [vmem:[%s1051 + $0x78] sm:$0xff]
        %v1063 = vld [vmem:[%s1051 + $0x80] sm:$0xff]
        %v1064 = vld [vmem:[%s1051 + $0x90] sm:$0xff]
        %v1065 = vld [vmem:[%s1051 + $0x98] sm:$0xff]
        %v1066 = vld [vmem:[%s1051 + $0xa8] sm:$0xff]
        %v1067 = vld [vmem:[%s1051 + $0xb0] sm:$0xff]
        %v1068 = vld [vmem:[%s1051 + $0xc0] sm:$0xff]
        %v1069 = vld [vmem:[%s1051 + $0xc8] sm:$0xff]
        %v1070 = vld [vmem:[%s1051 + $0xd8] sm:$0xff]
        %v1071 = vld [vmem:[%s1051 + $0xe0] sm:$0xff]
        %v1072 = vld [vmem:[%s1051 + $0xf0] sm:$0xff]
        %v1073 = vld [vmem:[%s1051 + $0xf8] sm:$0xff]
        %v1074 = vld [vmem:[%s1051 + $0x108] sm:$0xff]
        %v1075 = vld [vmem:[%s1051 + $0x110] sm:$0xff]
        %v1076 = vld [vmem:[%s1051 + $0x120] sm:$0xff]
        %v1077 = vld [vmem:[%s1051 + $0x128] sm:$0xff]
        %v1078 = vld [vmem:[%s1051 + $0x138] sm:$0xff]
        %v1079 = vld [vmem:[%s1051 + $0x140] sm:$0xff]
        %v1080 = vld [vmem:[%s1051 + $0x150] sm:$0xff]
        %v1081 = vld [vmem:[%s1051 + $0x158] sm:$0xff]
        %v1082 = vld [vmem:[%s1051 + $0x168] sm:$0xff]
        %v1083 = vld [vmem:[%s1051 + $0x170] sm:$0xff]
        %v1084 = vld [vmem:[%s1051 + $0x1] sm:$0xff]
        %v1085 = vld [vmem:[%s1051 + $0x9] sm:$0xff]
        %v1086 = vld [vmem:[%s1051 + $0x19] sm:$0xff]
        %v1087 = vld [vmem:[%s1051 + $0x21] sm:$0xff]
        %v1088 = vld [vmem:[%s1051 + $0x31] sm:$0xff]
        %v1089 = vld [vmem:[%s1051 + $0x39] sm:$0xff]
        %v1090 = vld [vmem:[%s1051 + $0x49] sm:$0xff]
        %v1091 = vld [vmem:[%s1051 + $0x51] sm:$0xff]
        %v1092 = vld [vmem:[%s1051 + $0x61] sm:$0xff]
        %v1093 = vld [vmem:[%s1051 + $0x69] sm:$0xff]
        %v1094 = vld [vmem:[%s1051 + $0x79] sm:$0xff]
        %v1095 = vld [vmem:[%s1051 + $0x81] sm:$0xff]
        %v1096 = vld [vmem:[%s1051 + $0x91] sm:$0xff]
        %v1097 = vld [vmem:[%s1051 + $0x99] sm:$0xff]
        %v1098 = vld [vmem:[%s1051 + $0xa9] sm:$0xff]
        %v1099 = vld [vmem:[%s1051 + $0xb1] sm:$0xff]
        %v1100 = vld [vmem:[%s1051 + $0xc1] sm:$0xff]
        %v1101 = vld [vmem:[%s1051 + $0xc9] sm:$0xff]
        %v1102 = vld [vmem:[%s1051 + $0xd9] sm:$0xff]
        %v1103 = vld [vmem:[%s1051 + $0xe1] sm:$0xff]
        %v1104 = vld [vmem:[%s1051 + $0xf1] sm:$0xff]
        %v1105 = vld [vmem:[%s1051 + $0xf9] sm:$0xff]
        %v1106 = vld [vmem:[%s1051 + $0x109] sm:$0xff]
        %v1107 = vld [vmem:[%s1051 + $0x111] sm:$0xff]
        %v1108 = vld [vmem:[%s1051 + $0x121] sm:$0xff]
        %v1109 = vld [vmem:[%s1051 + $0x129] sm:$0xff]
        %v1110 = vld [vmem:[%s1051 + $0x139] sm:$0xff]
        %v1111 = vld [vmem:[%s1051 + $0x141] sm:$0xff]
        %v1112 = vld [vmem:[%s1051 + $0x151] sm:$0xff]
        %v1113 = vld [vmem:[%s1051 + $0x159] sm:$0xff]
        %v1114 = vld [vmem:[%s1051 + $0x169] sm:$0xff]
        %v1115 = vld [vmem:[%s1051 + $0x171] sm:$0xff]
        %v1116 = vld [vmem:[%s1051 + $0x2] sm:$0xff]
        %v1117 = vld [vmem:[%s1051 + $0xa] sm:$0xff]
        %v1118 = vld [vmem:[%s1051 + $0x1a] sm:$0xff]
        %v1119 = vld [vmem:[%s1051 + $0x22] sm:$0xff]
        %v1120 = vld [vmem:[%s1051 + $0x32] sm:$0xff]
        %v1121 = vld [vmem:[%s1051 + $0x3a] sm:$0xff]
        %v1122 = vld [vmem:[%s1051 + $0x4a] sm:$0xff]
        %v1123 = vld [vmem:[%s1051 + $0x52] sm:$0xff]
        %v1124 = vld [vmem:[%s1051 + $0x62] sm:$0xff]
        %v1125 = vld [vmem:[%s1051 + $0x6a] sm:$0xff]
        %v1126 = vld [vmem:[%s1051 + $0x7a] sm:$0xff]
        %v1127 = vld [vmem:[%s1051 + $0x82] sm:$0xff]
        %v1128 = vld [vmem:[%s1051 + $0x92] sm:$0xff]
        %v1129 = vld [vmem:[%s1051 + $0x9a] sm:$0xff]
        %v1130 = vld [vmem:[%s1051 + $0xaa] sm:$0xff]
        %v1131 = vld [vmem:[%s1051 + $0xb2] sm:$0xff]
        %v1132 = vld [vmem:[%s1051 + $0xc2] sm:$0xff]
        %v1133 = vld [vmem:[%s1051 + $0xca] sm:$0xff]
        %v1134 = vld [vmem:[%s1051 + $0xda] sm:$0xff]
        %v1135 = vld [vmem:[%s1051 + $0xe2] sm:$0xff]
        %v1136 = vld [vmem:[%s1051 + $0xf2] sm:$0xff]
        %v1137 = vld [vmem:[%s1051 + $0xfa] sm:$0xff]
        %v1138 = vld [vmem:[%s1051 + $0x10a] sm:$0xff]
        %v1139 = vld [vmem:[%s1051 + $0x112] sm:$0xff]
        %v1140 = vld [vmem:[%s1051 + $0x122] sm:$0xff]
        %v1141 = vld [vmem:[%s1051 + $0x12a] sm:$0xff]
        %v1142 = vld [vmem:[%s1051 + $0x13a] sm:$0xff]
        %v1143 = vld [vmem:[%s1051 + $0x142] sm:$0xff]
        %v1144 = vld [vmem:[%s1051 + $0x152] sm:$0xff]
        %v1145 = vld [vmem:[%s1051 + $0x15a] sm:$0xff]
        %v1146 = vld [vmem:[%s1051 + $0x16a] sm:$0xff]
        %v1147 = vld [vmem:[%s1051 + $0x172] sm:$0xff]
        %1180 = vrot.lane.b32.xlu0 %v891, 3
        %v1181 = vpop.permute.xlu0 %1180
        %1182 = vrot.lane.b32.xlu0 %v892, 3
        %v1183 = vpop.permute.xlu0 %1182
        %1184 = vrot.lane.b32.xlu0 %v893, 3
        %v1185 = vpop.permute.xlu0 %1184
        %1186 = vrot.lane.b32.xlu0 %v894, 3
        %v1187 = vpop.permute.xlu0 %1186
        %1188 = vrot.lane.b32.xlu0 %v895, 3
        %v1189 = vpop.permute.xlu0 %1188
        %1190 = vrot.lane.b32.xlu0 %v896, 3
        %v1191 = vpop.permute.xlu0 %1190
        %1192 = vrot.lane.b32.xlu0 %v897, 3
        %v1193 = vpop.permute.xlu0 %1192
        %1194 = vrot.lane.b32.xlu0 %v898, 3
        %v1195 = vpop.permute.xlu0 %1194
        %1196 = vrot.lane.b32.xlu0 %v899, 3
        %v1197 = vpop.permute.xlu0 %1196
        %1198 = vrot.lane.b32.xlu0 %v900, 3
        %v1199 = vpop.permute.xlu0 %1198
        %1200 = vrot.lane.b32.xlu0 %v901, 3
        %v1201 = vpop.permute.xlu0 %1200
        %1202 = vrot.lane.b32.xlu0 %v902, 3
        %v1203 = vpop.permute.xlu0 %1202
        %1204 = vrot.lane.b32.xlu0 %v903, 3
        %v1205 = vpop.permute.xlu0 %1204
        %1206 = vrot.lane.b32.xlu0 %v904, 3
        %v1207 = vpop.permute.xlu0 %1206
        %1208 = vrot.lane.b32.xlu0 %v905, 3
        %v1209 = vpop.permute.xlu0 %1208
        %1210 = vrot.lane.b32.xlu0 %v906, 3
        %v1211 = vpop.permute.xlu0 %1210
        %1212 = vrot.lane.b32.xlu0 %v907, 3
        %v1213 = vpop.permute.xlu0 %1212
        %1214 = vrot.lane.b32.xlu0 %v908, 3
        %v1215 = vpop.permute.xlu0 %1214
        %1216 = vrot.lane.b32.xlu0 %v909, 3
        %v1217 = vpop.permute.xlu0 %1216
        %1218 = vrot.lane.b32.xlu0 %v910, 3
        %v1219 = vpop.permute.xlu0 %1218
        %1220 = vrot.lane.b32.xlu0 %v911, 3
        %v1221 = vpop.permute.xlu0 %1220
        %1222 = vrot.lane.b32.xlu0 %v912, 3
        %v1223 = vpop.permute.xlu0 %1222
        %1224 = vrot.lane.b32.xlu0 %v913, 3
        %v1225 = vpop.permute.xlu0 %1224
        %1226 = vrot.lane.b32.xlu0 %v914, 3
        %v1227 = vpop.permute.xlu0 %1226
        %1228 = vrot.lane.b32.xlu0 %v915, 3
        %v1229 = vpop.permute.xlu0 %1228
        %1230 = vrot.lane.b32.xlu0 %v916, 3
        %v1231 = vpop.permute.xlu0 %1230
        %1232 = vrot.lane.b32.xlu0 %v917, 3
        %v1233 = vpop.permute.xlu0 %1232
        %1234 = vrot.lane.b32.xlu0 %v918, 3
        %v1235 = vpop.permute.xlu0 %1234
        %1236 = vrot.lane.b32.xlu0 %v919, 3
        %v1237 = vpop.permute.xlu0 %1236
        %1238 = vrot.lane.b32.xlu0 %v920, 3
        %v1239 = vpop.permute.xlu0 %1238
        %1240 = vrot.lane.b32.xlu0 %v921, 3
        %v1241 = vpop.permute.xlu0 %1240
        %1242 = vrot.lane.b32.xlu0 %v922, 3
        %v1243 = vpop.permute.xlu0 %1242
        %1308 = vrot.lane.b32.xlu0 %v923, 6
        %v1309 = vpop.permute.xlu0 %1308
        %1310 = vrot.lane.b32.xlu0 %v924, 6
        %v1311 = vpop.permute.xlu0 %1310
        %1312 = vrot.lane.b32.xlu0 %v925, 6
        %v1313 = vpop.permute.xlu0 %1312
        %1314 = vrot.lane.b32.xlu0 %v926, 6
        %v1315 = vpop.permute.xlu0 %1314
        %1316 = vrot.lane.b32.xlu0 %v927, 6
        %v1317 = vpop.permute.xlu0 %1316
        %1318 = vrot.lane.b32.xlu0 %v928, 6
        %v1319 = vpop.permute.xlu0 %1318
        %1320 = vrot.lane.b32.xlu0 %v929, 6
        %v1321 = vpop.permute.xlu0 %1320
        %1322 = vrot.lane.b32.xlu0 %v930, 6
        %v1323 = vpop.permute.xlu0 %1322
        %1324 = vrot.lane.b32.xlu0 %v931, 6
        %v1325 = vpop.permute.xlu0 %1324
        %1326 = vrot.lane.b32.xlu0 %v932, 6
        %v1327 = vpop.permute.xlu0 %1326
        %1328 = vrot.lane.b32.xlu0 %v933, 6
        %v1329 = vpop.permute.xlu0 %1328
        %1330 = vrot.lane.b32.xlu0 %v934, 6
        %v1331 = vpop.permute.xlu0 %1330
        %1332 = vrot.lane.b32.xlu0 %v935, 6
        %v1333 = vpop.permute.xlu0 %1332
        %1334 = vrot.lane.b32.xlu0 %v936, 6
        %v1335 = vpop.permute.xlu0 %1334
        %1336 = vrot.lane.b32.xlu0 %v937, 6
        %v1337 = vpop.permute.xlu0 %1336
        %1338 = vrot.lane.b32.xlu0 %v938, 6
        %v1339 = vpop.permute.xlu0 %1338
        %1340 = vrot.lane.b32.xlu0 %v939, 6
        %v1341 = vpop.permute.xlu0 %1340
        %1342 = vrot.lane.b32.xlu0 %v940, 6
        %v1343 = vpop.permute.xlu0 %1342
        %1344 = vrot.lane.b32.xlu0 %v941, 6
        %v1345 = vpop.permute.xlu0 %1344
        %1346 = vrot.lane.b32.xlu0 %v942, 6
        %v1347 = vpop.permute.xlu0 %1346
        %1348 = vrot.lane.b32.xlu0 %v943, 6
        %v1349 = vpop.permute.xlu0 %1348
        %1350 = vrot.lane.b32.xlu0 %v944, 6
        %v1351 = vpop.permute.xlu0 %1350
        %1352 = vrot.lane.b32.xlu0 %v945, 6
        %v1353 = vpop.permute.xlu0 %1352
        %1354 = vrot.lane.b32.xlu0 %v946, 6
        %v1355 = vpop.permute.xlu0 %1354
        %1356 = vrot.lane.b32.xlu0 %v947, 6
        %v1357 = vpop.permute.xlu0 %1356
        %1358 = vrot.lane.b32.xlu0 %v948, 6
        %v1359 = vpop.permute.xlu0 %1358
        %1360 = vrot.lane.b32.xlu0 %v949, 6
        %v1361 = vpop.permute.xlu0 %1360
        %1362 = vrot.lane.b32.xlu0 %v950, 6
        %v1363 = vpop.permute.xlu0 %1362
        %1364 = vrot.lane.b32.xlu0 %v951, 6
        %v1365 = vpop.permute.xlu0 %1364
        %1366 = vrot.lane.b32.xlu0 %v952, 6
        %v1367 = vpop.permute.xlu0 %1366
        %1368 = vrot.lane.b32.xlu0 %v953, 6
        %v1369 = vpop.permute.xlu0 %1368
        %1370 = vrot.lane.b32.xlu0 %v954, 6
        %v1371 = vpop.permute.xlu0 %1370
        %1436 = vrot.lane.b32.xlu0 %v955, 9
        %v1437 = vpop.permute.xlu0 %1436
        %1438 = vrot.lane.b32.xlu0 %v956, 9
        %v1439 = vpop.permute.xlu0 %1438
        %1440 = vrot.lane.b32.xlu0 %v957, 9
        %v1441 = vpop.permute.xlu0 %1440
        %1442 = vrot.lane.b32.xlu0 %v958, 9
        %v1443 = vpop.permute.xlu0 %1442
        %1444 = vrot.lane.b32.xlu0 %v959, 9
        %v1445 = vpop.permute.xlu0 %1444
        %1446 = vrot.lane.b32.xlu0 %v960, 9
        %v1447 = vpop.permute.xlu0 %1446
        %1448 = vrot.lane.b32.xlu0 %v961, 9
        %v1449 = vpop.permute.xlu0 %1448
        %1450 = vrot.lane.b32.xlu0 %v962, 9
        %v1451 = vpop.permute.xlu0 %1450
        %1452 = vrot.lane.b32.xlu0 %v963, 9
        %v1453 = vpop.permute.xlu0 %1452
        %1454 = vrot.lane.b32.xlu0 %v964, 9
        %v1455 = vpop.permute.xlu0 %1454
        %1456 = vrot.lane.b32.xlu0 %v965, 9
        %v1457 = vpop.permute.xlu0 %1456
        %1458 = vrot.lane.b32.xlu0 %v966, 9
        %v1459 = vpop.permute.xlu0 %1458
        %1460 = vrot.lane.b32.xlu0 %v967, 9
        %v1461 = vpop.permute.xlu0 %1460
        %1462 = vrot.lane.b32.xlu0 %v968, 9
        %v1463 = vpop.permute.xlu0 %1462
        %1464 = vrot.lane.b32.xlu0 %v969, 9
        %v1465 = vpop.permute.xlu0 %1464
        %1466 = vrot.lane.b32.xlu0 %v970, 9
        %v1467 = vpop.permute.xlu0 %1466
        %1468 = vrot.lane.b32.xlu0 %v971, 9
        %v1469 = vpop.permute.xlu0 %1468
        %1470 = vrot.lane.b32.xlu0 %v972, 9
        %v1471 = vpop.permute.xlu0 %1470
        %1472 = vrot.lane.b32.xlu0 %v973, 9
        %v1473 = vpop.permute.xlu0 %1472
        %1474 = vrot.lane.b32.xlu0 %v974, 9
        %v1475 = vpop.permute.xlu0 %1474
        %1476 = vrot.lane.b32.xlu0 %v975, 9
        %v1477 = vpop.permute.xlu0 %1476
        %1478 = vrot.lane.b32.xlu0 %v976, 9
        %v1479 = vpop.permute.xlu0 %1478
        %1480 = vrot.lane.b32.xlu0 %v977, 9
        %v1481 = vpop.permute.xlu0 %1480
        %1482 = vrot.lane.b32.xlu0 %v978, 9
        %v1483 = vpop.permute.xlu0 %1482
        %1484 = vrot.lane.b32.xlu0 %v979, 9
        %v1485 = vpop.permute.xlu0 %1484
        %1486 = vrot.lane.b32.xlu0 %v980, 9
        %v1487 = vpop.permute.xlu0 %1486
        %1488 = vrot.lane.b32.xlu0 %v981, 9
        %v1489 = vpop.permute.xlu0 %1488
        %1490 = vrot.lane.b32.xlu0 %v982, 9
        %v1491 = vpop.permute.xlu0 %1490
        %1492 = vrot.lane.b32.xlu0 %v983, 9
        %v1493 = vpop.permute.xlu0 %1492
        %1494 = vrot.lane.b32.xlu0 %v984, 9
        %v1495 = vpop.permute.xlu0 %1494
        %1496 = vrot.lane.b32.xlu0 %v985, 9
        %v1497 = vpop.permute.xlu0 %1496
        %1498 = vrot.lane.b32.xlu0 %v986, 9
        %v1499 = vpop.permute.xlu0 %1498
        %1564 = vrot.lane.b32.xlu0 %v987, 12
        %v1565 = vpop.permute.xlu0 %1564
        %1566 = vrot.lane.b32.xlu0 %v988, 12
        %v1567 = vpop.permute.xlu0 %1566
        %1568 = vrot.lane.b32.xlu0 %v989, 12
        %v1569 = vpop.permute.xlu0 %1568
        %1570 = vrot.lane.b32.xlu0 %v990, 12
        %v1571 = vpop.permute.xlu0 %1570
        %1572 = vrot.lane.b32.xlu0 %v991, 12
        %v1573 = vpop.permute.xlu0 %1572
        %1574 = vrot.lane.b32.xlu0 %v992, 12
        %v1575 = vpop.permute.xlu0 %1574
        %1576 = vrot.lane.b32.xlu0 %v993, 12
        %v1577 = vpop.permute.xlu0 %1576
        %1578 = vrot.lane.b32.xlu0 %v994, 12
        %v1579 = vpop.permute.xlu0 %1578
        %1580 = vrot.lane.b32.xlu0 %v995, 12
        %v1581 = vpop.permute.xlu0 %1580
        %1582 = vrot.lane.b32.xlu0 %v996, 12
        %v1583 = vpop.permute.xlu0 %1582
        %1584 = vrot.lane.b32.xlu0 %v997, 12
        %v1585 = vpop.permute.xlu0 %1584
        %1586 = vrot.lane.b32.xlu0 %v998, 12
        %v1587 = vpop.permute.xlu0 %1586
        %1588 = vrot.lane.b32.xlu0 %v999, 12
        %v1589 = vpop.permute.xlu0 %1588
        %1590 = vrot.lane.b32.xlu0 %v1000, 12
        %v1591 = vpop.permute.xlu0 %1590
        %1592 = vrot.lane.b32.xlu0 %v1001, 12
        %v1593 = vpop.permute.xlu0 %1592
        %1594 = vrot.lane.b32.xlu0 %v1002, 12
        %v1595 = vpop.permute.xlu0 %1594
        %1596 = vrot.lane.b32.xlu0 %v1003, 12
        %v1597 = vpop.permute.xlu0 %1596
        %1598 = vrot.lane.b32.xlu0 %v1004, 12
        %v1599 = vpop.permute.xlu0 %1598
        %1600 = vrot.lane.b32.xlu0 %v1005, 12
        %v1601 = vpop.permute.xlu0 %1600
        %1602 = vrot.lane.b32.xlu0 %v1006, 12
        %v1603 = vpop.permute.xlu0 %1602
        %1604 = vrot.lane.b32.xlu0 %v1007, 12
        %v1605 = vpop.permute.xlu0 %1604
        %1606 = vrot.lane.b32.xlu0 %v1008, 12
        %v1607 = vpop.permute.xlu0 %1606
        %1608 = vrot.lane.b32.xlu0 %v1009, 12
        %v1609 = vpop.permute.xlu0 %1608
        %1610 = vrot.lane.b32.xlu0 %v1010, 12
        %v1611 = vpop.permute.xlu0 %1610
        %1612 = vrot.lane.b32.xlu0 %v1011, 12
        %v1613 = vpop.permute.xlu0 %1612
        %1614 = vrot.lane.b32.xlu0 %v1012, 12
        %v1615 = vpop.permute.xlu0 %1614
        %1616 = vrot.lane.b32.xlu0 %v1013, 12
        %v1617 = vpop.permute.xlu0 %1616
        %1618 = vrot.lane.b32.xlu0 %v1014, 12
        %v1619 = vpop.permute.xlu0 %1618
        %1620 = vrot.lane.b32.xlu0 %v1015, 12
        %v1621 = vpop.permute.xlu0 %1620
        %1622 = vrot.lane.b32.xlu0 %v1016, 12
        %v1623 = vpop.permute.xlu0 %1622
        %1624 = vrot.lane.b32.xlu0 %v1017, 12
        %v1625 = vpop.permute.xlu0 %1624
        %1626 = vrot.lane.b32.xlu0 %v1018, 12
        %v1627 = vpop.permute.xlu0 %1626
        %1692 = vrot.lane.b32.xlu0 %v1019, 15
        %v1693 = vpop.permute.xlu0 %1692
        %1694 = vrot.lane.b32.xlu0 %v1020, 15
        %v1695 = vpop.permute.xlu0 %1694
        %1696 = vrot.lane.b32.xlu0 %v1021, 15
        %v1697 = vpop.permute.xlu0 %1696
        %1698 = vrot.lane.b32.xlu0 %v1022, 15
        %v1699 = vpop.permute.xlu0 %1698
        %1700 = vrot.lane.b32.xlu0 %v1023, 15
        %v1701 = vpop.permute.xlu0 %1700
        %1702 = vrot.lane.b32.xlu0 %v1024, 15
        %v1703 = vpop.permute.xlu0 %1702
        %1704 = vrot.lane.b32.xlu0 %v1025, 15
        %v1705 = vpop.permute.xlu0 %1704
        %1706 = vrot.lane.b32.xlu0 %v1026, 15
        %v1707 = vpop.permute.xlu0 %1706
        %1708 = vrot.lane.b32.xlu0 %v1027, 15
        %v1709 = vpop.permute.xlu0 %1708
        %1710 = vrot.lane.b32.xlu0 %v1028, 15
        %v1711 = vpop.permute.xlu0 %1710
        %1712 = vrot.lane.b32.xlu0 %v1029, 15
        %v1713 = vpop.permute.xlu0 %1712
        %1714 = vrot.lane.b32.xlu0 %v1030, 15
        %v1715 = vpop.permute.xlu0 %1714
        %1716 = vrot.lane.b32.xlu0 %v1031, 15
        %v1717 = vpop.permute.xlu0 %1716
        %1718 = vrot.lane.b32.xlu0 %v1032, 15
        %v1719 = vpop.permute.xlu0 %1718
        %1720 = vrot.lane.b32.xlu0 %v1033, 15
        %v1721 = vpop.permute.xlu0 %1720
        %1722 = vrot.lane.b32.xlu0 %v1034, 15
        %v1723 = vpop.permute.xlu0 %1722
        %1724 = vrot.lane.b32.xlu0 %v1035, 15
        %v1725 = vpop.permute.xlu0 %1724
        %1726 = vrot.lane.b32.xlu0 %v1036, 15
        %v1727 = vpop.permute.xlu0 %1726
        %1728 = vrot.lane.b32.xlu0 %v1037, 15
        %v1729 = vpop.permute.xlu0 %1728
        %1730 = vrot.lane.b32.xlu0 %v1038, 15
        %v1731 = vpop.permute.xlu0 %1730
        %1732 = vrot.lane.b32.xlu0 %v1039, 15
        %v1733 = vpop.permute.xlu0 %1732
        %1734 = vrot.lane.b32.xlu0 %v1040, 15
        %v1735 = vpop.permute.xlu0 %1734
        %1736 = vrot.lane.b32.xlu0 %v1041, 15
        %v1737 = vpop.permute.xlu0 %1736
        %1738 = vrot.lane.b32.xlu0 %v1042, 15
        %v1739 = vpop.permute.xlu0 %1738
        %1740 = vrot.lane.b32.xlu0 %v1043, 15
        %v1741 = vpop.permute.xlu0 %1740
        %1742 = vrot.lane.b32.xlu0 %v1044, 15
        %v1743 = vpop.permute.xlu0 %1742
        %1744 = vrot.lane.b32.xlu0 %v1045, 15
        %v1745 = vpop.permute.xlu0 %1744
        %1746 = vrot.lane.b32.xlu0 %v1046, 15
        %v1747 = vpop.permute.xlu0 %1746
        %1748 = vrot.lane.b32.xlu0 %v1047, 15
        %v1749 = vpop.permute.xlu0 %1748
        %1750 = vrot.lane.b32.xlu0 %v1048, 15
        %v1751 = vpop.permute.xlu0 %1750
        %1752 = vrot.lane.b32.xlu0 %v1049, 15
        %v1753 = vpop.permute.xlu0 %1752
        %1754 = vrot.lane.b32.xlu0 %v1050, 15
        %v1755 = vpop.permute.xlu0 %1754
        %1820 = vrot.lane.b32.xlu0 %v1052, 18
        %v1821 = vpop.permute.xlu0 %1820
        %1822 = vrot.lane.b32.xlu0 %v1053, 18
        %v1823 = vpop.permute.xlu0 %1822
        %1824 = vrot.lane.b32.xlu0 %v1054, 18
        %v1825 = vpop.permute.xlu0 %1824
        %1826 = vrot.lane.b32.xlu0 %v1055, 18
        %v1827 = vpop.permute.xlu0 %1826
        %1828 = vrot.lane.b32.xlu0 %v1056, 18
        %v1829 = vpop.permute.xlu0 %1828
        %1830 = vrot.lane.b32.xlu0 %v1057, 18
        %v1831 = vpop.permute.xlu0 %1830
        %1832 = vrot.lane.b32.xlu0 %v1058, 18
        %v1833 = vpop.permute.xlu0 %1832
        %1834 = vrot.lane.b32.xlu0 %v1059, 18
        %v1835 = vpop.permute.xlu0 %1834
        %1836 = vrot.lane.b32.xlu0 %v1060, 18
        %v1837 = vpop.permute.xlu0 %1836
        %1838 = vrot.lane.b32.xlu0 %v1061, 18
        %v1839 = vpop.permute.xlu0 %1838
        %1840 = vrot.lane.b32.xlu0 %v1062, 18
        %v1841 = vpop.permute.xlu0 %1840
        %1842 = vrot.lane.b32.xlu0 %v1063, 18
        %v1843 = vpop.permute.xlu0 %1842
        %1844 = vrot.lane.b32.xlu0 %v1064, 18
        %v1845 = vpop.permute.xlu0 %1844
        %1846 = vrot.lane.b32.xlu0 %v1065, 18
        %v1847 = vpop.permute.xlu0 %1846
        %1848 = vrot.lane.b32.xlu0 %v1066, 18
        %v1849 = vpop.permute.xlu0 %1848
        %1850 = vrot.lane.b32.xlu0 %v1067, 18
        %v1851 = vpop.permute.xlu0 %1850
        %1852 = vrot.lane.b32.xlu0 %v1068, 18
        %v1853 = vpop.permute.xlu0 %1852
        %1854 = vrot.lane.b32.xlu0 %v1069, 18
        %v1855 = vpop.permute.xlu0 %1854
        %1856 = vrot.lane.b32.xlu0 %v1070, 18
        %v1857 = vpop.permute.xlu0 %1856
        %1858 = vrot.lane.b32.xlu0 %v1071, 18
        %v1859 = vpop.permute.xlu0 %1858
        %1860 = vrot.lane.b32.xlu0 %v1072, 18
        %v1861 = vpop.permute.xlu0 %1860
        %1862 = vrot.lane.b32.xlu0 %v1073, 18
        %v1863 = vpop.permute.xlu0 %1862
        %1864 = vrot.lane.b32.xlu0 %v1074, 18
        %v1865 = vpop.permute.xlu0 %1864
        %1866 = vrot.lane.b32.xlu0 %v1075, 18
        %v1867 = vpop.permute.xlu0 %1866
        %1868 = vrot.lane.b32.xlu0 %v1076, 18
        %v1869 = vpop.permute.xlu0 %1868
        %1870 = vrot.lane.b32.xlu0 %v1077, 18
        %v1871 = vpop.permute.xlu0 %1870
        %1872 = vrot.lane.b32.xlu0 %v1078, 18
        %v1873 = vpop.permute.xlu0 %1872
        %1874 = vrot.lane.b32.xlu0 %v1079, 18
        %v1875 = vpop.permute.xlu0 %1874
        %1876 = vrot.lane.b32.xlu0 %v1080, 18
        %v1877 = vpop.permute.xlu0 %1876
        %1878 = vrot.lane.b32.xlu0 %v1081, 18
        %v1879 = vpop.permute.xlu0 %1878
        %1880 = vrot.lane.b32.xlu0 %v1082, 18
        %v1881 = vpop.permute.xlu0 %1880
        %1882 = vrot.lane.b32.xlu0 %v1083, 18
        %v1883 = vpop.permute.xlu0 %1882
        %1948 = vrot.lane.b32.xlu0 %v1084, 21
        %v1949 = vpop.permute.xlu0 %1948
        %1950 = vrot.lane.b32.xlu0 %v1085, 21
        %v1951 = vpop.permute.xlu0 %1950
        %1952 = vrot.lane.b32.xlu0 %v1086, 21
        %v1953 = vpop.permute.xlu0 %1952
        %1954 = vrot.lane.b32.xlu0 %v1087, 21
        %v1955 = vpop.permute.xlu0 %1954
        %1956 = vrot.lane.b32.xlu0 %v1088, 21
        %v1957 = vpop.permute.xlu0 %1956
        %1958 = vrot.lane.b32.xlu0 %v1089, 21
        %v1959 = vpop.permute.xlu0 %1958
        %1960 = vrot.lane.b32.xlu0 %v1090, 21
        %v1961 = vpop.permute.xlu0 %1960
        %1962 = vrot.lane.b32.xlu0 %v1091, 21
        %v1963 = vpop.permute.xlu0 %1962
        %1964 = vrot.lane.b32.xlu0 %v1092, 21
        %v1965 = vpop.permute.xlu0 %1964
        %1966 = vrot.lane.b32.xlu0 %v1093, 21
        %v1967 = vpop.permute.xlu0 %1966
        %1968 = vrot.lane.b32.xlu0 %v1094, 21
        %v1969 = vpop.permute.xlu0 %1968
        %1970 = vrot.lane.b32.xlu0 %v1095, 21
        %v1971 = vpop.permute.xlu0 %1970
        %1972 = vrot.lane.b32.xlu0 %v1096, 21
        %v1973 = vpop.permute.xlu0 %1972
        %1974 = vrot.lane.b32.xlu0 %v1097, 21
        %v1975 = vpop.permute.xlu0 %1974
        %1976 = vrot.lane.b32.xlu0 %v1098, 21
        %v1977 = vpop.permute.xlu0 %1976
        %1978 = vrot.lane.b32.xlu0 %v1099, 21
        %v1979 = vpop.permute.xlu0 %1978
        %1980 = vrot.lane.b32.xlu0 %v1100, 21
        %v1981 = vpop.permute.xlu0 %1980
        %1982 = vrot.lane.b32.xlu0 %v1101, 21
        %v1983 = vpop.permute.xlu0 %1982
        %1984 = vrot.lane.b32.xlu0 %v1102, 21
        %v1985 = vpop.permute.xlu0 %1984
        %1986 = vrot.lane.b32.xlu0 %v1103, 21
        %v1987 = vpop.permute.xlu0 %1986
        %1988 = vrot.lane.b32.xlu0 %v1104, 21
        %v1989 = vpop.permute.xlu0 %1988
        %1990 = vrot.lane.b32.xlu0 %v1105, 21
        %v1991 = vpop.permute.xlu0 %1990
        %1992 = vrot.lane.b32.xlu0 %v1106, 21
        %v1993 = vpop.permute.xlu0 %1992
        %1994 = vrot.lane.b32.xlu0 %v1107, 21
        %v1995 = vpop.permute.xlu0 %1994
        %1996 = vrot.lane.b32.xlu0 %v1108, 21
        %v1997 = vpop.permute.xlu0 %1996
        %1998 = vrot.lane.b32.xlu0 %v1109, 21
        %v1999 = vpop.permute.xlu0 %1998
        %2000 = vrot.lane.b32.xlu0 %v1110, 21
        %v2001 = vpop.permute.xlu0 %2000
        %2002 = vrot.lane.b32.xlu0 %v1111, 21
        %v2003 = vpop.permute.xlu0 %2002
        %2004 = vrot.lane.b32.xlu0 %v1112, 21
        %v2005 = vpop.permute.xlu0 %2004
        %2006 = vrot.lane.b32.xlu0 %v1113, 21
        %v2007 = vpop.permute.xlu0 %2006
        %2008 = vrot.lane.b32.xlu0 %v1114, 21
        %v2009 = vpop.permute.xlu0 %2008
        %2010 = vrot.lane.b32.xlu0 %v1115, 21
        %v2011 = vpop.permute.xlu0 %2010
        %2076 = vrot.lane.b32.xlu0 %v1116, 24
        %v2077 = vpop.permute.xlu0 %2076
        %2078 = vrot.lane.b32.xlu0 %v1117, 24
        %v2079 = vpop.permute.xlu0 %2078
        %2080 = vrot.lane.b32.xlu0 %v1118, 24
        %v2081 = vpop.permute.xlu0 %2080
        %2082 = vrot.lane.b32.xlu0 %v1119, 24
        %v2083 = vpop.permute.xlu0 %2082
        %2084 = vrot.lane.b32.xlu0 %v1120, 24
        %v2085 = vpop.permute.xlu0 %2084
        %2086 = vrot.lane.b32.xlu0 %v1121, 24
        %v2087 = vpop.permute.xlu0 %2086
        %2088 = vrot.lane.b32.xlu0 %v1122, 24
        %v2089 = vpop.permute.xlu0 %2088
        %2090 = vrot.lane.b32.xlu0 %v1123, 24
        %v2091 = vpop.permute.xlu0 %2090
        %2092 = vrot.lane.b32.xlu0 %v1124, 24
        %v2093 = vpop.permute.xlu0 %2092
        %2094 = vrot.lane.b32.xlu0 %v1125, 24
        %v2095 = vpop.permute.xlu0 %2094
        %2096 = vrot.lane.b32.xlu0 %v1126, 24
        %v2097 = vpop.permute.xlu0 %2096
        %2098 = vrot.lane.b32.xlu0 %v1127, 24
        %v2099 = vpop.permute.xlu0 %2098
        %2100 = vrot.lane.b32.xlu0 %v1128, 24
        %v2101 = vpop.permute.xlu0 %2100
        %2102 = vrot.lane.b32.xlu0 %v1129, 24
        %v2103 = vpop.permute.xlu0 %2102
        %2104 = vrot.lane.b32.xlu0 %v1130, 24
        %v2105 = vpop.permute.xlu0 %2104
        %2106 = vrot.lane.b32.xlu0 %v1131, 24
        %v2107 = vpop.permute.xlu0 %2106
        %2108 = vrot.lane.b32.xlu0 %v1132, 24
        %v2109 = vpop.permute.xlu0 %2108
        %2110 = vrot.lane.b32.xlu0 %v1133, 24
        %v2111 = vpop.permute.xlu0 %2110
        %2112 = vrot.lane.b32.xlu0 %v1134, 24
        %v2113 = vpop.permute.xlu0 %2112
        %2114 = vrot.lane.b32.xlu0 %v1135, 24
        %v2115 = vpop.permute.xlu0 %2114
        %2116 = vrot.lane.b32.xlu0 %v1136, 24
        %v2117 = vpop.permute.xlu0 %2116
        %2118 = vrot.lane.b32.xlu0 %v1137, 24
        %v2119 = vpop.permute.xlu0 %2118
        %2120 = vrot.lane.b32.xlu0 %v1138, 24
        %v2121 = vpop.permute.xlu0 %2120
        %2122 = vrot.lane.b32.xlu0 %v1139, 24
        %v2123 = vpop.permute.xlu0 %2122
        %2124 = vrot.lane.b32.xlu0 %v1140, 24
        %v2125 = vpop.permute.xlu0 %2124
        %2126 = vrot.lane.b32.xlu0 %v1141, 24
        %v2127 = vpop.permute.xlu0 %2126
        %2128 = vrot.lane.b32.xlu0 %v1142, 24
        %v2129 = vpop.permute.xlu0 %2128
        %2130 = vrot.lane.b32.xlu0 %v1143, 24
        %v2131 = vpop.permute.xlu0 %2130
        %2132 = vrot.lane.b32.xlu0 %v1144, 24
        %v2133 = vpop.permute.xlu0 %2132
        %2134 = vrot.lane.b32.xlu0 %v1145, 24
        %v2135 = vpop.permute.xlu0 %2134
        %2136 = vrot.lane.b32.xlu0 %v1146, 24
        %v2137 = vpop.permute.xlu0 %2136
        %2138 = vrot.lane.b32.xlu0 %v1147, 24
        %v2139 = vpop.permute.xlu0 %2138
        %v2172 = vsel %vm752, %v859, %v1181
        %v2173 = vsel %vm752, %v860, %v1183
        %v2174 = vsel %vm752, %v861, %v1185
        %v2175 = vsel %vm752, %v862, %v1187
        %v2176 = vsel %vm752, %v863, %v1189
        %v2177 = vsel %vm752, %v864, %v1191
        %v2178 = vsel %vm752, %v865, %v1193
        %v2179 = vsel %vm752, %v866, %v1195
        %v2180 = vsel %vm752, %v867, %v1197
        %v2181 = vsel %vm752, %v868, %v1199
        %v2182 = vsel %vm752, %v869, %v1201
        %v2183 = vsel %vm752, %v870, %v1203
        %v2184 = vsel %vm752, %v871, %v1205
        %v2185 = vsel %vm752, %v872, %v1207
        %v2186 = vsel %vm752, %v873, %v1209
        %v2187 = vsel %vm752, %v874, %v1211
        %v2188 = vsel %vm752, %v875, %v1213
        %v2189 = vsel %vm752, %v876, %v1215
        %v2190 = vsel %vm752, %v877, %v1217
        %v2191 = vsel %vm752, %v878, %v1219
        %v2192 = vsel %vm752, %v879, %v1221
        %v2193 = vsel %vm752, %v880, %v1223
        %v2194 = vsel %vm752, %v881, %v1225
        %v2195 = vsel %vm752, %v882, %v1227
        %v2196 = vsel %vm752, %v883, %v1229
        %v2197 = vsel %vm752, %v884, %v1231
        %v2198 = vsel %vm752, %v885, %v1233
        %v2199 = vsel %vm752, %v886, %v1235
        %v2200 = vsel %vm752, %v887, %v1237
        %v2201 = vsel %vm752, %v888, %v1239
        %v2202 = vsel %vm752, %v889, %v1241
        %v2203 = vsel %vm752, %v890, %v1243
        %vm2204 = vcmask 48128
        %v2205 = vsel %vm2204, %v2172, %v1309
        %v2206 = vsel %vm2204, %v2173, %v1311
        %v2207 = vsel %vm2204, %v2174, %v1313
        %v2208 = vsel %vm2204, %v2175, %v1315
        %v2209 = vsel %vm2204, %v2176, %v1317
        %v2210 = vsel %vm2204, %v2177, %v1319
        %v2211 = vsel %vm2204, %v2178, %v1321
        %v2212 = vsel %vm2204, %v2179, %v1323
        %v2213 = vsel %vm2204, %v2180, %v1325
        %v2214 = vsel %vm2204, %v2181, %v1327
        %v2215 = vsel %vm2204, %v2182, %v1329
        %v2216 = vsel %vm2204, %v2183, %v1331
        %v2217 = vsel %vm2204, %v2184, %v1333
        %v2218 = vsel %vm2204, %v2185, %v1335
        %v2219 = vsel %vm2204, %v2186, %v1337
        %v2220 = vsel %vm2204, %v2187, %v1339
        %v2221 = vsel %vm2204, %v2188, %v1341
        %v2222 = vsel %vm2204, %v2189, %v1343
        %v2223 = vsel %vm2204, %v2190, %v1345
        %v2224 = vsel %vm2204, %v2191, %v1347
        %v2225 = vsel %vm2204, %v2192, %v1349
        %v2226 = vsel %vm2204, %v2193, %v1351
        %v2227 = vsel %vm2204, %v2194, %v1353
        %v2228 = vsel %vm2204, %v2195, %v1355
        %v2229 = vsel %vm2204, %v2196, %v1357
        %v2230 = vsel %vm2204, %v2197, %v1359
        %v2231 = vsel %vm2204, %v2198, %v1361
        %v2232 = vsel %vm2204, %v2199, %v1363
        %v2233 = vsel %vm2204, %v2200, %v1365
        %v2234 = vsel %vm2204, %v2201, %v1367
        %v2235 = vsel %vm2204, %v2202, %v1369
        %v2236 = vsel %vm2204, %v2203, %v1371
        %vm2237 = vcmask 72704
        %v2238 = vsel %vm2237, %v2205, %v1437
        %v2239 = vsel %vm2237, %v2206, %v1439
        %v2240 = vsel %vm2237, %v2207, %v1441
        %v2241 = vsel %vm2237, %v2208, %v1443
        %v2242 = vsel %vm2237, %v2209, %v1445
        %v2243 = vsel %vm2237, %v2210, %v1447
        %v2244 = vsel %vm2237, %v2211, %v1449
        %v2245 = vsel %vm2237, %v2212, %v1451
        %v2246 = vsel %vm2237, %v2213, %v1453
        %v2247 = vsel %vm2237, %v2214, %v1455
        %v2248 = vsel %vm2237, %v2215, %v1457
        %v2249 = vsel %vm2237, %v2216, %v1459
        %v2250 = vsel %vm2237, %v2217, %v1461
        %v2251 = vsel %vm2237, %v2218, %v1463
        %v2252 = vsel %vm2237, %v2219, %v1465
        %v2253 = vsel %vm2237, %v2220, %v1467
        %v2254 = vsel %vm2237, %v2221, %v1469
        %v2255 = vsel %vm2237, %v2222, %v1471
        %v2256 = vsel %vm2237, %v2223, %v1473
        %v2257 = vsel %vm2237, %v2224, %v1475
        %v2258 = vsel %vm2237, %v2225, %v1477
        %v2259 = vsel %vm2237, %v2226, %v1479
        %v2260 = vsel %vm2237, %v2227, %v1481
        %v2261 = vsel %vm2237, %v2228, %v1483
        %v2262 = vsel %vm2237, %v2229, %v1485
        %v2263 = vsel %vm2237, %v2230, %v1487
        %v2264 = vsel %vm2237, %v2231, %v1489
        %v2265 = vsel %vm2237, %v2232, %v1491
        %v2266 = vsel %vm2237, %v2233, %v1493
        %v2267 = vsel %vm2237, %v2234, %v1495
        %v2268 = vsel %vm2237, %v2235, %v1497
        %v2269 = vsel %vm2237, %v2236, %v1499
        %vm2270 = vcmask 97280
        %v2271 = vsel %vm2270, %v2238, %v1565
        %v2272 = vsel %vm2270, %v2239, %v1567
        %v2273 = vsel %vm2270, %v2240, %v1569
        %v2274 = vsel %vm2270, %v2241, %v1571
        %v2275 = vsel %vm2270, %v2242, %v1573
        %v2276 = vsel %vm2270, %v2243, %v1575
        %v2277 = vsel %vm2270, %v2244, %v1577
        %v2278 = vsel %vm2270, %v2245, %v1579
        %v2279 = vsel %vm2270, %v2246, %v1581
        %v2280 = vsel %vm2270, %v2247, %v1583
        %v2281 = vsel %vm2270, %v2248, %v1585
        %v2282 = vsel %vm2270, %v2249, %v1587
        %v2283 = vsel %vm2270, %v2250, %v1589
        %v2284 = vsel %vm2270, %v2251, %v1591
        %v2285 = vsel %vm2270, %v2252, %v1593
        %v2286 = vsel %vm2270, %v2253, %v1595
        %v2287 = vsel %vm2270, %v2254, %v1597
        %v2288 = vsel %vm2270, %v2255, %v1599
        %v2289 = vsel %vm2270, %v2256, %v1601
        %v2290 = vsel %vm2270, %v2257, %v1603
        %v2291 = vsel %vm2270, %v2258, %v1605
        %v2292 = vsel %vm2270, %v2259, %v1607
        %v2293 = vsel %vm2270, %v2260, %v1609
        %v2294 = vsel %vm2270, %v2261, %v1611
        %v2295 = vsel %vm2270, %v2262, %v1613
        %v2296 = vsel %vm2270, %v2263, %v1615
        %v2297 = vsel %vm2270, %v2264, %v1617
        %v2298 = vsel %vm2270, %v2265, %v1619
        %v2299 = vsel %vm2270, %v2266, %v1621
        %v2300 = vsel %vm2270, %v2267, %v1623
        %v2301 = vsel %vm2270, %v2268, %v1625
        %v2302 = vsel %vm2270, %v2269, %v1627
        %vm2303 = vcmask 121856
        %v2304 = vsel %vm2303, %v2271, %v1693
        %v2305 = vsel %vm2303, %v2272, %v1695
        %v2306 = vsel %vm2303, %v2273, %v1697
        %v2307 = vsel %vm2303, %v2274, %v1699
        %v2308 = vsel %vm2303, %v2275, %v1701
        %v2309 = vsel %vm2303, %v2276, %v1703
        %v2310 = vsel %vm2303, %v2277, %v1705
        %v2311 = vsel %vm2303, %v2278, %v1707
        %v2312 = vsel %vm2303, %v2279, %v1709
        %v2313 = vsel %vm2303, %v2280, %v1711
        %v2314 = vsel %vm2303, %v2281, %v1713
        %v2315 = vsel %vm2303, %v2282, %v1715
        %v2316 = vsel %vm2303, %v2283, %v1717
        %v2317 = vsel %vm2303, %v2284, %v1719
        %v2318 = vsel %vm2303, %v2285, %v1721
        %v2319 = vsel %vm2303, %v2286, %v1723
        %v2320 = vsel %vm2303, %v2287, %v1725
        %v2321 = vsel %vm2303, %v2288, %v1727
        %v2322 = vsel %vm2303, %v2289, %v1729
        %v2323 = vsel %vm2303, %v2290, %v1731
        %v2324 = vsel %vm2303, %v2291, %v1733
        %v2325 = vsel %vm2303, %v2292, %v1735
        %v2326 = vsel %vm2303, %v2293, %v1737
        %v2327 = vsel %vm2303, %v2294, %v1739
        %v2328 = vsel %vm2303, %v2295, %v1741
        %v2329 = vsel %vm2303, %v2296, %v1743
        %v2330 = vsel %vm2303, %v2297, %v1745
        %v2331 = vsel %vm2303, %v2298, %v1747
        %v2332 = vsel %vm2303, %v2299, %v1749
        %v2333 = vsel %vm2303, %v2300, %v1751
        %v2334 = vsel %vm2303, %v2301, %v1753
        %v2335 = vsel %vm2303, %v2302, %v1755
        %vm2336 = vcmask 146432
        %v2337 = vsel %vm2336, %v2304, %v1821
        %v2338 = vsel %vm2336, %v2305, %v1823
        %v2339 = vsel %vm2336, %v2306, %v1825
        %v2340 = vsel %vm2336, %v2307, %v1827
        %v2341 = vsel %vm2336, %v2308, %v1829
        %v2342 = vsel %vm2336, %v2309, %v1831
        %v2343 = vsel %vm2336, %v2310, %v1833
        %v2344 = vsel %vm2336, %v2311, %v1835
        %v2345 = vsel %vm2336, %v2312, %v1837
        %v2346 = vsel %vm2336, %v2313, %v1839
        %v2347 = vsel %vm2336, %v2314, %v1841
        %v2348 = vsel %vm2336, %v2315, %v1843
        %v2349 = vsel %vm2336, %v2316, %v1845
        %v2350 = vsel %vm2336, %v2317, %v1847
        %v2351 = vsel %vm2336, %v2318, %v1849
        %v2352 = vsel %vm2336, %v2319, %v1851
        %v2353 = vsel %vm2336, %v2320, %v1853
        %v2354 = vsel %vm2336, %v2321, %v1855
        %v2355 = vsel %vm2336, %v2322, %v1857
        %v2356 = vsel %vm2336, %v2323, %v1859
        %v2357 = vsel %vm2336, %v2324, %v1861
        %v2358 = vsel %vm2336, %v2325, %v1863
        %v2359 = vsel %vm2336, %v2326, %v1865
        %v2360 = vsel %vm2336, %v2327, %v1867
        %v2361 = vsel %vm2336, %v2328, %v1869
        %v2362 = vsel %vm2336, %v2329, %v1871
        %v2363 = vsel %vm2336, %v2330, %v1873
        %v2364 = vsel %vm2336, %v2331, %v1875
        %v2365 = vsel %vm2336, %v2332, %v1877
        %v2366 = vsel %vm2336, %v2333, %v1879
        %v2367 = vsel %vm2336, %v2334, %v1881
        %v2368 = vsel %vm2336, %v2335, %v1883
        %vm2369 = vcmask 171008
        %v2370 = vsel %vm2369, %v2337, %v1949
        %v2371 = vsel %vm2369, %v2338, %v1951
        %v2372 = vsel %vm2369, %v2339, %v1953
        %v2373 = vsel %vm2369, %v2340, %v1955
        %v2374 = vsel %vm2369, %v2341, %v1957
        %v2375 = vsel %vm2369, %v2342, %v1959
        %v2376 = vsel %vm2369, %v2343, %v1961
        %v2377 = vsel %vm2369, %v2344, %v1963
        %v2378 = vsel %vm2369, %v2345, %v1965
        %v2379 = vsel %vm2369, %v2346, %v1967
        %v2380 = vsel %vm2369, %v2347, %v1969
        %v2381 = vsel %vm2369, %v2348, %v1971
        %v2382 = vsel %vm2369, %v2349, %v1973
        %v2383 = vsel %vm2369, %v2350, %v1975
        %v2384 = vsel %vm2369, %v2351, %v1977
        %v2385 = vsel %vm2369, %v2352, %v1979
        %v2386 = vsel %vm2369, %v2353, %v1981
        %v2387 = vsel %vm2369, %v2354, %v1983
        %v2388 = vsel %vm2369, %v2355, %v1985
        %v2389 = vsel %vm2369, %v2356, %v1987
        %v2390 = vsel %vm2369, %v2357, %v1989
        %v2391 = vsel %vm2369, %v2358, %v1991
        %v2392 = vsel %vm2369, %v2359, %v1993
        %v2393 = vsel %vm2369, %v2360, %v1995
        %v2394 = vsel %vm2369, %v2361, %v1997
        %v2395 = vsel %vm2369, %v2362, %v1999
        %v2396 = vsel %vm2369, %v2363, %v2001
        %v2397 = vsel %vm2369, %v2364, %v2003
        %v2398 = vsel %vm2369, %v2365, %v2005
        %v2399 = vsel %vm2369, %v2366, %v2007
        %v2400 = vsel %vm2369, %v2367, %v2009
        %v2401 = vsel %vm2369, %v2368, %v2011
        %vm2402 = vcmask 195584
        %v2403 = vsel %vm2402, %v2370, %v2077
        %v2404 = vsel %vm2402, %v2371, %v2079
        %v2405 = vsel %vm2402, %v2372, %v2081
        %v2406 = vsel %vm2402, %v2373, %v2083
        %v2407 = vsel %vm2402, %v2374, %v2085
        %v2408 = vsel %vm2402, %v2375, %v2087
        %v2409 = vsel %vm2402, %v2376, %v2089
        %v2410 = vsel %vm2402, %v2377, %v2091
        %v2411 = vsel %vm2402, %v2378, %v2093
        %v2412 = vsel %vm2402, %v2379, %v2095
        %v2413 = vsel %vm2402, %v2380, %v2097
        %v2414 = vsel %vm2402, %v2381, %v2099
        %v2415 = vsel %vm2402, %v2382, %v2101
        %v2416 = vsel %vm2402, %v2383, %v2103
        %v2417 = vsel %vm2402, %v2384, %v2105
        %v2418 = vsel %vm2402, %v2385, %v2107
        %v2419 = vsel %vm2402, %v2386, %v2109
        %v2420 = vsel %vm2402, %v2387, %v2111
        %v2421 = vsel %vm2402, %v2388, %v2113
        %v2422 = vsel %vm2402, %v2389, %v2115
        %v2423 = vsel %vm2402, %v2390, %v2117
        %v2424 = vsel %vm2402, %v2391, %v2119
        %v2425 = vsel %vm2402, %v2392, %v2121
        %v2426 = vsel %vm2402, %v2393, %v2123
        %v2427 = vsel %vm2402, %v2394, %v2125
        %v2428 = vsel %vm2402, %v2395, %v2127
        %v2429 = vsel %vm2402, %v2396, %v2129
        %v2430 = vsel %vm2402, %v2397, %v2131
        %v2431 = vsel %vm2402, %v2398, %v2133
        %v2432 = vsel %vm2402, %v2399, %v2135
        %v2433 = vsel %vm2402, %v2400, %v2137
        %v2434 = vsel %vm2402, %v2401, %v2139
        %v2435 = vpack.c.bf16 %v2404, %v2403
        %v2436 = vpack.c.bf16 %v2406, %v2405
        %v2437 = vpack.c.bf16 %v2408, %v2407
        %v2438 = vpack.c.bf16 %v2410, %v2409
        %v2439 = vpack.c.bf16 %v2412, %v2411
        %v2440 = vpack.c.bf16 %v2414, %v2413
        %v2441 = vpack.c.bf16 %v2416, %v2415
        %v2442 = vpack.c.bf16 %v2418, %v2417
        %v2443 = vpack.c.bf16 %v2420, %v2419
        %v2444 = vpack.c.bf16 %v2422, %v2421
        %v2445 = vpack.c.bf16 %v2424, %v2423
        %v2446 = vpack.c.bf16 %v2426, %v2425
        %v2447 = vpack.c.bf16 %v2428, %v2427
        %v2448 = vpack.c.bf16 %v2430, %v2429
        %v2449 = vpack.c.bf16 %v2432, %v2431
        %v2450 = vpack.c.bf16 %v2434, %v2433
        %v2451 = vld [vmem:[%s1] sm:$0xf]
        %v2452 = vld [vmem:[%s1 + $0x4] sm:$0xf]
        %v2453 = vld [vmem:[%s1 + $0x8] sm:$0xf]
        %v2454 = vld [vmem:[%s1 + $0xc] sm:$0x3]
        %v2459 = vunpack.c.l.b16 %v2451
        %v2460 = vunpack.c.l.b16 %v2452
        %v2461 = vunpack.c.l.b16 %v2453
        %v2462 = vunpack.c.l.b16 %v2454
        %v2463 = vpack.c.b16 %v2460, %v2459
        %v2464 = vpack.c.b16 %v2462, %v2461
        %vm2466 = vcmask 220160
        %v2468 = vsel %vm2466, %v2435, 0
        %v2471 = vsel %vm2466, %v2436, 0
        %v2474 = vsel %vm2466, %v2437, 0
        %v2477 = vsel %vm2466, %v2438, 0
        %v2480 = vsel %vm2466, %v2439, 0
        %v2483 = vsel %vm2466, %v2440, 0
        %v2486 = vsel %vm2466, %v2441, 0
        %v2489 = vsel %vm2466, %v2442, 0
        %v2492 = vsel %vm2466, %v2443, 0
        %v2495 = vsel %vm2466, %v2444, 0
        %v2498 = vsel %vm2466, %v2445, 0
        %v2501 = vsel %vm2466, %v2446, 0
        %v2504 = vsel %vm2466, %v2447, 0
        %v2507 = vsel %vm2466, %v2448, 0
        %v2510 = vsel %vm2466, %v2449, 0
        %v2513 = vsel %vm2466, %v2450, 0
        %vm2515 = vcmask 1044480
        %vm2516 = vcmask 1045504
        %v2517 = vsel %vm2515, 4294967295, 65535
        %v2518 = vsel %vm2516, %v2517, 0
        %v2520 = vand.u32 %v2464, %v2518
        %2522 = vmatprep.subr.bf16.mxu0 0
        %2523 = vmatpush1.bf16.msra.mxu0 %v2463
        %2524 = vmatprep.subr.bf16.mxu0 0
        %2525 = vmatpush1.bf16.msra.mxu0 %v2520
        %2526 = vmatprep.subr.bf16.mxu0 0
        %2527 = vmatpush1.bf16.msra.mxu0 0
        %2528 = vmatprep.subr.bf16.mxu0 0
        %2529 = vmatpush1.bf16.msra.mxu0 0
        %2530 = vmatprep.subr.bf16.mxu0 0
        %2531 = vmatpush1.bf16.msra.mxu0 0
        %2532 = vmatprep.subr.bf16.mxu0 0
        %2533 = vmatpush1.bf16.msra.mxu0 0
        %2534 = vmatprep.subr.bf16.mxu0 0
        %2535 = vmatpush1.bf16.msra.mxu0 0
        %2536 = vmatprep.subr.bf16.mxu0 0
        %2537 = vmatpush1.bf16.msra.mxu0 0
        %2538 = vmatprep.subr.bf16.mxu0 0
        %2539 = vmatpush1.bf16.msra.mxu0 0
        %2540 = vmatprep.subr.bf16.mxu0 0
        %2541 = vmatpush1.bf16.msra.mxu0 0
        %2542 = vmatprep.subr.bf16.mxu0 0
        %2543 = vmatpush1.bf16.msra.mxu0 0
        %2544 = vmatprep.subr.bf16.mxu0 0
        %2545 = vmatpush1.bf16.msra.mxu0 0
        %2546 = vmatprep.subr.bf16.mxu0 0
        %2547 = vmatpush1.bf16.msra.mxu0 0
        %2548 = vmatprep.subr.bf16.mxu0 0
        %2549 = vmatpush1.bf16.msra.mxu0 0
        %2550 = vmatprep.subr.bf16.mxu0 0
        %2551 = vmatpush1.bf16.msra.mxu0 0
        %2552 = vmatprep.subr.bf16.mxu0 0
        %2553 = vmatpush1.bf16.msra.mxu0 0
        %2554 = vmatprep.mubr.bf16.mxu0 0
        %2555 = vmatmul.mubr.bf16.gmra.mrb[0].mxu0 %v2468
        %v2556 = vpop.f32.mrb[0].mxu0
        %v2557 = vadd.f32 0.0, %v2556
        %v2558 = vpop.f32.mrb[0].mxu0
        %v2559 = vpop.f32.mrb[0].mxu0
        %v2560 = vadd.f32 0.0, %v2559
        %v2561 = vpop.f32.mrb[0].mxu0
        %2562 = vmatprep.mubr.bf16.mxu0 0
        %2563 = vmatmul.mubr.bf16.gmra.mrb[0].mxu0 %v2471
        %v2564 = vpop.f32.mrb[0].mxu0
        %v2565 = vadd.f32 0.0, %v2564
        %v2566 = vpop.f32.mrb[0].mxu0
        %v2567 = vpop.f32.mrb[0].mxu0
        %v2568 = vadd.f32 0.0, %v2567
        %v2569 = vpop.f32.mrb[0].mxu0
        %2570 = vmatprep.mubr.bf16.mxu0 0
        %2571 = vmatmul.mubr.bf16.gmra.mrb[0].mxu0 %v2474
        %v2572 = vpop.f32.mrb[0].mxu0
        %v2573 = vadd.f32 0.0, %v2572
        %v2574 = vpop.f32.mrb[0].mxu0
        %v2575 = vpop.f32.mrb[0].mxu0
        %v2576 = vadd.f32 0.0, %v2575
        %v2577 = vpop.f32.mrb[0].mxu0
        %2578 = vmatprep.mubr.bf16.mxu0 0
        %2579 = vmatmul.mubr.bf16.gmra.mrb[0].mxu0 %v2477
        %v2580 = vpop.f32.mrb[0].mxu0
        %v2581 = vadd.f32 0.0, %v2580
        %v2582 = vpop.f32.mrb[0].mxu0
        %v2583 = vpop.f32.mrb[0].mxu0
        %v2584 = vadd.f32 0.0, %v2583
        %v2585 = vpop.f32.mrb[0].mxu0
        %2586 = vmatprep.mubr.bf16.mxu0 0
        %2587 = vmatmul.mubr.bf16.gmra.mrb[0].mxu0 %v2480
        %v2588 = vpop.f32.mrb[0].mxu0
        %v2589 = vadd.f32 0.0, %v2588
        %v2590 = vpop.f32.mrb[0].mxu0
        %v2591 = vpop.f32.mrb[0].mxu0
        %v2592 = vadd.f32 0.0, %v2591
        %v2593 = vpop.f32.mrb[0].mxu0
        %2594 = vmatprep.mubr.bf16.mxu0 0
        %2595 = vmatmul.mubr.bf16.gmra.mrb[0].mxu0 %v2483
        %v2596 = vpop.f32.mrb[0].mxu0
        %v2597 = vadd.f32 0.0, %v2596
        %v2598 = vpop.f32.mrb[0].mxu0
        %v2599 = vpop.f32.mrb[0].mxu0
        %v2600 = vadd.f32 0.0, %v2599
        %v2601 = vpop.f32.mrb[0].mxu0
        %2602 = vmatprep.mubr.bf16.mxu0 0
        %2603 = vmatmul.mubr.bf16.gmra.mrb[0].mxu0 %v2486
        %v2604 = vpop.f32.mrb[0].mxu0
        %v2605 = vadd.f32 0.0, %v2604
        %v2606 = vpop.f32.mrb[0].mxu0
        %v2607 = vpop.f32.mrb[0].mxu0
        %v2608 = vadd.f32 0.0, %v2607
        %v2609 = vpop.f32.mrb[0].mxu0
        %2610 = vmatprep.mubr.bf16.mxu0 0
        %2611 = vmatmul.mubr.bf16.gmra.mrb[0].mxu0 %v2489
        %v2612 = vpop.f32.mrb[0].mxu0
        %v2613 = vadd.f32 0.0, %v2612
        %v2614 = vpop.f32.mrb[0].mxu0
        %v2615 = vpop.f32.mrb[0].mxu0
        %v2616 = vadd.f32 0.0, %v2615
        %v2617 = vpop.f32.mrb[0].mxu0
        %2618 = vmatprep.mubr.bf16.mxu0 0
        %2619 = vmatmul.mubr.bf16.gmra.mrb[0].mxu0 %v2492
        %v2620 = vpop.f32.mrb[0].mxu0
        %v2621 = vadd.f32 0.0, %v2620
        %v2622 = vpop.f32.mrb[0].mxu0
        %v2623 = vpop.f32.mrb[0].mxu0
        %v2624 = vadd.f32 0.0, %v2623
        %v2625 = vpop.f32.mrb[0].mxu0
        %2626 = vmatprep.mubr.bf16.mxu0 0
        %2627 = vmatmul.mubr.bf16.gmra.mrb[0].mxu0 %v2495
        %v2628 = vpop.f32.mrb[0].mxu0
        %v2629 = vadd.f32 0.0, %v2628
        %v2630 = vpop.f32.mrb[0].mxu0
        %v2631 = vpop.f32.mrb[0].mxu0
        %v2632 = vadd.f32 0.0, %v2631
        %v2633 = vpop.f32.mrb[0].mxu0
        %2634 = vmatprep.mubr.bf16.mxu0 0
        %2635 = vmatmul.mubr.bf16.gmra.mrb[0].mxu0 %v2498
        %v2636 = vpop.f32.mrb[0].mxu0
        %v2637 = vadd.f32 0.0, %v2636
        %v2638 = vpop.f32.mrb[0].mxu0
        %v2639 = vpop.f32.mrb[0].mxu0
        %v2640 = vadd.f32 0.0, %v2639
        %v2641 = vpop.f32.mrb[0].mxu0
        %2642 = vmatprep.mubr.bf16.mxu0 0
        %2643 = vmatmul.mubr.bf16.gmra.mrb[0].mxu0 %v2501
        %v2644 = vpop.f32.mrb[0].mxu0
        %v2645 = vadd.f32 0.0, %v2644
        %v2646 = vpop.f32.mrb[0].mxu0
        %v2647 = vpop.f32.mrb[0].mxu0
        %v2648 = vadd.f32 0.0, %v2647
        %v2649 = vpop.f32.mrb[0].mxu0
        %2650 = vmatprep.mubr.bf16.mxu0 0
        %2651 = vmatmul.mubr.bf16.gmra.mrb[0].mxu0 %v2504
        %v2652 = vpop.f32.mrb[0].mxu0
        %v2653 = vadd.f32 0.0, %v2652
        %v2654 = vpop.f32.mrb[0].mxu0
        %v2655 = vpop.f32.mrb[0].mxu0
        %v2656 = vadd.f32 0.0, %v2655
        %v2657 = vpop.f32.mrb[0].mxu0
        %2658 = vmatprep.mubr.bf16.mxu0 0
        %2659 = vmatmul.mubr.bf16.gmra.mrb[0].mxu0 %v2507
        %v2660 = vpop.f32.mrb[0].mxu0
        %v2661 = vadd.f32 0.0, %v2660
        %v2662 = vpop.f32.mrb[0].mxu0
        %v2663 = vpop.f32.mrb[0].mxu0
        %v2664 = vadd.f32 0.0, %v2663
        %v2665 = vpop.f32.mrb[0].mxu0
        %2666 = vmatprep.mubr.bf16.mxu0 0
        %2667 = vmatmul.mubr.bf16.gmra.mrb[0].mxu0 %v2510
        %v2668 = vpop.f32.mrb[0].mxu0
        %v2669 = vadd.f32 0.0, %v2668
        %v2670 = vpop.f32.mrb[0].mxu0
        %v2671 = vpop.f32.mrb[0].mxu0
        %v2672 = vadd.f32 0.0, %v2671
        %v2673 = vpop.f32.mrb[0].mxu0
        %2674 = vmatprep.mubr.bf16.mxu0 0
        %2675 = vmatmul.mubr.bf16.gmra.mrb[0].mxu0 %v2513
        %v2676 = vpop.f32.mrb[0].mxu0
        %v2677 = vadd.f32 0.0, %v2676
        %v2678 = vpop.f32.mrb[0].mxu0
        %v2679 = vpop.f32.mrb[0].mxu0
        %v2680 = vadd.f32 0.0, %v2679
        %v2681 = vpop.f32.mrb[0].mxu0
        %2682 = vdwg.mxu0
        %v2683 = vld [vmem:[%s2] sm:$0x1]
        %v2685 = vlaneseq
        %v2686 = vshrl.u32 %v2685, 7
        %v2687 = vsub.s32 0, %v2686
        %v2688 = vrot.slane %v2683, %v2687
        %v2690 = vmul.f32 %v2557, %v2688
        %v2691 = vmul.f32 %v2560, %v2688
        %v2692 = vmul.f32 %v2565, %v2688
        %v2693 = vmul.f32 %v2568, %v2688
        %v2694 = vmul.f32 %v2573, %v2688
        %v2695 = vmul.f32 %v2576, %v2688
        %v2696 = vmul.f32 %v2581, %v2688
        %v2697 = vmul.f32 %v2584, %v2688
        %v2698 = vmul.f32 %v2589, %v2688
        %v2699 = vmul.f32 %v2592, %v2688
        %v2700 = vmul.f32 %v2597, %v2688
        %v2701 = vmul.f32 %v2600, %v2688
        %v2702 = vmul.f32 %v2605, %v2688
        %v2703 = vmul.f32 %v2608, %v2688
        %v2704 = vmul.f32 %v2613, %v2688
        %v2705 = vmul.f32 %v2616, %v2688
        %v2706 = vmul.f32 %v2621, %v2688
        %v2707 = vmul.f32 %v2624, %v2688
        %v2708 = vmul.f32 %v2629, %v2688
        %v2709 = vmul.f32 %v2632, %v2688
        %v2710 = vmul.f32 %v2637, %v2688
        %v2711 = vmul.f32 %v2640, %v2688
        %v2712 = vmul.f32 %v2645, %v2688
        %v2713 = vmul.f32 %v2648, %v2688
        %v2714 = vmul.f32 %v2653, %v2688
        %v2715 = vmul.f32 %v2656, %v2688
        %v2716 = vmul.f32 %v2661, %v2688
        %v2717 = vmul.f32 %v2664, %v2688
        %v2718 = vmul.f32 %v2669, %v2688
        %v2719 = vmul.f32 %v2672, %v2688
        %v2720 = vmul.f32 %v2677, %v2688
        %v2721 = vmul.f32 %v2680, %v2688
        %v2722 = vld [vmem:[%s3] sm:$0x1]
        %v2724 = vlaneseq
        %v2725 = vshrl.u32 %v2724, 7
        %v2726 = vsub.s32 0, %v2725
        %v2727 = vrot.slane %v2722, %v2726
        %v2729 = vadd.f32 %v2690, %v2727
        %v2730 = vadd.f32 %v2691, %v2727
        %v2731 = vadd.f32 %v2692, %v2727
        %v2732 = vadd.f32 %v2693, %v2727
        %v2733 = vadd.f32 %v2694, %v2727
        %v2734 = vadd.f32 %v2695, %v2727
        %v2735 = vadd.f32 %v2696, %v2727
        %v2736 = vadd.f32 %v2697, %v2727
        %v2737 = vadd.f32 %v2698, %v2727
        %v2738 = vadd.f32 %v2699, %v2727
        %v2739 = vadd.f32 %v2700, %v2727
        %v2740 = vadd.f32 %v2701, %v2727
        %v2741 = vadd.f32 %v2702, %v2727
        %v2742 = vadd.f32 %v2703, %v2727
        %v2743 = vadd.f32 %v2704, %v2727
        %v2744 = vadd.f32 %v2705, %v2727
        %v2745 = vadd.f32 %v2706, %v2727
        %v2746 = vadd.f32 %v2707, %v2727
        %v2747 = vadd.f32 %v2708, %v2727
        %v2748 = vadd.f32 %v2709, %v2727
        %v2749 = vadd.f32 %v2710, %v2727
        %v2750 = vadd.f32 %v2711, %v2727
        %v2751 = vadd.f32 %v2712, %v2727
        %v2752 = vadd.f32 %v2713, %v2727
        %v2753 = vadd.f32 %v2714, %v2727
        %v2754 = vadd.f32 %v2715, %v2727
        %v2755 = vadd.f32 %v2716, %v2727
        %v2756 = vadd.f32 %v2717, %v2727
        %v2757 = vadd.f32 %v2718, %v2727
        %v2758 = vadd.f32 %v2719, %v2727
        %v2759 = vadd.f32 %v2720, %v2727
        %v2760 = vadd.f32 %v2721, %v2727
        %v2761 = vmax.f32 %v2729, 0.0
        %v2762 = vmax.f32 %v2730, 0.0
        %v2763 = vmax.f32 %v2731, 0.0
        %v2764 = vmax.f32 %v2732, 0.0
        %v2765 = vmax.f32 %v2733, 0.0
        %v2766 = vmax.f32 %v2734, 0.0
        %v2767 = vmax.f32 %v2735, 0.0
        %v2768 = vmax.f32 %v2736, 0.0
        %v2769 = vmax.f32 %v2737, 0.0
        %v2770 = vmax.f32 %v2738, 0.0
        %v2771 = vmax.f32 %v2739, 0.0
        %v2772 = vmax.f32 %v2740, 0.0
        %v2773 = vmax.f32 %v2741, 0.0
        %v2774 = vmax.f32 %v2742, 0.0
        %v2775 = vmax.f32 %v2743, 0.0
        %v2776 = vmax.f32 %v2744, 0.0
        %v2777 = vmax.f32 %v2745, 0.0
        %v2778 = vmax.f32 %v2746, 0.0
        %v2779 = vmax.f32 %v2747, 0.0
        %v2780 = vmax.f32 %v2748, 0.0
        %v2781 = vmax.f32 %v2749, 0.0
        %v2782 = vmax.f32 %v2750, 0.0
        %v2783 = vmax.f32 %v2751, 0.0
        %v2784 = vmax.f32 %v2752, 0.0
        %v2785 = vmax.f32 %v2753, 0.0
        %v2786 = vmax.f32 %v2754, 0.0
        %v2787 = vmax.f32 %v2755, 0.0
        %v2788 = vmax.f32 %v2756, 0.0
        %v2789 = vmax.f32 %v2757, 0.0
        %v2790 = vmax.f32 %v2758, 0.0
        %v2791 = vmax.f32 %v2759, 0.0
        %v2792 = vmax.f32 %v2760, 0.0
        %vm2793 = vcmask 261120
        %2794 = vst.msk [vmem:[#allocation3] sm:$0xff] %vm2793, 0.0
        %2795 = vst.msk [vmem:[#allocation3 + $0x8] sm:$0xff] %vm2793, 0.0
        %vm2796 = vcmask 254976
        %2797 = vst.msk [vmem:[#allocation3 + $0x10] sm:$0x3] %vm2796, 0.0
        %s2798 = scalar_lea.vmem [#allocation3], 408
        %2799 = vst.msk [vmem:[%s2798] sm:$0xff] %vm2793, 0.0
        %2800 = vst.msk [vmem:[%s2798 + $0x8] sm:$0xff] %vm2793, 0.0
        %2801 = vst.msk [vmem:[%s2798 + $0x10] sm:$0x3] %vm2796, 0.0
        %s2802 = scalar_lea.vmem [#allocation3], 24
        %vm2803 = vcmask 253952
        %2804 = vst.msk [vmem:[%s2802] sm:$0x1] %vm2803, 0.0
        %2805 = vst.msk [vmem:[%s2802 + $0x18] sm:$0x1] %vm2803, 0.0
        %2806 = vst.msk [vmem:[%s2802 + $0x30] sm:$0x1] %vm2803, 0.0
        %2807 = vst.msk [vmem:[%s2802 + $0x48] sm:$0x1] %vm2803, 0.0
        %2808 = vst.msk [vmem:[%s2802 + $0x60] sm:$0x1] %vm2803, 0.0
        %2809 = vst.msk [vmem:[%s2802 + $0x78] sm:$0x1] %vm2803, 0.0
        %2810 = vst.msk [vmem:[%s2802 + $0x90] sm:$0x1] %vm2803, 0.0
        %2811 = vst.msk [vmem:[%s2802 + $0xa8] sm:$0x1] %vm2803, 0.0
        %2812 = vst.msk [vmem:[%s2802 + $0xc0] sm:$0x1] %vm2803, 0.0
        %2813 = vst.msk [vmem:[%s2802 + $0xd8] sm:$0x1] %vm2803, 0.0
        %2814 = vst.msk [vmem:[%s2802 + $0xf0] sm:$0x1] %vm2803, 0.0
        %2815 = vst.msk [vmem:[%s2802 + $0x108] sm:$0x1] %vm2803, 0.0
        %2816 = vst.msk [vmem:[%s2802 + $0x120] sm:$0x1] %vm2803, 0.0
        %2817 = vst.msk [vmem:[%s2802 + $0x138] sm:$0x1] %vm2803, 0.0
        %2818 = vst.msk [vmem:[%s2802 + $0x150] sm:$0x1] %vm2803, 0.0
        %2819 = vst.msk [vmem:[%s2802 + $0x168] sm:$0x1] %vm2803, 0.0
        %2820 = vst.msk [vmem:[%s2802 + $0x11] sm:$0x1] %vm2803, 0.0
        %2821 = vst.msk [vmem:[%s2802 + $0x29] sm:$0x1] %vm2803, 0.0
        %2822 = vst.msk [vmem:[%s2802 + $0x41] sm:$0x1] %vm2803, 0.0
        %2823 = vst.msk [vmem:[%s2802 + $0x59] sm:$0x1] %vm2803, 0.0
        %2824 = vst.msk [vmem:[%s2802 + $0x71] sm:$0x1] %vm2803, 0.0
        %2825 = vst.msk [vmem:[%s2802 + $0x89] sm:$0x1] %vm2803, 0.0
        %2826 = vst.msk [vmem:[%s2802 + $0xa1] sm:$0x1] %vm2803, 0.0
        %2827 = vst.msk [vmem:[%s2802 + $0xb9] sm:$0x1] %vm2803, 0.0
        %2828 = vst.msk [vmem:[%s2802 + $0xd1] sm:$0x1] %vm2803, 0.0
        %2829 = vst.msk [vmem:[%s2802 + $0xe9] sm:$0x1] %vm2803, 0.0
        %2830 = vst.msk [vmem:[%s2802 + $0x101] sm:$0x1] %vm2803, 0.0
        %2831 = vst.msk [vmem:[%s2802 + $0x119] sm:$0x1] %vm2803, 0.0
        %2832 = vst.msk [vmem:[%s2802 + $0x131] sm:$0x1] %vm2803, 0.0
        %2833 = vst.msk [vmem:[%s2802 + $0x149] sm:$0x1] %vm2803, 0.0
        %2834 = vst.msk [vmem:[%s2802 + $0x161] sm:$0x1] %vm2803, 0.0
        %2835 = vst.msk [vmem:[%s2802 + $0x179] sm:$0x1] %vm2803, 0.0
        %2836 = vst.msk [vmem:[%s2802 + $0x1] sm:$0xff] %vm2793, %v2761
        %2837 = vst.msk [vmem:[%s2802 + $0x9] sm:$0xff] %vm2793, %v2762
        %2838 = vst.msk [vmem:[%s2802 + $0x19] sm:$0xff] %vm2793, %v2763
        %2839 = vst.msk [vmem:[%s2802 + $0x21] sm:$0xff] %vm2793, %v2764
        %2840 = vst.msk [vmem:[%s2802 + $0x31] sm:$0xff] %vm2793, %v2765
        %2841 = vst.msk [vmem:[%s2802 + $0x39] sm:$0xff] %vm2793, %v2766
        %2842 = vst.msk [vmem:[%s2802 + $0x49] sm:$0xff] %vm2793, %v2767
        %2843 = vst.msk [vmem:[%s2802 + $0x51] sm:$0xff] %vm2793, %v2768
        %2844 = vst.msk [vmem:[%s2802 + $0x61] sm:$0xff] %vm2793, %v2769
        %2845 = vst.msk [vmem:[%s2802 + $0x69] sm:$0xff] %vm2793, %v2770
        %2846 = vst.msk [vmem:[%s2802 + $0x79] sm:$0xff] %vm2793, %v2771
        %2847 = vst.msk [vmem:[%s2802 + $0x81] sm:$0xff] %vm2793, %v2772
        %2848 = vst.msk [vmem:[%s2802 + $0x91] sm:$0xff] %vm2793, %v2773
        %2849 = vst.msk [vmem:[%s2802 + $0x99] sm:$0xff] %vm2793, %v2774
        %2850 = vst.msk [vmem:[%s2802 + $0xa9] sm:$0xff] %vm2793, %v2775
        %2851 = vst.msk [vmem:[%s2802 + $0xb1] sm:$0xff] %vm2793, %v2776
        %2852 = vst.msk [vmem:[%s2802 + $0xc1] sm:$0xff] %vm2793, %v2777
        %2853 = vst.msk [vmem:[%s2802 + $0xc9] sm:$0xff] %vm2793, %v2778
        %2854 = vst.msk [vmem:[%s2802 + $0xd9] sm:$0xff] %vm2793, %v2779
        %2855 = vst.msk [vmem:[%s2802 + $0xe1] sm:$0xff] %vm2793, %v2780
        %2856 = vst.msk [vmem:[%s2802 + $0xf1] sm:$0xff] %vm2793, %v2781
        %2857 = vst.msk [vmem:[%s2802 + $0xf9] sm:$0xff] %vm2793, %v2782
        %2858 = vst.msk [vmem:[%s2802 + $0x109] sm:$0xff] %vm2793, %v2783
        %2859 = vst.msk [vmem:[%s2802 + $0x111] sm:$0xff] %vm2793, %v2784
        %2860 = vst.msk [vmem:[%s2802 + $0x121] sm:$0xff] %vm2793, %v2785
        %2861 = vst.msk [vmem:[%s2802 + $0x129] sm:$0xff] %vm2793, %v2786
        %2862 = vst.msk [vmem:[%s2802 + $0x139] sm:$0xff] %vm2793, %v2787
        %2863 = vst.msk [vmem:[%s2802 + $0x141] sm:$0xff] %vm2793, %v2788
        %2864 = vst.msk [vmem:[%s2802 + $0x151] sm:$0xff] %vm2793, %v2789
        %2865 = vst.msk [vmem:[%s2802 + $0x159] sm:$0xff] %vm2793, %v2790
        %2866 = vst.msk [vmem:[%s2802 + $0x169] sm:$0xff] %vm2793, %v2791
        %2867 = vst.msk [vmem:[%s2802 + $0x171] sm:$0xff] %vm2793, %v2792
        %v2868 = vld [vmem:[#allocation3] sm:$0xff]
        %v2869 = vld [vmem:[#allocation3 + $0x8] sm:$0xff]
        %v2870 = vld [vmem:[#allocation3 + $0x18] sm:$0xff]
        %v2871 = vld [vmem:[#allocation3 + $0x20] sm:$0xff]
        %v2872 = vld [vmem:[#allocation3 + $0x30] sm:$0xff]
        %v2873 = vld [vmem:[#allocation3 + $0x38] sm:$0xff]
        %v2874 = vld [vmem:[#allocation3 + $0x48] sm:$0xff]
        %v2875 = vld [vmem:[#allocation3 + $0x50] sm:$0xff]
        %v2876 = vld [vmem:[#allocation3 + $0x60] sm:$0xff]
        %v2877 = vld [vmem:[#allocation3 + $0x68] sm:$0xff]
        %v2878 = vld [vmem:[#allocation3 + $0x78] sm:$0xff]
        %v2879 = vld [vmem:[#allocation3 + $0x80] sm:$0xff]
        %v2880 = vld [vmem:[#allocation3 + $0x90] sm:$0xff]
        %v2881 = vld [vmem:[#allocation3 + $0x98] sm:$0xff]
        %v2882 = vld [vmem:[#allocation3 + $0xa8] sm:$0xff]
        %v2883 = vld [vmem:[#allocation3 + $0xb0] sm:$0xff]
        %v2884 = vld [vmem:[#allocation3 + $0xc0] sm:$0xff]
        %v2885 = vld [vmem:[#allocation3 + $0xc8] sm:$0xff]
        %v2886 = vld [vmem:[#allocation3 + $0xd8] sm:$0xff]
        %v2887 = vld [vmem:[#allocation3 + $0xe0] sm:$0xff]
        %v2888 = vld [vmem:[#allocation3 + $0xf0] sm:$0xff]
        %v2889 = vld [vmem:[#allocation3 + $0xf8] sm:$0xff]
        %v2890 = vld [vmem:[#allocation3 + $0x108] sm:$0xff]
        %v2891 = vld [vmem:[#allocation3 + $0x110] sm:$0xff]
        %v2892 = vld [vmem:[#allocation3 + $0x120] sm:$0xff]
        %v2893 = vld [vmem:[#allocation3 + $0x128] sm:$0xff]
        %v2894 = vld [vmem:[#allocation3 + $0x138] sm:$0xff]
        %v2895 = vld [vmem:[#allocation3 + $0x140] sm:$0xff]
        %v2896 = vld [vmem:[#allocation3 + $0x150] sm:$0xff]
        %v2897 = vld [vmem:[#allocation3 + $0x158] sm:$0xff]
        %v2898 = vld [vmem:[#allocation3 + $0x168] sm:$0xff]
        %v2899 = vld [vmem:[#allocation3 + $0x170] sm:$0xff]
        %v2900 = vld [vmem:[#allocation3 + $0x1] sm:$0xff]
        %v2901 = vld [vmem:[#allocation3 + $0x9] sm:$0xff]
        %v2902 = vld [vmem:[#allocation3 + $0x19] sm:$0xff]
        %v2903 = vld [vmem:[#allocation3 + $0x21] sm:$0xff]
        %v2904 = vld [vmem:[#allocation3 + $0x31] sm:$0xff]
        %v2905 = vld [vmem:[#allocation3 + $0x39] sm:$0xff]
        %v2906 = vld [vmem:[#allocation3 + $0x49] sm:$0xff]
        %v2907 = vld [vmem:[#allocation3 + $0x51] sm:$0xff]
        %v2908 = vld [vmem:[#allocation3 + $0x61] sm:$0xff]
        %v2909 = vld [vmem:[#allocation3 + $0x69] sm:$0xff]
        %v2910 = vld [vmem:[#allocation3 + $0x79] sm:$0xff]
        %v2911 = vld [vmem:[#allocation3 + $0x81] sm:$0xff]
        %v2912 = vld [vmem:[#allocation3 + $0x91] sm:$0xff]
        %v2913 = vld [vmem:[#allocation3 + $0x99] sm:$0xff]
        %v2914 = vld [vmem:[#allocation3 + $0xa9] sm:$0xff]
        %v2915 = vld [vmem:[#allocation3 + $0xb1] sm:$0xff]
        %v2916 = vld [vmem:[#allocation3 + $0xc1] sm:$0xff]
        %v2917 = vld [vmem:[#allocation3 + $0xc9] sm:$0xff]
        %v2918 = vld [vmem:[#allocation3 + $0xd9] sm:$0xff]
        %v2919 = vld [vmem:[#allocation3 + $0xe1] sm:$0xff]
        %v2920 = vld [vmem:[#allocation3 + $0xf1] sm:$0xff]
        %v2921 = vld [vmem:[#allocation3 + $0xf9] sm:$0xff]
        %v2922 = vld [vmem:[#allocation3 + $0x109] sm:$0xff]
        %v2923 = vld [vmem:[#allocation3 + $0x111] sm:$0xff]
        %v2924 = vld [vmem:[#allocation3 + $0x121] sm:$0xff]
        %v2925 = vld [vmem:[#allocation3 + $0x129] sm:$0xff]
        %v2926 = vld [vmem:[#allocation3 + $0x139] sm:$0xff]
        %v2927 = vld [vmem:[#allocation3 + $0x141] sm:$0xff]
        %v2928 = vld [vmem:[#allocation3 + $0x151] sm:$0xff]
        %v2929 = vld [vmem:[#allocation3 + $0x159] sm:$0xff]
        %v2930 = vld [vmem:[#allocation3 + $0x169] sm:$0xff]
        %v2931 = vld [vmem:[#allocation3 + $0x171] sm:$0xff]
        %v2932 = vld [vmem:[#allocation3 + $0x2] sm:$0xff]
        %v2933 = vld [vmem:[#allocation3 + $0xa] sm:$0xff]
        %v2934 = vld [vmem:[#allocation3 + $0x1a] sm:$0xff]
        %v2935 = vld [vmem:[#allocation3 + $0x22] sm:$0xff]
        %v2936 = vld [vmem:[#allocation3 + $0x32] sm:$0xff]
        %v2937 = vld [vmem:[#allocation3 + $0x3a] sm:$0xff]
        %v2938 = vld [vmem:[#allocation3 + $0x4a] sm:$0xff]
        %v2939 = vld [vmem:[#allocation3 + $0x52] sm:$0xff]
        %v2940 = vld [vmem:[#allocation3 + $0x62] sm:$0xff]
        %v2941 = vld [vmem:[#allocation3 + $0x6a] sm:$0xff]
        %v2942 = vld [vmem:[#allocation3 + $0x7a] sm:$0xff]
        %v2943 = vld [vmem:[#allocation3 + $0x82] sm:$0xff]
        %v2944 = vld [vmem:[#allocation3 + $0x92] sm:$0xff]
        %v2945 = vld [vmem:[#allocation3 + $0x9a] sm:$0xff]
        %v2946 = vld [vmem:[#allocation3 + $0xaa] sm:$0xff]
        %v2947 = vld [vmem:[#allocation3 + $0xb2] sm:$0xff]
        %v2948 = vld [vmem:[#allocation3 + $0xc2] sm:$0xff]
        %v2949 = vld [vmem:[#allocation3 + $0xca] sm:$0xff]
        %v2950 = vld [vmem:[#allocation3 + $0xda] sm:$0xff]
        %v2951 = vld [vmem:[#allocation3 + $0xe2] sm:$0xff]
        %v2952 = vld [vmem:[#allocation3 + $0xf2] sm:$0xff]
        %v2953 = vld [vmem:[#allocation3 + $0xfa] sm:$0xff]
        %v2954 = vld [vmem:[#allocation3 + $0x10a] sm:$0xff]
        %v2955 = vld [vmem:[#allocation3 + $0x112] sm:$0xff]
        %v2956 = vld [vmem:[#allocation3 + $0x122] sm:$0xff]
        %v2957 = vld [vmem:[#allocation3 + $0x12a] sm:$0xff]
        %v2958 = vld [vmem:[#allocation3 + $0x13a] sm:$0xff]
        %v2959 = vld [vmem:[#allocation3 + $0x142] sm:$0xff]
        %v2960 = vld [vmem:[#allocation3 + $0x152] sm:$0xff]
        %v2961 = vld [vmem:[#allocation3 + $0x15a] sm:$0xff]
        %v2962 = vld [vmem:[#allocation3 + $0x16a] sm:$0xff]
        %v2963 = vld [vmem:[#allocation3 + $0x172] sm:$0xff]
        %v2964 = vld [vmem:[%s2802] sm:$0xff]
        %v2965 = vld [vmem:[%s2802 + $0x8] sm:$0xff]
        %v2966 = vld [vmem:[%s2802 + $0x18] sm:$0xff]
        %v2967 = vld [vmem:[%s2802 + $0x20] sm:$0xff]
        %v2968 = vld [vmem:[%s2802 + $0x30] sm:$0xff]
        %v2969 = vld [vmem:[%s2802 + $0x38] sm:$0xff]
        %v2970 = vld [vmem:[%s2802 + $0x48] sm:$0xff]
        %v2971 = vld [vmem:[%s2802 + $0x50] sm:$0xff]
        %v2972 = vld [vmem:[%s2802 + $0x60] sm:$0xff]
        %v2973 = vld [vmem:[%s2802 + $0x68] sm:$0xff]
        %v2974 = vld [vmem:[%s2802 + $0x78] sm:$0xff]
        %v2975 = vld [vmem:[%s2802 + $0x80] sm:$0xff]
        %v2976 = vld [vmem:[%s2802 + $0x90] sm:$0xff]
        %v2977 = vld [vmem:[%s2802 + $0x98] sm:$0xff]
        %v2978 = vld [vmem:[%s2802 + $0xa8] sm:$0xff]
        %v2979 = vld [vmem:[%s2802 + $0xb0] sm:$0xff]
        %v2980 = vld [vmem:[%s2802 + $0xc0] sm:$0xff]
        %v2981 = vld [vmem:[%s2802 + $0xc8] sm:$0xff]
        %v2982 = vld [vmem:[%s2802 + $0xd8] sm:$0xff]
        %v2983 = vld [vmem:[%s2802 + $0xe0] sm:$0xff]
        %v2984 = vld [vmem:[%s2802 + $0xf0] sm:$0xff]
        %v2985 = vld [vmem:[%s2802 + $0xf8] sm:$0xff]
        %v2986 = vld [vmem:[%s2802 + $0x108] sm:$0xff]
        %v2987 = vld [vmem:[%s2802 + $0x110] sm:$0xff]
        %v2988 = vld [vmem:[%s2802 + $0x120] sm:$0xff]
        %v2989 = vld [vmem:[%s2802 + $0x128] sm:$0xff]
        %v2990 = vld [vmem:[%s2802 + $0x138] sm:$0xff]
        %v2991 = vld [vmem:[%s2802 + $0x140] sm:$0xff]
        %v2992 = vld [vmem:[%s2802 + $0x150] sm:$0xff]
        %v2993 = vld [vmem:[%s2802 + $0x158] sm:$0xff]
        %v2994 = vld [vmem:[%s2802 + $0x168] sm:$0xff]
        %v2995 = vld [vmem:[%s2802 + $0x170] sm:$0xff]
        %v2996 = vld [vmem:[%s2802 + $0x1] sm:$0xff]
        %v2997 = vld [vmem:[%s2802 + $0x9] sm:$0xff]
        %v2998 = vld [vmem:[%s2802 + $0x19] sm:$0xff]
        %v2999 = vld [vmem:[%s2802 + $0x21] sm:$0xff]
        %v3000 = vld [vmem:[%s2802 + $0x31] sm:$0xff]
        %v3001 = vld [vmem:[%s2802 + $0x39] sm:$0xff]
        %v3002 = vld [vmem:[%s2802 + $0x49] sm:$0xff]
        %v3003 = vld [vmem:[%s2802 + $0x51] sm:$0xff]
        %v3004 = vld [vmem:[%s2802 + $0x61] sm:$0xff]
        %v3005 = vld [vmem:[%s2802 + $0x69] sm:$0xff]
        %v3006 = vld [vmem:[%s2802 + $0x79] sm:$0xff]
        %v3007 = vld [vmem:[%s2802 + $0x81] sm:$0xff]
        %v3008 = vld [vmem:[%s2802 + $0x91] sm:$0xff]
        %v3009 = vld [vmem:[%s2802 + $0x99] sm:$0xff]
        %v3010 = vld [vmem:[%s2802 + $0xa9] sm:$0xff]
        %v3011 = vld [vmem:[%s2802 + $0xb1] sm:$0xff]
        %v3012 = vld [vmem:[%s2802 + $0xc1] sm:$0xff]
        %v3013 = vld [vmem:[%s2802 + $0xc9] sm:$0xff]
        %v3014 = vld [vmem:[%s2802 + $0xd9] sm:$0xff]
        %v3015 = vld [vmem:[%s2802 + $0xe1] sm:$0xff]
        %v3016 = vld [vmem:[%s2802 + $0xf1] sm:$0xff]
        %v3017 = vld [vmem:[%s2802 + $0xf9] sm:$0xff]
        %v3018 = vld [vmem:[%s2802 + $0x109] sm:$0xff]
        %v3019 = vld [vmem:[%s2802 + $0x111] sm:$0xff]
        %v3020 = vld [vmem:[%s2802 + $0x121] sm:$0xff]
        %v3021 = vld [vmem:[%s2802 + $0x129] sm:$0xff]
        %v3022 = vld [vmem:[%s2802 + $0x139] sm:$0xff]
        %v3023 = vld [vmem:[%s2802 + $0x141] sm:$0xff]
        %v3024 = vld [vmem:[%s2802 + $0x151] sm:$0xff]
        %v3025 = vld [vmem:[%s2802 + $0x159] sm:$0xff]
        %v3026 = vld [vmem:[%s2802 + $0x169] sm:$0xff]
        %v3027 = vld [vmem:[%s2802 + $0x171] sm:$0xff]
        %v3028 = vld [vmem:[%s2802 + $0x2] sm:$0xff]
        %v3029 = vld [vmem:[%s2802 + $0xa] sm:$0xff]
        %v3030 = vld [vmem:[%s2802 + $0x1a] sm:$0xff]
        %v3031 = vld [vmem:[%s2802 + $0x22] sm:$0xff]
        %v3032 = vld [vmem:[%s2802 + $0x32] sm:$0xff]
        %v3033 = vld [vmem:[%s2802 + $0x3a] sm:$0xff]
        %v3034 = vld [vmem:[%s2802 + $0x4a] sm:$0xff]
        %v3035 = vld [vmem:[%s2802 + $0x52] sm:$0xff]
        %v3036 = vld [vmem:[%s2802 + $0x62] sm:$0xff]
        %v3037 = vld [vmem:[%s2802 + $0x6a] sm:$0xff]
        %v3038 = vld [vmem:[%s2802 + $0x7a] sm:$0xff]
        %v3039 = vld [vmem:[%s2802 + $0x82] sm:$0xff]
        %v3040 = vld [vmem:[%s2802 + $0x92] sm:$0xff]
        %v3041 = vld [vmem:[%s2802 + $0x9a] sm:$0xff]
        %v3042 = vld [vmem:[%s2802 + $0xaa] sm:$0xff]
        %v3043 = vld [vmem:[%s2802 + $0xb2] sm:$0xff]
        %v3044 = vld [vmem:[%s2802 + $0xc2] sm:$0xff]
        %v3045 = vld [vmem:[%s2802 + $0xca] sm:$0xff]
        %v3046 = vld [vmem:[%s2802 + $0xda] sm:$0xff]
        %v3047 = vld [vmem:[%s2802 + $0xe2] sm:$0xff]
        %v3048 = vld [vmem:[%s2802 + $0xf2] sm:$0xff]
        %v3049 = vld [vmem:[%s2802 + $0xfa] sm:$0xff]
        %v3050 = vld [vmem:[%s2802 + $0x10a] sm:$0xff]
        %v3051 = vld [vmem:[%s2802 + $0x112] sm:$0xff]
        %v3052 = vld [vmem:[%s2802 + $0x122] sm:$0xff]
        %v3053 = vld [vmem:[%s2802 + $0x12a] sm:$0xff]
        %v3054 = vld [vmem:[%s2802 + $0x13a] sm:$0xff]
        %v3055 = vld [vmem:[%s2802 + $0x142] sm:$0xff]
        %v3056 = vld [vmem:[%s2802 + $0x152] sm:$0xff]
        %v3057 = vld [vmem:[%s2802 + $0x15a] sm:$0xff]
        %v3058 = vld [vmem:[%s2802 + $0x16a] sm:$0xff]
        %v3059 = vld [vmem:[%s2802 + $0x172] sm:$0xff]
        %s3060 = scalar_lea.vmem [#allocation3], 48
        %v3061 = vld [vmem:[%s3060] sm:$0xff]
        %v3062 = vld [vmem:[%s3060 + $0x8] sm:$0xff]
        %v3063 = vld [vmem:[%s3060 + $0x18] sm:$0xff]
        %v3064 = vld [vmem:[%s3060 + $0x20] sm:$0xff]
        %v3065 = vld [vmem:[%s3060 + $0x30] sm:$0xff]
        %v3066 = vld [vmem:[%s3060 + $0x38] sm:$0xff]
        %v3067 = vld [vmem:[%s3060 + $0x48] sm:$0xff]
        %v3068 = vld [vmem:[%s3060 + $0x50] sm:$0xff]
        %v3069 = vld [vmem:[%s3060 + $0x60] sm:$0xff]
        %v3070 = vld [vmem:[%s3060 + $0x68] sm:$0xff]
        %v3071 = vld [vmem:[%s3060 + $0x78] sm:$0xff]
        %v3072 = vld [vmem:[%s3060 + $0x80] sm:$0xff]
        %v3073 = vld [vmem:[%s3060 + $0x90] sm:$0xff]
        %v3074 = vld [vmem:[%s3060 + $0x98] sm:$0xff]
        %v3075 = vld [vmem:[%s3060 + $0xa8] sm:$0xff]
        %v3076 = vld [vmem:[%s3060 + $0xb0] sm:$0xff]
        %v3077 = vld [vmem:[%s3060 + $0xc0] sm:$0xff]
        %v3078 = vld [vmem:[%s3060 + $0xc8] sm:$0xff]
        %v3079 = vld [vmem:[%s3060 + $0xd8] sm:$0xff]
        %v3080 = vld [vmem:[%s3060 + $0xe0] sm:$0xff]
        %v3081 = vld [vmem:[%s3060 + $0xf0] sm:$0xff]
        %v3082 = vld [vmem:[%s3060 + $0xf8] sm:$0xff]
        %v3083 = vld [vmem:[%s3060 + $0x108] sm:$0xff]
        %v3084 = vld [vmem:[%s3060 + $0x110] sm:$0xff]
        %v3085 = vld [vmem:[%s3060 + $0x120] sm:$0xff]
        %v3086 = vld [vmem:[%s3060 + $0x128] sm:$0xff]
        %v3087 = vld [vmem:[%s3060 + $0x138] sm:$0xff]
        %v3088 = vld [vmem:[%s3060 + $0x140] sm:$0xff]
        %v3089 = vld [vmem:[%s3060 + $0x150] sm:$0xff]
        %v3090 = vld [vmem:[%s3060 + $0x158] sm:$0xff]
        %v3091 = vld [vmem:[%s3060 + $0x168] sm:$0xff]
        %v3092 = vld [vmem:[%s3060 + $0x170] sm:$0xff]
        %v3093 = vld [vmem:[%s3060 + $0x1] sm:$0xff]
        %v3094 = vld [vmem:[%s3060 + $0x9] sm:$0xff]
        %v3095 = vld [vmem:[%s3060 + $0x19] sm:$0xff]
        %v3096 = vld [vmem:[%s3060 + $0x21] sm:$0xff]
        %v3097 = vld [vmem:[%s3060 + $0x31] sm:$0xff]
        %v3098 = vld [vmem:[%s3060 + $0x39] sm:$0xff]
        %v3099 = vld [vmem:[%s3060 + $0x49] sm:$0xff]
        %v3100 = vld [vmem:[%s3060 + $0x51] sm:$0xff]
        %v3101 = vld [vmem:[%s3060 + $0x61] sm:$0xff]
        %v3102 = vld [vmem:[%s3060 + $0x69] sm:$0xff]
        %v3103 = vld [vmem:[%s3060 + $0x79] sm:$0xff]
        %v3104 = vld [vmem:[%s3060 + $0x81] sm:$0xff]
        %v3105 = vld [vmem:[%s3060 + $0x91] sm:$0xff]
        %v3106 = vld [vmem:[%s3060 + $0x99] sm:$0xff]
        %v3107 = vld [vmem:[%s3060 + $0xa9] sm:$0xff]
        %v3108 = vld [vmem:[%s3060 + $0xb1] sm:$0xff]
        %v3109 = vld [vmem:[%s3060 + $0xc1] sm:$0xff]
        %v3110 = vld [vmem:[%s3060 + $0xc9] sm:$0xff]
        %v3111 = vld [vmem:[%s3060 + $0xd9] sm:$0xff]
        %v3112 = vld [vmem:[%s3060 + $0xe1] sm:$0xff]
        %v3113 = vld [vmem:[%s3060 + $0xf1] sm:$0xff]
        %v3114 = vld [vmem:[%s3060 + $0xf9] sm:$0xff]
        %v3115 = vld [vmem:[%s3060 + $0x109] sm:$0xff]
        %v3116 = vld [vmem:[%s3060 + $0x111] sm:$0xff]
        %v3117 = vld [vmem:[%s3060 + $0x121] sm:$0xff]
        %v3118 = vld [vmem:[%s3060 + $0x129] sm:$0xff]
        %v3119 = vld [vmem:[%s3060 + $0x139] sm:$0xff]
        %v3120 = vld [vmem:[%s3060 + $0x141] sm:$0xff]
        %v3121 = vld [vmem:[%s3060 + $0x151] sm:$0xff]
        %v3122 = vld [vmem:[%s3060 + $0x159] sm:$0xff]
        %v3123 = vld [vmem:[%s3060 + $0x169] sm:$0xff]
        %v3124 = vld [vmem:[%s3060 + $0x171] sm:$0xff]
        %v3125 = vld [vmem:[%s3060 + $0x2] sm:$0xff]
        %v3126 = vld [vmem:[%s3060 + $0xa] sm:$0xff]
        %v3127 = vld [vmem:[%s3060 + $0x1a] sm:$0xff]
        %v3128 = vld [vmem:[%s3060 + $0x22] sm:$0xff]
        %v3129 = vld [vmem:[%s3060 + $0x32] sm:$0xff]
        %v3130 = vld [vmem:[%s3060 + $0x3a] sm:$0xff]
        %v3131 = vld [vmem:[%s3060 + $0x4a] sm:$0xff]
        %v3132 = vld [vmem:[%s3060 + $0x52] sm:$0xff]
        %v3133 = vld [vmem:[%s3060 + $0x62] sm:$0xff]
        %v3134 = vld [vmem:[%s3060 + $0x6a] sm:$0xff]
        %v3135 = vld [vmem:[%s3060 + $0x7a] sm:$0xff]
        %v3136 = vld [vmem:[%s3060 + $0x82] sm:$0xff]
        %v3137 = vld [vmem:[%s3060 + $0x92] sm:$0xff]
        %v3138 = vld [vmem:[%s3060 + $0x9a] sm:$0xff]
        %v3139 = vld [vmem:[%s3060 + $0xaa] sm:$0xff]
        %v3140 = vld [vmem:[%s3060 + $0xb2] sm:$0xff]
        %v3141 = vld [vmem:[%s3060 + $0xc2] sm:$0xff]
        %v3142 = vld [vmem:[%s3060 + $0xca] sm:$0xff]
        %v3143 = vld [vmem:[%s3060 + $0xda] sm:$0xff]
        %v3144 = vld [vmem:[%s3060 + $0xe2] sm:$0xff]
        %v3145 = vld [vmem:[%s3060 + $0xf2] sm:$0xff]
        %v3146 = vld [vmem:[%s3060 + $0xfa] sm:$0xff]
        %v3147 = vld [vmem:[%s3060 + $0x10a] sm:$0xff]
        %v3148 = vld [vmem:[%s3060 + $0x112] sm:$0xff]
        %v3149 = vld [vmem:[%s3060 + $0x122] sm:$0xff]
        %v3150 = vld [vmem:[%s3060 + $0x12a] sm:$0xff]
        %v3151 = vld [vmem:[%s3060 + $0x13a] sm:$0xff]
        %v3152 = vld [vmem:[%s3060 + $0x142] sm:$0xff]
        %v3153 = vld [vmem:[%s3060 + $0x152] sm:$0xff]
        %v3154 = vld [vmem:[%s3060 + $0x15a] sm:$0xff]
        %v3155 = vld [vmem:[%s3060 + $0x16a] sm:$0xff]
        %v3156 = vld [vmem:[%s3060 + $0x172] sm:$0xff]
        %3189 = vrot.lane.b32.xlu0 %v2900, 32
        %v3190 = vpop.permute.xlu0 %3189
        %3191 = vrot.lane.b32.xlu0 %v2901, 32
        %v3192 = vpop.permute.xlu0 %3191
        %3193 = vrot.lane.b32.xlu0 %v2902, 32
        %v3194 = vpop.permute.xlu0 %3193
        %3195 = vrot.lane.b32.xlu0 %v2903, 32
        %v3196 = vpop.permute.xlu0 %3195
        %3197 = vrot.lane.b32.xlu0 %v2904, 32
        %v3198 = vpop.permute.xlu0 %3197
        %3199 = vrot.lane.b32.xlu0 %v2905, 32
        %v3200 = vpop.permute.xlu0 %3199
        %3201 = vrot.lane.b32.xlu0 %v2906, 32
        %v3202 = vpop.permute.xlu0 %3201
        %3203 = vrot.lane.b32.xlu0 %v2907, 32
        %v3204 = vpop.permute.xlu0 %3203
        %3205 = vrot.lane.b32.xlu0 %v2908, 32
        %v3206 = vpop.permute.xlu0 %3205
        %3207 = vrot.lane.b32.xlu0 %v2909, 32
        %v3208 = vpop.permute.xlu0 %3207
        %3209 = vrot.lane.b32.xlu0 %v2910, 32
        %v3210 = vpop.permute.xlu0 %3209
        %3211 = vrot.lane.b32.xlu0 %v2911, 32
        %v3212 = vpop.permute.xlu0 %3211
        %3213 = vrot.lane.b32.xlu0 %v2912, 32
        %v3214 = vpop.permute.xlu0 %3213
        %3215 = vrot.lane.b32.xlu0 %v2913, 32
        %v3216 = vpop.permute.xlu0 %3215
        %3217 = vrot.lane.b32.xlu0 %v2914, 32
        %v3218 = vpop.permute.xlu0 %3217
        %3219 = vrot.lane.b32.xlu0 %v2915, 32
        %v3220 = vpop.permute.xlu0 %3219
        %3221 = vrot.lane.b32.xlu0 %v2916, 32
        %v3222 = vpop.permute.xlu0 %3221
        %3223 = vrot.lane.b32.xlu0 %v2917, 32
        %v3224 = vpop.permute.xlu0 %3223
        %3225 = vrot.lane.b32.xlu0 %v2918, 32
        %v3226 = vpop.permute.xlu0 %3225
        %3227 = vrot.lane.b32.xlu0 %v2919, 32
        %v3228 = vpop.permute.xlu0 %3227
        %3229 = vrot.lane.b32.xlu0 %v2920, 32
        %v3230 = vpop.permute.xlu0 %3229
        %3231 = vrot.lane.b32.xlu0 %v2921, 32
        %v3232 = vpop.permute.xlu0 %3231
        %3233 = vrot.lane.b32.xlu0 %v2922, 32
        %v3234 = vpop.permute.xlu0 %3233
        %3235 = vrot.lane.b32.xlu0 %v2923, 32
        %v3236 = vpop.permute.xlu0 %3235
        %3237 = vrot.lane.b32.xlu0 %v2924, 32
        %v3238 = vpop.permute.xlu0 %3237
        %3239 = vrot.lane.b32.xlu0 %v2925, 32
        %v3240 = vpop.permute.xlu0 %3239
        %3241 = vrot.lane.b32.xlu0 %v2926, 32
        %v3242 = vpop.permute.xlu0 %3241
        %3243 = vrot.lane.b32.xlu0 %v2927, 32
        %v3244 = vpop.permute.xlu0 %3243
        %3245 = vrot.lane.b32.xlu0 %v2928, 32
        %v3246 = vpop.permute.xlu0 %3245
        %3247 = vrot.lane.b32.xlu0 %v2929, 32
        %v3248 = vpop.permute.xlu0 %3247
        %3249 = vrot.lane.b32.xlu0 %v2930, 32
        %v3250 = vpop.permute.xlu0 %3249
        %3251 = vrot.lane.b32.xlu0 %v2931, 32
        %v3252 = vpop.permute.xlu0 %3251
        %3317 = vrot.lane.b32.xlu0 %v2932, 64
        %v3318 = vpop.permute.xlu0 %3317
        %3319 = vrot.lane.b32.xlu0 %v2933, 64
        %v3320 = vpop.permute.xlu0 %3319
        %3321 = vrot.lane.b32.xlu0 %v2934, 64
        %v3322 = vpop.permute.xlu0 %3321
        %3323 = vrot.lane.b32.xlu0 %v2935, 64
        %v3324 = vpop.permute.xlu0 %3323
        %3325 = vrot.lane.b32.xlu0 %v2936, 64
        %v3326 = vpop.permute.xlu0 %3325
        %3327 = vrot.lane.b32.xlu0 %v2937, 64
        %v3328 = vpop.permute.xlu0 %3327
        %3329 = vrot.lane.b32.xlu0 %v2938, 64
        %v3330 = vpop.permute.xlu0 %3329
        %3331 = vrot.lane.b32.xlu0 %v2939, 64
        %v3332 = vpop.permute.xlu0 %3331
        %3333 = vrot.lane.b32.xlu0 %v2940, 64
        %v3334 = vpop.permute.xlu0 %3333
        %3335 = vrot.lane.b32.xlu0 %v2941, 64
        %v3336 = vpop.permute.xlu0 %3335
        %3337 = vrot.lane.b32.xlu0 %v2942, 64
        %v3338 = vpop.permute.xlu0 %3337
        %3339 = vrot.lane.b32.xlu0 %v2943, 64
        %v3340 = vpop.permute.xlu0 %3339
        %3341 = vrot.lane.b32.xlu0 %v2944, 64
        %v3342 = vpop.permute.xlu0 %3341
        %3343 = vrot.lane.b32.xlu0 %v2945, 64
        %v3344 = vpop.permute.xlu0 %3343
        %3345 = vrot.lane.b32.xlu0 %v2946, 64
        %v3346 = vpop.permute.xlu0 %3345
        %3347 = vrot.lane.b32.xlu0 %v2947, 64
        %v3348 = vpop.permute.xlu0 %3347
        %3349 = vrot.lane.b32.xlu0 %v2948, 64
        %v3350 = vpop.permute.xlu0 %3349
        %3351 = vrot.lane.b32.xlu0 %v2949, 64
        %v3352 = vpop.permute.xlu0 %3351
        %3353 = vrot.lane.b32.xlu0 %v2950, 64
        %v3354 = vpop.permute.xlu0 %3353
        %3355 = vrot.lane.b32.xlu0 %v2951, 64
        %v3356 = vpop.permute.xlu0 %3355
        %3357 = vrot.lane.b32.xlu0 %v2952, 64
        %v3358 = vpop.permute.xlu0 %3357
        %3359 = vrot.lane.b32.xlu0 %v2953, 64
        %v3360 = vpop.permute.xlu0 %3359
        %3361 = vrot.lane.b32.xlu0 %v2954, 64
        %v3362 = vpop.permute.xlu0 %3361
        %3363 = vrot.lane.b32.xlu0 %v2955, 64
        %v3364 = vpop.permute.xlu0 %3363
        %3365 = vrot.lane.b32.xlu0 %v2956, 64
        %v3366 = vpop.permute.xlu0 %3365
        %3367 = vrot.lane.b32.xlu0 %v2957, 64
        %v3368 = vpop.permute.xlu0 %3367
        %3369 = vrot.lane.b32.xlu0 %v2958, 64
        %v3370 = vpop.permute.xlu0 %3369
        %3371 = vrot.lane.b32.xlu0 %v2959, 64
        %v3372 = vpop.permute.xlu0 %3371
        %3373 = vrot.lane.b32.xlu0 %v2960, 64
        %v3374 = vpop.permute.xlu0 %3373
        %3375 = vrot.lane.b32.xlu0 %v2961, 64
        %v3376 = vpop.permute.xlu0 %3375
        %3377 = vrot.lane.b32.xlu0 %v2962, 64
        %v3378 = vpop.permute.xlu0 %3377
        %3379 = vrot.lane.b32.xlu0 %v2963, 64
        %v3380 = vpop.permute.xlu0 %3379
        %3445 = vrot.lane.b32.xlu0 %v2964, 96
        %v3446 = vpop.permute.xlu0 %3445
        %3447 = vrot.lane.b32.xlu0 %v2965, 96
        %v3448 = vpop.permute.xlu0 %3447
        %3449 = vrot.lane.b32.xlu0 %v2966, 96
        %v3450 = vpop.permute.xlu0 %3449
        %3451 = vrot.lane.b32.xlu0 %v2967, 96
        %v3452 = vpop.permute.xlu0 %3451
        %3453 = vrot.lane.b32.xlu0 %v2968, 96
        %v3454 = vpop.permute.xlu0 %3453
        %3455 = vrot.lane.b32.xlu0 %v2969, 96
        %v3456 = vpop.permute.xlu0 %3455
        %3457 = vrot.lane.b32.xlu0 %v2970, 96
        %v3458 = vpop.permute.xlu0 %3457
        %3459 = vrot.lane.b32.xlu0 %v2971, 96
        %v3460 = vpop.permute.xlu0 %3459
        %3461 = vrot.lane.b32.xlu0 %v2972, 96
        %v3462 = vpop.permute.xlu0 %3461
        %3463 = vrot.lane.b32.xlu0 %v2973, 96
        %v3464 = vpop.permute.xlu0 %3463
        %3465 = vrot.lane.b32.xlu0 %v2974, 96
        %v3466 = vpop.permute.xlu0 %3465
        %3467 = vrot.lane.b32.xlu0 %v2975, 96
        %v3468 = vpop.permute.xlu0 %3467
        %3469 = vrot.lane.b32.xlu0 %v2976, 96
        %v3470 = vpop.permute.xlu0 %3469
        %3471 = vrot.lane.b32.xlu0 %v2977, 96
        %v3472 = vpop.permute.xlu0 %3471
        %3473 = vrot.lane.b32.xlu0 %v2978, 96
        %v3474 = vpop.permute.xlu0 %3473
        %3475 = vrot.lane.b32.xlu0 %v2979, 96
        %v3476 = vpop.permute.xlu0 %3475
        %3477 = vrot.lane.b32.xlu0 %v2980, 96
        %v3478 = vpop.permute.xlu0 %3477
        %3479 = vrot.lane.b32.xlu0 %v2981, 96
        %v3480 = vpop.permute.xlu0 %3479
        %3481 = vrot.lane.b32.xlu0 %v2982, 96
        %v3482 = vpop.permute.xlu0 %3481
        %3483 = vrot.lane.b32.xlu0 %v2983, 96
        %v3484 = vpop.permute.xlu0 %3483
        %3485 = vrot.lane.b32.xlu0 %v2984, 96
        %v3486 = vpop.permute.xlu0 %3485
        %3487 = vrot.lane.b32.xlu0 %v2985, 96
        %v3488 = vpop.permute.xlu0 %3487
        %3489 = vrot.lane.b32.xlu0 %v2986, 96
        %v3490 = vpop.permute.xlu0 %3489
        %3491 = vrot.lane.b32.xlu0 %v2987, 96
        %v3492 = vpop.permute.xlu0 %3491
        %3493 = vrot.lane.b32.xlu0 %v2988, 96
        %v3494 = vpop.permute.xlu0 %3493
        %3495 = vrot.lane.b32.xlu0 %v2989, 96
        %v3496 = vpop.permute.xlu0 %3495
        %3497 = vrot.lane.b32.xlu0 %v2990, 96
        %v3498 = vpop.permute.xlu0 %3497
        %3499 = vrot.lane.b32.xlu0 %v2991, 96
        %v3500 = vpop.permute.xlu0 %3499
        %3501 = vrot.lane.b32.xlu0 %v2992, 96
        %v3502 = vpop.permute.xlu0 %3501
        %3503 = vrot.lane.b32.xlu0 %v2993, 96
        %v3504 = vpop.permute.xlu0 %3503
        %3505 = vrot.lane.b32.xlu0 %v2994, 96
        %v3506 = vpop.permute.xlu0 %3505
        %3507 = vrot.lane.b32.xlu0 %v2995, 96
        %v3508 = vpop.permute.xlu0 %3507
        %3573 = vrot.lane.b32.xlu0 %v3028, 32
        %v3574 = vpop.permute.xlu0 %3573
        %3575 = vrot.lane.b32.xlu0 %v3029, 32
        %v3576 = vpop.permute.xlu0 %3575
        %3577 = vrot.lane.b32.xlu0 %v3030, 32
        %v3578 = vpop.permute.xlu0 %3577
        %3579 = vrot.lane.b32.xlu0 %v3031, 32
        %v3580 = vpop.permute.xlu0 %3579
        %3581 = vrot.lane.b32.xlu0 %v3032, 32
        %v3582 = vpop.permute.xlu0 %3581
        %3583 = vrot.lane.b32.xlu0 %v3033, 32
        %v3584 = vpop.permute.xlu0 %3583
        %3585 = vrot.lane.b32.xlu0 %v3034, 32
        %v3586 = vpop.permute.xlu0 %3585
        %3587 = vrot.lane.b32.xlu0 %v3035, 32
        %v3588 = vpop.permute.xlu0 %3587
        %3589 = vrot.lane.b32.xlu0 %v3036, 32
        %v3590 = vpop.permute.xlu0 %3589
        %3591 = vrot.lane.b32.xlu0 %v3037, 32
        %v3592 = vpop.permute.xlu0 %3591
        %3593 = vrot.lane.b32.xlu0 %v3038, 32
        %v3594 = vpop.permute.xlu0 %3593
        %3595 = vrot.lane.b32.xlu0 %v3039, 32
        %v3596 = vpop.permute.xlu0 %3595
        %3597 = vrot.lane.b32.xlu0 %v3040, 32
        %v3598 = vpop.permute.xlu0 %3597
        %3599 = vrot.lane.b32.xlu0 %v3041, 32
        %v3600 = vpop.permute.xlu0 %3599
        %3601 = vrot.lane.b32.xlu0 %v3042, 32
        %v3602 = vpop.permute.xlu0 %3601
        %3603 = vrot.lane.b32.xlu0 %v3043, 32
        %v3604 = vpop.permute.xlu0 %3603
        %3605 = vrot.lane.b32.xlu0 %v3044, 32
        %v3606 = vpop.permute.xlu0 %3605
        %3607 = vrot.lane.b32.xlu0 %v3045, 32
        %v3608 = vpop.permute.xlu0 %3607
        %3609 = vrot.lane.b32.xlu0 %v3046, 32
        %v3610 = vpop.permute.xlu0 %3609
        %3611 = vrot.lane.b32.xlu0 %v3047, 32
        %v3612 = vpop.permute.xlu0 %3611
        %3613 = vrot.lane.b32.xlu0 %v3048, 32
        %v3614 = vpop.permute.xlu0 %3613
        %3615 = vrot.lane.b32.xlu0 %v3049, 32
        %v3616 = vpop.permute.xlu0 %3615
        %3617 = vrot.lane.b32.xlu0 %v3050, 32
        %v3618 = vpop.permute.xlu0 %3617
        %3619 = vrot.lane.b32.xlu0 %v3051, 32
        %v3620 = vpop.permute.xlu0 %3619
        %3621 = vrot.lane.b32.xlu0 %v3052, 32
        %v3622 = vpop.permute.xlu0 %3621
        %3623 = vrot.lane.b32.xlu0 %v3053, 32
        %v3624 = vpop.permute.xlu0 %3623
        %3625 = vrot.lane.b32.xlu0 %v3054, 32
        %v3626 = vpop.permute.xlu0 %3625
        %3627 = vrot.lane.b32.xlu0 %v3055, 32
        %v3628 = vpop.permute.xlu0 %3627
        %3629 = vrot.lane.b32.xlu0 %v3056, 32
        %v3630 = vpop.permute.xlu0 %3629
        %3631 = vrot.lane.b32.xlu0 %v3057, 32
        %v3632 = vpop.permute.xlu0 %3631
        %3633 = vrot.lane.b32.xlu0 %v3058, 32
        %v3634 = vpop.permute.xlu0 %3633
        %3635 = vrot.lane.b32.xlu0 %v3059, 32
        %v3636 = vpop.permute.xlu0 %3635
        %3701 = vrot.lane.b32.xlu0 %v3061, 64
        %v3702 = vpop.permute.xlu0 %3701
        %3703 = vrot.lane.b32.xlu0 %v3062, 64
        %v3704 = vpop.permute.xlu0 %3703
        %3705 = vrot.lane.b32.xlu0 %v3063, 64
        %v3706 = vpop.permute.xlu0 %3705
        %3707 = vrot.lane.b32.xlu0 %v3064, 64
        %v3708 = vpop.permute.xlu0 %3707
        %3709 = vrot.lane.b32.xlu0 %v3065, 64
        %v3710 = vpop.permute.xlu0 %3709
        %3711 = vrot.lane.b32.xlu0 %v3066, 64
        %v3712 = vpop.permute.xlu0 %3711
        %3713 = vrot.lane.b32.xlu0 %v3067, 64
        %v3714 = vpop.permute.xlu0 %3713
        %3715 = vrot.lane.b32.xlu0 %v3068, 64
        %v3716 = vpop.permute.xlu0 %3715
        %3717 = vrot.lane.b32.xlu0 %v3069, 64
        %v3718 = vpop.permute.xlu0 %3717
        %3719 = vrot.lane.b32.xlu0 %v3070, 64
        %v3720 = vpop.permute.xlu0 %3719
        %3721 = vrot.lane.b32.xlu0 %v3071, 64
        %v3722 = vpop.permute.xlu0 %3721
        %3723 = vrot.lane.b32.xlu0 %v3072, 64
        %v3724 = vpop.permute.xlu0 %3723
        %3725 = vrot.lane.b32.xlu0 %v3073, 64
        %v3726 = vpop.permute.xlu0 %3725
        %3727 = vrot.lane.b32.xlu0 %v3074, 64
        %v3728 = vpop.permute.xlu0 %3727
        %3729 = vrot.lane.b32.xlu0 %v3075, 64
        %v3730 = vpop.permute.xlu0 %3729
        %3731 = vrot.lane.b32.xlu0 %v3076, 64
        %v3732 = vpop.permute.xlu0 %3731
        %3733 = vrot.lane.b32.xlu0 %v3077, 64
        %v3734 = vpop.permute.xlu0 %3733
        %3735 = vrot.lane.b32.xlu0 %v3078, 64
        %v3736 = vpop.permute.xlu0 %3735
        %3737 = vrot.lane.b32.xlu0 %v3079, 64
        %v3738 = vpop.permute.xlu0 %3737
        %3739 = vrot.lane.b32.xlu0 %v3080, 64
        %v3740 = vpop.permute.xlu0 %3739
        %3741 = vrot.lane.b32.xlu0 %v3081, 64
        %v3742 = vpop.permute.xlu0 %3741
        %3743 = vrot.lane.b32.xlu0 %v3082, 64
        %v3744 = vpop.permute.xlu0 %3743
        %3745 = vrot.lane.b32.xlu0 %v3083, 64
        %v3746 = vpop.permute.xlu0 %3745
        %3747 = vrot.lane.b32.xlu0 %v3084, 64
        %v3748 = vpop.permute.xlu0 %3747
        %3749 = vrot.lane.b32.xlu0 %v3085, 64
        %v3750 = vpop.permute.xlu0 %3749
        %3751 = vrot.lane.b32.xlu0 %v3086, 64
        %v3752 = vpop.permute.xlu0 %3751
        %3753 = vrot.lane.b32.xlu0 %v3087, 64
        %v3754 = vpop.permute.xlu0 %3753
        %3755 = vrot.lane.b32.xlu0 %v3088, 64
        %v3756 = vpop.permute.xlu0 %3755
        %3757 = vrot.lane.b32.xlu0 %v3089, 64
        %v3758 = vpop.permute.xlu0 %3757
        %3759 = vrot.lane.b32.xlu0 %v3090, 64
        %v3760 = vpop.permute.xlu0 %3759
        %3761 = vrot.lane.b32.xlu0 %v3091, 64
        %v3762 = vpop.permute.xlu0 %3761
        %3763 = vrot.lane.b32.xlu0 %v3092, 64
        %v3764 = vpop.permute.xlu0 %3763
        %3829 = vrot.lane.b32.xlu0 %v3093, 96
        %v3830 = vpop.permute.xlu0 %3829
        %3831 = vrot.lane.b32.xlu0 %v3094, 96
        %v3832 = vpop.permute.xlu0 %3831
        %3833 = vrot.lane.b32.xlu0 %v3095, 96
        %v3834 = vpop.permute.xlu0 %3833
        %3835 = vrot.lane.b32.xlu0 %v3096, 96
        %v3836 = vpop.permute.xlu0 %3835
        %3837 = vrot.lane.b32.xlu0 %v3097, 96
        %v3838 = vpop.permute.xlu0 %3837
        %3839 = vrot.lane.b32.xlu0 %v3098, 96
        %v3840 = vpop.permute.xlu0 %3839
        %3841 = vrot.lane.b32.xlu0 %v3099, 96
        %v3842 = vpop.permute.xlu0 %3841
        %3843 = vrot.lane.b32.xlu0 %v3100, 96
        %v3844 = vpop.permute.xlu0 %3843
        %3845 = vrot.lane.b32.xlu0 %v3101, 96
        %v3846 = vpop.permute.xlu0 %3845
        %3847 = vrot.lane.b32.xlu0 %v3102, 96
        %v3848 = vpop.permute.xlu0 %3847
        %3849 = vrot.lane.b32.xlu0 %v3103, 96
        %v3850 = vpop.permute.xlu0 %3849
        %3851 = vrot.lane.b32.xlu0 %v3104, 96
        %v3852 = vpop.permute.xlu0 %3851
        %3853 = vrot.lane.b32.xlu0 %v3105, 96
        %v3854 = vpop.permute.xlu0 %3853
        %3855 = vrot.lane.b32.xlu0 %v3106, 96
        %v3856 = vpop.permute.xlu0 %3855
        %3857 = vrot.lane.b32.xlu0 %v3107, 96
        %v3858 = vpop.permute.xlu0 %3857
        %3859 = vrot.lane.b32.xlu0 %v3108, 96
        %v3860 = vpop.permute.xlu0 %3859
        %3861 = vrot.lane.b32.xlu0 %v3109, 96
        %v3862 = vpop.permute.xlu0 %3861
        %3863 = vrot.lane.b32.xlu0 %v3110, 96
        %v3864 = vpop.permute.xlu0 %3863
        %3865 = vrot.lane.b32.xlu0 %v3111, 96
        %v3866 = vpop.permute.xlu0 %3865
        %3867 = vrot.lane.b32.xlu0 %v3112, 96
        %v3868 = vpop.permute.xlu0 %3867
        %3869 = vrot.lane.b32.xlu0 %v3113, 96
        %v3870 = vpop.permute.xlu0 %3869
        %3871 = vrot.lane.b32.xlu0 %v3114, 96
        %v3872 = vpop.permute.xlu0 %3871
        %3873 = vrot.lane.b32.xlu0 %v3115, 96
        %v3874 = vpop.permute.xlu0 %3873
        %3875 = vrot.lane.b32.xlu0 %v3116, 96
        %v3876 = vpop.permute.xlu0 %3875
        %3877 = vrot.lane.b32.xlu0 %v3117, 96
        %v3878 = vpop.permute.xlu0 %3877
        %3879 = vrot.lane.b32.xlu0 %v3118, 96
        %v3880 = vpop.permute.xlu0 %3879
        %3881 = vrot.lane.b32.xlu0 %v3119, 96
        %v3882 = vpop.permute.xlu0 %3881
        %3883 = vrot.lane.b32.xlu0 %v3120, 96
        %v3884 = vpop.permute.xlu0 %3883
        %3885 = vrot.lane.b32.xlu0 %v3121, 96
        %v3886 = vpop.permute.xlu0 %3885
        %3887 = vrot.lane.b32.xlu0 %v3122, 96
        %v3888 = vpop.permute.xlu0 %3887
        %3889 = vrot.lane.b32.xlu0 %v3123, 96
        %v3890 = vpop.permute.xlu0 %3889
        %3891 = vrot.lane.b32.xlu0 %v3124, 96
        %v3892 = vpop.permute.xlu0 %3891
        %v3925 = vsel %vm2793, %v2868, %v3190
        %v3926 = vsel %vm2793, %v2869, %v3192
        %v3927 = vsel %vm2793, %v2870, %v3194
        %v3928 = vsel %vm2793, %v2871, %v3196
        %v3929 = vsel %vm2793, %v2872, %v3198
        %v3930 = vsel %vm2793, %v2873, %v3200
        %v3931 = vsel %vm2793, %v2874, %v3202
        %v3932 = vsel %vm2793, %v2875, %v3204
        %v3933 = vsel %vm2793, %v2876, %v3206
        %v3934 = vsel %vm2793, %v2877, %v3208
        %v3935 = vsel %vm2793, %v2878, %v3210
        %v3936 = vsel %vm2793, %v2879, %v3212
        %v3937 = vsel %vm2793, %v2880, %v3214
        %v3938 = vsel %vm2793, %v2881, %v3216
        %v3939 = vsel %vm2793, %v2882, %v3218
        %v3940 = vsel %vm2793, %v2883, %v3220
        %v3941 = vsel %vm2793, %v2884, %v3222
        %v3942 = vsel %vm2793, %v2885, %v3224
        %v3943 = vsel %vm2793, %v2886, %v3226
        %v3944 = vsel %vm2793, %v2887, %v3228
        %v3945 = vsel %vm2793, %v2888, %v3230
        %v3946 = vsel %vm2793, %v2889, %v3232
        %v3947 = vsel %vm2793, %v2890, %v3234
        %v3948 = vsel %vm2793, %v2891, %v3236
        %v3949 = vsel %vm2793, %v2892, %v3238
        %v3950 = vsel %vm2793, %v2893, %v3240
        %v3951 = vsel %vm2793, %v2894, %v3242
        %v3952 = vsel %vm2793, %v2895, %v3244
        %v3953 = vsel %vm2793, %v2896, %v3246
        %v3954 = vsel %vm2793, %v2897, %v3248
        %v3955 = vsel %vm2793, %v2898, %v3250
        %v3956 = vsel %vm2793, %v2899, %v3252
        %vm3957 = vcmask 523264
        %v3958 = vsel %vm3957, %v3925, %v3318
        %v3959 = vsel %vm3957, %v3926, %v3320
        %v3960 = vsel %vm3957, %v3927, %v3322
        %v3961 = vsel %vm3957, %v3928, %v3324
        %v3962 = vsel %vm3957, %v3929, %v3326
        %v3963 = vsel %vm3957, %v3930, %v3328
        %v3964 = vsel %vm3957, %v3931, %v3330
        %v3965 = vsel %vm3957, %v3932, %v3332
        %v3966 = vsel %vm3957, %v3933, %v3334
        %v3967 = vsel %vm3957, %v3934, %v3336
        %v3968 = vsel %vm3957, %v3935, %v3338
        %v3969 = vsel %vm3957, %v3936, %v3340
        %v3970 = vsel %vm3957, %v3937, %v3342
        %v3971 = vsel %vm3957, %v3938, %v3344
        %v3972 = vsel %vm3957, %v3939, %v3346
        %v3973 = vsel %vm3957, %v3940, %v3348
        %v3974 = vsel %vm3957, %v3941, %v3350
        %v3975 = vsel %vm3957, %v3942, %v3352
        %v3976 = vsel %vm3957, %v3943, %v3354
        %v3977 = vsel %vm3957, %v3944, %v3356
        %v3978 = vsel %vm3957, %v3945, %v3358
        %v3979 = vsel %vm3957, %v3946, %v3360
        %v3980 = vsel %vm3957, %v3947, %v3362
        %v3981 = vsel %vm3957, %v3948, %v3364
        %v3982 = vsel %vm3957, %v3949, %v3366
        %v3983 = vsel %vm3957, %v3950, %v3368
        %v3984 = vsel %vm3957, %v3951, %v3370
        %v3985 = vsel %vm3957, %v3952, %v3372
        %v3986 = vsel %vm3957, %v3953, %v3374
        %v3987 = vsel %vm3957, %v3954, %v3376
        %v3988 = vsel %vm3957, %v3955, %v3378
        %v3989 = vsel %vm3957, %v3956, %v3380
        %vm3990 = vcmask 785408
        %v3991 = vsel %vm3990, %v3958, %v3446
        %v3992 = vsel %vm3990, %v3959, %v3448
        %v3993 = vsel %vm3990, %v3960, %v3450
        %v3994 = vsel %vm3990, %v3961, %v3452
        %v3995 = vsel %vm3990, %v3962, %v3454
        %v3996 = vsel %vm3990, %v3963, %v3456
        %v3997 = vsel %vm3990, %v3964, %v3458
        %v3998 = vsel %vm3990, %v3965, %v3460
        %v3999 = vsel %vm3990, %v3966, %v3462
        %v4000 = vsel %vm3990, %v3967, %v3464
        %v4001 = vsel %vm3990, %v3968, %v3466
        %v4002 = vsel %vm3990, %v3969, %v3468
        %v4003 = vsel %vm3990, %v3970, %v3470
        %v4004 = vsel %vm3990, %v3971, %v3472
        %v4005 = vsel %vm3990, %v3972, %v3474
        %v4006 = vsel %vm3990, %v3973, %v3476
        %v4007 = vsel %vm3990, %v3974, %v3478
        %v4008 = vsel %vm3990, %v3975, %v3480
        %v4009 = vsel %vm3990, %v3976, %v3482
        %v4010 = vsel %vm3990, %v3977, %v3484
        %v4011 = vsel %vm3990, %v3978, %v3486
        %v4012 = vsel %vm3990, %v3979, %v3488
        %v4013 = vsel %vm3990, %v3980, %v3490
        %v4014 = vsel %vm3990, %v3981, %v3492
        %v4015 = vsel %vm3990, %v3982, %v3494
        %v4016 = vsel %vm3990, %v3983, %v3496
        %v4017 = vsel %vm3990, %v3984, %v3498
        %v4018 = vsel %vm3990, %v3985, %v3500
        %v4019 = vsel %vm3990, %v3986, %v3502
        %v4020 = vsel %vm3990, %v3987, %v3504
        %v4021 = vsel %vm3990, %v3988, %v3506
        %v4022 = vsel %vm3990, %v3989, %v3508
        %v4023 = vsel %vm2793, %v2996, %v3574
        %v4024 = vsel %vm2793, %v2997, %v3576
        %v4025 = vsel %vm2793, %v2998, %v3578
        %v4026 = vsel %vm2793, %v2999, %v3580
        %v4027 = vsel %vm2793, %v3000, %v3582
        %v4028 = vsel %vm2793, %v3001, %v3584
        %v4029 = vsel %vm2793, %v3002, %v3586
        %v4030 = vsel %vm2793, %v3003, %v3588
        %v4031 = vsel %vm2793, %v3004, %v3590
        %v4032 = vsel %vm2793, %v3005, %v3592
        %v4033 = vsel %vm2793, %v3006, %v3594
        %v4034 = vsel %vm2793, %v3007, %v3596
        %v4035 = vsel %vm2793, %v3008, %v3598
        %v4036 = vsel %vm2793, %v3009, %v3600
        %v4037 = vsel %vm2793, %v3010, %v3602
        %v4038 = vsel %vm2793, %v3011, %v3604
        %v4039 = vsel %vm2793, %v3012, %v3606
        %v4040 = vsel %vm2793, %v3013, %v3608
        %v4041 = vsel %vm2793, %v3014, %v3610
        %v4042 = vsel %vm2793, %v3015, %v3612
        %v4043 = vsel %vm2793, %v3016, %v3614
        %v4044 = vsel %vm2793, %v3017, %v3616
        %v4045 = vsel %vm2793, %v3018, %v3618
        %v4046 = vsel %vm2793, %v3019, %v3620
        %v4047 = vsel %vm2793, %v3020, %v3622
        %v4048 = vsel %vm2793, %v3021, %v3624
        %v4049 = vsel %vm2793, %v3022, %v3626
        %v4050 = vsel %vm2793, %v3023, %v3628
        %v4051 = vsel %vm2793, %v3024, %v3630
        %v4052 = vsel %vm2793, %v3025, %v3632
        %v4053 = vsel %vm2793, %v3026, %v3634
        %v4054 = vsel %vm2793, %v3027, %v3636
        %v4055 = vsel %vm3957, %v4023, %v3702
        %v4056 = vsel %vm3957, %v4024, %v3704
        %v4057 = vsel %vm3957, %v4025, %v3706
        %v4058 = vsel %vm3957, %v4026, %v3708
        %v4059 = vsel %vm3957, %v4027, %v3710
        %v4060 = vsel %vm3957, %v4028, %v3712
        %v4061 = vsel %vm3957, %v4029, %v3714
        %v4062 = vsel %vm3957, %v4030, %v3716
        %v4063 = vsel %vm3957, %v4031, %v3718
        %v4064 = vsel %vm3957, %v4032, %v3720
        %v4065 = vsel %vm3957, %v4033, %v3722
        %v4066 = vsel %vm3957, %v4034, %v3724
        %v4067 = vsel %vm3957, %v4035, %v3726
        %v4068 = vsel %vm3957, %v4036, %v3728
        %v4069 = vsel %vm3957, %v4037, %v3730
        %v4070 = vsel %vm3957, %v4038, %v3732
        %v4071 = vsel %vm3957, %v4039, %v3734
        %v4072 = vsel %vm3957, %v4040, %v3736
        %v4073 = vsel %vm3957, %v4041, %v3738
        %v4074 = vsel %vm3957, %v4042, %v3740
        %v4075 = vsel %vm3957, %v4043, %v3742
        %v4076 = vsel %vm3957, %v4044, %v3744
        %v4077 = vsel %vm3957, %v4045, %v3746
        %v4078 = vsel %vm3957, %v4046, %v3748
        %v4079 = vsel %vm3957, %v4047, %v3750
        %v4080 = vsel %vm3957, %v4048, %v3752
        %v4081 = vsel %vm3957, %v4049, %v3754
        %v4082 = vsel %vm3957, %v4050, %v3756
        %v4083 = vsel %vm3957, %v4051, %v3758
        %v4084 = vsel %vm3957, %v4052, %v3760
        %v4085 = vsel %vm3957, %v4053, %v3762
        %v4086 = vsel %vm3957, %v4054, %v3764
        %v4087 = vsel %vm3990, %v4055, %v3830
        %v4088 = vsel %vm3990, %v4056, %v3832
        %v4089 = vsel %vm3990, %v4057, %v3834
        %v4090 = vsel %vm3990, %v4058, %v3836
        %v4091 = vsel %vm3990, %v4059, %v3838
        %v4092 = vsel %vm3990, %v4060, %v3840
        %v4093 = vsel %vm3990, %v4061, %v3842
        %v4094 = vsel %vm3990, %v4062, %v3844
        %v4095 = vsel %vm3990, %v4063, %v3846
        %v4096 = vsel %vm3990, %v4064, %v3848
        %v4097 = vsel %vm3990, %v4065, %v3850
        %v4098 = vsel %vm3990, %v4066, %v3852
        %v4099 = vsel %vm3990, %v4067, %v3854
        %v4100 = vsel %vm3990, %v4068, %v3856
        %v4101 = vsel %vm3990, %v4069, %v3858
        %v4102 = vsel %vm3990, %v4070, %v3860
        %v4103 = vsel %vm3990, %v4071, %v3862
        %v4104 = vsel %vm3990, %v4072, %v3864
        %v4105 = vsel %vm3990, %v4073, %v3866
        %v4106 = vsel %vm3990, %v4074, %v3868
        %v4107 = vsel %vm3990, %v4075, %v3870
        %v4108 = vsel %vm3990, %v4076, %v3872
        %v4109 = vsel %vm3990, %v4077, %v3874
        %v4110 = vsel %vm3990, %v4078, %v3876
        %v4111 = vsel %vm3990, %v4079, %v3878
        %v4112 = vsel %vm3990, %v4080, %v3880
        %v4113 = vsel %vm3990, %v4081, %v3882
        %v4114 = vsel %vm3990, %v4082, %v3884
        %v4115 = vsel %vm3990, %v4083, %v3886
        %v4116 = vsel %vm3990, %v4084, %v3888
        %v4117 = vsel %vm3990, %v4085, %v3890
        %v4118 = vsel %vm3990, %v4086, %v3892
        %v4119 = vpack.c.bf16 %v3992, %v3991
        %v4120 = vpack.c.bf16 %v4088, %v4087
        %v4121 = vpack.c.bf16 %v3126, %v3125
        %v4122 = vpack.c.bf16 %v3994, %v3993
        %v4123 = vpack.c.bf16 %v4090, %v4089
        %v4124 = vpack.c.bf16 %v3128, %v3127
        %v4125 = vpack.c.bf16 %v3996, %v3995
        %v4126 = vpack.c.bf16 %v4092, %v4091
        %v4127 = vpack.c.bf16 %v3130, %v3129
        %v4128 = vpack.c.bf16 %v3998, %v3997
        %v4129 = vpack.c.bf16 %v4094, %v4093
        %v4130 = vpack.c.bf16 %v3132, %v3131
        %v4131 = vpack.c.bf16 %v4000, %v3999
        %v4132 = vpack.c.bf16 %v4096, %v4095
        %v4133 = vpack.c.bf16 %v3134, %v3133
        %v4134 = vpack.c.bf16 %v4002, %v4001
        %v4135 = vpack.c.bf16 %v4098, %v4097
        %v4136 = vpack.c.bf16 %v3136, %v3135
        %v4137 = vpack.c.bf16 %v4004, %v4003
        %v4138 = vpack.c.bf16 %v4100, %v4099
        %v4139 = vpack.c.bf16 %v3138, %v3137
        %v4140 = vpack.c.bf16 %v4006, %v4005
        %v4141 = vpack.c.bf16 %v4102, %v4101
        %v4142 = vpack.c.bf16 %v3140, %v3139
        %v4143 = vpack.c.bf16 %v4008, %v4007
        %v4144 = vpack.c.bf16 %v4104, %v4103
        %v4145 = vpack.c.bf16 %v3142, %v3141
        %v4146 = vpack.c.bf16 %v4010, %v4009
        %v4147 = vpack.c.bf16 %v4106, %v4105
        %v4148 = vpack.c.bf16 %v3144, %v3143
        %v4149 = vpack.c.bf16 %v4012, %v4011
        %v4150 = vpack.c.bf16 %v4108, %v4107
        %v4151 = vpack.c.bf16 %v3146, %v3145
        %v4152 = vpack.c.bf16 %v4014, %v4013
        %v4153 = vpack.c.bf16 %v4110, %v4109
        %v4154 = vpack.c.bf16 %v3148, %v3147
        %v4155 = vpack.c.bf16 %v4016, %v4015
        %v4156 = vpack.c.bf16 %v4112, %v4111
        %v4157 = vpack.c.bf16 %v3150, %v3149
        %v4158 = vpack.c.bf16 %v4018, %v4017
        %v4159 = vpack.c.bf16 %v4114, %v4113
        %v4160 = vpack.c.bf16 %v3152, %v3151
        %v4161 = vpack.c.bf16 %v4020, %v4019
        %v4162 = vpack.c.bf16 %v4116, %v4115
        %v4163 = vpack.c.bf16 %v3154, %v3153
        %v4164 = vpack.c.bf16 %v4022, %v4021
        %v4165 = vpack.c.bf16 %v4118, %v4117
        %v4166 = vpack.c.bf16 %v3156, %v3155
        %v4167 = vld [vmem:[%s4] sm:$0xf]
        %v4168 = vld [vmem:[%s4 + $0x4] sm:$0xf]
        %v4169 = vld [vmem:[%s4 + $0x8] sm:$0xf]
        %v4170 = vld [vmem:[%s4 + $0xc] sm:$0xf]
        %v4171 = vld [vmem:[%s4 + $0x10] sm:$0xf]
        %v4172 = vld [vmem:[%s4 + $0x14] sm:$0xf]
        %v4173 = vld [vmem:[%s4 + $0x18] sm:$0xf]
        %v4174 = vld [vmem:[%s4 + $0x1c] sm:$0xf]
        %v4175 = vld [vmem:[%s4 + $0x20] sm:$0xf]
        %v4176 = vld [vmem:[%s4 + $0x24] sm:$0xf]
        %v4177 = vld [vmem:[%s4 + $0x28] sm:$0xf]
        %v4178 = vld [vmem:[%s4 + $0x2c] sm:$0xf]
        %v4179 = vld [vmem:[%s4 + $0x30] sm:$0xf]
        %v4180 = vld [vmem:[%s4 + $0x34] sm:$0xf]
        %v4181 = vld [vmem:[%s4 + $0x38] sm:$0xf]
        %v4182 = vld [vmem:[%s4 + $0x3c] sm:$0xf]
        %v4183 = vld [vmem:[%s4 + $0x40] sm:$0xf]
        %v4184 = vld [vmem:[%s4 + $0x44] sm:$0xf]
        %v4185 = vld [vmem:[%s4 + $0x48] sm:$0xf]
        %v4186 = vld [vmem:[%s4 + $0x4c] sm:$0xf]
        %v4187 = vld [vmem:[%s4 + $0x50] sm:$0xf]
        %v4188 = vld [vmem:[%s4 + $0x54] sm:$0xf]
        %v4189 = vld [vmem:[%s4 + $0x58] sm:$0xf]
        %v4190 = vld [vmem:[%s4 + $0x5c] sm:$0xf]
        %v4191 = vld [vmem:[%s4 + $0x60] sm:$0xf]
        %v4192 = vld [vmem:[%s4 + $0x64] sm:$0xf]
        %v4193 = vld [vmem:[%s4 + $0x68] sm:$0xf]
        %v4194 = vld [vmem:[%s4 + $0x6c] sm:$0xf]
        %v4195 = vld [vmem:[%s4 + $0x70] sm:$0xf]
        %v4196 = vld [vmem:[%s4 + $0x74] sm:$0xf]
        %v4197 = vld [vmem:[%s4 + $0x78] sm:$0xf]
        %v4198 = vld [vmem:[%s4 + $0x7c] sm:$0xf]
        %v4199 = vld [vmem:[%s4 + $0x80] sm:$0xf]
        %v4200 = vld [vmem:[%s4 + $0x84] sm:$0xf]
        %v4201 = vld [vmem:[%s4 + $0x88] sm:$0xf]
        %v4202 = vld [vmem:[%s4 + $0x8c] sm:$0xf]
        %v4239 = vunpack.c.l.b16 %v4167
        %v4240 = vunpack.c.l.b16 %v4168
        %v4241 = vunpack.c.l.b16 %v4169
        %v4242 = vunpack.c.l.b16 %v4170
        %v4243 = vunpack.c.l.b16 %v4171
        %v4244 = vunpack.c.l.b16 %v4172
        %v4245 = vunpack.c.l.b16 %v4173
        %v4246 = vunpack.c.l.b16 %v4174
        %v4247 = vunpack.c.l.b16 %v4175
        %v4248 = vunpack.c.l.b16 %v4176
        %v4249 = vunpack.c.l.b16 %v4177
        %v4250 = vunpack.c.l.b16 %v4178
        %v4251 = vunpack.c.l.b16 %v4179
        %v4252 = vunpack.c.l.b16 %v4180
        %v4253 = vunpack.c.l.b16 %v4181
        %v4254 = vunpack.c.l.b16 %v4182
        %v4255 = vunpack.c.l.b16 %v4183
        %v4256 = vunpack.c.l.b16 %v4184
        %v4257 = vunpack.c.l.b16 %v4185
        %v4258 = vunpack.c.l.b16 %v4186
        %v4259 = vunpack.c.l.b16 %v4187
        %v4260 = vunpack.c.l.b16 %v4188
        %v4261 = vunpack.c.l.b16 %v4189
        %v4262 = vunpack.c.l.b16 %v4190
        %v4263 = vunpack.c.l.b16 %v4191
        %v4264 = vunpack.c.l.b16 %v4192
        %v4265 = vunpack.c.l.b16 %v4193
        %v4266 = vunpack.c.l.b16 %v4194
        %v4267 = vunpack.c.l.b16 %v4195
        %v4268 = vunpack.c.l.b16 %v4196
        %v4269 = vunpack.c.l.b16 %v4197
        %v4270 = vunpack.c.l.b16 %v4198
        %v4271 = vunpack.c.l.b16 %v4199
        %v4272 = vunpack.c.l.b16 %v4200
        %v4273 = vunpack.c.l.b16 %v4201
        %v4274 = vunpack.c.l.b16 %v4202
        %v4275 = vpack.c.b16 %v4240, %v4239
        %v4276 = vpack.c.b16 %v4242, %v4241
        %v4277 = vpack.c.b16 %v4244, %v4243
        %v4278 = vpack.c.b16 %v4246, %v4245
        %v4279 = vpack.c.b16 %v4248, %v4247
        %v4280 = vpack.c.b16 %v4250, %v4249
        %v4281 = vpack.c.b16 %v4252, %v4251
        %v4282 = vpack.c.b16 %v4254, %v4253
        %v4283 = vpack.c.b16 %v4256, %v4255
        %v4284 = vpack.c.b16 %v4258, %v4257
        %v4285 = vpack.c.b16 %v4260, %v4259
        %v4286 = vpack.c.b16 %v4262, %v4261
        %v4287 = vpack.c.b16 %v4264, %v4263
        %v4288 = vpack.c.b16 %v4266, %v4265
        %v4289 = vpack.c.b16 %v4268, %v4267
        %v4290 = vpack.c.b16 %v4270, %v4269
        %v4291 = vpack.c.b16 %v4272, %v4271
        %v4292 = vpack.c.b16 %v4274, %v4273
        %v4312 = vsel %vm2793, %v4121, 0
        %v4315 = vsel %vm2793, %v4124, 0
        %v4318 = vsel %vm2793, %v4127, 0
        %v4321 = vsel %vm2793, %v4130, 0
        %v4324 = vsel %vm2793, %v4133, 0
        %v4327 = vsel %vm2793, %v4136, 0
        %v4330 = vsel %vm2793, %v4139, 0
        %v4333 = vsel %vm2793, %v4142, 0
        %v4336 = vsel %vm2793, %v4145, 0
        %v4339 = vsel %vm2793, %v4148, 0
        %v4342 = vsel %vm2793, %v4151, 0
        %v4345 = vsel %vm2793, %v4154, 0
        %v4348 = vsel %vm2793, %v4157, 0
        %v4351 = vsel %vm2793, %v4160, 0
        %v4354 = vsel %vm2793, %v4163, 0
        %v4357 = vsel %vm2793, %v4166, 0
        %4359 = vmatprep.subr.bf16.mxu0 0
        %4360 = vmatpush1.bf16.msra.mxu0 %v4275
        %4361 = vmatprep.subr.bf16.mxu0 0
        %4362 = vmatpush1.bf16.msra.mxu0 %v4276
        %4363 = vmatprep.subr.bf16.mxu0 0
        %4364 = vmatpush1.bf16.msra.mxu0 %v4277
        %4365 = vmatprep.subr.bf16.mxu0 0
        %4366 = vmatpush1.bf16.msra.mxu0 %v4278
        %4367 = vmatprep.subr.bf16.mxu0 0
        %4368 = vmatpush1.bf16.msra.mxu0 %v4279
        %4369 = vmatprep.subr.bf16.mxu0 0
        %4370 = vmatpush1.bf16.msra.mxu0 %v4280
        %4371 = vmatprep.subr.bf16.mxu0 0
        %4372 = vmatpush1.bf16.msra.mxu0 %v4281
        %4373 = vmatprep.subr.bf16.mxu0 0
        %4374 = vmatpush1.bf16.msra.mxu0 %v4282
        %4375 = vmatprep.subr.bf16.mxu0 0
        %4376 = vmatpush1.bf16.msra.mxu0 %v4283
        %4377 = vmatprep.subr.bf16.mxu0 0
        %4378 = vmatpush1.bf16.msra.mxu0 %v4284
        %4379 = vmatprep.subr.bf16.mxu0 0
        %4380 = vmatpush1.bf16.msra.mxu0 %v4285
        %4381 = vmatprep.subr.bf16.mxu0 0
        %4382 = vmatpush1.bf16.msra.mxu0 %v4286
        %4383 = vmatprep.subr.bf16.mxu0 0
        %4384 = vmatpush1.bf16.msra.mxu0 %v4287
        %4385 = vmatprep.subr.bf16.mxu0 0
        %4386 = vmatpush1.bf16.msra.mxu0 %v4288
        %4387 = vmatprep.subr.bf16.mxu0 0
        %4388 = vmatpush1.bf16.msra.mxu0 %v4289
        %4389 = vmatprep.subr.bf16.mxu0 0
        %4390 = vmatpush1.bf16.msra.mxu0 %v4290
        %4391 = vmatprep.mubr.bf16.mxu0 %v4120
        %4392 = vmatmul.mubr.bf16.gmra.mrb[0].mxu0 %v4119
        %v4393 = vpop.f32.mrb[0].mxu0
        %v4394 = vadd.f32 0.0, %v4393
        %v4395 = vpop.f32.mrb[0].mxu0
        %v4396 = vpop.f32.mrb[0].mxu0
        %v4397 = vadd.f32 0.0, %v4396
        %v4398 = vpop.f32.mrb[0].mxu0
        %4399 = vmatprep.mubr.bf16.mxu0 %v4123
        %4400 = vmatmul.mubr.bf16.gmra.mrb[0].mxu0 %v4122
        %v4401 = vpop.f32.mrb[0].mxu0
        %v4402 = vadd.f32 0.0, %v4401
        %v4403 = vpop.f32.mrb[0].mxu0
        %v4404 = vpop.f32.mrb[0].mxu0
        %v4405 = vadd.f32 0.0, %v4404
        %v4406 = vpop.f32.mrb[0].mxu0
        %4407 = vmatprep.mubr.bf16.mxu0 %v4126
        %4408 = vmatmul.mubr.bf16.gmra.mrb[0].mxu0 %v4125
        %v4409 = vpop.f32.mrb[0].mxu0
        %v4410 = vadd.f32 0.0, %v4409
        %v4411 = vpop.f32.mrb[0].mxu0
        %v4412 = vpop.f32.mrb[0].mxu0
        %v4413 = vadd.f32 0.0, %v4412
        %v4414 = vpop.f32.mrb[0].mxu0
        %4415 = vmatprep.mubr.bf16.mxu0 %v4129
        %4416 = vmatmul.mubr.bf16.gmra.mrb[0].mxu0 %v4128
        %v4417 = vpop.f32.mrb[0].mxu0
        %v4418 = vadd.f32 0.0, %v4417
        %v4419 = vpop.f32.mrb[0].mxu0
        %v4420 = vpop.f32.mrb[0].mxu0
        %v4421 = vadd.f32 0.0, %v4420
        %v4422 = vpop.f32.mrb[0].mxu0
        %4423 = vmatprep.mubr.bf16.mxu0 %v4132
        %4424 = vmatmul.mubr.bf16.gmra.mrb[0].mxu0 %v4131
        %v4425 = vpop.f32.mrb[0].mxu0
        %v4426 = vadd.f32 0.0, %v4425
        %v4427 = vpop.f32.mrb[0].mxu0
        %v4428 = vpop.f32.mrb[0].mxu0
        %v4429 = vadd.f32 0.0, %v4428
        %v4430 = vpop.f32.mrb[0].mxu0
        %4431 = vmatprep.mubr.bf16.mxu0 %v4135
        %4432 = vmatmul.mubr.bf16.gmra.mrb[0].mxu0 %v4134
        %v4433 = vpop.f32.mrb[0].mxu0
        %v4434 = vadd.f32 0.0, %v4433
        %v4435 = vpop.f32.mrb[0].mxu0
        %v4436 = vpop.f32.mrb[0].mxu0
        %v4437 = vadd.f32 0.0, %v4436
        %v4438 = vpop.f32.mrb[0].mxu0
        %4439 = vmatprep.mubr.bf16.mxu0 %v4138
        %4440 = vmatmul.mubr.bf16.gmra.mrb[0].mxu0 %v4137
        %v4441 = vpop.f32.mrb[0].mxu0
        %v4442 = vadd.f32 0.0, %v4441
        %v4443 = vpop.f32.mrb[0].mxu0
        %v4444 = vpop.f32.mrb[0].mxu0
        %v4445 = vadd.f32 0.0, %v4444
        %v4446 = vpop.f32.mrb[0].mxu0
        %4447 = vmatprep.mubr.bf16.mxu0 %v4141
        %4448 = vmatmul.mubr.bf16.gmra.mrb[0].mxu0 %v4140
        %v4449 = vpop.f32.mrb[0].mxu0
        %v4450 = vadd.f32 0.0, %v4449
        %v4451 = vpop.f32.mrb[0].mxu0
        %v4452 = vpop.f32.mrb[0].mxu0
        %v4453 = vadd.f32 0.0, %v4452
        %v4454 = vpop.f32.mrb[0].mxu0
        %4455 = vmatprep.mubr.bf16.mxu0 %v4144
        %4456 = vmatmul.mubr.bf16.gmra.mrb[0].mxu0 %v4143
        %v4457 = vpop.f32.mrb[0].mxu0
        %v4458 = vadd.f32 0.0, %v4457
        %v4459 = vpop.f32.mrb[0].mxu0
        %v4460 = vpop.f32.mrb[0].mxu0
        %v4461 = vadd.f32 0.0, %v4460
        %v4462 = vpop.f32.mrb[0].mxu0
        %4463 = vmatprep.mubr.bf16.mxu0 %v4147
        %4464 = vmatmul.mubr.bf16.gmra.mrb[0].mxu0 %v4146
        %v4465 = vpop.f32.mrb[0].mxu0
        %v4466 = vadd.f32 0.0, %v4465
        %v4467 = vpop.f32.mrb[0].mxu0
        %v4468 = vpop.f32.mrb[0].mxu0
        %v4469 = vadd.f32 0.0, %v4468
        %v4470 = vpop.f32.mrb[0].mxu0
        %4471 = vmatprep.mubr.bf16.mxu0 %v4150
        %4472 = vmatmul.mubr.bf16.gmra.mrb[0].mxu0 %v4149
        %v4473 = vpop.f32.mrb[0].mxu0
        %v4474 = vadd.f32 0.0, %v4473
        %v4475 = vpop.f32.mrb[0].mxu0
        %v4476 = vpop.f32.mrb[0].mxu0
        %v4477 = vadd.f32 0.0, %v4476
        %v4478 = vpop.f32.mrb[0].mxu0
        %4479 = vmatprep.mubr.bf16.mxu0 %v4153
        %4480 = vmatmul.mubr.bf16.gmra.mrb[0].mxu0 %v4152
        %v4481 = vpop.f32.mrb[0].mxu0
        %v4482 = vadd.f32 0.0, %v4481
        %v4483 = vpop.f32.mrb[0].mxu0
        %v4484 = vpop.f32.mrb[0].mxu0
        %v4485 = vadd.f32 0.0, %v4484
        %v4486 = vpop.f32.mrb[0].mxu0
        %4487 = vmatprep.mubr.bf16.mxu0 %v4156
        %4488 = vmatmul.mubr.bf16.gmra.mrb[0].mxu0 %v4155
        %v4489 = vpop.f32.mrb[0].mxu0
        %v4490 = vadd.f32 0.0, %v4489
        %v4491 = vpop.f32.mrb[0].mxu0
        %v4492 = vpop.f32.mrb[0].mxu0
        %v4493 = vadd.f32 0.0, %v4492
        %v4494 = vpop.f32.mrb[0].mxu0
        %4495 = vmatprep.mubr.bf16.mxu0 %v4159
        %4496 = vmatmul.mubr.bf16.gmra.mrb[0].mxu0 %v4158
        %v4497 = vpop.f32.mrb[0].mxu0
        %v4498 = vadd.f32 0.0, %v4497
        %v4499 = vpop.f32.mrb[0].mxu0
        %v4500 = vpop.f32.mrb[0].mxu0
        %v4501 = vadd.f32 0.0, %v4500
        %v4502 = vpop.f32.mrb[0].mxu0
        %4503 = vmatprep.mubr.bf16.mxu0 %v4162
        %4504 = vmatmul.mubr.bf16.gmra.mrb[0].mxu0 %v4161
        %v4505 = vpop.f32.mrb[0].mxu0
        %v4506 = vadd.f32 0.0, %v4505
        %v4507 = vpop.f32.mrb[0].mxu0
        %v4508 = vpop.f32.mrb[0].mxu0
        %v4509 = vadd.f32 0.0, %v4508
        %v4510 = vpop.f32.mrb[0].mxu0
        %4511 = vmatprep.mubr.bf16.mxu0 %v4165
        %4512 = vmatmul.mubr.bf16.gmra.mrb[0].mxu0 %v4164
        %v4513 = vpop.f32.mrb[0].mxu0
        %v4514 = vadd.f32 0.0, %v4513
        %v4515 = vpop.f32.mrb[0].mxu0
        %v4516 = vpop.f32.mrb[0].mxu0
        %v4517 = vadd.f32 0.0, %v4516
        %v4518 = vpop.f32.mrb[0].mxu0
        %4519 = vdwg.mxu0
        %4520 = vmatprep.subr.bf16.mxu0 0
        %4521 = vmatpush1.bf16.msra.mxu0 %v4291
        %4522 = vmatprep.subr.bf16.mxu0 0
        %4523 = vmatpush1.bf16.msra.mxu0 %v4292
        %4524 = vmatprep.subr.bf16.mxu0 0
        %4525 = vmatpush1.bf16.msra.mxu0 0
        %4526 = vmatprep.subr.bf16.mxu0 0
        %4527 = vmatpush1.bf16.msra.mxu0 0
        %4528 = vmatprep.subr.bf16.mxu0 0
        %4529 = vmatpush1.bf16.msra.mxu0 0
        %4530 = vmatprep.subr.bf16.mxu0 0
        %4531 = vmatpush1.bf16.msra.mxu0 0
        %4532 = vmatprep.subr.bf16.mxu0 0
        %4533 = vmatpush1.bf16.msra.mxu0 0
        %4534 = vmatprep.subr.bf16.mxu0 0
        %4535 = vmatpush1.bf16.msra.mxu0 0
        %4536 = vmatprep.subr.bf16.mxu0 0
        %4537 = vmatpush1.bf16.msra.mxu0 0
        %4538 = vmatprep.subr.bf16.mxu0 0
        %4539 = vmatpush1.bf16.msra.mxu0 0
        %4540 = vmatprep.subr.bf16.mxu0 0
        %4541 = vmatpush1.bf16.msra.mxu0 0
        %4542 = vmatprep.subr.bf16.mxu0 0
        %4543 = vmatpush1.bf16.msra.mxu0 0
        %4544 = vmatprep.subr.bf16.mxu0 0
        %4545 = vmatpush1.bf16.msra.mxu0 0
        %4546 = vmatprep.subr.bf16.mxu0 0
        %4547 = vmatpush1.bf16.msra.mxu0 0
        %4548 = vmatprep.subr.bf16.mxu0 0
        %4549 = vmatpush1.bf16.msra.mxu0 0
        %4550 = vmatprep.subr.bf16.mxu0 0
        %4551 = vmatpush1.bf16.msra.mxu0 0
        %4552 = vmatprep.mubr.bf16.mxu0 0
        %4553 = vmatmul.mubr.bf16.gmra.mrb[0].mxu0 %v4312
        %v4554 = vpop.f32.mrb[0].mxu0
        %v4555 = vadd.f32 %v4394, %v4554
        %v4556 = vpop.f32.mrb[0].mxu0
        %v4557 = vpop.f32.mrb[0].mxu0
        %v4558 = vadd.f32 %v4397, %v4557
        %v4559 = vpop.f32.mrb[0].mxu0
        %4560 = vmatprep.mubr.bf16.mxu0 0
        %4561 = vmatmul.mubr.bf16.gmra.mrb[0].mxu0 %v4315
        %v4562 = vpop.f32.mrb[0].mxu0
        %v4563 = vadd.f32 %v4402, %v4562
        %v4564 = vpop.f32.mrb[0].mxu0
        %v4565 = vpop.f32.mrb[0].mxu0
        %v4566 = vadd.f32 %v4405, %v4565
        %v4567 = vpop.f32.mrb[0].mxu0
        %4568 = vmatprep.mubr.bf16.mxu0 0
        %4569 = vmatmul.mubr.bf16.gmra.mrb[0].mxu0 %v4318
        %v4570 = vpop.f32.mrb[0].mxu0
        %v4571 = vadd.f32 %v4410, %v4570
        %v4572 = vpop.f32.mrb[0].mxu0
        %v4573 = vpop.f32.mrb[0].mxu0
        %v4574 = vadd.f32 %v4413, %v4573
        %v4575 = vpop.f32.mrb[0].mxu0
        %4576 = vmatprep.mubr.bf16.mxu0 0
        %4577 = vmatmul.mubr.bf16.gmra.mrb[0].mxu0 %v4321
        %v4578 = vpop.f32.mrb[0].mxu0
        %v4579 = vadd.f32 %v4418, %v4578
        %v4580 = vpop.f32.mrb[0].mxu0
        %v4581 = vpop.f32.mrb[0].mxu0
        %v4582 = vadd.f32 %v4421, %v4581
        %v4583 = vpop.f32.mrb[0].mxu0
        %4584 = vmatprep.mubr.bf16.mxu0 0
        %4585 = vmatmul.mubr.bf16.gmra.mrb[0].mxu0 %v4324
        %v4586 = vpop.f32.mrb[0].mxu0
        %v4587 = vadd.f32 %v4426, %v4586
        %v4588 = vpop.f32.mrb[0].mxu0
        %v4589 = vpop.f32.mrb[0].mxu0
        %v4590 = vadd.f32 %v4429, %v4589
        %v4591 = vpop.f32.mrb[0].mxu0
        %4592 = vmatprep.mubr.bf16.mxu0 0
        %4593 = vmatmul.mubr.bf16.gmra.mrb[0].mxu0 %v4327
        %v4594 = vpop.f32.mrb[0].mxu0
        %v4595 = vadd.f32 %v4434, %v4594
        %v4596 = vpop.f32.mrb[0].mxu0
        %v4597 = vpop.f32.mrb[0].mxu0
        %v4598 = vadd.f32 %v4437, %v4597
        %v4599 = vpop.f32.mrb[0].mxu0
        %4600 = vmatprep.mubr.bf16.mxu0 0
        %4601 = vmatmul.mubr.bf16.gmra.mrb[0].mxu0 %v4330
        %v4602 = vpop.f32.mrb[0].mxu0
        %v4603 = vadd.f32 %v4442, %v4602
        %v4604 = vpop.f32.mrb[0].mxu0
        %v4605 = vpop.f32.mrb[0].mxu0
        %v4606 = vadd.f32 %v4445, %v4605
        %v4607 = vpop.f32.mrb[0].mxu0
        %4608 = vmatprep.mubr.bf16.mxu0 0
        %4609 = vmatmul.mubr.bf16.gmra.mrb[0].mxu0 %v4333
        %v4610 = vpop.f32.mrb[0].mxu0
        %v4611 = vadd.f32 %v4450, %v4610
        %v4612 = vpop.f32.mrb[0].mxu0
        %v4613 = vpop.f32.mrb[0].mxu0
        %v4614 = vadd.f32 %v4453, %v4613
        %v4615 = vpop.f32.mrb[0].mxu0
        %4616 = vmatprep.mubr.bf16.mxu0 0
        %4617 = vmatmul.mubr.bf16.gmra.mrb[0].mxu0 %v4336
        %v4618 = vpop.f32.mrb[0].mxu0
        %v4619 = vadd.f32 %v4458, %v4618
        %v4620 = vpop.f32.mrb[0].mxu0
        %v4621 = vpop.f32.mrb[0].mxu0
        %v4622 = vadd.f32 %v4461, %v4621
        %v4623 = vpop.f32.mrb[0].mxu0
        %4624 = vmatprep.mubr.bf16.mxu0 0
        %4625 = vmatmul.mubr.bf16.gmra.mrb[0].mxu0 %v4339
        %v4626 = vpop.f32.mrb[0].mxu0
        %v4627 = vadd.f32 %v4466, %v4626
        %v4628 = vpop.f32.mrb[0].mxu0
        %v4629 = vpop.f32.mrb[0].mxu0
        %v4630 = vadd.f32 %v4469, %v4629
        %v4631 = vpop.f32.mrb[0].mxu0
        %4632 = vmatprep.mubr.bf16.mxu0 0
        %4633 = vmatmul.mubr.bf16.gmra.mrb[0].mxu0 %v4342
        %v4634 = vpop.f32.mrb[0].mxu0
        %v4635 = vadd.f32 %v4474, %v4634
        %v4636 = vpop.f32.mrb[0].mxu0
        %v4637 = vpop.f32.mrb[0].mxu0
        %v4638 = vadd.f32 %v4477, %v4637
        %v4639 = vpop.f32.mrb[0].mxu0
        %4640 = vmatprep.mubr.bf16.mxu0 0
        %4641 = vmatmul.mubr.bf16.gmra.mrb[0].mxu0 %v4345
        %v4642 = vpop.f32.mrb[0].mxu0
        %v4643 = vadd.f32 %v4482, %v4642
        %v4644 = vpop.f32.mrb[0].mxu0
        %v4645 = vpop.f32.mrb[0].mxu0
        %v4646 = vadd.f32 %v4485, %v4645
        %v4647 = vpop.f32.mrb[0].mxu0
        %4648 = vmatprep.mubr.bf16.mxu0 0
        %4649 = vmatmul.mubr.bf16.gmra.mrb[0].mxu0 %v4348
        %v4650 = vpop.f32.mrb[0].mxu0
        %v4651 = vadd.f32 %v4490, %v4650
        %v4652 = vpop.f32.mrb[0].mxu0
        %v4653 = vpop.f32.mrb[0].mxu0
        %v4654 = vadd.f32 %v4493, %v4653
        %v4655 = vpop.f32.mrb[0].mxu0
        %4656 = vmatprep.mubr.bf16.mxu0 0
        %4657 = vmatmul.mubr.bf16.gmra.mrb[0].mxu0 %v4351
        %v4658 = vpop.f32.mrb[0].mxu0
        %v4659 = vadd.f32 %v4498, %v4658
        %v4660 = vpop.f32.mrb[0].mxu0
        %v4661 = vpop.f32.mrb[0].mxu0
        %v4662 = vadd.f32 %v4501, %v4661
        %v4663 = vpop.f32.mrb[0].mxu0
        %4664 = vmatprep.mubr.bf16.mxu0 0
        %4665 = vmatmul.mubr.bf16.gmra.mrb[0].mxu0 %v4354
        %v4666 = vpop.f32.mrb[0].mxu0
        %v4667 = vadd.f32 %v4506, %v4666
        %v4668 = vpop.f32.mrb[0].mxu0
        %v4669 = vpop.f32.mrb[0].mxu0
        %v4670 = vadd.f32 %v4509, %v4669
        %v4671 = vpop.f32.mrb[0].mxu0
        %4672 = vmatprep.mubr.bf16.mxu0 0
        %4673 = vmatmul.mubr.bf16.gmra.mrb[0].mxu0 %v4357
        %v4674 = vpop.f32.mrb[0].mxu0
        %v4675 = vadd.f32 %v4514, %v4674
        %v4676 = vpop.f32.mrb[0].mxu0
        %v4677 = vpop.f32.mrb[0].mxu0
        %v4678 = vadd.f32 %v4517, %v4677
        %v4679 = vpop.f32.mrb[0].mxu0
        %4680 = vdwg.mxu0
        %v4681 = vld [vmem:[%s5] sm:$0x1]
        %v4683 = vlaneseq
        %v4684 = vshrl.u32 %v4683, 7
        %v4685 = vsub.s32 0, %v4684
        %v4686 = vrot.slane %v4681, %v4685
        %v4688 = vmul.f32 %v4555, %v4686
        %v4689 = vmul.f32 %v4558, %v4686
        %v4690 = vmul.f32 %v4563, %v4686
        %v4691 = vmul.f32 %v4566, %v4686
        %v4692 = vmul.f32 %v4571, %v4686
        %v4693 = vmul.f32 %v4574, %v4686
        %v4694 = vmul.f32 %v4579, %v4686
        %v4695 = vmul.f32 %v4582, %v4686
        %v4696 = vmul.f32 %v4587, %v4686
        %v4697 = vmul.f32 %v4590, %v4686
        %v4698 = vmul.f32 %v4595, %v4686
        %v4699 = vmul.f32 %v4598, %v4686
        %v4700 = vmul.f32 %v4603, %v4686
        %v4701 = vmul.f32 %v4606, %v4686
        %v4702 = vmul.f32 %v4611, %v4686
        %v4703 = vmul.f32 %v4614, %v4686
        %v4704 = vmul.f32 %v4619, %v4686
        %v4705 = vmul.f32 %v4622, %v4686
        %v4706 = vmul.f32 %v4627, %v4686
        %v4707 = vmul.f32 %v4630, %v4686
        %v4708 = vmul.f32 %v4635, %v4686
        %v4709 = vmul.f32 %v4638, %v4686
        %v4710 = vmul.f32 %v4643, %v4686
        %v4711 = vmul.f32 %v4646, %v4686
        %v4712 = vmul.f32 %v4651, %v4686
        %v4713 = vmul.f32 %v4654, %v4686
        %v4714 = vmul.f32 %v4659, %v4686
        %v4715 = vmul.f32 %v4662, %v4686
        %v4716 = vmul.f32 %v4667, %v4686
        %v4717 = vmul.f32 %v4670, %v4686
        %v4718 = vmul.f32 %v4675, %v4686
        %v4719 = vmul.f32 %v4678, %v4686
        %v4720 = vld [vmem:[%s6] sm:$0x1]
        %v4722 = vlaneseq
        %v4723 = vshrl.u32 %v4722, 7
        %v4724 = vsub.s32 0, %v4723
        %v4725 = vrot.slane %v4720, %v4724
        %v4727 = vadd.f32 %v4688, %v4725
        %v4728 = vadd.f32 %v4689, %v4725
        %v4729 = vadd.f32 %v4690, %v4725
        %v4730 = vadd.f32 %v4691, %v4725
        %v4731 = vadd.f32 %v4692, %v4725
        %v4732 = vadd.f32 %v4693, %v4725
        %v4733 = vadd.f32 %v4694, %v4725
        %v4734 = vadd.f32 %v4695, %v4725
        %v4735 = vadd.f32 %v4696, %v4725
        %v4736 = vadd.f32 %v4697, %v4725
        %v4737 = vadd.f32 %v4698, %v4725
        %v4738 = vadd.f32 %v4699, %v4725
        %v4739 = vadd.f32 %v4700, %v4725
        %v4740 = vadd.f32 %v4701, %v4725
        %v4741 = vadd.f32 %v4702, %v4725
        %v4742 = vadd.f32 %v4703, %v4725
        %v4743 = vadd.f32 %v4704, %v4725
        %v4744 = vadd.f32 %v4705, %v4725
        %v4745 = vadd.f32 %v4706, %v4725
        %v4746 = vadd.f32 %v4707, %v4725
        %v4747 = vadd.f32 %v4708, %v4725
        %v4748 = vadd.f32 %v4709, %v4725
        %v4749 = vadd.f32 %v4710, %v4725
        %v4750 = vadd.f32 %v4711, %v4725
        %v4751 = vadd.f32 %v4712, %v4725
        %v4752 = vadd.f32 %v4713, %v4725
        %v4753 = vadd.f32 %v4714, %v4725
        %v4754 = vadd.f32 %v4715, %v4725
        %v4755 = vadd.f32 %v4716, %v4725
        %v4756 = vadd.f32 %v4717, %v4725
        %v4757 = vadd.f32 %v4718, %v4725
        %v4758 = vadd.f32 %v4719, %v4725
        %v4759 = vmax.f32 %v4727, 0.0
        %v4760 = vmax.f32 %v4728, 0.0
        %v4761 = vmax.f32 %v4729, 0.0
        %v4762 = vmax.f32 %v4730, 0.0
        %v4763 = vmax.f32 %v4731, 0.0
        %v4764 = vmax.f32 %v4732, 0.0
        %v4765 = vmax.f32 %v4733, 0.0
        %v4766 = vmax.f32 %v4734, 0.0
        %v4767 = vmax.f32 %v4735, 0.0
        %v4768 = vmax.f32 %v4736, 0.0
        %v4769 = vmax.f32 %v4737, 0.0
        %v4770 = vmax.f32 %v4738, 0.0
        %v4771 = vmax.f32 %v4739, 0.0
        %v4772 = vmax.f32 %v4740, 0.0
        %v4773 = vmax.f32 %v4741, 0.0
        %v4774 = vmax.f32 %v4742, 0.0
        %v4775 = vmax.f32 %v4743, 0.0
        %v4776 = vmax.f32 %v4744, 0.0
        %v4777 = vmax.f32 %v4745, 0.0
        %v4778 = vmax.f32 %v4746, 0.0
        %v4779 = vmax.f32 %v4747, 0.0
        %v4780 = vmax.f32 %v4748, 0.0
        %v4781 = vmax.f32 %v4749, 0.0
        %v4782 = vmax.f32 %v4750, 0.0
        %v4783 = vmax.f32 %v4751, 0.0
        %v4784 = vmax.f32 %v4752, 0.0
        %v4785 = vmax.f32 %v4753, 0.0
        %v4786 = vmax.f32 %v4754, 0.0
        %v4787 = vmax.f32 %v4755, 0.0
        %v4788 = vmax.f32 %v4756, 0.0
        %v4789 = vmax.f32 %v4757, 0.0
        %v4790 = vmax.f32 %v4758, 0.0
        %v4791 = vsel %vm2793, %v4759, -inf
        %v4792 = vsel %vm2793, %v4761, -inf
        %v4793 = vmax.f32 %v4791, %v4792
        %v4794 = vsel %vm2793, %v4760, -inf
        %v4795 = vsel %vm2793, %v4762, -inf
        %v4796 = vmax.f32 %v4794, %v4795
        %v4797 = vsel %vm2793, %v4763, -inf
        %v4798 = vsel %vm2793, %v4765, -inf
        %v4799 = vmax.f32 %v4797, %v4798
        %v4800 = vsel %vm2793, %v4764, -inf
        %v4801 = vsel %vm2793, %v4766, -inf
        %v4802 = vmax.f32 %v4800, %v4801
        %v4803 = vsel %vm2793, %v4767, -inf
        %v4804 = vsel %vm2793, %v4769, -inf
        %v4805 = vmax.f32 %v4803, %v4804
        %v4806 = vsel %vm2793, %v4768, -inf
        %v4807 = vsel %vm2793, %v4770, -inf
        %v4808 = vmax.f32 %v4806, %v4807
        %v4809 = vsel %vm2793, %v4771, -inf
        %v4810 = vsel %vm2793, %v4773, -inf
        %v4811 = vmax.f32 %v4809, %v4810
        %v4812 = vsel %vm2793, %v4772, -inf
        %v4813 = vsel %vm2793, %v4774, -inf
        %v4814 = vmax.f32 %v4812, %v4813
        %v4815 = vsel %vm2793, %v4775, -inf
        %v4816 = vsel %vm2793, %v4777, -inf
        %v4817 = vmax.f32 %v4815, %v4816
        %v4818 = vsel %vm2793, %v4776, -inf
        %v4819 = vsel %vm2793, %v4778, -inf
        %v4820 = vmax.f32 %v4818, %v4819
        %v4821 = vsel %vm2793, %v4779, -inf
        %v4822 = vsel %vm2793, %v4781, -inf
        %v4823 = vmax.f32 %v4821, %v4822
        %v4824 = vsel %vm2793, %v4780, -inf
        %v4825 = vsel %vm2793, %v4782, -inf
        %v4826 = vmax.f32 %v4824, %v4825
        %v4827 = vsel %vm2793, %v4783, -inf
        %v4828 = vsel %vm2793, %v4785, -inf
        %v4829 = vmax.f32 %v4827, %v4828
        %v4830 = vsel %vm2793, %v4784, -inf
        %v4831 = vsel %vm2793, %v4786, -inf
        %v4832 = vmax.f32 %v4830, %v4831
        %v4833 = vsel %vm2793, %v4787, -inf
        %v4834 = vsel %vm2793, %v4789, -inf
        %v4835 = vmax.f32 %v4833, %v4834
        %v4836 = vsel %vm2793, %v4788, -inf
        %v4837 = vsel %vm2793, %v4790, -inf
        %v4838 = vmax.f32 %v4836, %v4837
        %v4855 = vcombine.high %v4793, %v4793
        %v4857 = vunpack.c.l.s4 1983009808
        %v4858 = vunpack.c.0.s8 %v4857
        %v4859 = vlaneseq
        %v4860 = vshrl.u32 %v4859, 7
        %v4861 = vsub.s32 %v4858, %v4860
        %v4862 = vrot.slane %v4793, %v4861
        %v4864 = vunpack.c.l.s4 1983009808
        %v4865 = vunpack.c.0.s8 %v4864
        %v4866 = vlaneseq
        %v4867 = vshrl.u32 %v4866, 7
        %v4868 = vsub.s32 %v4865, %v4867
        %v4869 = vrot.slane %v4855, %v4868
        %v4870 = vcombine.high %v4862, %v4862
        %v4871 = vcombine.high %v4869, %v4869
        %v4872 = vcombine.high %v4796, %v4796
        %v4874 = vunpack.c.l.s4 1983009808
        %v4875 = vunpack.c.0.s8 %v4874
        %v4876 = vlaneseq
        %v4877 = vshrl.u32 %v4876, 7
        %v4878 = vsub.s32 %v4875, %v4877
        %v4879 = vrot.slane %v4796, %v4878
        %v4881 = vunpack.c.l.s4 1983009808
        %v4882 = vunpack.c.0.s8 %v4881
        %v4883 = vlaneseq
        %v4884 = vshrl.u32 %v4883, 7
        %v4885 = vsub.s32 %v4882, %v4884
        %v4886 = vrot.slane %v4872, %v4885
        %v4887 = vcombine.high %v4879, %v4879
        %v4888 = vcombine.high %v4886, %v4886
        %v4889 = vcombine.high %v4799, %v4799
        %v4891 = vunpack.c.l.s4 1983009808
        %v4892 = vunpack.c.0.s8 %v4891
        %v4893 = vlaneseq
        %v4894 = vshrl.u32 %v4893, 7
        %v4895 = vsub.s32 %v4892, %v4894
        %v4896 = vrot.slane %v4799, %v4895
        %v4898 = vunpack.c.l.s4 1983009808
        %v4899 = vunpack.c.0.s8 %v4898
        %v4900 = vlaneseq
        %v4901 = vshrl.u32 %v4900, 7
        %v4902 = vsub.s32 %v4899, %v4901
        %v4903 = vrot.slane %v4889, %v4902
        %v4904 = vcombine.high %v4896, %v4896
        %v4905 = vcombine.high %v4903, %v4903
        %v4906 = vcombine.high %v4802, %v4802
        %v4908 = vunpack.c.l.s4 1983009808
        %v4909 = vunpack.c.0.s8 %v4908
        %v4910 = vlaneseq
        %v4911 = vshrl.u32 %v4910, 7
        %v4912 = vsub.s32 %v4909, %v4911
        %v4913 = vrot.slane %v4802, %v4912
        %v4915 = vunpack.c.l.s4 1983009808
        %v4916 = vunpack.c.0.s8 %v4915
        %v4917 = vlaneseq
        %v4918 = vshrl.u32 %v4917, 7
        %v4919 = vsub.s32 %v4916, %v4918
        %v4920 = vrot.slane %v4906, %v4919
        %v4921 = vcombine.high %v4913, %v4913
        %v4922 = vcombine.high %v4920, %v4920
        %v4923 = vcombine.high %v4805, %v4805
        %v4925 = vunpack.c.l.s4 1983009808
        %v4926 = vunpack.c.0.s8 %v4925
        %v4927 = vlaneseq
        %v4928 = vshrl.u32 %v4927, 7
        %v4929 = vsub.s32 %v4926, %v4928
        %v4930 = vrot.slane %v4805, %v4929
        %v4932 = vunpack.c.l.s4 1983009808
        %v4933 = vunpack.c.0.s8 %v4932
        %v4934 = vlaneseq
        %v4935 = vshrl.u32 %v4934, 7
        %v4936 = vsub.s32 %v4933, %v4935
        %v4937 = vrot.slane %v4923, %v4936
        %v4938 = vcombine.high %v4930, %v4930
        %v4939 = vcombine.high %v4937, %v4937
        %v4940 = vcombine.high %v4808, %v4808
        %v4942 = vunpack.c.l.s4 1983009808
        %v4943 = vunpack.c.0.s8 %v4942
        %v4944 = vlaneseq
        %v4945 = vshrl.u32 %v4944, 7
        %v4946 = vsub.s32 %v4943, %v4945
        %v4947 = vrot.slane %v4808, %v4946
        %v4949 = vunpack.c.l.s4 1983009808
        %v4950 = vunpack.c.0.s8 %v4949
        %v4951 = vlaneseq
        %v4952 = vshrl.u32 %v4951, 7
        %v4953 = vsub.s32 %v4950, %v4952
        %v4954 = vrot.slane %v4940, %v4953
        %v4955 = vcombine.high %v4947, %v4947
        %v4956 = vcombine.high %v4954, %v4954
        %v4957 = vcombine.high %v4811, %v4811
        %v4959 = vunpack.c.l.s4 1983009808
        %v4960 = vunpack.c.0.s8 %v4959
        %v4961 = vlaneseq
        %v4962 = vshrl.u32 %v4961, 7
        %v4963 = vsub.s32 %v4960, %v4962
        %v4964 = vrot.slane %v4811, %v4963
        %v4966 = vunpack.c.l.s4 1983009808
        %v4967 = vunpack.c.0.s8 %v4966
        %v4968 = vlaneseq
        %v4969 = vshrl.u32 %v4968, 7
        %v4970 = vsub.s32 %v4967, %v4969
        %v4971 = vrot.slane %v4957, %v4970
        %v4972 = vcombine.high %v4964, %v4964
        %v4973 = vcombine.high %v4971, %v4971
        %v4974 = vcombine.high %v4814, %v4814
        %v4976 = vunpack.c.l.s4 1983009808
        %v4977 = vunpack.c.0.s8 %v4976
        %v4978 = vlaneseq
        %v4979 = vshrl.u32 %v4978, 7
        %v4980 = vsub.s32 %v4977, %v4979
        %v4981 = vrot.slane %v4814, %v4980
        %v4983 = vunpack.c.l.s4 1983009808
        %v4984 = vunpack.c.0.s8 %v4983
        %v4985 = vlaneseq
        %v4986 = vshrl.u32 %v4985, 7
        %v4987 = vsub.s32 %v4984, %v4986
        %v4988 = vrot.slane %v4974, %v4987
        %v4989 = vcombine.high %v4981, %v4981
        %v4990 = vcombine.high %v4988, %v4988
        %v4991 = vcombine.high %v4817, %v4817
        %v4993 = vunpack.c.l.s4 1983009808
        %v4994 = vunpack.c.0.s8 %v4993
        %v4995 = vlaneseq
        %v4996 = vshrl.u32 %v4995, 7
        %v4997 = vsub.s32 %v4994, %v4996
        %v4998 = vrot.slane %v4817, %v4997
        %v5000 = vunpack.c.l.s4 1983009808
        %v5001 = vunpack.c.0.s8 %v5000
        %v5002 = vlaneseq
        %v5003 = vshrl.u32 %v5002, 7
        %v5004 = vsub.s32 %v5001, %v5003
        %v5005 = vrot.slane %v4991, %v5004
        %v5006 = vcombine.high %v4998, %v4998
        %v5007 = vcombine.high %v5005, %v5005
        %v5008 = vcombine.high %v4820, %v4820
        %v5010 = vunpack.c.l.s4 1983009808
        %v5011 = vunpack.c.0.s8 %v5010
        %v5012 = vlaneseq
        %v5013 = vshrl.u32 %v5012, 7
        %v5014 = vsub.s32 %v5011, %v5013
        %v5015 = vrot.slane %v4820, %v5014
        %v5017 = vunpack.c.l.s4 1983009808
        %v5018 = vunpack.c.0.s8 %v5017
        %v5019 = vlaneseq
        %v5020 = vshrl.u32 %v5019, 7
        %v5021 = vsub.s32 %v5018, %v5020
        %v5022 = vrot.slane %v5008, %v5021
        %v5023 = vcombine.high %v5015, %v5015
        %v5024 = vcombine.high %v5022, %v5022
        %v5025 = vcombine.high %v4823, %v4823
        %v5027 = vunpack.c.l.s4 1983009808
        %v5028 = vunpack.c.0.s8 %v5027
        %v5029 = vlaneseq
        %v5030 = vshrl.u32 %v5029, 7
        %v5031 = vsub.s32 %v5028, %v5030
        %v5032 = vrot.slane %v4823, %v5031
        %v5034 = vunpack.c.l.s4 1983009808
        %v5035 = vunpack.c.0.s8 %v5034
        %v5036 = vlaneseq
        %v5037 = vshrl.u32 %v5036, 7
        %v5038 = vsub.s32 %v5035, %v5037
        %v5039 = vrot.slane %v5025, %v5038
        %v5040 = vcombine.high %v5032, %v5032
        %v5041 = vcombine.high %v5039, %v5039
        %v5042 = vcombine.high %v4826, %v4826
        %v5044 = vunpack.c.l.s4 1983009808
        %v5045 = vunpack.c.0.s8 %v5044
        %v5046 = vlaneseq
        %v5047 = vshrl.u32 %v5046, 7
        %v5048 = vsub.s32 %v5045, %v5047
        %v5049 = vrot.slane %v4826, %v5048
        %v5051 = vunpack.c.l.s4 1983009808
        %v5052 = vunpack.c.0.s8 %v5051
        %v5053 = vlaneseq
        %v5054 = vshrl.u32 %v5053, 7
        %v5055 = vsub.s32 %v5052, %v5054
        %v5056 = vrot.slane %v5042, %v5055
        %v5057 = vcombine.high %v5049, %v5049
        %v5058 = vcombine.high %v5056, %v5056
        %v5059 = vcombine.high %v4829, %v4829
        %v5061 = vunpack.c.l.s4 1983009808
        %v5062 = vunpack.c.0.s8 %v5061
        %v5063 = vlaneseq
        %v5064 = vshrl.u32 %v5063, 7
        %v5065 = vsub.s32 %v5062, %v5064
        %v5066 = vrot.slane %v4829, %v5065
        %v5068 = vunpack.c.l.s4 1983009808
        %v5069 = vunpack.c.0.s8 %v5068
        %v5070 = vlaneseq
        %v5071 = vshrl.u32 %v5070, 7
        %v5072 = vsub.s32 %v5069, %v5071
        %v5073 = vrot.slane %v5059, %v5072
        %v5074 = vcombine.high %v5066, %v5066
        %v5075 = vcombine.high %v5073, %v5073
        %v5076 = vcombine.high %v4832, %v4832
        %v5078 = vunpack.c.l.s4 1983009808
        %v5079 = vunpack.c.0.s8 %v5078
        %v5080 = vlaneseq
        %v5081 = vshrl.u32 %v5080, 7
        %v5082 = vsub.s32 %v5079, %v5081
        %v5083 = vrot.slane %v4832, %v5082
        %v5085 = vunpack.c.l.s4 1983009808
        %v5086 = vunpack.c.0.s8 %v5085
        %v5087 = vlaneseq
        %v5088 = vshrl.u32 %v5087, 7
        %v5089 = vsub.s32 %v5086, %v5088
        %v5090 = vrot.slane %v5076, %v5089
        %v5091 = vcombine.high %v5083, %v5083
        %v5092 = vcombine.high %v5090, %v5090
        %v5093 = vcombine.high %v4835, %v4835
        %v5095 = vunpack.c.l.s4 1983009808
        %v5096 = vunpack.c.0.s8 %v5095
        %v5097 = vlaneseq
        %v5098 = vshrl.u32 %v5097, 7
        %v5099 = vsub.s32 %v5096, %v5098
        %v5100 = vrot.slane %v4835, %v5099
        %v5102 = vunpack.c.l.s4 1983009808
        %v5103 = vunpack.c.0.s8 %v5102
        %v5104 = vlaneseq
        %v5105 = vshrl.u32 %v5104, 7
        %v5106 = vsub.s32 %v5103, %v5105
        %v5107 = vrot.slane %v5093, %v5106
        %v5108 = vcombine.high %v5100, %v5100
        %v5109 = vcombine.high %v5107, %v5107
        %v5110 = vcombine.high %v4838, %v4838
        %v5112 = vunpack.c.l.s4 1983009808
        %v5113 = vunpack.c.0.s8 %v5112
        %v5114 = vlaneseq
        %v5115 = vshrl.u32 %v5114, 7
        %v5116 = vsub.s32 %v5113, %v5115
        %v5117 = vrot.slane %v4838, %v5116
        %v5119 = vunpack.c.l.s4 1983009808
        %v5120 = vunpack.c.0.s8 %v5119
        %v5121 = vlaneseq
        %v5122 = vshrl.u32 %v5121, 7
        %v5123 = vsub.s32 %v5120, %v5122
        %v5124 = vrot.slane %v5110, %v5123
        %v5125 = vcombine.high %v5117, %v5117
        %v5126 = vcombine.high %v5124, %v5124
        %v5191 = vsel %vm2796, %v4862, -inf
        %v5192 = vrot.slane %v5191, 4
        %v5193 = vmax.f32 %v5191, %v5192
        %v5194 = vrot.slane %v5193, 2
        %v5195 = vmax.f32 %v5193, %v5194
        %v5196 = vrot.slane %v5195, 1
        %v5197 = vmax.f32 %v5195, %v5196
        %v5198 = vsel %vm2796, %v4870, -inf
        %v5199 = vrot.slane %v5198, 4
        %v5200 = vmax.f32 %v5198, %v5199
        %v5201 = vrot.slane %v5200, 2
        %v5202 = vmax.f32 %v5200, %v5201
        %v5203 = vrot.slane %v5202, 1
        %v5204 = vmax.f32 %v5202, %v5203
        %v5205 = vsel %vm2796, %v4869, -inf
        %v5206 = vrot.slane %v5205, 4
        %v5207 = vmax.f32 %v5205, %v5206
        %v5208 = vrot.slane %v5207, 2
        %v5209 = vmax.f32 %v5207, %v5208
        %v5210 = vrot.slane %v5209, 1
        %v5211 = vmax.f32 %v5209, %v5210
        %v5212 = vsel %vm2796, %v4871, -inf
        %v5213 = vrot.slane %v5212, 4
        %v5214 = vmax.f32 %v5212, %v5213
        %v5215 = vrot.slane %v5214, 2
        %v5216 = vmax.f32 %v5214, %v5215
        %v5217 = vrot.slane %v5216, 1
        %v5218 = vmax.f32 %v5216, %v5217
        %v5219 = vsel %vm2796, %v4879, -inf
        %v5220 = vrot.slane %v5219, 4
        %v5221 = vmax.f32 %v5219, %v5220
        %v5222 = vrot.slane %v5221, 2
        %v5223 = vmax.f32 %v5221, %v5222
        %v5224 = vrot.slane %v5223, 1
        %v5225 = vmax.f32 %v5223, %v5224
        %v5226 = vsel %vm2796, %v4887, -inf
        %v5227 = vrot.slane %v5226, 4
        %v5228 = vmax.f32 %v5226, %v5227
        %v5229 = vrot.slane %v5228, 2
        %v5230 = vmax.f32 %v5228, %v5229
        %v5231 = vrot.slane %v5230, 1
        %v5232 = vmax.f32 %v5230, %v5231
        %v5233 = vsel %vm2796, %v4886, -inf
        %v5234 = vrot.slane %v5233, 4
        %v5235 = vmax.f32 %v5233, %v5234
        %v5236 = vrot.slane %v5235, 2
        %v5237 = vmax.f32 %v5235, %v5236
        %v5238 = vrot.slane %v5237, 1
        %v5239 = vmax.f32 %v5237, %v5238
        %v5240 = vsel %vm2796, %v4888, -inf
        %v5241 = vrot.slane %v5240, 4
        %v5242 = vmax.f32 %v5240, %v5241
        %v5243 = vrot.slane %v5242, 2
        %v5244 = vmax.f32 %v5242, %v5243
        %v5245 = vrot.slane %v5244, 1
        %v5246 = vmax.f32 %v5244, %v5245
        %v5247 = vsel %vm2796, %v4896, -inf
        %v5248 = vrot.slane %v5247, 4
        %v5249 = vmax.f32 %v5247, %v5248
        %v5250 = vrot.slane %v5249, 2
        %v5251 = vmax.f32 %v5249, %v5250
        %v5252 = vrot.slane %v5251, 1
        %v5253 = vmax.f32 %v5251, %v5252
        %v5254 = vsel %vm2796, %v4904, -inf
        %v5255 = vrot.slane %v5254, 4
        %v5256 = vmax.f32 %v5254, %v5255
        %v5257 = vrot.slane %v5256, 2
        %v5258 = vmax.f32 %v5256, %v5257
        %v5259 = vrot.slane %v5258, 1
        %v5260 = vmax.f32 %v5258, %v5259
        %v5261 = vsel %vm2796, %v4903, -inf
        %v5262 = vrot.slane %v5261, 4
        %v5263 = vmax.f32 %v5261, %v5262
        %v5264 = vrot.slane %v5263, 2
        %v5265 = vmax.f32 %v5263, %v5264
        %v5266 = vrot.slane %v5265, 1
        %v5267 = vmax.f32 %v5265, %v5266
        %v5268 = vsel %vm2796, %v4905, -inf
        %v5269 = vrot.slane %v5268, 4
        %v5270 = vmax.f32 %v5268, %v5269
        %v5271 = vrot.slane %v5270, 2
        %v5272 = vmax.f32 %v5270, %v5271
        %v5273 = vrot.slane %v5272, 1
        %v5274 = vmax.f32 %v5272, %v5273
        %v5275 = vsel %vm2796, %v4913, -inf
        %v5276 = vrot.slane %v5275, 4
        %v5277 = vmax.f32 %v5275, %v5276
        %v5278 = vrot.slane %v5277, 2
        %v5279 = vmax.f32 %v5277, %v5278
        %v5280 = vrot.slane %v5279, 1
        %v5281 = vmax.f32 %v5279, %v5280
        %v5282 = vsel %vm2796, %v4921, -inf
        %v5283 = vrot.slane %v5282, 4
        %v5284 = vmax.f32 %v5282, %v5283
        %v5285 = vrot.slane %v5284, 2
        %v5286 = vmax.f32 %v5284, %v5285
        %v5287 = vrot.slane %v5286, 1
        %v5288 = vmax.f32 %v5286, %v5287
        %v5289 = vsel %vm2796, %v4920, -inf
        %v5290 = vrot.slane %v5289, 4
        %v5291 = vmax.f32 %v5289, %v5290
        %v5292 = vrot.slane %v5291, 2
        %v5293 = vmax.f32 %v5291, %v5292
        %v5294 = vrot.slane %v5293, 1
        %v5295 = vmax.f32 %v5293, %v5294
        %v5296 = vsel %vm2796, %v4922, -inf
        %v5297 = vrot.slane %v5296, 4
        %v5298 = vmax.f32 %v5296, %v5297
        %v5299 = vrot.slane %v5298, 2
        %v5300 = vmax.f32 %v5298, %v5299
        %v5301 = vrot.slane %v5300, 1
        %v5302 = vmax.f32 %v5300, %v5301
        %v5303 = vsel %vm2796, %v4930, -inf
        %v5304 = vrot.slane %v5303, 4
        %v5305 = vmax.f32 %v5303, %v5304
        %v5306 = vrot.slane %v5305, 2
        %v5307 = vmax.f32 %v5305, %v5306
        %v5308 = vrot.slane %v5307, 1
        %v5309 = vmax.f32 %v5307, %v5308
        %v5310 = vsel %vm2796, %v4938, -inf
        %v5311 = vrot.slane %v5310, 4
        %v5312 = vmax.f32 %v5310, %v5311
        %v5313 = vrot.slane %v5312, 2
        %v5314 = vmax.f32 %v5312, %v5313
        %v5315 = vrot.slane %v5314, 1
        %v5316 = vmax.f32 %v5314, %v5315
        %v5317 = vsel %vm2796, %v4937, -inf
        %v5318 = vrot.slane %v5317, 4
        %v5319 = vmax.f32 %v5317, %v5318
        %v5320 = vrot.slane %v5319, 2
        %v5321 = vmax.f32 %v5319, %v5320
        %v5322 = vrot.slane %v5321, 1
        %v5323 = vmax.f32 %v5321, %v5322
        %v5324 = vsel %vm2796, %v4939, -inf
        %v5325 = vrot.slane %v5324, 4
        %v5326 = vmax.f32 %v5324, %v5325
        %v5327 = vrot.slane %v5326, 2
        %v5328 = vmax.f32 %v5326, %v5327
        %v5329 = vrot.slane %v5328, 1
        %v5330 = vmax.f32 %v5328, %v5329
        %v5331 = vsel %vm2796, %v4947, -inf
        %v5332 = vrot.slane %v5331, 4
        %v5333 = vmax.f32 %v5331, %v5332
        %v5334 = vrot.slane %v5333, 2
        %v5335 = vmax.f32 %v5333, %v5334
        %v5336 = vrot.slane %v5335, 1
        %v5337 = vmax.f32 %v5335, %v5336
        %v5338 = vsel %vm2796, %v4955, -inf
        %v5339 = vrot.slane %v5338, 4
        %v5340 = vmax.f32 %v5338, %v5339
        %v5341 = vrot.slane %v5340, 2
        %v5342 = vmax.f32 %v5340, %v5341
        %v5343 = vrot.slane %v5342, 1
        %v5344 = vmax.f32 %v5342, %v5343
        %v5345 = vsel %vm2796, %v4954, -inf
        %v5346 = vrot.slane %v5345, 4
        %v5347 = vmax.f32 %v5345, %v5346
        %v5348 = vrot.slane %v5347, 2
        %v5349 = vmax.f32 %v5347, %v5348
        %v5350 = vrot.slane %v5349, 1
        %v5351 = vmax.f32 %v5349, %v5350
        %v5352 = vsel %vm2796, %v4956, -inf
        %v5353 = vrot.slane %v5352, 4
        %v5354 = vmax.f32 %v5352, %v5353
        %v5355 = vrot.slane %v5354, 2
        %v5356 = vmax.f32 %v5354, %v5355
        %v5357 = vrot.slane %v5356, 1
        %v5358 = vmax.f32 %v5356, %v5357
        %v5359 = vsel %vm2796, %v4964, -inf
        %v5360 = vrot.slane %v5359, 4
        %v5361 = vmax.f32 %v5359, %v5360
        %v5362 = vrot.slane %v5361, 2
        %v5363 = vmax.f32 %v5361, %v5362
        %v5364 = vrot.slane %v5363, 1
        %v5365 = vmax.f32 %v5363, %v5364
        %v5366 = vsel %vm2796, %v4972, -inf
        %v5367 = vrot.slane %v5366, 4
        %v5368 = vmax.f32 %v5366, %v5367
        %v5369 = vrot.slane %v5368, 2
        %v5370 = vmax.f32 %v5368, %v5369
        %v5371 = vrot.slane %v5370, 1
        %v5372 = vmax.f32 %v5370, %v5371
        %v5373 = vsel %vm2796, %v4971, -inf
        %v5374 = vrot.slane %v5373, 4
        %v5375 = vmax.f32 %v5373, %v5374
        %v5376 = vrot.slane %v5375, 2
        %v5377 = vmax.f32 %v5375, %v5376
        %v5378 = vrot.slane %v5377, 1
        %v5379 = vmax.f32 %v5377, %v5378
        %v5380 = vsel %vm2796, %v4973, -inf
        %v5381 = vrot.slane %v5380, 4
        %v5382 = vmax.f32 %v5380, %v5381
        %v5383 = vrot.slane %v5382, 2
        %v5384 = vmax.f32 %v5382, %v5383
        %v5385 = vrot.slane %v5384, 1
        %v5386 = vmax.f32 %v5384, %v5385
        %v5387 = vsel %vm2796, %v4981, -inf
        %v5388 = vrot.slane %v5387, 4
        %v5389 = vmax.f32 %v5387, %v5388
        %v5390 = vrot.slane %v5389, 2
        %v5391 = vmax.f32 %v5389, %v5390
        %v5392 = vrot.slane %v5391, 1
        %v5393 = vmax.f32 %v5391, %v5392
        %v5394 = vsel %vm2796, %v4989, -inf
        %v5395 = vrot.slane %v5394, 4
        %v5396 = vmax.f32 %v5394, %v5395
        %v5397 = vrot.slane %v5396, 2
        %v5398 = vmax.f32 %v5396, %v5397
        %v5399 = vrot.slane %v5398, 1
        %v5400 = vmax.f32 %v5398, %v5399
        %v5401 = vsel %vm2796, %v4988, -inf
        %v5402 = vrot.slane %v5401, 4
        %v5403 = vmax.f32 %v5401, %v5402
        %v5404 = vrot.slane %v5403, 2
        %v5405 = vmax.f32 %v5403, %v5404
        %v5406 = vrot.slane %v5405, 1
        %v5407 = vmax.f32 %v5405, %v5406
        %v5408 = vsel %vm2796, %v4990, -inf
        %v5409 = vrot.slane %v5408, 4
        %v5410 = vmax.f32 %v5408, %v5409
        %v5411 = vrot.slane %v5410, 2
        %v5412 = vmax.f32 %v5410, %v5411
        %v5413 = vrot.slane %v5412, 1
        %v5414 = vmax.f32 %v5412, %v5413
        %v5415 = vsel %vm2796, %v4998, -inf
        %v5416 = vrot.slane %v5415, 4
        %v5417 = vmax.f32 %v5415, %v5416
        %v5418 = vrot.slane %v5417, 2
        %v5419 = vmax.f32 %v5417, %v5418
        %v5420 = vrot.slane %v5419, 1
        %v5421 = vmax.f32 %v5419, %v5420
        %v5422 = vsel %vm2796, %v5006, -inf
        %v5423 = vrot.slane %v5422, 4
        %v5424 = vmax.f32 %v5422, %v5423
        %v5425 = vrot.slane %v5424, 2
        %v5426 = vmax.f32 %v5424, %v5425
        %v5427 = vrot.slane %v5426, 1
        %v5428 = vmax.f32 %v5426, %v5427
        %v5429 = vsel %vm2796, %v5005, -inf
        %v5430 = vrot.slane %v5429, 4
        %v5431 = vmax.f32 %v5429, %v5430
        %v5432 = vrot.slane %v5431, 2
        %v5433 = vmax.f32 %v5431, %v5432
        %v5434 = vrot.slane %v5433, 1
        %v5435 = vmax.f32 %v5433, %v5434
        %v5436 = vsel %vm2796, %v5007, -inf
        %v5437 = vrot.slane %v5436, 4
        %v5438 = vmax.f32 %v5436, %v5437
        %v5439 = vrot.slane %v5438, 2
        %v5440 = vmax.f32 %v5438, %v5439
        %v5441 = vrot.slane %v5440, 1
        %v5442 = vmax.f32 %v5440, %v5441
        %v5443 = vsel %vm2796, %v5015, -inf
        %v5444 = vrot.slane %v5443, 4
        %v5445 = vmax.f32 %v5443, %v5444
        %v5446 = vrot.slane %v5445, 2
        %v5447 = vmax.f32 %v5445, %v5446
        %v5448 = vrot.slane %v5447, 1
        %v5449 = vmax.f32 %v5447, %v5448
        %v5450 = vsel %vm2796, %v5023, -inf
        %v5451 = vrot.slane %v5450, 4
        %v5452 = vmax.f32 %v5450, %v5451
        %v5453 = vrot.slane %v5452, 2
        %v5454 = vmax.f32 %v5452, %v5453
        %v5455 = vrot.slane %v5454, 1
        %v5456 = vmax.f32 %v5454, %v5455
        %v5457 = vsel %vm2796, %v5022, -inf
        %v5458 = vrot.slane %v5457, 4
        %v5459 = vmax.f32 %v5457, %v5458
        %v5460 = vrot.slane %v5459, 2
        %v5461 = vmax.f32 %v5459, %v5460
        %v5462 = vrot.slane %v5461, 1
        %v5463 = vmax.f32 %v5461, %v5462
        %v5464 = vsel %vm2796, %v5024, -inf
        %v5465 = vrot.slane %v5464, 4
        %v5466 = vmax.f32 %v5464, %v5465
        %v5467 = vrot.slane %v5466, 2
        %v5468 = vmax.f32 %v5466, %v5467
        %v5469 = vrot.slane %v5468, 1
        %v5470 = vmax.f32 %v5468, %v5469
        %v5471 = vsel %vm2796, %v5032, -inf
        %v5472 = vrot.slane %v5471, 4
        %v5473 = vmax.f32 %v5471, %v5472
        %v5474 = vrot.slane %v5473, 2
        %v5475 = vmax.f32 %v5473, %v5474
        %v5476 = vrot.slane %v5475, 1
        %v5477 = vmax.f32 %v5475, %v5476
        %v5478 = vsel %vm2796, %v5040, -inf
        %v5479 = vrot.slane %v5478, 4
        %v5480 = vmax.f32 %v5478, %v5479
        %v5481 = vrot.slane %v5480, 2
        %v5482 = vmax.f32 %v5480, %v5481
        %v5483 = vrot.slane %v5482, 1
        %v5484 = vmax.f32 %v5482, %v5483
        %v5485 = vsel %vm2796, %v5039, -inf
        %v5486 = vrot.slane %v5485, 4
        %v5487 = vmax.f32 %v5485, %v5486
        %v5488 = vrot.slane %v5487, 2
        %v5489 = vmax.f32 %v5487, %v5488
        %v5490 = vrot.slane %v5489, 1
        %v5491 = vmax.f32 %v5489, %v5490
        %v5492 = vsel %vm2796, %v5041, -inf
        %v5493 = vrot.slane %v5492, 4
        %v5494 = vmax.f32 %v5492, %v5493
        %v5495 = vrot.slane %v5494, 2
        %v5496 = vmax.f32 %v5494, %v5495
        %v5497 = vrot.slane %v5496, 1
        %v5498 = vmax.f32 %v5496, %v5497
        %v5499 = vsel %vm2796, %v5049, -inf
        %v5500 = vrot.slane %v5499, 4
        %v5501 = vmax.f32 %v5499, %v5500
        %v5502 = vrot.slane %v5501, 2
        %v5503 = vmax.f32 %v5501, %v5502
        %v5504 = vrot.slane %v5503, 1
        %v5505 = vmax.f32 %v5503, %v5504
        %v5506 = vsel %vm2796, %v5057, -inf
        %v5507 = vrot.slane %v5506, 4
        %v5508 = vmax.f32 %v5506, %v5507
        %v5509 = vrot.slane %v5508, 2
        %v5510 = vmax.f32 %v5508, %v5509
        %v5511 = vrot.slane %v5510, 1
        %v5512 = vmax.f32 %v5510, %v5511
        %v5513 = vsel %vm2796, %v5056, -inf
        %v5514 = vrot.slane %v5513, 4
        %v5515 = vmax.f32 %v5513, %v5514
        %v5516 = vrot.slane %v5515, 2
        %v5517 = vmax.f32 %v5515, %v5516
        %v5518 = vrot.slane %v5517, 1
        %v5519 = vmax.f32 %v5517, %v5518
        %v5520 = vsel %vm2796, %v5058, -inf
        %v5521 = vrot.slane %v5520, 4
        %v5522 = vmax.f32 %v5520, %v5521
        %v5523 = vrot.slane %v5522, 2
        %v5524 = vmax.f32 %v5522, %v5523
        %v5525 = vrot.slane %v5524, 1
        %v5526 = vmax.f32 %v5524, %v5525
        %v5527 = vsel %vm2796, %v5066, -inf
        %v5528 = vrot.slane %v5527, 4
        %v5529 = vmax.f32 %v5527, %v5528
        %v5530 = vrot.slane %v5529, 2
        %v5531 = vmax.f32 %v5529, %v5530
        %v5532 = vrot.slane %v5531, 1
        %v5533 = vmax.f32 %v5531, %v5532
        %v5534 = vsel %vm2796, %v5074, -inf
        %v5535 = vrot.slane %v5534, 4
        %v5536 = vmax.f32 %v5534, %v5535
        %v5537 = vrot.slane %v5536, 2
        %v5538 = vmax.f32 %v5536, %v5537
        %v5539 = vrot.slane %v5538, 1
        %v5540 = vmax.f32 %v5538, %v5539
        %v5541 = vsel %vm2796, %v5073, -inf
        %v5542 = vrot.slane %v5541, 4
        %v5543 = vmax.f32 %v5541, %v5542
        %v5544 = vrot.slane %v5543, 2
        %v5545 = vmax.f32 %v5543, %v5544
        %v5546 = vrot.slane %v5545, 1
        %v5547 = vmax.f32 %v5545, %v5546
        %v5548 = vsel %vm2796, %v5075, -inf
        %v5549 = vrot.slane %v5548, 4
        %v5550 = vmax.f32 %v5548, %v5549
        %v5551 = vrot.slane %v5550, 2
        %v5552 = vmax.f32 %v5550, %v5551
        %v5553 = vrot.slane %v5552, 1
        %v5554 = vmax.f32 %v5552, %v5553
        %v5555 = vsel %vm2796, %v5083, -inf
        %v5556 = vrot.slane %v5555, 4
        %v5557 = vmax.f32 %v5555, %v5556
        %v5558 = vrot.slane %v5557, 2
        %v5559 = vmax.f32 %v5557, %v5558
        %v5560 = vrot.slane %v5559, 1
        %v5561 = vmax.f32 %v5559, %v5560
        %v5562 = vsel %vm2796, %v5091, -inf
        %v5563 = vrot.slane %v5562, 4
        %v5564 = vmax.f32 %v5562, %v5563
        %v5565 = vrot.slane %v5564, 2
        %v5566 = vmax.f32 %v5564, %v5565
        %v5567 = vrot.slane %v5566, 1
        %v5568 = vmax.f32 %v5566, %v5567
        %v5569 = vsel %vm2796, %v5090, -inf
        %v5570 = vrot.slane %v5569, 4
        %v5571 = vmax.f32 %v5569, %v5570
        %v5572 = vrot.slane %v5571, 2
        %v5573 = vmax.f32 %v5571, %v5572
        %v5574 = vrot.slane %v5573, 1
        %v5575 = vmax.f32 %v5573, %v5574
        %v5576 = vsel %vm2796, %v5092, -inf
        %v5577 = vrot.slane %v5576, 4
        %v5578 = vmax.f32 %v5576, %v5577
        %v5579 = vrot.slane %v5578, 2
        %v5580 = vmax.f32 %v5578, %v5579
        %v5581 = vrot.slane %v5580, 1
        %v5582 = vmax.f32 %v5580, %v5581
        %v5583 = vsel %vm2796, %v5100, -inf
        %v5584 = vrot.slane %v5583, 4
        %v5585 = vmax.f32 %v5583, %v5584
        %v5586 = vrot.slane %v5585, 2
        %v5587 = vmax.f32 %v5585, %v5586
        %v5588 = vrot.slane %v5587, 1
        %v5589 = vmax.f32 %v5587, %v5588
        %v5590 = vsel %vm2796, %v5108, -inf
        %v5591 = vrot.slane %v5590, 4
        %v5592 = vmax.f32 %v5590, %v5591
        %v5593 = vrot.slane %v5592, 2
        %v5594 = vmax.f32 %v5592, %v5593
        %v5595 = vrot.slane %v5594, 1
        %v5596 = vmax.f32 %v5594, %v5595
        %v5597 = vsel %vm2796, %v5107, -inf
        %v5598 = vrot.slane %v5597, 4
        %v5599 = vmax.f32 %v5597, %v5598
        %v5600 = vrot.slane %v5599, 2
        %v5601 = vmax.f32 %v5599, %v5600
        %v5602 = vrot.slane %v5601, 1
        %v5603 = vmax.f32 %v5601, %v5602
        %v5604 = vsel %vm2796, %v5109, -inf
        %v5605 = vrot.slane %v5604, 4
        %v5606 = vmax.f32 %v5604, %v5605
        %v5607 = vrot.slane %v5606, 2
        %v5608 = vmax.f32 %v5606, %v5607
        %v5609 = vrot.slane %v5608, 1
        %v5610 = vmax.f32 %v5608, %v5609
        %v5611 = vsel %vm2796, %v5117, -inf
        %v5612 = vrot.slane %v5611, 4
        %v5613 = vmax.f32 %v5611, %v5612
        %v5614 = vrot.slane %v5613, 2
        %v5615 = vmax.f32 %v5613, %v5614
        %v5616 = vrot.slane %v5615, 1
        %v5617 = vmax.f32 %v5615, %v5616
        %v5618 = vsel %vm2796, %v5125, -inf
        %v5619 = vrot.slane %v5618, 4
        %v5620 = vmax.f32 %v5618, %v5619
        %v5621 = vrot.slane %v5620, 2
        %v5622 = vmax.f32 %v5620, %v5621
        %v5623 = vrot.slane %v5622, 1
        %v5624 = vmax.f32 %v5622, %v5623
        %v5625 = vsel %vm2796, %v5124, -inf
        %v5626 = vrot.slane %v5625, 4
        %v5627 = vmax.f32 %v5625, %v5626
        %v5628 = vrot.slane %v5627, 2
        %v5629 = vmax.f32 %v5627, %v5628
        %v5630 = vrot.slane %v5629, 1
        %v5631 = vmax.f32 %v5629, %v5630
        %v5632 = vsel %vm2796, %v5126, -inf
        %v5633 = vrot.slane %v5632, 4
        %v5634 = vmax.f32 %v5632, %v5633
        %v5635 = vrot.slane %v5634, 2
        %v5636 = vmax.f32 %v5634, %v5635
        %v5637 = vrot.slane %v5636, 1
        %v5638 = vmax.f32 %v5636, %v5637
        %5639 = vst.msk [vmem:[#allocation4] sm:$0xff] %vm2793, 0.0
        %5640 = vst.msk [vmem:[#allocation4 + $0x8] sm:$0x3] %vm2796, 0.0
        %s5641 = scalar_lea.vmem [#allocation4], 144
        %5642 = vst.msk [vmem:[%s5641] sm:$0xff] %vm2793, 0.0
        %5643 = vst.msk [vmem:[%s5641 + $0x8] sm:$0x3] %vm2796, 0.0
        %s5644 = scalar_lea.vmem [#allocation4], 16
        %5645 = vst.msk [vmem:[%s5644] sm:$0x1] %vm2803, 0.0
        %5646 = vst.msk [vmem:[%s5644 + $0x10] sm:$0x1] %vm2803, 0.0
        %5647 = vst.msk [vmem:[%s5644 + $0x20] sm:$0x1] %vm2803, 0.0
        %5648 = vst.msk [vmem:[%s5644 + $0x30] sm:$0x1] %vm2803, 0.0
        %5649 = vst.msk [vmem:[%s5644 + $0x40] sm:$0x1] %vm2803, 0.0
        %5650 = vst.msk [vmem:[%s5644 + $0x50] sm:$0x1] %vm2803, 0.0
        %5651 = vst.msk [vmem:[%s5644 + $0x60] sm:$0x1] %vm2803, 0.0
        %5652 = vst.msk [vmem:[%s5644 + $0x70] sm:$0x1] %vm2803, 0.0
        %5653 = vst.msk [vmem:[%s5644 + $0x9] sm:$0x1] %vm2803, 0.0
        %5654 = vst.msk [vmem:[%s5644 + $0x19] sm:$0x1] %vm2803, 0.0
        %5655 = vst.msk [vmem:[%s5644 + $0x29] sm:$0x1] %vm2803, 0.0
        %5656 = vst.msk [vmem:[%s5644 + $0x39] sm:$0x1] %vm2803, 0.0
        %5657 = vst.msk [vmem:[%s5644 + $0x49] sm:$0x1] %vm2803, 0.0
        %5658 = vst.msk [vmem:[%s5644 + $0x59] sm:$0x1] %vm2803, 0.0
        %5659 = vst.msk [vmem:[%s5644 + $0x69] sm:$0x1] %vm2803, 0.0
        %5660 = vst.msk [vmem:[%s5644 + $0x79] sm:$0x1] %vm2803, 0.0
        %vm5725 = vcmask 1041409
        %v5726 = vsel %vm5725, %v5204, %v5197
        %vm5727 = vcmask 1042434
        %v5728 = vsel %vm5727, %v5211, %v5726
        %vm5729 = vcmask 1043459
        %v5730 = vsel %vm5729, %v5218, %v5728
        %vm5731 = vcmask 1044484
        %v5732 = vsel %vm5731, %v5225, %v5730
        %vm5733 = vcmask 1045509
        %v5734 = vsel %vm5733, %v5232, %v5732
        %vm5735 = vcmask 1046534
        %v5736 = vsel %vm5735, %v5239, %v5734
        %vm5737 = vcmask 1047559
        %v5738 = vsel %vm5737, %v5246, %v5736
        %v5739 = vsel %vm5725, %v5260, %v5253
        %v5740 = vsel %vm5727, %v5267, %v5739
        %v5741 = vsel %vm5729, %v5274, %v5740
        %v5742 = vsel %vm5731, %v5281, %v5741
        %v5743 = vsel %vm5733, %v5288, %v5742
        %v5744 = vsel %vm5735, %v5295, %v5743
        %v5745 = vsel %vm5737, %v5302, %v5744
        %v5746 = vsel %vm5725, %v5316, %v5309
        %v5747 = vsel %vm5727, %v5323, %v5746
        %v5748 = vsel %vm5729, %v5330, %v5747
        %v5749 = vsel %vm5731, %v5337, %v5748
        %v5750 = vsel %vm5733, %v5344, %v5749
        %v5751 = vsel %vm5735, %v5351, %v5750
        %v5752 = vsel %vm5737, %v5358, %v5751
        %v5753 = vsel %vm5725, %v5372, %v5365
        %v5754 = vsel %vm5727, %v5379, %v5753
        %v5755 = vsel %vm5729, %v5386, %v5754
        %v5756 = vsel %vm5731, %v5393, %v5755
        %v5757 = vsel %vm5733, %v5400, %v5756
        %v5758 = vsel %vm5735, %v5407, %v5757
        %v5759 = vsel %vm5737, %v5414, %v5758
        %v5760 = vsel %vm5725, %v5428, %v5421
        %v5761 = vsel %vm5727, %v5435, %v5760
        %v5762 = vsel %vm5729, %v5442, %v5761
        %v5763 = vsel %vm5731, %v5449, %v5762
        %v5764 = vsel %vm5733, %v5456, %v5763
        %v5765 = vsel %vm5735, %v5463, %v5764
        %v5766 = vsel %vm5737, %v5470, %v5765
        %v5767 = vsel %vm5725, %v5484, %v5477
        %v5768 = vsel %vm5727, %v5491, %v5767
        %v5769 = vsel %vm5729, %v5498, %v5768
        %v5770 = vsel %vm5731, %v5505, %v5769
        %v5771 = vsel %vm5733, %v5512, %v5770
        %v5772 = vsel %vm5735, %v5519, %v5771
        %v5773 = vsel %vm5737, %v5526, %v5772
        %v5774 = vsel %vm5725, %v5540, %v5533
        %v5775 = vsel %vm5727, %v5547, %v5774
        %v5776 = vsel %vm5729, %v5554, %v5775
        %v5777 = vsel %vm5731, %v5561, %v5776
        %v5778 = vsel %vm5733, %v5568, %v5777
        %v5779 = vsel %vm5735, %v5575, %v5778
        %v5780 = vsel %vm5737, %v5582, %v5779
        %v5781 = vsel %vm5725, %v5596, %v5589
        %v5782 = vsel %vm5727, %v5603, %v5781
        %v5783 = vsel %vm5729, %v5610, %v5782
        %v5784 = vsel %vm5731, %v5617, %v5783
        %v5785 = vsel %vm5733, %v5624, %v5784
        %v5786 = vsel %vm5735, %v5631, %v5785
        %v5787 = vsel %vm5737, %v5638, %v5786
        %5796 = vst.msk [vmem:[%s5644 + $0x1] sm:$0xff] %vm2793, %v5738
        %5797 = vst.msk [vmem:[%s5644 + $0x11] sm:$0xff] %vm2793, %v5745
        %5798 = vst.msk [vmem:[%s5644 + $0x21] sm:$0xff] %vm2793, %v5752
        %5799 = vst.msk [vmem:[%s5644 + $0x31] sm:$0xff] %vm2793, %v5759
        %5800 = vst.msk [vmem:[%s5644 + $0x41] sm:$0xff] %vm2793, %v5766
        %5801 = vst.msk [vmem:[%s5644 + $0x51] sm:$0xff] %vm2793, %v5773
        %5802 = vst.msk [vmem:[%s5644 + $0x61] sm:$0xff] %vm2793, %v5780
        %5803 = vst.msk [vmem:[%s5644 + $0x71] sm:$0xff] %vm2793, %v5787
        %v5804 = vld [vmem:[#allocation4] sm:$0xff]
        %v5805 = vld [vmem:[#allocation4 + $0x10] sm:$0xff]
        %v5806 = vld [vmem:[#allocation4 + $0x20] sm:$0xff]
        %v5807 = vld [vmem:[#allocation4 + $0x30] sm:$0xff]
        %v5808 = vld [vmem:[#allocation4 + $0x40] sm:$0xff]
        %v5809 = vld [vmem:[#allocation4 + $0x50] sm:$0xff]
        %v5810 = vld [vmem:[#allocation4 + $0x60] sm:$0xff]
        %v5811 = vld [vmem:[#allocation4 + $0x70] sm:$0xff]
        %v5812 = vld [vmem:[#allocation4 + $0x1] sm:$0xff]
        %v5813 = vld [vmem:[#allocation4 + $0x11] sm:$0xff]
        %v5814 = vld [vmem:[#allocation4 + $0x21] sm:$0xff]
        %v5815 = vld [vmem:[#allocation4 + $0x31] sm:$0xff]
        %v5816 = vld [vmem:[#allocation4 + $0x41] sm:$0xff]
        %v5817 = vld [vmem:[#allocation4 + $0x51] sm:$0xff]
        %v5818 = vld [vmem:[#allocation4 + $0x61] sm:$0xff]
        %v5819 = vld [vmem:[#allocation4 + $0x71] sm:$0xff]
        %v5820 = vld [vmem:[#allocation4 + $0x2] sm:$0xff]
        %v5821 = vld [vmem:[#allocation4 + $0x12] sm:$0xff]
        %v5822 = vld [vmem:[#allocation4 + $0x22] sm:$0xff]
        %v5823 = vld [vmem:[#allocation4 + $0x32] sm:$0xff]
        %v5824 = vld [vmem:[#allocation4 + $0x42] sm:$0xff]
        %v5825 = vld [vmem:[#allocation4 + $0x52] sm:$0xff]
        %v5826 = vld [vmem:[#allocation4 + $0x62] sm:$0xff]
        %v5827 = vld [vmem:[#allocation4 + $0x72] sm:$0xff]
        %v5828 = vld [vmem:[%s5644] sm:$0xff]
        %v5829 = vld [vmem:[%s5644 + $0x10] sm:$0xff]
        %v5830 = vld [vmem:[%s5644 + $0x20] sm:$0xff]
        %v5831 = vld [vmem:[%s5644 + $0x30] sm:$0xff]
        %v5832 = vld [vmem:[%s5644 + $0x40] sm:$0xff]
        %v5833 = vld [vmem:[%s5644 + $0x50] sm:$0xff]
        %v5834 = vld [vmem:[%s5644 + $0x60] sm:$0xff]
        %v5835 = vld [vmem:[%s5644 + $0x70] sm:$0xff]
        %v5836 = vld [vmem:[%s5644 + $0x1] sm:$0xff]
        %v5837 = vld [vmem:[%s5644 + $0x11] sm:$0xff]
        %v5838 = vld [vmem:[%s5644 + $0x21] sm:$0xff]
        %v5839 = vld [vmem:[%s5644 + $0x31] sm:$0xff]
        %v5840 = vld [vmem:[%s5644 + $0x41] sm:$0xff]
        %v5841 = vld [vmem:[%s5644 + $0x51] sm:$0xff]
        %v5842 = vld [vmem:[%s5644 + $0x61] sm:$0xff]
        %v5843 = vld [vmem:[%s5644 + $0x71] sm:$0xff]
        %v5844 = vld [vmem:[%s5644 + $0x2] sm:$0xff]
        %v5845 = vld [vmem:[%s5644 + $0x12] sm:$0xff]
        %v5846 = vld [vmem:[%s5644 + $0x22] sm:$0xff]
        %v5847 = vld [vmem:[%s5644 + $0x32] sm:$0xff]
        %v5848 = vld [vmem:[%s5644 + $0x42] sm:$0xff]
        %v5849 = vld [vmem:[%s5644 + $0x52] sm:$0xff]
        %v5850 = vld [vmem:[%s5644 + $0x62] sm:$0xff]
        %v5851 = vld [vmem:[%s5644 + $0x72] sm:$0xff]
        %s5852 = scalar_lea.vmem [#allocation4], 32
        %v5853 = vld [vmem:[%s5852] sm:$0xff]
        %v5854 = vld [vmem:[%s5852 + $0x10] sm:$0xff]
        %v5855 = vld [vmem:[%s5852 + $0x20] sm:$0xff]
        %v5856 = vld [vmem:[%s5852 + $0x30] sm:$0xff]
        %v5857 = vld [vmem:[%s5852 + $0x40] sm:$0xff]
        %v5858 = vld [vmem:[%s5852 + $0x50] sm:$0xff]
        %v5859 = vld [vmem:[%s5852 + $0x60] sm:$0xff]
        %v5860 = vld [vmem:[%s5852 + $0x70] sm:$0xff]
        %v5861 = vld [vmem:[%s5852 + $0x1] sm:$0xff]
        %v5862 = vld [vmem:[%s5852 + $0x11] sm:$0xff]
        %v5863 = vld [vmem:[%s5852 + $0x21] sm:$0xff]
        %v5864 = vld [vmem:[%s5852 + $0x31] sm:$0xff]
        %v5865 = vld [vmem:[%s5852 + $0x41] sm:$0xff]
        %v5866 = vld [vmem:[%s5852 + $0x51] sm:$0xff]
        %v5867 = vld [vmem:[%s5852 + $0x61] sm:$0xff]
        %v5868 = vld [vmem:[%s5852 + $0x71] sm:$0xff]
        %v5869 = vld [vmem:[%s5852 + $0x2] sm:$0xff]
        %v5870 = vld [vmem:[%s5852 + $0x12] sm:$0xff]
        %v5871 = vld [vmem:[%s5852 + $0x22] sm:$0xff]
        %v5872 = vld [vmem:[%s5852 + $0x32] sm:$0xff]
        %v5873 = vld [vmem:[%s5852 + $0x42] sm:$0xff]
        %v5874 = vld [vmem:[%s5852 + $0x52] sm:$0xff]
        %v5875 = vld [vmem:[%s5852 + $0x62] sm:$0xff]
        %v5876 = vld [vmem:[%s5852 + $0x72] sm:$0xff]
        %5885 = vrot.lane.b32.xlu0 %v5812, 32
        %v5886 = vpop.permute.xlu0 %5885
        %5887 = vrot.lane.b32.xlu0 %v5813, 32
        %v5888 = vpop.permute.xlu0 %5887
        %5889 = vrot.lane.b32.xlu0 %v5814, 32
        %v5890 = vpop.permute.xlu0 %5889
        %5891 = vrot.lane.b32.xlu0 %v5815, 32
        %v5892 = vpop.permute.xlu0 %5891
        %5893 = vrot.lane.b32.xlu0 %v5816, 32
        %v5894 = vpop.permute.xlu0 %5893
        %5895 = vrot.lane.b32.xlu0 %v5817, 32
        %v5896 = vpop.permute.xlu0 %5895
        %5897 = vrot.lane.b32.xlu0 %v5818, 32
        %v5898 = vpop.permute.xlu0 %5897
        %5899 = vrot.lane.b32.xlu0 %v5819, 32
        %v5900 = vpop.permute.xlu0 %5899
        %5917 = vrot.lane.b32.xlu0 %v5820, 64
        %v5918 = vpop.permute.xlu0 %5917
        %5919 = vrot.lane.b32.xlu0 %v5821, 64
        %v5920 = vpop.permute.xlu0 %5919
        %5921 = vrot.lane.b32.xlu0 %v5822, 64
        %v5922 = vpop.permute.xlu0 %5921
        %5923 = vrot.lane.b32.xlu0 %v5823, 64
        %v5924 = vpop.permute.xlu0 %5923
        %5925 = vrot.lane.b32.xlu0 %v5824, 64
        %v5926 = vpop.permute.xlu0 %5925
        %5927 = vrot.lane.b32.xlu0 %v5825, 64
        %v5928 = vpop.permute.xlu0 %5927
        %5929 = vrot.lane.b32.xlu0 %v5826, 64
        %v5930 = vpop.permute.xlu0 %5929
        %5931 = vrot.lane.b32.xlu0 %v5827, 64
        %v5932 = vpop.permute.xlu0 %5931
        %5949 = vrot.lane.b32.xlu0 %v5828, 96
        %v5950 = vpop.permute.xlu0 %5949
        %5951 = vrot.lane.b32.xlu0 %v5829, 96
        %v5952 = vpop.permute.xlu0 %5951
        %5953 = vrot.lane.b32.xlu0 %v5830, 96
        %v5954 = vpop.permute.xlu0 %5953
        %5955 = vrot.lane.b32.xlu0 %v5831, 96
        %v5956 = vpop.permute.xlu0 %5955
        %5957 = vrot.lane.b32.xlu0 %v5832, 96
        %v5958 = vpop.permute.xlu0 %5957
        %5959 = vrot.lane.b32.xlu0 %v5833, 96
        %v5960 = vpop.permute.xlu0 %5959
        %5961 = vrot.lane.b32.xlu0 %v5834, 96
        %v5962 = vpop.permute.xlu0 %5961
        %5963 = vrot.lane.b32.xlu0 %v5835, 96
        %v5964 = vpop.permute.xlu0 %5963
        %5981 = vrot.lane.b32.xlu0 %v5844, 32
        %v5982 = vpop.permute.xlu0 %5981
        %5983 = vrot.lane.b32.xlu0 %v5845, 32
        %v5984 = vpop.permute.xlu0 %5983
        %5985 = vrot.lane.b32.xlu0 %v5846, 32
        %v5986 = vpop.permute.xlu0 %5985
        %5987 = vrot.lane.b32.xlu0 %v5847, 32
        %v5988 = vpop.permute.xlu0 %5987
        %5989 = vrot.lane.b32.xlu0 %v5848, 32
        %v5990 = vpop.permute.xlu0 %5989
        %5991 = vrot.lane.b32.xlu0 %v5849, 32
        %v5992 = vpop.permute.xlu0 %5991
        %5993 = vrot.lane.b32.xlu0 %v5850, 32
        %v5994 = vpop.permute.xlu0 %5993
        %5995 = vrot.lane.b32.xlu0 %v5851, 32
        %v5996 = vpop.permute.xlu0 %5995
        %6013 = vrot.lane.b32.xlu0 %v5853, 64
        %v6014 = vpop.permute.xlu0 %6013
        %6015 = vrot.lane.b32.xlu0 %v5854, 64
        %v6016 = vpop.permute.xlu0 %6015
        %6017 = vrot.lane.b32.xlu0 %v5855, 64
        %v6018 = vpop.permute.xlu0 %6017
        %6019 = vrot.lane.b32.xlu0 %v5856, 64
        %v6020 = vpop.permute.xlu0 %6019
        %6021 = vrot.lane.b32.xlu0 %v5857, 64
        %v6022 = vpop.permute.xlu0 %6021
        %6023 = vrot.lane.b32.xlu0 %v5858, 64
        %v6024 = vpop.permute.xlu0 %6023
        %6025 = vrot.lane.b32.xlu0 %v5859, 64
        %v6026 = vpop.permute.xlu0 %6025
        %6027 = vrot.lane.b32.xlu0 %v5860, 64
        %v6028 = vpop.permute.xlu0 %6027
        %6045 = vrot.lane.b32.xlu0 %v5861, 96
        %v6046 = vpop.permute.xlu0 %6045
        %6047 = vrot.lane.b32.xlu0 %v5862, 96
        %v6048 = vpop.permute.xlu0 %6047
        %6049 = vrot.lane.b32.xlu0 %v5863, 96
        %v6050 = vpop.permute.xlu0 %6049
        %6051 = vrot.lane.b32.xlu0 %v5864, 96
        %v6052 = vpop.permute.xlu0 %6051
        %6053 = vrot.lane.b32.xlu0 %v5865, 96
        %v6054 = vpop.permute.xlu0 %6053
        %6055 = vrot.lane.b32.xlu0 %v5866, 96
        %v6056 = vpop.permute.xlu0 %6055
        %6057 = vrot.lane.b32.xlu0 %v5867, 96
        %v6058 = vpop.permute.xlu0 %6057
        %6059 = vrot.lane.b32.xlu0 %v5868, 96
        %v6060 = vpop.permute.xlu0 %6059
        %v6069 = vsel %vm2793, %v5804, %v5886
        %v6070 = vsel %vm2793, %v5805, %v5888
        %v6071 = vsel %vm2793, %v5806, %v5890
        %v6072 = vsel %vm2793, %v5807, %v5892
        %v6073 = vsel %vm2793, %v5808, %v5894
        %v6074 = vsel %vm2793, %v5809, %v5896
        %v6075 = vsel %vm2793, %v5810, %v5898
        %v6076 = vsel %vm2793, %v5811, %v5900
        %v6077 = vsel %vm3957, %v6069, %v5918
        %v6078 = vsel %vm3957, %v6070, %v5920
        %v6079 = vsel %vm3957, %v6071, %v5922
        %v6080 = vsel %vm3957, %v6072, %v5924
        %v6081 = vsel %vm3957, %v6073, %v5926
        %v6082 = vsel %vm3957, %v6074, %v5928
        %v6083 = vsel %vm3957, %v6075, %v5930
        %v6084 = vsel %vm3957, %v6076, %v5932
        %v6085 = vsel %vm3990, %v6077, %v5950
        %v6086 = vsel %vm3990, %v6078, %v5952
        %v6087 = vsel %vm3990, %v6079, %v5954
        %v6088 = vsel %vm3990, %v6080, %v5956
        %v6089 = vsel %vm3990, %v6081, %v5958
        %v6090 = vsel %vm3990, %v6082, %v5960
        %v6091 = vsel %vm3990, %v6083, %v5962
        %v6092 = vsel %vm3990, %v6084, %v5964
        %v6093 = vsel %vm2793, %v5836, %v5982
        %v6094 = vsel %vm2793, %v5837, %v5984
        %v6095 = vsel %vm2793, %v5838, %v5986
        %v6096 = vsel %vm2793, %v5839, %v5988
        %v6097 = vsel %vm2793, %v5840, %v5990
        %v6098 = vsel %vm2793, %v5841, %v5992
        %v6099 = vsel %vm2793, %v5842, %v5994
        %v6100 = vsel %vm2793, %v5843, %v5996
        %v6101 = vsel %vm3957, %v6093, %v6014
        %v6102 = vsel %vm3957, %v6094, %v6016
        %v6103 = vsel %vm3957, %v6095, %v6018
        %v6104 = vsel %vm3957, %v6096, %v6020
        %v6105 = vsel %vm3957, %v6097, %v6022
        %v6106 = vsel %vm3957, %v6098, %v6024
        %v6107 = vsel %vm3957, %v6099, %v6026
        %v6108 = vsel %vm3957, %v6100, %v6028
        %v6109 = vsel %vm3990, %v6101, %v6046
        %v6110 = vsel %vm3990, %v6102, %v6048
        %v6111 = vsel %vm3990, %v6103, %v6050
        %v6112 = vsel %vm3990, %v6104, %v6052
        %v6113 = vsel %vm3990, %v6105, %v6054
        %v6114 = vsel %vm3990, %v6106, %v6056
        %v6115 = vsel %vm3990, %v6107, %v6058
        %v6116 = vsel %vm3990, %v6108, %v6060
        %v6117 = vpack.c.bf16 %v6086, %v6085
        %v6118 = vpack.c.bf16 %v6110, %v6109
        %v6119 = vpack.c.bf16 %v5870, %v5869
        %v6120 = vpack.c.bf16 %v6088, %v6087
        %v6121 = vpack.c.bf16 %v6112, %v6111
        %v6122 = vpack.c.bf16 %v5872, %v5871
        %v6123 = vpack.c.bf16 %v6090, %v6089
        %v6124 = vpack.c.bf16 %v6114, %v6113
        %v6125 = vpack.c.bf16 %v5874, %v5873
        %v6126 = vpack.c.bf16 %v6092, %v6091
        %v6127 = vpack.c.bf16 %v6116, %v6115
        %v6128 = vpack.c.bf16 %v5876, %v5875
        %v6129 = vld [vmem:[%s7] sm:$0xf]
        %v6130 = vld [vmem:[%s7 + $0x4] sm:$0xf]
        %v6131 = vld [vmem:[%s7 + $0x8] sm:$0xf]
        %v6132 = vld [vmem:[%s7 + $0xc] sm:$0xf]
        %v6133 = vld [vmem:[%s7 + $0x10] sm:$0xf]
        %v6134 = vld [vmem:[%s7 + $0x14] sm:$0xf]
        %v6135 = vld [vmem:[%s7 + $0x18] sm:$0xf]
        %v6136 = vld [vmem:[%s7 + $0x1c] sm:$0xf]
        %v6137 = vld [vmem:[%s7 + $0x20] sm:$0xf]
        %v6138 = vld [vmem:[%s7 + $0x24] sm:$0xf]
        %v6139 = vld [vmem:[%s7 + $0x28] sm:$0xf]
        %v6140 = vld [vmem:[%s7 + $0x2c] sm:$0xf]
        %v6141 = vld [vmem:[%s7 + $0x30] sm:$0xf]
        %v6142 = vld [vmem:[%s7 + $0x34] sm:$0xf]
        %v6143 = vld [vmem:[%s7 + $0x38] sm:$0xf]
        %v6144 = vld [vmem:[%s7 + $0x3c] sm:$0xf]
        %v6145 = vld [vmem:[%s7 + $0x40] sm:$0xf]
        %v6146 = vld [vmem:[%s7 + $0x44] sm:$0xf]
        %v6147 = vld [vmem:[%s7 + $0x48] sm:$0xf]
        %v6148 = vld [vmem:[%s7 + $0x4c] sm:$0xf]
        %v6149 = vld [vmem:[%s7 + $0x50] sm:$0xf]
        %v6150 = vld [vmem:[%s7 + $0x54] sm:$0xf]
        %v6151 = vld [vmem:[%s7 + $0x58] sm:$0xf]
        %v6152 = vld [vmem:[%s7 + $0x5c] sm:$0xf]
        %v6153 = vld [vmem:[%s7 + $0x60] sm:$0xf]
        %v6154 = vld [vmem:[%s7 + $0x64] sm:$0xf]
        %v6155 = vld [vmem:[%s7 + $0x68] sm:$0xf]
        %v6156 = vld [vmem:[%s7 + $0x6c] sm:$0xf]
        %v6157 = vld [vmem:[%s7 + $0x70] sm:$0xf]
        %v6158 = vld [vmem:[%s7 + $0x74] sm:$0xf]
        %v6159 = vld [vmem:[%s7 + $0x78] sm:$0xf]
        %v6160 = vld [vmem:[%s7 + $0x7c] sm:$0xf]
        %v6161 = vld [vmem:[%s7 + $0x80] sm:$0xf]
        %v6162 = vld [vmem:[%s7 + $0x84] sm:$0xf]
        %v6163 = vld [vmem:[%s7 + $0x88] sm:$0xf]
        %v6164 = vld [vmem:[%s7 + $0x8c] sm:$0xf]
        %v6201 = vunpack.c.l.b16 %v6129
        %v6202 = vunpack.c.l.b16 %v6130
        %v6203 = vunpack.c.l.b16 %v6131
        %v6204 = vunpack.c.l.b16 %v6132
        %v6205 = vunpack.c.l.b16 %v6133
        %v6206 = vunpack.c.l.b16 %v6134
        %v6207 = vunpack.c.l.b16 %v6135
        %v6208 = vunpack.c.l.b16 %v6136
        %v6209 = vunpack.c.l.b16 %v6137
        %v6210 = vunpack.c.l.b16 %v6138
        %v6211 = vunpack.c.l.b16 %v6139
        %v6212 = vunpack.c.l.b16 %v6140
        %v6213 = vunpack.c.l.b16 %v6141
        %v6214 = vunpack.c.l.b16 %v6142
        %v6215 = vunpack.c.l.b16 %v6143
        %v6216 = vunpack.c.l.b16 %v6144
        %v6217 = vunpack.c.l.b16 %v6145
        %v6218 = vunpack.c.l.b16 %v6146
        %v6219 = vunpack.c.l.b16 %v6147
        %v6220 = vunpack.c.l.b16 %v6148
        %v6221 = vunpack.c.l.b16 %v6149
        %v6222 = vunpack.c.l.b16 %v6150
        %v6223 = vunpack.c.l.b16 %v6151
        %v6224 = vunpack.c.l.b16 %v6152
        %v6225 = vunpack.c.l.b16 %v6153
        %v6226 = vunpack.c.l.b16 %v6154
        %v6227 = vunpack.c.l.b16 %v6155
        %v6228 = vunpack.c.l.b16 %v6156
        %v6229 = vunpack.c.l.b16 %v6157
        %v6230 = vunpack.c.l.b16 %v6158
        %v6231 = vunpack.c.l.b16 %v6159
        %v6232 = vunpack.c.l.b16 %v6160
        %v6233 = vunpack.c.l.b16 %v6161
        %v6234 = vunpack.c.l.b16 %v6162
        %v6235 = vunpack.c.l.b16 %v6163
        %v6236 = vunpack.c.l.b16 %v6164
        %v6237 = vpack.c.b16 %v6202, %v6201
        %v6238 = vpack.c.b16 %v6204, %v6203
        %v6239 = vpack.c.b16 %v6206, %v6205
        %v6240 = vpack.c.b16 %v6208, %v6207
        %v6241 = vpack.c.b16 %v6210, %v6209
        %v6242 = vpack.c.b16 %v6212, %v6211
        %v6243 = vpack.c.b16 %v6214, %v6213
        %v6244 = vpack.c.b16 %v6216, %v6215
        %v6245 = vpack.c.b16 %v6218, %v6217
        %v6246 = vpack.c.b16 %v6220, %v6219
        %v6247 = vpack.c.b16 %v6222, %v6221
        %v6248 = vpack.c.b16 %v6224, %v6223
        %v6249 = vpack.c.b16 %v6226, %v6225
        %v6250 = vpack.c.b16 %v6228, %v6227
        %v6251 = vpack.c.b16 %v6230, %v6229
        %v6252 = vpack.c.b16 %v6232, %v6231
        %v6253 = vpack.c.b16 %v6234, %v6233
        %v6254 = vpack.c.b16 %v6236, %v6235
        %v6274 = vsel %vm2793, %v6119, 0
        %v6277 = vsel %vm2793, %v6122, 0
        %v6280 = vsel %vm2793, %v6125, 0
        %v6283 = vsel %vm2793, %v6128, 0
        %6285 = vmatprep.subr.bf16.mxu0 0
        %6286 = vmatpush1.bf16.msra.mxu0 %v6237
        %6287 = vmatprep.subr.bf16.mxu0 0
        %6288 = vmatpush1.bf16.msra.mxu0 %v6238
        %6289 = vmatprep.subr.bf16.mxu0 0
        %6290 = vmatpush1.bf16.msra.mxu0 %v6239
        %6291 = vmatprep.subr.bf16.mxu0 0
        %6292 = vmatpush1.bf16.msra.mxu0 %v6240
        %6293 = vmatprep.subr.bf16.mxu0 0
        %6294 = vmatpush1.bf16.msra.mxu0 %v6241
        %6295 = vmatprep.subr.bf16.mxu0 0
        %6296 = vmatpush1.bf16.msra.mxu0 %v6242
        %6297 = vmatprep.subr.bf16.mxu0 0
        %6298 = vmatpush1.bf16.msra.mxu0 %v6243
        %6299 = vmatprep.subr.bf16.mxu0 0
        %6300 = vmatpush1.bf16.msra.mxu0 %v6244
        %6301 = vmatprep.subr.bf16.mxu0 0
        %6302 = vmatpush1.bf16.msra.mxu0 %v6245
        %6303 = vmatprep.subr.bf16.mxu0 0
        %6304 = vmatpush1.bf16.msra.mxu0 %v6246
        %6305 = vmatprep.subr.bf16.mxu0 0
        %6306 = vmatpush1.bf16.msra.mxu0 %v6247
        %6307 = vmatprep.subr.bf16.mxu0 0
        %6308 = vmatpush1.bf16.msra.mxu0 %v6248
        %6309 = vmatprep.subr.bf16.mxu0 0
        %6310 = vmatpush1.bf16.msra.mxu0 %v6249
        %6311 = vmatprep.subr.bf16.mxu0 0
        %6312 = vmatpush1.bf16.msra.mxu0 %v6250
        %6313 = vmatprep.subr.bf16.mxu0 0
        %6314 = vmatpush1.bf16.msra.mxu0 %v6251
        %6315 = vmatprep.subr.bf16.mxu0 0
        %6316 = vmatpush1.bf16.msra.mxu0 %v6252
        %6317 = vmatprep.mubr.bf16.mxu0 %v6118
        %6318 = vmatmul.mubr.bf16.gmra.mrb[0].mxu0 %v6117
        %v6319 = vpop.f32.mrb[0].mxu0
        %v6320 = vadd.f32 0.0, %v6319
        %v6321 = vpop.f32.mrb[0].mxu0
        %v6322 = vpop.f32.mrb[0].mxu0
        %v6323 = vadd.f32 0.0, %v6322
        %v6324 = vpop.f32.mrb[0].mxu0
        %6325 = vmatprep.mubr.bf16.mxu0 %v6121
        %6326 = vmatmul.mubr.bf16.gmra.mrb[0].mxu0 %v6120
        %v6327 = vpop.f32.mrb[0].mxu0
        %v6328 = vadd.f32 0.0, %v6327
        %v6329 = vpop.f32.mrb[0].mxu0
        %v6330 = vpop.f32.mrb[0].mxu0
        %v6331 = vadd.f32 0.0, %v6330
        %v6332 = vpop.f32.mrb[0].mxu0
        %6333 = vmatprep.mubr.bf16.mxu0 %v6124
        %6334 = vmatmul.mubr.bf16.gmra.mrb[0].mxu0 %v6123
        %v6335 = vpop.f32.mrb[0].mxu0
        %v6336 = vadd.f32 0.0, %v6335
        %v6337 = vpop.f32.mrb[0].mxu0
        %v6338 = vpop.f32.mrb[0].mxu0
        %v6339 = vadd.f32 0.0, %v6338
        %v6340 = vpop.f32.mrb[0].mxu0
        %6341 = vmatprep.mubr.bf16.mxu0 %v6127
        %6342 = vmatmul.mubr.bf16.gmra.mrb[0].mxu0 %v6126
        %v6343 = vpop.f32.mrb[0].mxu0
        %v6344 = vadd.f32 0.0, %v6343
        %v6345 = vpop.f32.mrb[0].mxu0
        %v6346 = vpop.f32.mrb[0].mxu0
        %v6347 = vadd.f32 0.0, %v6346
        %v6348 = vpop.f32.mrb[0].mxu0
        %6349 = vdwg.mxu0
        %6350 = vmatprep.subr.bf16.mxu0 0
        %6351 = vmatpush1.bf16.msra.mxu0 %v6253
        %6352 = vmatprep.subr.bf16.mxu0 0
        %6353 = vmatpush1.bf16.msra.mxu0 %v6254
        %6354 = vmatprep.subr.bf16.mxu0 0
        %6355 = vmatpush1.bf16.msra.mxu0 0
        %6356 = vmatprep.subr.bf16.mxu0 0
        %6357 = vmatpush1.bf16.msra.mxu0 0
        %6358 = vmatprep.subr.bf16.mxu0 0
        %6359 = vmatpush1.bf16.msra.mxu0 0
        %6360 = vmatprep.subr.bf16.mxu0 0
        %6361 = vmatpush1.bf16.msra.mxu0 0
        %6362 = vmatprep.subr.bf16.mxu0 0
        %6363 = vmatpush1.bf16.msra.mxu0 0
        %6364 = vmatprep.subr.bf16.mxu0 0
        %6365 = vmatpush1.bf16.msra.mxu0 0
        %6366 = vmatprep.subr.bf16.mxu0 0
        %6367 = vmatpush1.bf16.msra.mxu0 0
        %6368 = vmatprep.subr.bf16.mxu0 0
        %6369 = vmatpush1.bf16.msra.mxu0 0
        %6370 = vmatprep.subr.bf16.mxu0 0
        %6371 = vmatpush1.bf16.msra.mxu0 0
        %6372 = vmatprep.subr.bf16.mxu0 0
        %6373 = vmatpush1.bf16.msra.mxu0 0
        %6374 = vmatprep.subr.bf16.mxu0 0
        %6375 = vmatpush1.bf16.msra.mxu0 0
        %6376 = vmatprep.subr.bf16.mxu0 0
        %6377 = vmatpush1.bf16.msra.mxu0 0
        %6378 = vmatprep.subr.bf16.mxu0 0
        %6379 = vmatpush1.bf16.msra.mxu0 0
        %6380 = vmatprep.subr.bf16.mxu0 0
        %6381 = vmatpush1.bf16.msra.mxu0 0
        %6382 = vmatprep.mubr.bf16.mxu0 0
        %6383 = vmatmul.mubr.bf16.gmra.mrb[0].mxu0 %v6274
        %v6384 = vpop.f32.mrb[0].mxu0
        %v6385 = vadd.f32 %v6320, %v6384
        %v6386 = vpop.f32.mrb[0].mxu0
        %v6387 = vpop.f32.mrb[0].mxu0
        %v6388 = vadd.f32 %v6323, %v6387
        %v6389 = vpop.f32.mrb[0].mxu0
        %6390 = vmatprep.mubr.bf16.mxu0 0
        %6391 = vmatmul.mubr.bf16.gmra.mrb[0].mxu0 %v6277
        %v6392 = vpop.f32.mrb[0].mxu0
        %v6393 = vadd.f32 %v6328, %v6392
        %v6394 = vpop.f32.mrb[0].mxu0
        %v6395 = vpop.f32.mrb[0].mxu0
        %v6396 = vadd.f32 %v6331, %v6395
        %v6397 = vpop.f32.mrb[0].mxu0
        %6398 = vmatprep.mubr.bf16.mxu0 0
        %6399 = vmatmul.mubr.bf16.gmra.mrb[0].mxu0 %v6280
        %v6400 = vpop.f32.mrb[0].mxu0
        %v6401 = vadd.f32 %v6336, %v6400
        %v6402 = vpop.f32.mrb[0].mxu0
        %v6403 = vpop.f32.mrb[0].mxu0
        %v6404 = vadd.f32 %v6339, %v6403
        %v6405 = vpop.f32.mrb[0].mxu0
        %6406 = vmatprep.mubr.bf16.mxu0 0
        %6407 = vmatmul.mubr.bf16.gmra.mrb[0].mxu0 %v6283
        %v6408 = vpop.f32.mrb[0].mxu0
        %v6409 = vadd.f32 %v6344, %v6408
        %v6410 = vpop.f32.mrb[0].mxu0
        %v6411 = vpop.f32.mrb[0].mxu0
        %v6412 = vadd.f32 %v6347, %v6411
        %v6413 = vpop.f32.mrb[0].mxu0
        %6414 = vdwg.mxu0
        %v6415 = vld [vmem:[%s8] sm:$0x1]
        %v6417 = vlaneseq
        %v6418 = vshrl.u32 %v6417, 7
        %v6419 = vsub.s32 0, %v6418
        %v6420 = vrot.slane %v6415, %v6419
        %v6422 = vmul.f32 %v6385, %v6420
        %v6423 = vmul.f32 %v6388, %v6420
        %v6424 = vmul.f32 %v6393, %v6420
        %v6425 = vmul.f32 %v6396, %v6420
        %v6426 = vmul.f32 %v6401, %v6420
        %v6427 = vmul.f32 %v6404, %v6420
        %v6428 = vmul.f32 %v6409, %v6420
        %v6429 = vmul.f32 %v6412, %v6420
        %v6430 = vld [vmem:[%s9] sm:$0x1]
        %v6432 = vlaneseq
        %v6433 = vshrl.u32 %v6432, 7
        %v6434 = vsub.s32 0, %v6433
        %v6435 = vrot.slane %v6430, %v6434
        %v6437 = vadd.f32 %v6422, %v6435
        %v6438 = vadd.f32 %v6423, %v6435
        %v6439 = vadd.f32 %v6424, %v6435
        %v6440 = vadd.f32 %v6425, %v6435
        %v6441 = vadd.f32 %v6426, %v6435
        %v6442 = vadd.f32 %v6427, %v6435
        %v6443 = vadd.f32 %v6428, %v6435
        %v6444 = vadd.f32 %v6429, %v6435
        %v6445 = vmax.f32 %v6437, 0.0
        %v6446 = vmax.f32 %v6438, 0.0
        %v6447 = vmax.f32 %v6439, 0.0
        %v6448 = vmax.f32 %v6440, 0.0
        %v6449 = vmax.f32 %v6441, 0.0
        %v6450 = vmax.f32 %v6442, 0.0
        %v6451 = vmax.f32 %v6443, 0.0
        %v6452 = vmax.f32 %v6444, 0.0
        %6453 = vst.msk [vmem:[#allocation5] sm:$0xff] %vm3957, 0.0
        %vm6454 = vcmask 517120
        %6455 = vst.msk [vmem:[#allocation5 + $0x8] sm:$0x3] %vm6454, 0.0
        %s6456 = scalar_lea.vmem [#allocation5], 144
        %6457 = vst.msk [vmem:[%s6456] sm:$0xff] %vm3957, 0.0
        %6458 = vst.msk [vmem:[%s6456 + $0x8] sm:$0x3] %vm6454, 0.0
        %s6459 = scalar_lea.vmem [#allocation5], 16
        %vm6460 = vcmask 516096
        %6461 = vst.msk [vmem:[%s6459] sm:$0x1] %vm6460, 0.0
        %6462 = vst.msk [vmem:[%s6459 + $0x10] sm:$0x1] %vm6460, 0.0
        %6463 = vst.msk [vmem:[%s6459 + $0x20] sm:$0x1] %vm6460, 0.0
        %6464 = vst.msk [vmem:[%s6459 + $0x30] sm:$0x1] %vm6460, 0.0
        %6465 = vst.msk [vmem:[%s6459 + $0x40] sm:$0x1] %vm6460, 0.0
        %6466 = vst.msk [vmem:[%s6459 + $0x50] sm:$0x1] %vm6460, 0.0
        %6467 = vst.msk [vmem:[%s6459 + $0x60] sm:$0x1] %vm6460, 0.0
        %6468 = vst.msk [vmem:[%s6459 + $0x70] sm:$0x1] %vm6460, 0.0
        %6469 = vst.msk [vmem:[%s6459 + $0x9] sm:$0x1] %vm6460, 0.0
        %6470 = vst.msk [vmem:[%s6459 + $0x19] sm:$0x1] %vm6460, 0.0
        %6471 = vst.msk [vmem:[%s6459 + $0x29] sm:$0x1] %vm6460, 0.0
        %6472 = vst.msk [vmem:[%s6459 + $0x39] sm:$0x1] %vm6460, 0.0
        %6473 = vst.msk [vmem:[%s6459 + $0x49] sm:$0x1] %vm6460, 0.0
        %6474 = vst.msk [vmem:[%s6459 + $0x59] sm:$0x1] %vm6460, 0.0
        %6475 = vst.msk [vmem:[%s6459 + $0x69] sm:$0x1] %vm6460, 0.0
        %6476 = vst.msk [vmem:[%s6459 + $0x79] sm:$0x1] %vm6460, 0.0
        %6477 = vst.msk [vmem:[%s6459 + $0x1] sm:$0xff] %vm3957, %v6445
        %6478 = vst.msk [vmem:[%s6459 + $0x11] sm:$0xff] %vm3957, %v6446
        %6479 = vst.msk [vmem:[%s6459 + $0x21] sm:$0xff] %vm3957, %v6447
        %6480 = vst.msk [vmem:[%s6459 + $0x31] sm:$0xff] %vm3957, %v6448
        %6481 = vst.msk [vmem:[%s6459 + $0x41] sm:$0xff] %vm3957, %v6449
        %6482 = vst.msk [vmem:[%s6459 + $0x51] sm:$0xff] %vm3957, %v6450
        %6483 = vst.msk [vmem:[%s6459 + $0x61] sm:$0xff] %vm3957, %v6451
        %6484 = vst.msk [vmem:[%s6459 + $0x71] sm:$0xff] %vm3957, %v6452
        %v6485 = vld [vmem:[#allocation5] sm:$0xff]
        %v6486 = vld [vmem:[#allocation5 + $0x10] sm:$0xff]
        %v6487 = vld [vmem:[#allocation5 + $0x20] sm:$0xff]
        %v6488 = vld [vmem:[#allocation5 + $0x30] sm:$0xff]
        %v6489 = vld [vmem:[#allocation5 + $0x40] sm:$0xff]
        %v6490 = vld [vmem:[#allocation5 + $0x50] sm:$0xff]
        %v6491 = vld [vmem:[#allocation5 + $0x60] sm:$0xff]
        %v6492 = vld [vmem:[#allocation5 + $0x70] sm:$0xff]
        %v6493 = vld [vmem:[#allocation5 + $0x1] sm:$0xff]
        %v6494 = vld [vmem:[#allocation5 + $0x11] sm:$0xff]
        %v6495 = vld [vmem:[#allocation5 + $0x21] sm:$0xff]
        %v6496 = vld [vmem:[#allocation5 + $0x31] sm:$0xff]
        %v6497 = vld [vmem:[#allocation5 + $0x41] sm:$0xff]
        %v6498 = vld [vmem:[#allocation5 + $0x51] sm:$0xff]
        %v6499 = vld [vmem:[#allocation5 + $0x61] sm:$0xff]
        %v6500 = vld [vmem:[#allocation5 + $0x71] sm:$0xff]
        %v6501 = vld [vmem:[#allocation5 + $0x2] sm:$0xff]
        %v6502 = vld [vmem:[#allocation5 + $0x12] sm:$0xff]
        %v6503 = vld [vmem:[#allocation5 + $0x22] sm:$0xff]
        %v6504 = vld [vmem:[#allocation5 + $0x32] sm:$0xff]
        %v6505 = vld [vmem:[#allocation5 + $0x42] sm:$0xff]
        %v6506 = vld [vmem:[#allocation5 + $0x52] sm:$0xff]
        %v6507 = vld [vmem:[#allocation5 + $0x62] sm:$0xff]
        %v6508 = vld [vmem:[#allocation5 + $0x72] sm:$0xff]
        %v6509 = vld [vmem:[%s6459] sm:$0xff]
        %v6510 = vld [vmem:[%s6459 + $0x10] sm:$0xff]
        %v6511 = vld [vmem:[%s6459 + $0x20] sm:$0xff]
        %v6512 = vld [vmem:[%s6459 + $0x30] sm:$0xff]
        %v6513 = vld [vmem:[%s6459 + $0x40] sm:$0xff]
        %v6514 = vld [vmem:[%s6459 + $0x50] sm:$0xff]
        %v6515 = vld [vmem:[%s6459 + $0x60] sm:$0xff]
        %v6516 = vld [vmem:[%s6459 + $0x70] sm:$0xff]
        %v6517 = vld [vmem:[%s6459 + $0x1] sm:$0xff]
        %v6518 = vld [vmem:[%s6459 + $0x11] sm:$0xff]
        %v6519 = vld [vmem:[%s6459 + $0x21] sm:$0xff]
        %v6520 = vld [vmem:[%s6459 + $0x31] sm:$0xff]
        %v6521 = vld [vmem:[%s6459 + $0x41] sm:$0xff]
        %v6522 = vld [vmem:[%s6459 + $0x51] sm:$0xff]
        %v6523 = vld [vmem:[%s6459 + $0x61] sm:$0xff]
        %v6524 = vld [vmem:[%s6459 + $0x71] sm:$0xff]
        %v6525 = vld [vmem:[%s6459 + $0x2] sm:$0xff]
        %v6526 = vld [vmem:[%s6459 + $0x12] sm:$0xff]
        %v6527 = vld [vmem:[%s6459 + $0x22] sm:$0xff]
        %v6528 = vld [vmem:[%s6459 + $0x32] sm:$0xff]
        %v6529 = vld [vmem:[%s6459 + $0x42] sm:$0xff]
        %v6530 = vld [vmem:[%s6459 + $0x52] sm:$0xff]
        %v6531 = vld [vmem:[%s6459 + $0x62] sm:$0xff]
        %v6532 = vld [vmem:[%s6459 + $0x72] sm:$0xff]
        %s6533 = scalar_lea.vmem [#allocation5], 32
        %v6534 = vld [vmem:[%s6533] sm:$0xff]
        %v6535 = vld [vmem:[%s6533 + $0x10] sm:$0xff]
        %v6536 = vld [vmem:[%s6533 + $0x20] sm:$0xff]
        %v6537 = vld [vmem:[%s6533 + $0x30] sm:$0xff]
        %v6538 = vld [vmem:[%s6533 + $0x40] sm:$0xff]
        %v6539 = vld [vmem:[%s6533 + $0x50] sm:$0xff]
        %v6540 = vld [vmem:[%s6533 + $0x60] sm:$0xff]
        %v6541 = vld [vmem:[%s6533 + $0x70] sm:$0xff]
        %v6542 = vld [vmem:[%s6533 + $0x1] sm:$0xff]
        %v6543 = vld [vmem:[%s6533 + $0x11] sm:$0xff]
        %v6544 = vld [vmem:[%s6533 + $0x21] sm:$0xff]
        %v6545 = vld [vmem:[%s6533 + $0x31] sm:$0xff]
        %v6546 = vld [vmem:[%s6533 + $0x41] sm:$0xff]
        %v6547 = vld [vmem:[%s6533 + $0x51] sm:$0xff]
        %v6548 = vld [vmem:[%s6533 + $0x61] sm:$0xff]
        %v6549 = vld [vmem:[%s6533 + $0x71] sm:$0xff]
        %v6550 = vld [vmem:[%s6533 + $0x2] sm:$0xff]
        %v6551 = vld [vmem:[%s6533 + $0x12] sm:$0xff]
        %v6552 = vld [vmem:[%s6533 + $0x22] sm:$0xff]
        %v6553 = vld [vmem:[%s6533 + $0x32] sm:$0xff]
        %v6554 = vld [vmem:[%s6533 + $0x42] sm:$0xff]
        %v6555 = vld [vmem:[%s6533 + $0x52] sm:$0xff]
        %v6556 = vld [vmem:[%s6533 + $0x62] sm:$0xff]
        %v6557 = vld [vmem:[%s6533 + $0x72] sm:$0xff]
        %6566 = vrot.lane.b32.xlu0 %v6493, 64
        %v6567 = vpop.permute.xlu0 %6566
        %6568 = vrot.lane.b32.xlu0 %v6494, 64
        %v6569 = vpop.permute.xlu0 %6568
        %6570 = vrot.lane.b32.xlu0 %v6495, 64
        %v6571 = vpop.permute.xlu0 %6570
        %6572 = vrot.lane.b32.xlu0 %v6496, 64
        %v6573 = vpop.permute.xlu0 %6572
        %6574 = vrot.lane.b32.xlu0 %v6497, 64
        %v6575 = vpop.permute.xlu0 %6574
        %6576 = vrot.lane.b32.xlu0 %v6498, 64
        %v6577 = vpop.permute.xlu0 %6576
        %6578 = vrot.lane.b32.xlu0 %v6499, 64
        %v6579 = vpop.permute.xlu0 %6578
        %6580 = vrot.lane.b32.xlu0 %v6500, 64
        %v6581 = vpop.permute.xlu0 %6580
        %6598 = vrot.lane.b32.xlu0 %v6509, 64
        %v6599 = vpop.permute.xlu0 %6598
        %6600 = vrot.lane.b32.xlu0 %v6510, 64
        %v6601 = vpop.permute.xlu0 %6600
        %6602 = vrot.lane.b32.xlu0 %v6511, 64
        %v6603 = vpop.permute.xlu0 %6602
        %6604 = vrot.lane.b32.xlu0 %v6512, 64
        %v6605 = vpop.permute.xlu0 %6604
        %6606 = vrot.lane.b32.xlu0 %v6513, 64
        %v6607 = vpop.permute.xlu0 %6606
        %6608 = vrot.lane.b32.xlu0 %v6514, 64
        %v6609 = vpop.permute.xlu0 %6608
        %6610 = vrot.lane.b32.xlu0 %v6515, 64
        %v6611 = vpop.permute.xlu0 %6610
        %6612 = vrot.lane.b32.xlu0 %v6516, 64
        %v6613 = vpop.permute.xlu0 %6612
        %6630 = vrot.lane.b32.xlu0 %v6525, 64
        %v6631 = vpop.permute.xlu0 %6630
        %6632 = vrot.lane.b32.xlu0 %v6526, 64
        %v6633 = vpop.permute.xlu0 %6632
        %6634 = vrot.lane.b32.xlu0 %v6527, 64
        %v6635 = vpop.permute.xlu0 %6634
        %6636 = vrot.lane.b32.xlu0 %v6528, 64
        %v6637 = vpop.permute.xlu0 %6636
        %6638 = vrot.lane.b32.xlu0 %v6529, 64
        %v6639 = vpop.permute.xlu0 %6638
        %6640 = vrot.lane.b32.xlu0 %v6530, 64
        %v6641 = vpop.permute.xlu0 %6640
        %6642 = vrot.lane.b32.xlu0 %v6531, 64
        %v6643 = vpop.permute.xlu0 %6642
        %6644 = vrot.lane.b32.xlu0 %v6532, 64
        %v6645 = vpop.permute.xlu0 %6644
        %6662 = vrot.lane.b32.xlu0 %v6542, 64
        %v6663 = vpop.permute.xlu0 %6662
        %6664 = vrot.lane.b32.xlu0 %v6543, 64
        %v6665 = vpop.permute.xlu0 %6664
        %6666 = vrot.lane.b32.xlu0 %v6544, 64
        %v6667 = vpop.permute.xlu0 %6666
        %6668 = vrot.lane.b32.xlu0 %v6545, 64
        %v6669 = vpop.permute.xlu0 %6668
        %6670 = vrot.lane.b32.xlu0 %v6546, 64
        %v6671 = vpop.permute.xlu0 %6670
        %6672 = vrot.lane.b32.xlu0 %v6547, 64
        %v6673 = vpop.permute.xlu0 %6672
        %6674 = vrot.lane.b32.xlu0 %v6548, 64
        %v6675 = vpop.permute.xlu0 %6674
        %6676 = vrot.lane.b32.xlu0 %v6549, 64
        %v6677 = vpop.permute.xlu0 %6676
        %v6686 = vsel %vm3957, %v6485, %v6567
        %v6687 = vsel %vm3957, %v6486, %v6569
        %v6688 = vsel %vm3957, %v6487, %v6571
        %v6689 = vsel %vm3957, %v6488, %v6573
        %v6690 = vsel %vm3957, %v6489, %v6575
        %v6691 = vsel %vm3957, %v6490, %v6577
        %v6692 = vsel %vm3957, %v6491, %v6579
        %v6693 = vsel %vm3957, %v6492, %v6581
        %v6694 = vsel %vm3957, %v6501, %v6599
        %v6695 = vsel %vm3957, %v6502, %v6601
        %v6696 = vsel %vm3957, %v6503, %v6603
        %v6697 = vsel %vm3957, %v6504, %v6605
        %v6698 = vsel %vm3957, %v6505, %v6607
        %v6699 = vsel %vm3957, %v6506, %v6609
        %v6700 = vsel %vm3957, %v6507, %v6611
        %v6701 = vsel %vm3957, %v6508, %v6613
        %v6702 = vsel %vm3957, %v6517, %v6631
        %v6703 = vsel %vm3957, %v6518, %v6633
        %v6704 = vsel %vm3957, %v6519, %v6635
        %v6705 = vsel %vm3957, %v6520, %v6637
        %v6706 = vsel %vm3957, %v6521, %v6639
        %v6707 = vsel %vm3957, %v6522, %v6641
        %v6708 = vsel %vm3957, %v6523, %v6643
        %v6709 = vsel %vm3957, %v6524, %v6645
        %v6710 = vsel %vm3957, %v6534, %v6663
        %v6711 = vsel %vm3957, %v6535, %v6665
        %v6712 = vsel %vm3957, %v6536, %v6667
        %v6713 = vsel %vm3957, %v6537, %v6669
        %v6714 = vsel %vm3957, %v6538, %v6671
        %v6715 = vsel %vm3957, %v6539, %v6673
        %v6716 = vsel %vm3957, %v6540, %v6675
        %v6717 = vsel %vm3957, %v6541, %v6677
        %v6718 = vpack.c.bf16 %v6687, %v6686
        %v6719 = vpack.c.bf16 %v6695, %v6694
        %v6720 = vpack.c.bf16 %v6703, %v6702
        %v6721 = vpack.c.bf16 %v6711, %v6710
        %v6722 = vpack.c.bf16 %v6551, %v6550
        %v6723 = vpack.c.bf16 %v6689, %v6688
        %v6724 = vpack.c.bf16 %v6697, %v6696
        %v6725 = vpack.c.bf16 %v6705, %v6704
        %v6726 = vpack.c.bf16 %v6713, %v6712
        %v6727 = vpack.c.bf16 %v6553, %v6552
        %v6728 = vpack.c.bf16 %v6691, %v6690
        %v6729 = vpack.c.bf16 %v6699, %v6698
        %v6730 = vpack.c.bf16 %v6707, %v6706
        %v6731 = vpack.c.bf16 %v6715, %v6714
        %v6732 = vpack.c.bf16 %v6555, %v6554
        %v6733 = vpack.c.bf16 %v6693, %v6692
        %v6734 = vpack.c.bf16 %v6701, %v6700
        %v6735 = vpack.c.bf16 %v6709, %v6708
        %v6736 = vpack.c.bf16 %v6717, %v6716
        %v6737 = vpack.c.bf16 %v6557, %v6556
        %v6738 = vld [vmem:[%s10] sm:$0xf]
        %v6739 = vld [vmem:[%s10 + $0x4] sm:$0xf]
        %v6740 = vld [vmem:[%s10 + $0x8] sm:$0xf]
        %v6741 = vld [vmem:[%s10 + $0xc] sm:$0xf]
        %v6742 = vld [vmem:[%s10 + $0x10] sm:$0xf]
        %v6743 = vld [vmem:[%s10 + $0x14] sm:$0xf]
        %v6744 = vld [vmem:[%s10 + $0x18] sm:$0xf]
        %v6745 = vld [vmem:[%s10 + $0x1c] sm:$0xf]
        %v6746 = vld [vmem:[%s10 + $0x20] sm:$0xf]
        %v6747 = vld [vmem:[%s10 + $0x24] sm:$0xf]
        %v6748 = vld [vmem:[%s10 + $0x28] sm:$0xf]
        %v6749 = vld [vmem:[%s10 + $0x2c] sm:$0xf]
        %v6750 = vld [vmem:[%s10 + $0x30] sm:$0xf]
        %v6751 = vld [vmem:[%s10 + $0x34] sm:$0xf]
        %v6752 = vld [vmem:[%s10 + $0x38] sm:$0xf]
        %v6753 = vld [vmem:[%s10 + $0x3c] sm:$0xf]
        %v6754 = vld [vmem:[%s10 + $0x40] sm:$0xf]
        %v6755 = vld [vmem:[%s10 + $0x44] sm:$0xf]
        %v6756 = vld [vmem:[%s10 + $0x48] sm:$0xf]
        %v6757 = vld [vmem:[%s10 + $0x4c] sm:$0xf]
        %v6758 = vld [vmem:[%s10 + $0x50] sm:$0xf]
        %v6759 = vld [vmem:[%s10 + $0x54] sm:$0xf]
        %v6760 = vld [vmem:[%s10 + $0x58] sm:$0xf]
        %v6761 = vld [vmem:[%s10 + $0x5c] sm:$0xf]
        %v6762 = vld [vmem:[%s10 + $0x60] sm:$0xf]
        %v6763 = vld [vmem:[%s10 + $0x64] sm:$0xf]
        %v6764 = vld [vmem:[%s10 + $0x68] sm:$0xf]
        %v6765 = vld [vmem:[%s10 + $0x6c] sm:$0xf]
        %v6766 = vld [vmem:[%s10 + $0x70] sm:$0xf]
        %v6767 = vld [vmem:[%s10 + $0x74] sm:$0xf]
        %v6768 = vld [vmem:[%s10 + $0x78] sm:$0xf]
        %v6769 = vld [vmem:[%s10 + $0x7c] sm:$0xf]
        %v6770 = vld [vmem:[%s10 + $0x80] sm:$0xf]
        %v6771 = vld [vmem:[%s10 + $0x84] sm:$0xf]
        %v6772 = vld [vmem:[%s10 + $0x88] sm:$0xf]
        %v6773 = vld [vmem:[%s10 + $0x8c] sm:$0xf]
        %v6774 = vld [vmem:[%s10 + $0x90] sm:$0xf]
        %v6775 = vld [vmem:[%s10 + $0x94] sm:$0xf]
        %v6776 = vld [vmem:[%s10 + $0x98] sm:$0xf]
        %v6777 = vld [vmem:[%s10 + $0x9c] sm:$0xf]
        %v6778 = vld [vmem:[%s10 + $0xa0] sm:$0xf]
        %v6779 = vld [vmem:[%s10 + $0xa4] sm:$0xf]
        %v6780 = vld [vmem:[%s10 + $0xa8] sm:$0xf]
        %v6781 = vld [vmem:[%s10 + $0xac] sm:$0xf]
        %v6782 = vld [vmem:[%s10 + $0xb0] sm:$0xf]
        %v6783 = vld [vmem:[%s10 + $0xb4] sm:$0xf]
        %v6784 = vld [vmem:[%s10 + $0xb8] sm:$0xf]
        %v6785 = vld [vmem:[%s10 + $0xbc] sm:$0xf]
        %v6786 = vld [vmem:[%s10 + $0xc0] sm:$0xf]
        %v6787 = vld [vmem:[%s10 + $0xc4] sm:$0xf]
        %v6788 = vld [vmem:[%s10 + $0xc8] sm:$0xf]
        %v6789 = vld [vmem:[%s10 + $0xcc] sm:$0xf]
        %v6790 = vld [vmem:[%s10 + $0xd0] sm:$0xf]
        %v6791 = vld [vmem:[%s10 + $0xd4] sm:$0xf]
        %v6792 = vld [vmem:[%s10 + $0xd8] sm:$0xf]
        %v6793 = vld [vmem:[%s10 + $0xdc] sm:$0xf]
        %v6794 = vld [vmem:[%s10 + $0xe0] sm:$0xf]
        %v6795 = vld [vmem:[%s10 + $0xe4] sm:$0xf]
        %v6796 = vld [vmem:[%s10 + $0xe8] sm:$0xf]
        %v6797 = vld [vmem:[%s10 + $0xec] sm:$0xf]
        %v6798 = vld [vmem:[%s10 + $0xf0] sm:$0xf]
        %v6799 = vld [vmem:[%s10 + $0xf4] sm:$0xf]
        %v6800 = vld [vmem:[%s10 + $0xf8] sm:$0xf]
        %v6801 = vld [vmem:[%s10 + $0xfc] sm:$0xf]
        %v6802 = vld [vmem:[%s10 + $0x100] sm:$0xf]
        %v6803 = vld [vmem:[%s10 + $0x104] sm:$0xf]
        %v6804 = vld [vmem:[%s10 + $0x108] sm:$0xf]
        %v6805 = vld [vmem:[%s10 + $0x10c] sm:$0xf]
        %v6806 = vld [vmem:[%s10 + $0x110] sm:$0xf]
        %v6807 = vld [vmem:[%s10 + $0x114] sm:$0xf]
        %v6808 = vld [vmem:[%s10 + $0x118] sm:$0xf]
        %v6809 = vld [vmem:[%s10 + $0x11c] sm:$0xf]
        %v6882 = vunpack.c.l.b16 %v6738
        %v6883 = vunpack.c.l.b16 %v6739
        %v6884 = vunpack.c.l.b16 %v6740
        %v6885 = vunpack.c.l.b16 %v6741
        %v6886 = vunpack.c.l.b16 %v6742
        %v6887 = vunpack.c.l.b16 %v6743
        %v6888 = vunpack.c.l.b16 %v6744
        %v6889 = vunpack.c.l.b16 %v6745
        %v6890 = vunpack.c.l.b16 %v6746
        %v6891 = vunpack.c.l.b16 %v6747
        %v6892 = vunpack.c.l.b16 %v6748
        %v6893 = vunpack.c.l.b16 %v6749
        %v6894 = vunpack.c.l.b16 %v6750
        %v6895 = vunpack.c.l.b16 %v6751
        %v6896 = vunpack.c.l.b16 %v6752
        %v6897 = vunpack.c.l.b16 %v6753
        %v6898 = vunpack.c.l.b16 %v6754
        %v6899 = vunpack.c.l.b16 %v6755
        %v6900 = vunpack.c.l.b16 %v6756
        %v6901 = vunpack.c.l.b16 %v6757
        %v6902 = vunpack.c.l.b16 %v6758
        %v6903 = vunpack.c.l.b16 %v6759
        %v6904 = vunpack.c.l.b16 %v6760
        %v6905 = vunpack.c.l.b16 %v6761
        %v6906 = vunpack.c.l.b16 %v6762
        %v6907 = vunpack.c.l.b16 %v6763
        %v6908 = vunpack.c.l.b16 %v6764
        %v6909 = vunpack.c.l.b16 %v6765
        %v6910 = vunpack.c.l.b16 %v6766
        %v6911 = vunpack.c.l.b16 %v6767
        %v6912 = vunpack.c.l.b16 %v6768
        %v6913 = vunpack.c.l.b16 %v6769
        %v6914 = vunpack.c.l.b16 %v6770
        %v6915 = vunpack.c.l.b16 %v6771
        %v6916 = vunpack.c.l.b16 %v6772
        %v6917 = vunpack.c.l.b16 %v6773
        %v6918 = vunpack.c.l.b16 %v6774
        %v6919 = vunpack.c.l.b16 %v6775
        %v6920 = vunpack.c.l.b16 %v6776
        %v6921 = vunpack.c.l.b16 %v6777
        %v6922 = vunpack.c.l.b16 %v6778
        %v6923 = vunpack.c.l.b16 %v6779
        %v6924 = vunpack.c.l.b16 %v6780
        %v6925 = vunpack.c.l.b16 %v6781
        %v6926 = vunpack.c.l.b16 %v6782
        %v6927 = vunpack.c.l.b16 %v6783
        %v6928 = vunpack.c.l.b16 %v6784
        %v6929 = vunpack.c.l.b16 %v6785
        %v6930 = vunpack.c.l.b16 %v6786
        %v6931 = vunpack.c.l.b16 %v6787
        %v6932 = vunpack.c.l.b16 %v6788
        %v6933 = vunpack.c.l.b16 %v6789
        %v6934 = vunpack.c.l.b16 %v6790
        %v6935 = vunpack.c.l.b16 %v6791
        %v6936 = vunpack.c.l.b16 %v6792
        %v6937 = vunpack.c.l.b16 %v6793
        %v6938 = vunpack.c.l.b16 %v6794
        %v6939 = vunpack.c.l.b16 %v6795
        %v6940 = vunpack.c.l.b16 %v6796
        %v6941 = vunpack.c.l.b16 %v6797
        %v6942 = vunpack.c.l.b16 %v6798
        %v6943 = vunpack.c.l.b16 %v6799
        %v6944 = vunpack.c.l.b16 %v6800
        %v6945 = vunpack.c.l.b16 %v6801
        %v6946 = vunpack.c.l.b16 %v6802
        %v6947 = vunpack.c.l.b16 %v6803
        %v6948 = vunpack.c.l.b16 %v6804
        %v6949 = vunpack.c.l.b16 %v6805
        %v6950 = vunpack.c.l.b16 %v6806
        %v6951 = vunpack.c.l.b16 %v6807
        %v6952 = vunpack.c.l.b16 %v6808
        %v6953 = vunpack.c.l.b16 %v6809
        %v6954 = vpack.c.b16 %v6883, %v6882
        %v6955 = vpack.c.b16 %v6885, %v6884
        %v6956 = vpack.c.b16 %v6887, %v6886
        %v6957 = vpack.c.b16 %v6889, %v6888
        %v6958 = vpack.c.b16 %v6891, %v6890
        %v6959 = vpack.c.b16 %v6893, %v6892
        %v6960 = vpack.c.b16 %v6895, %v6894
        %v6961 = vpack.c.b16 %v6897, %v6896
        %v6962 = vpack.c.b16 %v6899, %v6898
        %v6963 = vpack.c.b16 %v6901, %v6900
        %v6964 = vpack.c.b16 %v6903, %v6902
        %v6965 = vpack.c.b16 %v6905, %v6904
        %v6966 = vpack.c.b16 %v6907, %v6906
        %v6967 = vpack.c.b16 %v6909, %v6908
        %v6968 = vpack.c.b16 %v6911, %v6910
        %v6969 = vpack.c.b16 %v6913, %v6912
        %v6970 = vpack.c.b16 %v6915, %v6914
        %v6971 = vpack.c.b16 %v6917, %v6916
        %v6972 = vpack.c.b16 %v6919, %v6918
        %v6973 = vpack.c.b16 %v6921, %v6920
        %v6974 = vpack.c.b16 %v6923, %v6922
        %v6975 = vpack.c.b16 %v6925, %v6924
        %v6976 = vpack.c.b16 %v6927, %v6926
        %v6977 = vpack.c.b16 %v6929, %v6928
        %v6978 = vpack.c.b16 %v6931, %v6930
        %v6979 = vpack.c.b16 %v6933, %v6932
        %v6980 = vpack.c.b16 %v6935, %v6934
        %v6981 = vpack.c.b16 %v6937, %v6936
        %v6982 = vpack.c.b16 %v6939, %v6938
        %v6983 = vpack.c.b16 %v6941, %v6940
        %v6984 = vpack.c.b16 %v6943, %v6942
        %v6985 = vpack.c.b16 %v6945, %v6944
        %v6986 = vpack.c.b16 %v6947, %v6946
        %v6987 = vpack.c.b16 %v6949, %v6948
        %v6988 = vpack.c.b16 %v6951, %v6950
        %v6989 = vpack.c.b16 %v6953, %v6952
        %v7027 = vsel %vm3957, %v6722, 0
        %v7030 = vsel %vm3957, %v6727, 0
        %v7033 = vsel %vm3957, %v6732, 0
        %v7036 = vsel %vm3957, %v6737, 0
        %7038 = vmatprep.subr.bf16.mxu0 0
        %7039 = vmatpush1.bf16.msra.mxu0 %v6954
        %7040 = vmatprep.subr.bf16.mxu0 0
        %7041 = vmatpush1.bf16.msra.mxu0 %v6955
        %7042 = vmatprep.subr.bf16.mxu0 0
        %7043 = vmatpush1.bf16.msra.mxu0 %v6956
        %7044 = vmatprep.subr.bf16.mxu0 0
        %7045 = vmatpush1.bf16.msra.mxu0 %v6957
        %7046 = vmatprep.subr.bf16.mxu0 0
        %7047 = vmatpush1.bf16.msra.mxu0 %v6958
        %7048 = vmatprep.subr.bf16.mxu0 0
        %7049 = vmatpush1.bf16.msra.mxu0 %v6959
        %7050 = vmatprep.subr.bf16.mxu0 0
        %7051 = vmatpush1.bf16.msra.mxu0 %v6960
        %7052 = vmatprep.subr.bf16.mxu0 0
        %7053 = vmatpush1.bf16.msra.mxu0 %v6961
        %7054 = vmatprep.subr.bf16.mxu0 0
        %7055 = vmatpush1.bf16.msra.mxu0 %v6962
        %7056 = vmatprep.subr.bf16.mxu0 0
        %7057 = vmatpush1.bf16.msra.mxu0 %v6963
        %7058 = vmatprep.subr.bf16.mxu0 0
        %7059 = vmatpush1.bf16.msra.mxu0 %v6964
        %7060 = vmatprep.subr.bf16.mxu0 0
        %7061 = vmatpush1.bf16.msra.mxu0 %v6965
        %7062 = vmatprep.subr.bf16.mxu0 0
        %7063 = vmatpush1.bf16.msra.mxu0 %v6966
        %7064 = vmatprep.subr.bf16.mxu0 0
        %7065 = vmatpush1.bf16.msra.mxu0 %v6967
        %7066 = vmatprep.subr.bf16.mxu0 0
        %7067 = vmatpush1.bf16.msra.mxu0 %v6968
        %7068 = vmatprep.subr.bf16.mxu0 0
        %7069 = vmatpush1.bf16.msra.mxu0 %v6969
        %7070 = vmatprep.mubr.bf16.mxu0 %v6719
        %7071 = vmatmul.mubr.bf16.gmra.mrb[0].mxu0 %v6718
        %v7072 = vpop.f32.mrb[0].mxu0
        %v7073 = vadd.f32 0.0, %v7072
        %v7074 = vpop.f32.mrb[0].mxu0
        %v7075 = vpop.f32.mrb[0].mxu0
        %v7076 = vadd.f32 0.0, %v7075
        %v7077 = vpop.f32.mrb[0].mxu0
        %7078 = vmatprep.mubr.bf16.mxu0 %v6724
        %7079 = vmatmul.mubr.bf16.gmra.mrb[0].mxu0 %v6723
        %v7080 = vpop.f32.mrb[0].mxu0
        %v7081 = vadd.f32 0.0, %v7080
        %v7082 = vpop.f32.mrb[0].mxu0
        %v7083 = vpop.f32.mrb[0].mxu0
        %v7084 = vadd.f32 0.0, %v7083
        %v7085 = vpop.f32.mrb[0].mxu0
        %7086 = vmatprep.mubr.bf16.mxu0 %v6729
        %7087 = vmatmul.mubr.bf16.gmra.mrb[0].mxu0 %v6728
        %v7088 = vpop.f32.mrb[0].mxu0
        %v7089 = vadd.f32 0.0, %v7088
        %v7090 = vpop.f32.mrb[0].mxu0
        %v7091 = vpop.f32.mrb[0].mxu0
        %v7092 = vadd.f32 0.0, %v7091
        %v7093 = vpop.f32.mrb[0].mxu0
        %7094 = vmatprep.mubr.bf16.mxu0 %v6734
        %7095 = vmatmul.mubr.bf16.gmra.mrb[0].mxu0 %v6733
        %v7096 = vpop.f32.mrb[0].mxu0
        %v7097 = vadd.f32 0.0, %v7096
        %v7098 = vpop.f32.mrb[0].mxu0
        %v7099 = vpop.f32.mrb[0].mxu0
        %v7100 = vadd.f32 0.0, %v7099
        %v7101 = vpop.f32.mrb[0].mxu0
        %7102 = vdwg.mxu0
        %7103 = vmatprep.subr.bf16.mxu0 0
        %7104 = vmatpush1.bf16.msra.mxu0 %v6970
        %7105 = vmatprep.subr.bf16.mxu0 0
        %7106 = vmatpush1.bf16.msra.mxu0 %v6971
        %7107 = vmatprep.subr.bf16.mxu0 0
        %7108 = vmatpush1.bf16.msra.mxu0 %v6972
        %7109 = vmatprep.subr.bf16.mxu0 0
        %7110 = vmatpush1.bf16.msra.mxu0 %v6973
        %7111 = vmatprep.subr.bf16.mxu0 0
        %7112 = vmatpush1.bf16.msra.mxu0 %v6974
        %7113 = vmatprep.subr.bf16.mxu0 0
        %7114 = vmatpush1.bf16.msra.mxu0 %v6975
        %7115 = vmatprep.subr.bf16.mxu0 0
        %7116 = vmatpush1.bf16.msra.mxu0 %v6976
        %7117 = vmatprep.subr.bf16.mxu0 0
        %7118 = vmatpush1.bf16.msra.mxu0 %v6977
        %7119 = vmatprep.subr.bf16.mxu0 0
        %7120 = vmatpush1.bf16.msra.mxu0 %v6978
        %7121 = vmatprep.subr.bf16.mxu0 0
        %7122 = vmatpush1.bf16.msra.mxu0 %v6979
        %7123 = vmatprep.subr.bf16.mxu0 0
        %7124 = vmatpush1.bf16.msra.mxu0 %v6980
        %7125 = vmatprep.subr.bf16.mxu0 0
        %7126 = vmatpush1.bf16.msra.mxu0 %v6981
        %7127 = vmatprep.subr.bf16.mxu0 0
        %7128 = vmatpush1.bf16.msra.mxu0 %v6982
        %7129 = vmatprep.subr.bf16.mxu0 0
        %7130 = vmatpush1.bf16.msra.mxu0 %v6983
        %7131 = vmatprep.subr.bf16.mxu0 0
        %7132 = vmatpush1.bf16.msra.mxu0 %v6984
        %7133 = vmatprep.subr.bf16.mxu0 0
        %7134 = vmatpush1.bf16.msra.mxu0 %v6985
        %7135 = vmatprep.mubr.bf16.mxu0 %v6721
        %7136 = vmatmul.mubr.bf16.gmra.mrb[0].mxu0 %v6720
        %v7137 = vpop.f32.mrb[0].mxu0
        %v7138 = vadd.f32 %v7073, %v7137
        %v7139 = vpop.f32.mrb[0].mxu0
        %v7140 = vpop.f32.mrb[0].mxu0
        %v7141 = vadd.f32 %v7076, %v7140
        %v7142 = vpop.f32.mrb[0].mxu0
        %7143 = vmatprep.mubr.bf16.mxu0 %v6726
        %7144 = vmatmul.mubr.bf16.gmra.mrb[0].mxu0 %v6725
        %v7145 = vpop.f32.mrb[0].mxu0
        %v7146 = vadd.f32 %v7081, %v7145
        %v7147 = vpop.f32.mrb[0].mxu0
        %v7148 = vpop.f32.mrb[0].mxu0
        %v7149 = vadd.f32 %v7084, %v7148
        %v7150 = vpop.f32.mrb[0].mxu0
        %7151 = vmatprep.mubr.bf16.mxu0 %v6731
        %7152 = vmatmul.mubr.bf16.gmra.mrb[0].mxu0 %v6730
        %v7153 = vpop.f32.mrb[0].mxu0
        %v7154 = vadd.f32 %v7089, %v7153
        %v7155 = vpop.f32.mrb[0].mxu0
        %v7156 = vpop.f32.mrb[0].mxu0
        %v7157 = vadd.f32 %v7092, %v7156
        %v7158 = vpop.f32.mrb[0].mxu0
        %7159 = vmatprep.mubr.bf16.mxu0 %v6736
        %7160 = vmatmul.mubr.bf16.gmra.mrb[0].mxu0 %v6735
        %v7161 = vpop.f32.mrb[0].mxu0
        %v7162 = vadd.f32 %v7097, %v7161
        %v7163 = vpop.f32.mrb[0].mxu0
        %v7164 = vpop.f32.mrb[0].mxu0
        %v7165 = vadd.f32 %v7100, %v7164
        %v7166 = vpop.f32.mrb[0].mxu0
        %7167 = vdwg.mxu0
        %7168 = vmatprep.subr.bf16.mxu0 0
        %7169 = vmatpush1.bf16.msra.mxu0 %v6986
        %7170 = vmatprep.subr.bf16.mxu0 0
        %7171 = vmatpush1.bf16.msra.mxu0 %v6987
        %7172 = vmatprep.subr.bf16.mxu0 0
        %7173 = vmatpush1.bf16.msra.mxu0 %v6988
        %7174 = vmatprep.subr.bf16.mxu0 0
        %7175 = vmatpush1.bf16.msra.mxu0 %v6989
        %7176 = vmatprep.subr.bf16.mxu0 0
        %7177 = vmatpush1.bf16.msra.mxu0 0
        %7178 = vmatprep.subr.bf16.mxu0 0
        %7179 = vmatpush1.bf16.msra.mxu0 0
        %7180 = vmatprep.subr.bf16.mxu0 0
        %7181 = vmatpush1.bf16.msra.mxu0 0
        %7182 = vmatprep.subr.bf16.mxu0 0
        %7183 = vmatpush1.bf16.msra.mxu0 0
        %7184 = vmatprep.subr.bf16.mxu0 0
        %7185 = vmatpush1.bf16.msra.mxu0 0
        %7186 = vmatprep.subr.bf16.mxu0 0
        %7187 = vmatpush1.bf16.msra.mxu0 0
        %7188 = vmatprep.subr.bf16.mxu0 0
        %7189 = vmatpush1.bf16.msra.mxu0 0
        %7190 = vmatprep.subr.bf16.mxu0 0
        %7191 = vmatpush1.bf16.msra.mxu0 0
        %7192 = vmatprep.subr.bf16.mxu0 0
        %7193 = vmatpush1.bf16.msra.mxu0 0
        %7194 = vmatprep.subr.bf16.mxu0 0
        %7195 = vmatpush1.bf16.msra.mxu0 0
        %7196 = vmatprep.subr.bf16.mxu0 0
        %7197 = vmatpush1.bf16.msra.mxu0 0
        %7198 = vmatprep.subr.bf16.mxu0 0
        %7199 = vmatpush1.bf16.msra.mxu0 0
        %7200 = vmatprep.mubr.bf16.mxu0 0
        %7201 = vmatmul.mubr.bf16.gmra.mrb[0].mxu0 %v7027
        %v7202 = vpop.f32.mrb[0].mxu0
        %v7203 = vadd.f32 %v7138, %v7202
        %v7204 = vpop.f32.mrb[0].mxu0
        %v7205 = vpop.f32.mrb[0].mxu0
        %v7206 = vadd.f32 %v7141, %v7205
        %v7207 = vpop.f32.mrb[0].mxu0
        %7208 = vmatprep.mubr.bf16.mxu0 0
        %7209 = vmatmul.mubr.bf16.gmra.mrb[0].mxu0 %v7030
        %v7210 = vpop.f32.mrb[0].mxu0
        %v7211 = vadd.f32 %v7146, %v7210
        %v7212 = vpop.f32.mrb[0].mxu0
        %v7213 = vpop.f32.mrb[0].mxu0
        %v7214 = vadd.f32 %v7149, %v7213
        %v7215 = vpop.f32.mrb[0].mxu0
        %7216 = vmatprep.mubr.bf16.mxu0 0
        %7217 = vmatmul.mubr.bf16.gmra.mrb[0].mxu0 %v7033
        %v7218 = vpop.f32.mrb[0].mxu0
        %v7219 = vadd.f32 %v7154, %v7218
        %v7220 = vpop.f32.mrb[0].mxu0
        %v7221 = vpop.f32.mrb[0].mxu0
        %v7222 = vadd.f32 %v7157, %v7221
        %v7223 = vpop.f32.mrb[0].mxu0
        %7224 = vmatprep.mubr.bf16.mxu0 0
        %7225 = vmatmul.mubr.bf16.gmra.mrb[0].mxu0 %v7036
        %v7226 = vpop.f32.mrb[0].mxu0
        %v7227 = vadd.f32 %v7162, %v7226
        %v7228 = vpop.f32.mrb[0].mxu0
        %v7229 = vpop.f32.mrb[0].mxu0
        %v7230 = vadd.f32 %v7165, %v7229
        %v7231 = vpop.f32.mrb[0].mxu0
        %7232 = vdwg.mxu0
        %v7233 = vld [vmem:[%s11] sm:$0x1]
        %v7235 = vlaneseq
        %v7236 = vshrl.u32 %v7235, 7
        %v7237 = vsub.s32 0, %v7236
        %v7238 = vrot.slane %v7233, %v7237
        %v7240 = vmul.f32 %v7203, %v7238
        %v7241 = vmul.f32 %v7206, %v7238
        %v7242 = vmul.f32 %v7211, %v7238
        %v7243 = vmul.f32 %v7214, %v7238
        %v7244 = vmul.f32 %v7219, %v7238
        %v7245 = vmul.f32 %v7222, %v7238
        %v7246 = vmul.f32 %v7227, %v7238
        %v7247 = vmul.f32 %v7230, %v7238
        %v7248 = vld [vmem:[%s12] sm:$0x1]
        %v7250 = vlaneseq
        %v7251 = vshrl.u32 %v7250, 7
        %v7252 = vsub.s32 0, %v7251
        %v7253 = vrot.slane %v7248, %v7252
        %v7255 = vadd.f32 %v7240, %v7253
        %v7256 = vadd.f32 %v7241, %v7253
        %v7257 = vadd.f32 %v7242, %v7253
        %v7258 = vadd.f32 %v7243, %v7253
        %v7259 = vadd.f32 %v7244, %v7253
        %v7260 = vadd.f32 %v7245, %v7253
        %v7261 = vadd.f32 %v7246, %v7253
        %v7262 = vadd.f32 %v7247, %v7253
        %v7263 = vmax.f32 %v7255, 0.0
        %v7264 = vmax.f32 %v7256, 0.0
        %v7265 = vmax.f32 %v7257, 0.0
        %v7266 = vmax.f32 %v7258, 0.0
        %v7267 = vmax.f32 %v7259, 0.0
        %v7268 = vmax.f32 %v7260, 0.0
        %v7269 = vmax.f32 %v7261, 0.0
        %v7270 = vmax.f32 %v7262, 0.0
        %v7271 = vsel %vm3957, %v7263, -inf
        %v7272 = vsel %vm3957, %v7264, -inf
        %v7273 = vmax.f32 %v7271, %v7272
        %v7274 = vsel %vm3957, %v7265, -inf
        %v7275 = vsel %vm3957, %v7266, -inf
        %v7276 = vmax.f32 %v7274, %v7275
        %v7277 = vsel %vm3957, %v7267, -inf
        %v7278 = vsel %vm3957, %v7268, -inf
        %v7279 = vmax.f32 %v7277, %v7278
        %v7280 = vsel %vm3957, %v7269, -inf
        %v7281 = vsel %vm3957, %v7270, -inf
        %v7282 = vmax.f32 %v7280, %v7281
        %v7287 = vcombine.high %v7273, %v7273
        %v7289 = vunpack.c.l.s4 1983009808
        %v7290 = vunpack.c.0.s8 %v7289
        %v7291 = vlaneseq
        %v7292 = vshrl.u32 %v7291, 7
        %v7293 = vsub.s32 %v7290, %v7292
        %v7294 = vrot.slane %v7273, %v7293
        %v7296 = vunpack.c.l.s4 1983009808
        %v7297 = vunpack.c.0.s8 %v7296
        %v7298 = vlaneseq
        %v7299 = vshrl.u32 %v7298, 7
        %v7300 = vsub.s32 %v7297, %v7299
        %v7301 = vrot.slane %v7287, %v7300
        %v7302 = vcombine.high %v7294, %v7294
        %v7303 = vcombine.high %v7301, %v7301
        %v7304 = vcombine.high %v7276, %v7276
        %v7306 = vunpack.c.l.s4 1983009808
        %v7307 = vunpack.c.0.s8 %v7306
        %v7308 = vlaneseq
        %v7309 = vshrl.u32 %v7308, 7
        %v7310 = vsub.s32 %v7307, %v7309
        %v7311 = vrot.slane %v7276, %v7310
        %v7313 = vunpack.c.l.s4 1983009808
        %v7314 = vunpack.c.0.s8 %v7313
        %v7315 = vlaneseq
        %v7316 = vshrl.u32 %v7315, 7
        %v7317 = vsub.s32 %v7314, %v7316
        %v7318 = vrot.slane %v7304, %v7317
        %v7319 = vcombine.high %v7311, %v7311
        %v7320 = vcombine.high %v7318, %v7318
        %v7321 = vcombine.high %v7279, %v7279
        %v7323 = vunpack.c.l.s4 1983009808
        %v7324 = vunpack.c.0.s8 %v7323
        %v7325 = vlaneseq
        %v7326 = vshrl.u32 %v7325, 7
        %v7327 = vsub.s32 %v7324, %v7326
        %v7328 = vrot.slane %v7279, %v7327
        %v7330 = vunpack.c.l.s4 1983009808
        %v7331 = vunpack.c.0.s8 %v7330
        %v7332 = vlaneseq
        %v7333 = vshrl.u32 %v7332, 7
        %v7334 = vsub.s32 %v7331, %v7333
        %v7335 = vrot.slane %v7321, %v7334
        %v7336 = vcombine.high %v7328, %v7328
        %v7337 = vcombine.high %v7335, %v7335
        %v7338 = vcombine.high %v7282, %v7282
        %v7340 = vunpack.c.l.s4 1983009808
        %v7341 = vunpack.c.0.s8 %v7340
        %v7342 = vlaneseq
        %v7343 = vshrl.u32 %v7342, 7
        %v7344 = vsub.s32 %v7341, %v7343
        %v7345 = vrot.slane %v7282, %v7344
        %v7347 = vunpack.c.l.s4 1983009808
        %v7348 = vunpack.c.0.s8 %v7347
        %v7349 = vlaneseq
        %v7350 = vshrl.u32 %v7349, 7
        %v7351 = vsub.s32 %v7348, %v7350
        %v7352 = vrot.slane %v7338, %v7351
        %v7353 = vcombine.high %v7345, %v7345
        %v7354 = vcombine.high %v7352, %v7352
        %v7371 = vsel %vm6454, %v7294, -inf
        %v7372 = vrot.slane %v7371, 4
        %v7373 = vmax.f32 %v7371, %v7372
        %v7374 = vrot.slane %v7373, 2
        %v7375 = vmax.f32 %v7373, %v7374
        %v7376 = vrot.slane %v7375, 1
        %v7377 = vmax.f32 %v7375, %v7376
        %v7378 = vsel %vm6454, %v7302, -inf
        %v7379 = vrot.slane %v7378, 4
        %v7380 = vmax.f32 %v7378, %v7379
        %v7381 = vrot.slane %v7380, 2
        %v7382 = vmax.f32 %v7380, %v7381
        %v7383 = vrot.slane %v7382, 1
        %v7384 = vmax.f32 %v7382, %v7383
        %v7385 = vsel %vm6454, %v7301, -inf
        %v7386 = vrot.slane %v7385, 4
        %v7387 = vmax.f32 %v7385, %v7386
        %v7388 = vrot.slane %v7387, 2
        %v7389 = vmax.f32 %v7387, %v7388
        %v7390 = vrot.slane %v7389, 1
        %v7391 = vmax.f32 %v7389, %v7390
        %v7392 = vsel %vm6454, %v7303, -inf
        %v7393 = vrot.slane %v7392, 4
        %v7394 = vmax.f32 %v7392, %v7393
        %v7395 = vrot.slane %v7394, 2
        %v7396 = vmax.f32 %v7394, %v7395
        %v7397 = vrot.slane %v7396, 1
        %v7398 = vmax.f32 %v7396, %v7397
        %v7399 = vsel %vm6454, %v7311, -inf
        %v7400 = vrot.slane %v7399, 4
        %v7401 = vmax.f32 %v7399, %v7400
        %v7402 = vrot.slane %v7401, 2
        %v7403 = vmax.f32 %v7401, %v7402
        %v7404 = vrot.slane %v7403, 1
        %v7405 = vmax.f32 %v7403, %v7404
        %v7406 = vsel %vm6454, %v7319, -inf
        %v7407 = vrot.slane %v7406, 4
        %v7408 = vmax.f32 %v7406, %v7407
        %v7409 = vrot.slane %v7408, 2
        %v7410 = vmax.f32 %v7408, %v7409
        %v7411 = vrot.slane %v7410, 1
        %v7412 = vmax.f32 %v7410, %v7411
        %v7413 = vsel %vm6454, %v7318, -inf
        %v7414 = vrot.slane %v7413, 4
        %v7415 = vmax.f32 %v7413, %v7414
        %v7416 = vrot.slane %v7415, 2
        %v7417 = vmax.f32 %v7415, %v7416
        %v7418 = vrot.slane %v7417, 1
        %v7419 = vmax.f32 %v7417, %v7418
        %v7420 = vsel %vm6454, %v7320, -inf
        %v7421 = vrot.slane %v7420, 4
        %v7422 = vmax.f32 %v7420, %v7421
        %v7423 = vrot.slane %v7422, 2
        %v7424 = vmax.f32 %v7422, %v7423
        %v7425 = vrot.slane %v7424, 1
        %v7426 = vmax.f32 %v7424, %v7425
        %v7427 = vsel %vm6454, %v7328, -inf
        %v7428 = vrot.slane %v7427, 4
        %v7429 = vmax.f32 %v7427, %v7428
        %v7430 = vrot.slane %v7429, 2
        %v7431 = vmax.f32 %v7429, %v7430
        %v7432 = vrot.slane %v7431, 1
        %v7433 = vmax.f32 %v7431, %v7432
        %v7434 = vsel %vm6454, %v7336, -inf
        %v7435 = vrot.slane %v7434, 4
        %v7436 = vmax.f32 %v7434, %v7435
        %v7437 = vrot.slane %v7436, 2
        %v7438 = vmax.f32 %v7436, %v7437
        %v7439 = vrot.slane %v7438, 1
        %v7440 = vmax.f32 %v7438, %v7439
        %v7441 = vsel %vm6454, %v7335, -inf
        %v7442 = vrot.slane %v7441, 4
        %v7443 = vmax.f32 %v7441, %v7442
        %v7444 = vrot.slane %v7443, 2
        %v7445 = vmax.f32 %v7443, %v7444
        %v7446 = vrot.slane %v7445, 1
        %v7447 = vmax.f32 %v7445, %v7446
        %v7448 = vsel %vm6454, %v7337, -inf
        %v7449 = vrot.slane %v7448, 4
        %v7450 = vmax.f32 %v7448, %v7449
        %v7451 = vrot.slane %v7450, 2
        %v7452 = vmax.f32 %v7450, %v7451
        %v7453 = vrot.slane %v7452, 1
        %v7454 = vmax.f32 %v7452, %v7453
        %v7455 = vsel %vm6454, %v7345, -inf
        %v7456 = vrot.slane %v7455, 4
        %v7457 = vmax.f32 %v7455, %v7456
        %v7458 = vrot.slane %v7457, 2
        %v7459 = vmax.f32 %v7457, %v7458
        %v7460 = vrot.slane %v7459, 1
        %v7461 = vmax.f32 %v7459, %v7460
        %v7462 = vsel %vm6454, %v7353, -inf
        %v7463 = vrot.slane %v7462, 4
        %v7464 = vmax.f32 %v7462, %v7463
        %v7465 = vrot.slane %v7464, 2
        %v7466 = vmax.f32 %v7464, %v7465
        %v7467 = vrot.slane %v7466, 1
        %v7468 = vmax.f32 %v7466, %v7467
        %v7469 = vsel %vm6454, %v7352, -inf
        %v7470 = vrot.slane %v7469, 4
        %v7471 = vmax.f32 %v7469, %v7470
        %v7472 = vrot.slane %v7471, 2
        %v7473 = vmax.f32 %v7471, %v7472
        %v7474 = vrot.slane %v7473, 1
        %v7475 = vmax.f32 %v7473, %v7474
        %v7476 = vsel %vm6454, %v7354, -inf
        %v7477 = vrot.slane %v7476, 4
        %v7478 = vmax.f32 %v7476, %v7477
        %v7479 = vrot.slane %v7478, 2
        %v7480 = vmax.f32 %v7478, %v7479
        %v7481 = vrot.slane %v7480, 1
        %v7482 = vmax.f32 %v7480, %v7481
        %vm7483 = vcmask 521216
        %7484 = vst.msk [vmem:[#allocation6] sm:$0x3f] %vm7483, 0.0
        %s7485 = scalar_lea.vmem [#allocation6], 40
        %7486 = vst.msk [vmem:[%s7485] sm:$0x3f] %vm7483, 0.0
        %s7487 = scalar_lea.vmem [#allocation6], 8
        %7488 = vst.msk [vmem:[%s7487] sm:$0x1] %vm6460, 0.0
        %7489 = vst.msk [vmem:[%s7487 + $0x8] sm:$0x1] %vm6460, 0.0
        %7490 = vst.msk [vmem:[%s7487 + $0x10] sm:$0x1] %vm6460, 0.0
        %7491 = vst.msk [vmem:[%s7487 + $0x18] sm:$0x1] %vm6460, 0.0
        %7492 = vst.msk [vmem:[%s7487 + $0x5] sm:$0x1] %vm6460, 0.0
        %7493 = vst.msk [vmem:[%s7487 + $0xd] sm:$0x1] %vm6460, 0.0
        %7494 = vst.msk [vmem:[%s7487 + $0x15] sm:$0x1] %vm6460, 0.0
        %7495 = vst.msk [vmem:[%s7487 + $0x1d] sm:$0x1] %vm6460, 0.0
        %v7512 = vsel %vm5725, %v7384, %v7377
        %v7513 = vsel %vm5727, %v7391, %v7512
        %v7514 = vsel %vm5729, %v7398, %v7513
        %v7515 = vsel %vm5725, %v7412, %v7405
        %v7516 = vsel %vm5727, %v7419, %v7515
        %v7517 = vsel %vm5729, %v7426, %v7516
        %v7518 = vsel %vm5725, %v7440, %v7433
        %v7519 = vsel %vm5727, %v7447, %v7518
        %v7520 = vsel %vm5729, %v7454, %v7519
        %v7521 = vsel %vm5725, %v7468, %v7461
        %v7522 = vsel %vm5727, %v7475, %v7521
        %v7523 = vsel %vm5729, %v7482, %v7522
        %vm7528 = vcmask 519168
        %7529 = vst.msk [vmem:[%s7487 + $0x1] sm:$0xf] %vm7528, %v7514
        %7530 = vst.msk [vmem:[%s7487 + $0x9] sm:$0xf] %vm7528, %v7517
        %7531 = vst.msk [vmem:[%s7487 + $0x11] sm:$0xf] %vm7528, %v7520
        %7532 = vst.msk [vmem:[%s7487 + $0x19] sm:$0xf] %vm7528, %v7523
        %v7533 = vld [vmem:[#allocation6] sm:$0xf]
        %v7534 = vld [vmem:[#allocation6 + $0x8] sm:$0xf]
        %v7535 = vld [vmem:[#allocation6 + $0x10] sm:$0xf]
        %v7536 = vld [vmem:[#allocation6 + $0x18] sm:$0xf]
        %v7537 = vld [vmem:[#allocation6 + $0x1] sm:$0xf]
        %v7538 = vld [vmem:[#allocation6 + $0x9] sm:$0xf]
        %v7539 = vld [vmem:[#allocation6 + $0x11] sm:$0xf]
        %v7540 = vld [vmem:[#allocation6 + $0x19] sm:$0xf]
        %v7541 = vld [vmem:[#allocation6 + $0x2] sm:$0xf]
        %v7542 = vld [vmem:[#allocation6 + $0xa] sm:$0xf]
        %v7543 = vld [vmem:[#allocation6 + $0x12] sm:$0xf]
        %v7544 = vld [vmem:[#allocation6 + $0x1a] sm:$0xf]
        %v7545 = vld [vmem:[%s7487] sm:$0xf]
        %v7546 = vld [vmem:[%s7487 + $0x8] sm:$0xf]
        %v7547 = vld [vmem:[%s7487 + $0x10] sm:$0xf]
        %v7548 = vld [vmem:[%s7487 + $0x18] sm:$0xf]
        %v7549 = vld [vmem:[%s7487 + $0x1] sm:$0xf]
        %v7550 = vld [vmem:[%s7487 + $0x9] sm:$0xf]
        %v7551 = vld [vmem:[%s7487 + $0x11] sm:$0xf]
        %v7552 = vld [vmem:[%s7487 + $0x19] sm:$0xf]
        %v7553 = vld [vmem:[%s7487 + $0x2] sm:$0xf]
        %v7554 = vld [vmem:[%s7487 + $0xa] sm:$0xf]
        %v7555 = vld [vmem:[%s7487 + $0x12] sm:$0xf]
        %v7556 = vld [vmem:[%s7487 + $0x1a] sm:$0xf]
        %s7557 = scalar_lea.vmem [#allocation6], 16
        %v7558 = vld [vmem:[%s7557] sm:$0xf]
        %v7559 = vld [vmem:[%s7557 + $0x8] sm:$0xf]
        %v7560 = vld [vmem:[%s7557 + $0x10] sm:$0xf]
        %v7561 = vld [vmem:[%s7557 + $0x18] sm:$0xf]
        %v7562 = vld [vmem:[%s7557 + $0x1] sm:$0xf]
        %v7563 = vld [vmem:[%s7557 + $0x9] sm:$0xf]
        %v7564 = vld [vmem:[%s7557 + $0x11] sm:$0xf]
        %v7565 = vld [vmem:[%s7557 + $0x19] sm:$0xf]
        %v7566 = vld [vmem:[%s7557 + $0x2] sm:$0xf]
        %v7567 = vld [vmem:[%s7557 + $0xa] sm:$0xf]
        %v7568 = vld [vmem:[%s7557 + $0x12] sm:$0xf]
        %v7569 = vld [vmem:[%s7557 + $0x1a] sm:$0xf]
        %7574 = vrot.lane.b32.xlu0 %v7537, 64
        %v7575 = vpop.permute.xlu0 %7574
        %7576 = vrot.lane.b32.xlu0 %v7538, 64
        %v7577 = vpop.permute.xlu0 %7576
        %7578 = vrot.lane.b32.xlu0 %v7539, 64
        %v7579 = vpop.permute.xlu0 %7578
        %7580 = vrot.lane.b32.xlu0 %v7540, 64
        %v7581 = vpop.permute.xlu0 %7580
        %7590 = vrot.lane.b32.xlu0 %v7545, 64
        %v7591 = vpop.permute.xlu0 %7590
        %7592 = vrot.lane.b32.xlu0 %v7546, 64
        %v7593 = vpop.permute.xlu0 %7592
        %7594 = vrot.lane.b32.xlu0 %v7547, 64
        %v7595 = vpop.permute.xlu0 %7594
        %7596 = vrot.lane.b32.xlu0 %v7548, 64
        %v7597 = vpop.permute.xlu0 %7596
        %7606 = vrot.lane.b32.xlu0 %v7553, 64
        %v7607 = vpop.permute.xlu0 %7606
        %7608 = vrot.lane.b32.xlu0 %v7554, 64
        %v7609 = vpop.permute.xlu0 %7608
        %7610 = vrot.lane.b32.xlu0 %v7555, 64
        %v7611 = vpop.permute.xlu0 %7610
        %7612 = vrot.lane.b32.xlu0 %v7556, 64
        %v7613 = vpop.permute.xlu0 %7612
        %7622 = vrot.lane.b32.xlu0 %v7562, 64
        %v7623 = vpop.permute.xlu0 %7622
        %7624 = vrot.lane.b32.xlu0 %v7563, 64
        %v7625 = vpop.permute.xlu0 %7624
        %7626 = vrot.lane.b32.xlu0 %v7564, 64
        %v7627 = vpop.permute.xlu0 %7626
        %7628 = vrot.lane.b32.xlu0 %v7565, 64
        %v7629 = vpop.permute.xlu0 %7628
        %v7634 = vsel %vm3957, %v7533, %v7575
        %v7635 = vsel %vm3957, %v7534, %v7577
        %v7636 = vsel %vm3957, %v7535, %v7579
        %v7637 = vsel %vm3957, %v7536, %v7581
        %v7638 = vsel %vm3957, %v7541, %v7591
        %v7639 = vsel %vm3957, %v7542, %v7593
        %v7640 = vsel %vm3957, %v7543, %v7595
        %v7641 = vsel %vm3957, %v7544, %v7597
        %v7642 = vsel %vm3957, %v7549, %v7607
        %v7643 = vsel %vm3957, %v7550, %v7609
        %v7644 = vsel %vm3957, %v7551, %v7611
        %v7645 = vsel %vm3957, %v7552, %v7613
        %v7646 = vsel %vm3957, %v7558, %v7623
        %v7647 = vsel %vm3957, %v7559, %v7625
        %v7648 = vsel %vm3957, %v7560, %v7627
        %v7649 = vsel %vm3957, %v7561, %v7629
        %v7670 = vcombine.low %v7634, %v7638
        %v7671 = vcombine.low %v7642, %v7646
        %v7672 = vcombine.low %v7635, %v7639
        %v7673 = vcombine.low %v7643, %v7647
        %v7674 = vcombine.low %v7636, %v7640
        %v7675 = vcombine.low %v7644, %v7648
        %v7676 = vcombine.low %v7637, %v7641
        %v7677 = vcombine.low %v7645, %v7649
        %v7678 = vcombine.low %v7670, %v7672
        %v7679 = vcombine.high %v7670, %v7672
        %v7680 = vcombine.low %v7671, %v7673
        %v7681 = vcombine.high %v7671, %v7673
        %v7682 = vcombine.low %v7566, %v7567
        %v7683 = vcombine.low %v7674, %v7676
        %v7684 = vcombine.high %v7674, %v7676
        %v7685 = vcombine.low %v7675, %v7677
        %v7686 = vcombine.high %v7675, %v7677
        %v7687 = vcombine.low %v7568, %v7569
        %v7698 = vpack.c.bf16 %v7683, %v7678
        %v7699 = vpack.c.bf16 %v7684, %v7679
        %v7700 = vpack.c.bf16 %v7685, %v7680
        %v7701 = vpack.c.bf16 %v7686, %v7681
        %v7702 = vpack.c.bf16 %v7687, %v7682
        %v7703 = vld [vmem:[%s13] sm:$0xf]
        %v7704 = vld [vmem:[%s13 + $0x4] sm:$0xf]
        %v7705 = vld [vmem:[%s13 + $0x8] sm:$0xf]
        %v7706 = vld [vmem:[%s13 + $0xc] sm:$0xf]
        %v7707 = vld [vmem:[%s13 + $0x10] sm:$0xf]
        %v7708 = vld [vmem:[%s13 + $0x14] sm:$0xf]
        %v7709 = vld [vmem:[%s13 + $0x18] sm:$0xf]
        %v7710 = vld [vmem:[%s13 + $0x1c] sm:$0xf]
        %v7711 = vld [vmem:[%s13 + $0x20] sm:$0xf]
        %v7712 = vld [vmem:[%s13 + $0x24] sm:$0xf]
        %v7713 = vld [vmem:[%s13 + $0x28] sm:$0xf]
        %v7714 = vld [vmem:[%s13 + $0x2c] sm:$0xf]
        %v7715 = vld [vmem:[%s13 + $0x30] sm:$0xf]
        %v7716 = vld [vmem:[%s13 + $0x34] sm:$0xf]
        %v7717 = vld [vmem:[%s13 + $0x38] sm:$0xf]
        %v7718 = vld [vmem:[%s13 + $0x3c] sm:$0xf]
        %v7719 = vld [vmem:[%s13 + $0x40] sm:$0xf]
        %v7720 = vld [vmem:[%s13 + $0x44] sm:$0xf]
        %v7721 = vld [vmem:[%s13 + $0x48] sm:$0xf]
        %v7722 = vld [vmem:[%s13 + $0x4c] sm:$0xf]
        %v7723 = vld [vmem:[%s13 + $0x50] sm:$0xf]
        %v7724 = vld [vmem:[%s13 + $0x54] sm:$0xf]
        %v7725 = vld [vmem:[%s13 + $0x58] sm:$0xf]
        %v7726 = vld [vmem:[%s13 + $0x5c] sm:$0xf]
        %v7727 = vld [vmem:[%s13 + $0x60] sm:$0xf]
        %v7728 = vld [vmem:[%s13 + $0x64] sm:$0xf]
        %v7729 = vld [vmem:[%s13 + $0x68] sm:$0xf]
        %v7730 = vld [vmem:[%s13 + $0x6c] sm:$0xf]
        %v7731 = vld [vmem:[%s13 + $0x70] sm:$0xf]
        %v7732 = vld [vmem:[%s13 + $0x74] sm:$0xf]
        %v7733 = vld [vmem:[%s13 + $0x78] sm:$0xf]
        %v7734 = vld [vmem:[%s13 + $0x7c] sm:$0xf]
        %v7735 = vld [vmem:[%s13 + $0x80] sm:$0xf]
        %v7736 = vld [vmem:[%s13 + $0x84] sm:$0xf]
        %v7737 = vld [vmem:[%s13 + $0x88] sm:$0xf]
        %v7738 = vld [vmem:[%s13 + $0x8c] sm:$0xf]
        %v7739 = vld [vmem:[%s13 + $0x90] sm:$0xf]
        %v7740 = vld [vmem:[%s13 + $0x94] sm:$0xf]
        %v7741 = vld [vmem:[%s13 + $0x98] sm:$0xf]
        %v7742 = vld [vmem:[%s13 + $0x9c] sm:$0xf]
        %v7743 = vld [vmem:[%s13 + $0xa0] sm:$0xf]
        %v7744 = vld [vmem:[%s13 + $0xa4] sm:$0xf]
        %v7745 = vld [vmem:[%s13 + $0xa8] sm:$0xf]
        %v7746 = vld [vmem:[%s13 + $0xac] sm:$0xf]
        %v7747 = vld [vmem:[%s13 + $0xb0] sm:$0xf]
        %v7748 = vld [vmem:[%s13 + $0xb4] sm:$0xf]
        %v7749 = vld [vmem:[%s13 + $0xb8] sm:$0xf]
        %v7750 = vld [vmem:[%s13 + $0xbc] sm:$0xf]
        %v7751 = vld [vmem:[%s13 + $0xc0] sm:$0xf]
        %v7752 = vld [vmem:[%s13 + $0xc4] sm:$0xf]
        %v7753 = vld [vmem:[%s13 + $0xc8] sm:$0xf]
        %v7754 = vld [vmem:[%s13 + $0xcc] sm:$0xf]
        %v7755 = vld [vmem:[%s13 + $0xd0] sm:$0xf]
        %v7756 = vld [vmem:[%s13 + $0xd4] sm:$0xf]
        %v7757 = vld [vmem:[%s13 + $0xd8] sm:$0xf]
        %v7758 = vld [vmem:[%s13 + $0xdc] sm:$0xf]
        %v7759 = vld [vmem:[%s13 + $0xe0] sm:$0xf]
        %v7760 = vld [vmem:[%s13 + $0xe4] sm:$0xf]
        %v7761 = vld [vmem:[%s13 + $0xe8] sm:$0xf]
        %v7762 = vld [vmem:[%s13 + $0xec] sm:$0xf]
        %v7763 = vld [vmem:[%s13 + $0xf0] sm:$0xf]
        %v7764 = vld [vmem:[%s13 + $0xf4] sm:$0xf]
        %v7765 = vld [vmem:[%s13 + $0xf8] sm:$0xf]
        %v7766 = vld [vmem:[%s13 + $0xfc] sm:$0xf]
        %v7767 = vld [vmem:[%s13 + $0x100] sm:$0xf]
        %v7768 = vld [vmem:[%s13 + $0x104] sm:$0xf]
        %v7769 = vld [vmem:[%s13 + $0x108] sm:$0xf]
        %v7770 = vld [vmem:[%s13 + $0x10c] sm:$0xf]
        %v7771 = vld [vmem:[%s13 + $0x110] sm:$0xf]
        %v7772 = vld [vmem:[%s13 + $0x114] sm:$0xf]
        %v7773 = vld [vmem:[%s13 + $0x118] sm:$0xf]
        %v7774 = vld [vmem:[%s13 + $0x11c] sm:$0xf]
        %v7847 = vunpack.c.l.b16 %v7703
        %v7848 = vunpack.c.l.b16 %v7704
        %v7849 = vunpack.c.l.b16 %v7705
        %v7850 = vunpack.c.l.b16 %v7706
        %v7851 = vunpack.c.l.b16 %v7707
        %v7852 = vunpack.c.l.b16 %v7708
        %v7853 = vunpack.c.l.b16 %v7709
        %v7854 = vunpack.c.l.b16 %v7710
        %v7855 = vunpack.c.l.b16 %v7711
        %v7856 = vunpack.c.l.b16 %v7712
        %v7857 = vunpack.c.l.b16 %v7713
        %v7858 = vunpack.c.l.b16 %v7714
        %v7859 = vunpack.c.l.b16 %v7715
        %v7860 = vunpack.c.l.b16 %v7716
        %v7861 = vunpack.c.l.b16 %v7717
        %v7862 = vunpack.c.l.b16 %v7718
        %v7863 = vunpack.c.l.b16 %v7719
        %v7864 = vunpack.c.l.b16 %v7720
        %v7865 = vunpack.c.l.b16 %v7721
        %v7866 = vunpack.c.l.b16 %v7722
        %v7867 = vunpack.c.l.b16 %v7723
        %v7868 = vunpack.c.l.b16 %v7724
        %v7869 = vunpack.c.l.b16 %v7725
        %v7870 = vunpack.c.l.b16 %v7726
        %v7871 = vunpack.c.l.b16 %v7727
        %v7872 = vunpack.c.l.b16 %v7728
        %v7873 = vunpack.c.l.b16 %v7729
        %v7874 = vunpack.c.l.b16 %v7730
        %v7875 = vunpack.c.l.b16 %v7731
        %v7876 = vunpack.c.l.b16 %v7732
        %v7877 = vunpack.c.l.b16 %v7733
        %v7878 = vunpack.c.l.b16 %v7734
        %v7879 = vunpack.c.l.b16 %v7735
        %v7880 = vunpack.c.l.b16 %v7736
        %v7881 = vunpack.c.l.b16 %v7737
        %v7882 = vunpack.c.l.b16 %v7738
        %v7883 = vunpack.c.l.b16 %v7739
        %v7884 = vunpack.c.l.b16 %v7740
        %v7885 = vunpack.c.l.b16 %v7741
        %v7886 = vunpack.c.l.b16 %v7742
        %v7887 = vunpack.c.l.b16 %v7743
        %v7888 = vunpack.c.l.b16 %v7744
        %v7889 = vunpack.c.l.b16 %v7745
        %v7890 = vunpack.c.l.b16 %v7746
        %v7891 = vunpack.c.l.b16 %v7747
        %v7892 = vunpack.c.l.b16 %v7748
        %v7893 = vunpack.c.l.b16 %v7749
        %v7894 = vunpack.c.l.b16 %v7750
        %v7895 = vunpack.c.l.b16 %v7751
        %v7896 = vunpack.c.l.b16 %v7752
        %v7897 = vunpack.c.l.b16 %v7753
        %v7898 = vunpack.c.l.b16 %v7754
        %v7899 = vunpack.c.l.b16 %v7755
        %v7900 = vunpack.c.l.b16 %v7756
        %v7901 = vunpack.c.l.b16 %v7757
        %v7902 = vunpack.c.l.b16 %v7758
        %v7903 = vunpack.c.l.b16 %v7759
        %v7904 = vunpack.c.l.b16 %v7760
        %v7905 = vunpack.c.l.b16 %v7761
        %v7906 = vunpack.c.l.b16 %v7762
        %v7907 = vunpack.c.l.b16 %v7763
        %v7908 = vunpack.c.l.b16 %v7764
        %v7909 = vunpack.c.l.b16 %v7765
        %v7910 = vunpack.c.l.b16 %v7766
        %v7911 = vunpack.c.l.b16 %v7767
        %v7912 = vunpack.c.l.b16 %v7768
        %v7913 = vunpack.c.l.b16 %v7769
        %v7914 = vunpack.c.l.b16 %v7770
        %v7915 = vunpack.c.l.b16 %v7771
        %v7916 = vunpack.c.l.b16 %v7772
        %v7917 = vunpack.c.l.b16 %v7773
        %v7918 = vunpack.c.l.b16 %v7774
        %v7919 = vpack.c.b16 %v7848, %v7847
        %v7920 = vpack.c.b16 %v7850, %v7849
        %v7921 = vpack.c.b16 %v7852, %v7851
        %v7922 = vpack.c.b16 %v7854, %v7853
        %v7923 = vpack.c.b16 %v7856, %v7855
        %v7924 = vpack.c.b16 %v7858, %v7857
        %v7925 = vpack.c.b16 %v7860, %v7859
        %v7926 = vpack.c.b16 %v7862, %v7861
        %v7927 = vpack.c.b16 %v7864, %v7863
        %v7928 = vpack.c.b16 %v7866, %v7865
        %v7929 = vpack.c.b16 %v7868, %v7867
        %v7930 = vpack.c.b16 %v7870, %v7869
        %v7931 = vpack.c.b16 %v7872, %v7871
        %v7932 = vpack.c.b16 %v7874, %v7873
        %v7933 = vpack.c.b16 %v7876, %v7875
        %v7934 = vpack.c.b16 %v7878, %v7877
        %v7935 = vpack.c.b16 %v7880, %v7879
        %v7936 = vpack.c.b16 %v7882, %v7881
        %v7937 = vpack.c.b16 %v7884, %v7883
        %v7938 = vpack.c.b16 %v7886, %v7885
        %v7939 = vpack.c.b16 %v7888, %v7887
        %v7940 = vpack.c.b16 %v7890, %v7889
        %v7941 = vpack.c.b16 %v7892, %v7891
        %v7942 = vpack.c.b16 %v7894, %v7893
        %v7943 = vpack.c.b16 %v7896, %v7895
        %v7944 = vpack.c.b16 %v7898, %v7897
        %v7945 = vpack.c.b16 %v7900, %v7899
        %v7946 = vpack.c.b16 %v7902, %v7901
        %v7947 = vpack.c.b16 %v7904, %v7903
        %v7948 = vpack.c.b16 %v7906, %v7905
        %v7949 = vpack.c.b16 %v7908, %v7907
        %v7950 = vpack.c.b16 %v7910, %v7909
        %v7951 = vpack.c.b16 %v7912, %v7911
        %v7952 = vpack.c.b16 %v7914, %v7913
        %v7953 = vpack.c.b16 %v7916, %v7915
        %v7954 = vpack.c.b16 %v7918, %v7917
        %v7992 = vsel %vm3957, %v7702, 0
        %7994 = vmatprep.subr.bf16.mxu0 0
        %7995 = vmatpush1.bf16.msra.mxu0 %v7919
        %7996 = vmatprep.subr.bf16.mxu0 0
        %7997 = vmatpush1.bf16.msra.mxu0 %v7920
        %7998 = vmatprep.subr.bf16.mxu0 0
        %7999 = vmatpush1.bf16.msra.mxu0 %v7921
        %8000 = vmatprep.subr.bf16.mxu0 0
        %8001 = vmatpush1.bf16.msra.mxu0 %v7922
        %8002 = vmatprep.subr.bf16.mxu0 0
        %8003 = vmatpush1.bf16.msra.mxu0 %v7923
        %8004 = vmatprep.subr.bf16.mxu0 0
        %8005 = vmatpush1.bf16.msra.mxu0 %v7924
        %8006 = vmatprep.subr.bf16.mxu0 0
        %8007 = vmatpush1.bf16.msra.mxu0 %v7925
        %8008 = vmatprep.subr.bf16.mxu0 0
        %8009 = vmatpush1.bf16.msra.mxu0 %v7926
        %8010 = vmatprep.subr.bf16.mxu0 0
        %8011 = vmatpush1.bf16.msra.mxu0 %v7927
        %8012 = vmatprep.subr.bf16.mxu0 0
        %8013 = vmatpush1.bf16.msra.mxu0 %v7928
        %8014 = vmatprep.subr.bf16.mxu0 0
        %8015 = vmatpush1.bf16.msra.mxu0 %v7929
        %8016 = vmatprep.subr.bf16.mxu0 0
        %8017 = vmatpush1.bf16.msra.mxu0 %v7930
        %8018 = vmatprep.subr.bf16.mxu0 0
        %8019 = vmatpush1.bf16.msra.mxu0 %v7931
        %8020 = vmatprep.subr.bf16.mxu0 0
        %8021 = vmatpush1.bf16.msra.mxu0 %v7932
        %8022 = vmatprep.subr.bf16.mxu0 0
        %8023 = vmatpush1.bf16.msra.mxu0 %v7933
        %8024 = vmatprep.subr.bf16.mxu0 0
        %8025 = vmatpush1.bf16.msra.mxu0 %v7934
        %8026 = vmatprep.mubr.bf16.mxu0 %v7699
        %8027 = vmatmul.mubr.bf16.gmra.mrb[0].mxu0 %v7698
        %v8028 = vpop.f32.mrb[0].mxu0
        %v8029 = vadd.f32 0.0, %v8028
        %v8030 = vpop.f32.mrb[0].mxu0
        %v8031 = vpop.f32.mrb[0].mxu0
        %v8032 = vadd.f32 0.0, %v8031
        %v8033 = vpop.f32.mrb[0].mxu0
        %8034 = vdwg.mxu0
        %8035 = vmatprep.subr.bf16.mxu0 0
        %8036 = vmatpush1.bf16.msra.mxu0 %v7935
        %8037 = vmatprep.subr.bf16.mxu0 0
        %8038 = vmatpush1.bf16.msra.mxu0 %v7936
        %8039 = vmatprep.subr.bf16.mxu0 0
        %8040 = vmatpush1.bf16.msra.mxu0 %v7937
        %8041 = vmatprep.subr.bf16.mxu0 0
        %8042 = vmatpush1.bf16.msra.mxu0 %v7938
        %8043 = vmatprep.subr.bf16.mxu0 0
        %8044 = vmatpush1.bf16.msra.mxu0 %v7939
        %8045 = vmatprep.subr.bf16.mxu0 0
        %8046 = vmatpush1.bf16.msra.mxu0 %v7940
        %8047 = vmatprep.subr.bf16.mxu0 0
        %8048 = vmatpush1.bf16.msra.mxu0 %v7941
        %8049 = vmatprep.subr.bf16.mxu0 0
        %8050 = vmatpush1.bf16.msra.mxu0 %v7942
        %8051 = vmatprep.subr.bf16.mxu0 0
        %8052 = vmatpush1.bf16.msra.mxu0 %v7943
        %8053 = vmatprep.subr.bf16.mxu0 0
        %8054 = vmatpush1.bf16.msra.mxu0 %v7944
        %8055 = vmatprep.subr.bf16.mxu0 0
        %8056 = vmatpush1.bf16.msra.mxu0 %v7945
        %8057 = vmatprep.subr.bf16.mxu0 0
        %8058 = vmatpush1.bf16.msra.mxu0 %v7946
        %8059 = vmatprep.subr.bf16.mxu0 0
        %8060 = vmatpush1.bf16.msra.mxu0 %v7947
        %8061 = vmatprep.subr.bf16.mxu0 0
        %8062 = vmatpush1.bf16.msra.mxu0 %v7948
        %8063 = vmatprep.subr.bf16.mxu0 0
        %8064 = vmatpush1.bf16.msra.mxu0 %v7949
        %8065 = vmatprep.subr.bf16.mxu0 0
        %8066 = vmatpush1.bf16.msra.mxu0 %v7950
        %8067 = vmatprep.mubr.bf16.mxu0 %v7701
        %8068 = vmatmul.mubr.bf16.gmra.mrb[0].mxu0 %v7700
        %v8069 = vpop.f32.mrb[0].mxu0
        %v8070 = vadd.f32 %v8029, %v8069
        %v8071 = vpop.f32.mrb[0].mxu0
        %v8072 = vpop.f32.mrb[0].mxu0
        %v8073 = vadd.f32 %v8032, %v8072
        %v8074 = vpop.f32.mrb[0].mxu0
        %8075 = vdwg.mxu0
        %8076 = vmatprep.subr.bf16.mxu0 0
        %8077 = vmatpush1.bf16.msra.mxu0 %v7951
        %8078 = vmatprep.subr.bf16.mxu0 0
        %8079 = vmatpush1.bf16.msra.mxu0 %v7952
        %8080 = vmatprep.subr.bf16.mxu0 0
        %8081 = vmatpush1.bf16.msra.mxu0 %v7953
        %8082 = vmatprep.subr.bf16.mxu0 0
        %8083 = vmatpush1.bf16.msra.mxu0 %v7954
        %8084 = vmatprep.subr.bf16.mxu0 0
        %8085 = vmatpush1.bf16.msra.mxu0 0
        %8086 = vmatprep.subr.bf16.mxu0 0
        %8087 = vmatpush1.bf16.msra.mxu0 0
        %8088 = vmatprep.subr.bf16.mxu0 0
        %8089 = vmatpush1.bf16.msra.mxu0 0
        %8090 = vmatprep.subr.bf16.mxu0 0
        %8091 = vmatpush1.bf16.msra.mxu0 0
        %8092 = vmatprep.subr.bf16.mxu0 0
        %8093 = vmatpush1.bf16.msra.mxu0 0
        %8094 = vmatprep.subr.bf16.mxu0 0
        %8095 = vmatpush1.bf16.msra.mxu0 0
        %8096 = vmatprep.subr.bf16.mxu0 0
        %8097 = vmatpush1.bf16.msra.mxu0 0
        %8098 = vmatprep.subr.bf16.mxu0 0
        %8099 = vmatpush1.bf16.msra.mxu0 0
        %8100 = vmatprep.subr.bf16.mxu0 0
        %8101 = vmatpush1.bf16.msra.mxu0 0
        %8102 = vmatprep.subr.bf16.mxu0 0
        %8103 = vmatpush1.bf16.msra.mxu0 0
        %8104 = vmatprep.subr.bf16.mxu0 0
        %8105 = vmatpush1.bf16.msra.mxu0 0
        %8106 = vmatprep.subr.bf16.mxu0 0
        %8107 = vmatpush1.bf16.msra.mxu0 0
        %8108 = vmatprep.mubr.bf16.mxu0 0
        %8109 = vmatmul.mubr.bf16.gmra.mrb[0].mxu0 %v7992
        %v8110 = vpop.f32.mrb[0].mxu0
        %v8111 = vadd.f32 %v8070, %v8110
        %v8112 = vpop.f32.mrb[0].mxu0
        %v8113 = vpop.f32.mrb[0].mxu0
        %v8114 = vadd.f32 %v8073, %v8113
        %v8115 = vpop.f32.mrb[0].mxu0
        %8116 = vdwg.mxu0
        %v8117 = vld [vmem:[%s14] sm:$0x1]
        %v8119 = vlaneseq
        %v8120 = vshrl.u32 %v8119, 7
        %v8121 = vsub.s32 0, %v8120
        %v8122 = vrot.slane %v8117, %v8121
        %v8124 = vmul.f32 %v8111, %v8122
        %v8125 = vmul.f32 %v8114, %v8122
        %v8126 = vld [vmem:[%s15] sm:$0x1]
        %v8128 = vlaneseq
        %v8129 = vshrl.u32 %v8128, 7
        %v8130 = vsub.s32 0, %v8129
        %v8131 = vrot.slane %v8126, %v8130
        %v8133 = vadd.f32 %v8124, %v8131
        %v8134 = vadd.f32 %v8125, %v8131
        %v8135 = vmax.f32 %v8133, 0.0
        %v8136 = vmax.f32 %v8134, 0.0
        %v8139 = vcombine.high %v8135, %v8135
        %v8140 = vcombine.high %v8136, %v8136
        %8143 = vst [vmem:[#allocation7] sm:$0x3f] 0.0
        %s8144 = scalar_lea.vmem [#allocation7], 40
        %8145 = vst [vmem:[%s8144] sm:$0x3f] 0.0
        %s8146 = scalar_lea.vmem [#allocation7], 8
        %8147 = vst [vmem:[%s8146] sm:$0x1] 0.0
        %8148 = vst [vmem:[%s8146 + $0x8] sm:$0x1] 0.0
        %8149 = vst [vmem:[%s8146 + $0x10] sm:$0x1] 0.0
        %8150 = vst [vmem:[%s8146 + $0x18] sm:$0x1] 0.0
        %8151 = vst [vmem:[%s8146 + $0x5] sm:$0x1] 0.0
        %8152 = vst [vmem:[%s8146 + $0xd] sm:$0x1] 0.0
        %8153 = vst [vmem:[%s8146 + $0x15] sm:$0x1] 0.0
        %8154 = vst [vmem:[%s8146 + $0x1d] sm:$0x1] 0.0
        %8155 = vst [vmem:[%s8146 + $0x1] sm:$0xf] %v8135
        %8156 = vst [vmem:[%s8146 + $0x9] sm:$0xf] %v8139
        %8157 = vst [vmem:[%s8146 + $0x11] sm:$0xf] %v8136
        %8158 = vst [vmem:[%s8146 + $0x19] sm:$0xf] %v8140
        %v8159 = vld [vmem:[#allocation7] sm:$0xf]
        %v8160 = vld [vmem:[#allocation7 + $0x8] sm:$0xf]
        %v8161 = vld [vmem:[#allocation7 + $0x10] sm:$0xf]
        %v8162 = vld [vmem:[#allocation7 + $0x18] sm:$0xf]
        %v8163 = vld [vmem:[#allocation7 + $0x1] sm:$0xf]
        %v8164 = vld [vmem:[#allocation7 + $0x9] sm:$0xf]
        %v8165 = vld [vmem:[#allocation7 + $0x11] sm:$0xf]
        %v8166 = vld [vmem:[#allocation7 + $0x19] sm:$0xf]
        %v8167 = vld [vmem:[#allocation7 + $0x2] sm:$0xf]
        %v8168 = vld [vmem:[#allocation7 + $0xa] sm:$0xf]
        %v8169 = vld [vmem:[#allocation7 + $0x12] sm:$0xf]
        %v8170 = vld [vmem:[#allocation7 + $0x1a] sm:$0xf]
        %v8171 = vld [vmem:[%s8146] sm:$0xf]
        %v8172 = vld [vmem:[%s8146 + $0x8] sm:$0xf]
        %v8173 = vld [vmem:[%s8146 + $0x10] sm:$0xf]
        %v8174 = vld [vmem:[%s8146 + $0x18] sm:$0xf]
        %v8175 = vld [vmem:[%s8146 + $0x1] sm:$0xf]
        %v8176 = vld [vmem:[%s8146 + $0x9] sm:$0xf]
        %v8177 = vld [vmem:[%s8146 + $0x11] sm:$0xf]
        %v8178 = vld [vmem:[%s8146 + $0x19] sm:$0xf]
        %v8179 = vld [vmem:[%s8146 + $0x2] sm:$0xf]
        %v8180 = vld [vmem:[%s8146 + $0xa] sm:$0xf]
        %v8181 = vld [vmem:[%s8146 + $0x12] sm:$0xf]
        %v8182 = vld [vmem:[%s8146 + $0x1a] sm:$0xf]
        %s8183 = scalar_lea.vmem [#allocation7], 16
        %v8184 = vld [vmem:[%s8183] sm:$0xf]
        %v8185 = vld [vmem:[%s8183 + $0x8] sm:$0xf]
        %v8186 = vld [vmem:[%s8183 + $0x10] sm:$0xf]
        %v8187 = vld [vmem:[%s8183 + $0x18] sm:$0xf]
        %v8188 = vld [vmem:[%s8183 + $0x1] sm:$0xf]
        %v8189 = vld [vmem:[%s8183 + $0x9] sm:$0xf]
        %v8190 = vld [vmem:[%s8183 + $0x11] sm:$0xf]
        %v8191 = vld [vmem:[%s8183 + $0x19] sm:$0xf]
        %v8192 = vld [vmem:[%s8183 + $0x2] sm:$0xf]
        %v8193 = vld [vmem:[%s8183 + $0xa] sm:$0xf]
        %v8194 = vld [vmem:[%s8183 + $0x12] sm:$0xf]
        %v8195 = vld [vmem:[%s8183 + $0x1a] sm:$0xf]
        %v8232 = vcombine.low %v8159, %v8163
        %v8233 = vcombine.low %v8167, %v8171
        %v8234 = vcombine.low %v8175, %v8179
        %v8235 = vcombine.low %v8184, %v8188
        %v8236 = vcombine.low %v8160, %v8164
        %v8237 = vcombine.low %v8168, %v8172
        %v8238 = vcombine.low %v8176, %v8180
        %v8239 = vcombine.low %v8185, %v8189
        %v8240 = vcombine.low %v8161, %v8165
        %v8241 = vcombine.low %v8169, %v8173
        %v8242 = vcombine.low %v8177, %v8181
        %v8243 = vcombine.low %v8186, %v8190
        %v8244 = vcombine.low %v8162, %v8166
        %v8245 = vcombine.low %v8170, %v8174
        %v8246 = vcombine.low %v8178, %v8182
        %v8247 = vcombine.low %v8187, %v8191
        %v8248 = vcombine.low %v8232, %v8236
        %v8249 = vcombine.high %v8232, %v8236
        %v8250 = vcombine.low %v8233, %v8237
        %v8251 = vcombine.high %v8233, %v8237
        %v8252 = vcombine.low %v8234, %v8238
        %v8253 = vcombine.high %v8234, %v8238
        %v8254 = vcombine.low %v8235, %v8239
        %v8255 = vcombine.high %v8235, %v8239
        %v8256 = vcombine.low %v8192, %v8193
        %v8257 = vcombine.low %v8240, %v8244
        %v8258 = vcombine.high %v8240, %v8244
        %v8259 = vcombine.low %v8241, %v8245
        %v8260 = vcombine.high %v8241, %v8245
        %v8261 = vcombine.low %v8242, %v8246
        %v8262 = vcombine.high %v8242, %v8246
        %v8263 = vcombine.low %v8243, %v8247
        %v8264 = vcombine.high %v8243, %v8247
        %v8265 = vcombine.low %v8194, %v8195
        %v8284 = vpack.c.bf16 %v8257, %v8248
        %v8285 = vpack.c.bf16 %v8258, %v8249
        %v8286 = vpack.c.bf16 %v8259, %v8250
        %v8287 = vpack.c.bf16 %v8260, %v8251
        %v8288 = vpack.c.bf16 %v8261, %v8252
        %v8289 = vpack.c.bf16 %v8262, %v8253
        %v8290 = vpack.c.bf16 %v8263, %v8254
        %v8291 = vpack.c.bf16 %v8264, %v8255
        %v8292 = vpack.c.bf16 %v8265, %v8256
        %v8293 = vld [vmem:[#allocation9] sm:$0xf]
        %v8294 = vld [vmem:[#allocation9 + $0x4] sm:$0xf]
        %v8295 = vld [vmem:[#allocation9 + $0x8] sm:$0xf]
        %v8296 = vld [vmem:[#allocation9 + $0xc] sm:$0xf]
        %v8297 = vld [vmem:[#allocation9 + $0x10] sm:$0xf]
        %v8298 = vld [vmem:[#allocation9 + $0x14] sm:$0xf]
        %v8299 = vld [vmem:[#allocation9 + $0x18] sm:$0xf]
        %v8300 = vld [vmem:[#allocation9 + $0x1c] sm:$0xf]
        %v8301 = vld [vmem:[#allocation9 + $0x20] sm:$0xf]
        %v8302 = vld [vmem:[#allocation9 + $0x24] sm:$0xf]
        %v8303 = vld [vmem:[#allocation9 + $0x28] sm:$0xf]
        %v8304 = vld [vmem:[#allocation9 + $0x2c] sm:$0xf]
        %v8305 = vld [vmem:[#allocation9 + $0x30] sm:$0xf]
        %v8306 = vld [vmem:[#allocation9 + $0x34] sm:$0xf]
        %v8307 = vld [vmem:[#allocation9 + $0x38] sm:$0xf]
        %v8308 = vld [vmem:[#allocation9 + $0x3c] sm:$0xf]
        %v8309 = vld [vmem:[#allocation9 + $0x40] sm:$0xf]
        %v8310 = vld [vmem:[#allocation9 + $0x44] sm:$0xf]
        %v8311 = vld [vmem:[#allocation9 + $0x48] sm:$0xf]
        %v8312 = vld [vmem:[#allocation9 + $0x4c] sm:$0xf]
        %v8313 = vld [vmem:[#allocation9 + $0x50] sm:$0xf]
        %v8314 = vld [vmem:[#allocation9 + $0x54] sm:$0xf]
        %v8315 = vld [vmem:[#allocation9 + $0x58] sm:$0xf]
        %v8316 = vld [vmem:[#allocation9 + $0x5c] sm:$0xf]
        %v8317 = vld [vmem:[#allocation9 + $0x60] sm:$0xf]
        %v8318 = vld [vmem:[#allocation9 + $0x64] sm:$0xf]
        %v8319 = vld [vmem:[#allocation9 + $0x68] sm:$0xf]
        %v8320 = vld [vmem:[#allocation9 + $0x6c] sm:$0xf]
        %v8321 = vld [vmem:[#allocation9 + $0x70] sm:$0xf]
        %v8322 = vld [vmem:[#allocation9 + $0x74] sm:$0xf]
        %v8323 = vld [vmem:[#allocation9 + $0x78] sm:$0xf]
        %v8324 = vld [vmem:[#allocation9 + $0x7c] sm:$0xf]
        %v8325 = vld [vmem:[#allocation9 + $0x80] sm:$0xf]
        %v8326 = vld [vmem:[#allocation9 + $0x84] sm:$0xf]
        %v8327 = vld [vmem:[#allocation9 + $0x88] sm:$0xf]
        %v8328 = vld [vmem:[#allocation9 + $0x8c] sm:$0xf]
        %v8329 = vld [vmem:[#allocation9 + $0x90] sm:$0xf]
        %v8330 = vld [vmem:[#allocation9 + $0x94] sm:$0xf]
        %v8331 = vld [vmem:[#allocation9 + $0x98] sm:$0xf]
        %v8332 = vld [vmem:[#allocation9 + $0x9c] sm:$0xf]
        %v8333 = vld [vmem:[#allocation9 + $0xa0] sm:$0xf]
        %v8334 = vld [vmem:[#allocation9 + $0xa4] sm:$0xf]
        %v8335 = vld [vmem:[#allocation9 + $0xa8] sm:$0xf]
        %v8336 = vld [vmem:[#allocation9 + $0xac] sm:$0xf]
        %v8337 = vld [vmem:[#allocation9 + $0xb0] sm:$0xf]
        %v8338 = vld [vmem:[#allocation9 + $0xb4] sm:$0xf]
        %v8339 = vld [vmem:[#allocation9 + $0xb8] sm:$0xf]
        %v8340 = vld [vmem:[#allocation9 + $0xbc] sm:$0xf]
        %v8341 = vld [vmem:[#allocation9 + $0xc0] sm:$0xf]
        %v8342 = vld [vmem:[#allocation9 + $0xc4] sm:$0xf]
        %v8343 = vld [vmem:[#allocation9 + $0xc8] sm:$0xf]
        %v8344 = vld [vmem:[#allocation9 + $0xcc] sm:$0xf]
        %v8345 = vld [vmem:[#allocation9 + $0xd0] sm:$0xf]
        %v8346 = vld [vmem:[#allocation9 + $0xd4] sm:$0xf]
        %v8347 = vld [vmem:[#allocation9 + $0xd8] sm:$0xf]
        %v8348 = vld [vmem:[#allocation9 + $0xdc] sm:$0xf]
        %v8349 = vld [vmem:[#allocation9 + $0xe0] sm:$0xf]
        %v8350 = vld [vmem:[#allocation9 + $0xe4] sm:$0xf]
        %v8351 = vld [vmem:[#allocation9 + $0xe8] sm:$0xf]
        %v8352 = vld [vmem:[#allocation9 + $0xec] sm:$0xf]
        %v8353 = vld [vmem:[#allocation9 + $0xf0] sm:$0xf]
        %v8354 = vld [vmem:[#allocation9 + $0xf4] sm:$0xf]
        %v8355 = vld [vmem:[#allocation9 + $0xf8] sm:$0xf]
        %v8356 = vld [vmem:[#allocation9 + $0xfc] sm:$0xf]
        %v8357 = vld [vmem:[#allocation9 + $0x100] sm:$0xf]
        %v8358 = vld [vmem:[#allocation9 + $0x104] sm:$0xf]
        %v8359 = vld [vmem:[#allocation9 + $0x108] sm:$0xf]
        %v8360 = vld [vmem:[#allocation9 + $0x10c] sm:$0xf]
        %v8361 = vld [vmem:[#allocation9 + $0x110] sm:$0xf]
        %v8362 = vld [vmem:[#allocation9 + $0x114] sm:$0xf]
        %v8363 = vld [vmem:[#allocation9 + $0x118] sm:$0xf]
        %v8364 = vld [vmem:[#allocation9 + $0x11c] sm:$0xf]
        %v8365 = vld [vmem:[#allocation9 + $0x120] sm:$0xf]
        %v8366 = vld [vmem:[#allocation9 + $0x124] sm:$0xf]
        %v8367 = vld [vmem:[#allocation9 + $0x128] sm:$0xf]
        %v8368 = vld [vmem:[#allocation9 + $0x12c] sm:$0xf]
        %v8369 = vld [vmem:[#allocation9 + $0x130] sm:$0xf]
        %v8370 = vld [vmem:[#allocation9 + $0x134] sm:$0xf]
        %v8371 = vld [vmem:[#allocation9 + $0x138] sm:$0xf]
        %v8372 = vld [vmem:[#allocation9 + $0x13c] sm:$0xf]
        %v8373 = vld [vmem:[#allocation9 + $0x140] sm:$0xf]
        %v8374 = vld [vmem:[#allocation9 + $0x144] sm:$0xf]
        %v8375 = vld [vmem:[#allocation9 + $0x148] sm:$0xf]
        %v8376 = vld [vmem:[#allocation9 + $0x14c] sm:$0xf]
        %v8377 = vld [vmem:[#allocation9 + $0x150] sm:$0xf]
        %v8378 = vld [vmem:[#allocation9 + $0x154] sm:$0xf]
        %v8379 = vld [vmem:[#allocation9 + $0x158] sm:$0xf]
        %v8380 = vld [vmem:[#allocation9 + $0x15c] sm:$0xf]
        %v8381 = vld [vmem:[#allocation9 + $0x160] sm:$0xf]
        %v8382 = vld [vmem:[#allocation9 + $0x164] sm:$0xf]
        %v8383 = vld [vmem:[#allocation9 + $0x168] sm:$0xf]
        %v8384 = vld [vmem:[#allocation9 + $0x16c] sm:$0xf]
        %v8385 = vld [vmem:[#allocation9 + $0x170] sm:$0xf]
        %v8386 = vld [vmem:[#allocation9 + $0x174] sm:$0xf]
        %v8387 = vld [vmem:[#allocation9 + $0x178] sm:$0xf]
        %v8388 = vld [vmem:[#allocation9 + $0x17c] sm:$0xf]
        %v8389 = vld [vmem:[#allocation9 + $0x180] sm:$0xf]
        %v8390 = vld [vmem:[#allocation9 + $0x184] sm:$0xf]
        %v8391 = vld [vmem:[#allocation9 + $0x188] sm:$0xf]
        %v8392 = vld [vmem:[#allocation9 + $0x18c] sm:$0xf]
        %v8393 = vld [vmem:[#allocation9 + $0x190] sm:$0xf]
        %v8394 = vld [vmem:[#allocation9 + $0x194] sm:$0xf]
        %v8395 = vld [vmem:[#allocation9 + $0x198] sm:$0xf]
        %v8396 = vld [vmem:[#allocation9 + $0x19c] sm:$0xf]
        %v8397 = vld [vmem:[#allocation9 + $0x1a0] sm:$0xf]
        %v8398 = vld [vmem:[#allocation9 + $0x1a4] sm:$0xf]
        %v8399 = vld [vmem:[#allocation9 + $0x1a8] sm:$0xf]
        %v8400 = vld [vmem:[#allocation9 + $0x1ac] sm:$0xf]
        %v8401 = vld [vmem:[#allocation9 + $0x1b0] sm:$0xf]
        %v8402 = vld [vmem:[#allocation9 + $0x1b4] sm:$0xf]
        %v8403 = vld [vmem:[#allocation9 + $0x1b8] sm:$0xf]
        %v8404 = vld [vmem:[#allocation9 + $0x1bc] sm:$0xf]
        %v8405 = vld [vmem:[#allocation9 + $0x1c0] sm:$0xf]
        %v8406 = vld [vmem:[#allocation9 + $0x1c4] sm:$0xf]
        %v8407 = vld [vmem:[#allocation9 + $0x1c8] sm:$0xf]
        %v8408 = vld [vmem:[#allocation9 + $0x1cc] sm:$0xf]
        %v8409 = vld [vmem:[#allocation9 + $0x1d0] sm:$0xf]
        %v8410 = vld [vmem:[#allocation9 + $0x1d4] sm:$0xf]
        %v8411 = vld [vmem:[#allocation9 + $0x1d8] sm:$0xf]
        %v8412 = vld [vmem:[#allocation9 + $0x1dc] sm:$0xf]
        %v8413 = vld [vmem:[#allocation9 + $0x1e0] sm:$0xf]
        %v8414 = vld [vmem:[#allocation9 + $0x1e4] sm:$0xf]
        %v8415 = vld [vmem:[#allocation9 + $0x1e8] sm:$0xf]
        %v8416 = vld [vmem:[#allocation9 + $0x1ec] sm:$0xf]
        %v8417 = vld [vmem:[#allocation9 + $0x1f0] sm:$0xf]
        %v8418 = vld [vmem:[#allocation9 + $0x1f4] sm:$0xf]
        %v8419 = vld [vmem:[#allocation9 + $0x1f8] sm:$0xf]
        %v8420 = vld [vmem:[#allocation9 + $0x1fc] sm:$0xf]
        %v8421 = vld [vmem:[#allocation9 + $0x200] sm:$0xf]
        %v8422 = vld [vmem:[#allocation9 + $0x204] sm:$0xf]
        %v8423 = vld [vmem:[#allocation9 + $0x208] sm:$0xf]
        %v8424 = vld [vmem:[#allocation9 + $0x20c] sm:$0xf]
        %v8425 = vld [vmem:[#allocation9 + $0x210] sm:$0xf]
        %v8426 = vld [vmem:[#allocation9 + $0x214] sm:$0xf]
        %v8427 = vld [vmem:[#allocation9 + $0x218] sm:$0xf]
        %v8428 = vld [vmem:[#allocation9 + $0x21c] sm:$0xf]
        %v8429 = vld [vmem:[#allocation9 + $0x220] sm:$0xf]
        %v8430 = vld [vmem:[#allocation9 + $0x224] sm:$0xf]
        %v8431 = vld [vmem:[#allocation9 + $0x228] sm:$0xf]
        %v8432 = vld [vmem:[#allocation9 + $0x22c] sm:$0xf]
        %v8433 = vld [vmem:[#allocation9 + $0x230] sm:$0xf]
        %v8434 = vld [vmem:[#allocation9 + $0x234] sm:$0xf]
        %v8435 = vld [vmem:[#allocation9 + $0x238] sm:$0xf]
        %v8436 = vld [vmem:[#allocation9 + $0x23c] sm:$0xf]
        %v8581 = vunpack.c.l.b16 %v8293
        %v8582 = vunpack.c.l.b16 %v8294
        %v8583 = vunpack.c.l.b16 %v8295
        %v8584 = vunpack.c.l.b16 %v8296
        %v8585 = vunpack.c.l.b16 %v8297
        %v8586 = vunpack.c.l.b16 %v8298
        %v8587 = vunpack.c.l.b16 %v8299
        %v8588 = vunpack.c.l.b16 %v8300
        %v8589 = vunpack.c.l.b16 %v8301
        %v8590 = vunpack.c.l.b16 %v8302
        %v8591 = vunpack.c.l.b16 %v8303
        %v8592 = vunpack.c.l.b16 %v8304
        %v8593 = vunpack.c.l.b16 %v8305
        %v8594 = vunpack.c.l.b16 %v8306
        %v8595 = vunpack.c.l.b16 %v8307
        %v8596 = vunpack.c.l.b16 %v8308
        %v8597 = vunpack.c.l.b16 %v8309
        %v8598 = vunpack.c.l.b16 %v8310
        %v8599 = vunpack.c.l.b16 %v8311
        %v8600 = vunpack.c.l.b16 %v8312
        %v8601 = vunpack.c.l.b16 %v8313
        %v8602 = vunpack.c.l.b16 %v8314
        %v8603 = vunpack.c.l.b16 %v8315
        %v8604 = vunpack.c.l.b16 %v8316
        %v8605 = vunpack.c.l.b16 %v8317
        %v8606 = vunpack.c.l.b16 %v8318
        %v8607 = vunpack.c.l.b16 %v8319
        %v8608 = vunpack.c.l.b16 %v8320
        %v8609 = vunpack.c.l.b16 %v8321
        %v8610 = vunpack.c.l.b16 %v8322
        %v8611 = vunpack.c.l.b16 %v8323
        %v8612 = vunpack.c.l.b16 %v8324
        %v8613 = vunpack.c.l.b16 %v8325
        %v8614 = vunpack.c.l.b16 %v8326
        %v8615 = vunpack.c.l.b16 %v8327
        %v8616 = vunpack.c.l.b16 %v8328
        %v8617 = vunpack.c.l.b16 %v8329
        %v8618 = vunpack.c.l.b16 %v8330
        %v8619 = vunpack.c.l.b16 %v8331
        %v8620 = vunpack.c.l.b16 %v8332
        %v8621 = vunpack.c.l.b16 %v8333
        %v8622 = vunpack.c.l.b16 %v8334
        %v8623 = vunpack.c.l.b16 %v8335
        %v8624 = vunpack.c.l.b16 %v8336
        %v8625 = vunpack.c.l.b16 %v8337
        %v8626 = vunpack.c.l.b16 %v8338
        %v8627 = vunpack.c.l.b16 %v8339
        %v8628 = vunpack.c.l.b16 %v8340
        %v8629 = vunpack.c.l.b16 %v8341
        %v8630 = vunpack.c.l.b16 %v8342
        %v8631 = vunpack.c.l.b16 %v8343
        %v8632 = vunpack.c.l.b16 %v8344
        %v8633 = vunpack.c.l.b16 %v8345
        %v8634 = vunpack.c.l.b16 %v8346
        %v8635 = vunpack.c.l.b16 %v8347
        %v8636 = vunpack.c.l.b16 %v8348
        %v8637 = vunpack.c.l.b16 %v8349
        %v8638 = vunpack.c.l.b16 %v8350
        %v8639 = vunpack.c.l.b16 %v8351
        %v8640 = vunpack.c.l.b16 %v8352
        %v8641 = vunpack.c.l.b16 %v8353
        %v8642 = vunpack.c.l.b16 %v8354
        %v8643 = vunpack.c.l.b16 %v8355
        %v8644 = vunpack.c.l.b16 %v8356
        %v8645 = vunpack.c.l.b16 %v8357
        %v8646 = vunpack.c.l.b16 %v8358
        %v8647 = vunpack.c.l.b16 %v8359
        %v8648 = vunpack.c.l.b16 %v8360
        %v8649 = vunpack.c.l.b16 %v8361
        %v8650 = vunpack.c.l.b16 %v8362
        %v8651 = vunpack.c.l.b16 %v8363
        %v8652 = vunpack.c.l.b16 %v8364
        %v8653 = vunpack.c.l.b16 %v8365
        %v8654 = vunpack.c.l.b16 %v8366
        %v8655 = vunpack.c.l.b16 %v8367
        %v8656 = vunpack.c.l.b16 %v8368
        %v8657 = vunpack.c.l.b16 %v8369
        %v8658 = vunpack.c.l.b16 %v8370
        %v8659 = vunpack.c.l.b16 %v8371
        %v8660 = vunpack.c.l.b16 %v8372
        %v8661 = vunpack.c.l.b16 %v8373
        %v8662 = vunpack.c.l.b16 %v8374
        %v8663 = vunpack.c.l.b16 %v8375
        %v8664 = vunpack.c.l.b16 %v8376
        %v8665 = vunpack.c.l.b16 %v8377
        %v8666 = vunpack.c.l.b16 %v8378
        %v8667 = vunpack.c.l.b16 %v8379
        %v8668 = vunpack.c.l.b16 %v8380
        %v8669 = vunpack.c.l.b16 %v8381
        %v8670 = vunpack.c.l.b16 %v8382
        %v8671 = vunpack.c.l.b16 %v8383
        %v8672 = vunpack.c.l.b16 %v8384
        %v8673 = vunpack.c.l.b16 %v8385
        %v8674 = vunpack.c.l.b16 %v8386
        %v8675 = vunpack.c.l.b16 %v8387
        %v8676 = vunpack.c.l.b16 %v8388
        %v8677 = vunpack.c.l.b16 %v8389
        %v8678 = vunpack.c.l.b16 %v8390
        %v8679 = vunpack.c.l.b16 %v8391
        %v8680 = vunpack.c.l.b16 %v8392
        %v8681 = vunpack.c.l.b16 %v8393
        %v8682 = vunpack.c.l.b16 %v8394
        %v8683 = vunpack.c.l.b16 %v8395
        %v8684 = vunpack.c.l.b16 %v8396
        %v8685 = vunpack.c.l.b16 %v8397
        %v8686 = vunpack.c.l.b16 %v8398
        %v8687 = vunpack.c.l.b16 %v8399
        %v8688 = vunpack.c.l.b16 %v8400
        %v8689 = vunpack.c.l.b16 %v8401
        %v8690 = vunpack.c.l.b16 %v8402
        %v8691 = vunpack.c.l.b16 %v8403
        %v8692 = vunpack.c.l.b16 %v8404
        %v8693 = vunpack.c.l.b16 %v8405
        %v8694 = vunpack.c.l.b16 %v8406
        %v8695 = vunpack.c.l.b16 %v8407
        %v8696 = vunpack.c.l.b16 %v8408
        %v8697 = vunpack.c.l.b16 %v8409
        %v8698 = vunpack.c.l.b16 %v8410
        %v8699 = vunpack.c.l.b16 %v8411
        %v8700 = vunpack.c.l.b16 %v8412
        %v8701 = vunpack.c.l.b16 %v8413
        %v8702 = vunpack.c.l.b16 %v8414
        %v8703 = vunpack.c.l.b16 %v8415
        %v8704 = vunpack.c.l.b16 %v8416
        %v8705 = vunpack.c.l.b16 %v8417
        %v8706 = vunpack.c.l.b16 %v8418
        %v8707 = vunpack.c.l.b16 %v8419
        %v8708 = vunpack.c.l.b16 %v8420
        %v8709 = vunpack.c.l.b16 %v8421
        %v8710 = vunpack.c.l.b16 %v8422
        %v8711 = vunpack.c.l.b16 %v8423
        %v8712 = vunpack.c.l.b16 %v8424
        %v8713 = vunpack.c.l.b16 %v8425
        %v8714 = vunpack.c.l.b16 %v8426
        %v8715 = vunpack.c.l.b16 %v8427
        %v8716 = vunpack.c.l.b16 %v8428
        %v8717 = vunpack.c.l.b16 %v8429
        %v8718 = vunpack.c.l.b16 %v8430
        %v8719 = vunpack.c.l.b16 %v8431
        %v8720 = vunpack.c.l.b16 %v8432
        %v8721 = vunpack.c.l.b16 %v8433
        %v8722 = vunpack.c.l.b16 %v8434
        %v8723 = vunpack.c.l.b16 %v8435
        %v8724 = vunpack.c.l.b16 %v8436
        %v8725 = vpack.c.b16 %v8582, %v8581
        %v8726 = vpack.c.b16 %v8584, %v8583
        %v8727 = vpack.c.b16 %v8586, %v8585
        %v8728 = vpack.c.b16 %v8588, %v8587
        %v8729 = vpack.c.b16 %v8590, %v8589
        %v8730 = vpack.c.b16 %v8592, %v8591
        %v8731 = vpack.c.b16 %v8594, %v8593
        %v8732 = vpack.c.b16 %v8596, %v8595
        %v8733 = vpack.c.b16 %v8598, %v8597
        %v8734 = vpack.c.b16 %v8600, %v8599
        %v8735 = vpack.c.b16 %v8602, %v8601
        %v8736 = vpack.c.b16 %v8604, %v8603
        %v8737 = vpack.c.b16 %v8606, %v8605
        %v8738 = vpack.c.b16 %v8608, %v8607
        %v8739 = vpack.c.b16 %v8610, %v8609
        %v8740 = vpack.c.b16 %v8612, %v8611
        %v8741 = vpack.c.b16 %v8614, %v8613
        %v8742 = vpack.c.b16 %v8616, %v8615
        %v8743 = vpack.c.b16 %v8618, %v8617
        %v8744 = vpack.c.b16 %v8620, %v8619
        %v8745 = vpack.c.b16 %v8622, %v8621
        %v8746 = vpack.c.b16 %v8624, %v8623
        %v8747 = vpack.c.b16 %v8626, %v8625
        %v8748 = vpack.c.b16 %v8628, %v8627
        %v8749 = vpack.c.b16 %v8630, %v8629
        %v8750 = vpack.c.b16 %v8632, %v8631
        %v8751 = vpack.c.b16 %v8634, %v8633
        %v8752 = vpack.c.b16 %v8636, %v8635
        %v8753 = vpack.c.b16 %v8638, %v8637
        %v8754 = vpack.c.b16 %v8640, %v8639
        %v8755 = vpack.c.b16 %v8642, %v8641
        %v8756 = vpack.c.b16 %v8644, %v8643
        %v8757 = vpack.c.b16 %v8646, %v8645
        %v8758 = vpack.c.b16 %v8648, %v8647
        %v8759 = vpack.c.b16 %v8650, %v8649
        %v8760 = vpack.c.b16 %v8652, %v8651
        %v8761 = vpack.c.b16 %v8654, %v8653
        %v8762 = vpack.c.b16 %v8656, %v8655
        %v8763 = vpack.c.b16 %v8658, %v8657
        %v8764 = vpack.c.b16 %v8660, %v8659
        %v8765 = vpack.c.b16 %v8662, %v8661
        %v8766 = vpack.c.b16 %v8664, %v8663
        %v8767 = vpack.c.b16 %v8666, %v8665
        %v8768 = vpack.c.b16 %v8668, %v8667
        %v8769 = vpack.c.b16 %v8670, %v8669
        %v8770 = vpack.c.b16 %v8672, %v8671
        %v8771 = vpack.c.b16 %v8674, %v8673
        %v8772 = vpack.c.b16 %v8676, %v8675
        %v8773 = vpack.c.b16 %v8678, %v8677
        %v8774 = vpack.c.b16 %v8680, %v8679
        %v8775 = vpack.c.b16 %v8682, %v8681
        %v8776 = vpack.c.b16 %v8684, %v8683
        %v8777 = vpack.c.b16 %v8686, %v8685
        %v8778 = vpack.c.b16 %v8688, %v8687
        %v8779 = vpack.c.b16 %v8690, %v8689
        %v8780 = vpack.c.b16 %v8692, %v8691
        %v8781 = vpack.c.b16 %v8694, %v8693
        %v8782 = vpack.c.b16 %v8696, %v8695
        %v8783 = vpack.c.b16 %v8698, %v8697
        %v8784 = vpack.c.b16 %v8700, %v8699
        %v8785 = vpack.c.b16 %v8702, %v8701
        %v8786 = vpack.c.b16 %v8704, %v8703
        %v8787 = vpack.c.b16 %v8706, %v8705
        %v8788 = vpack.c.b16 %v8708, %v8707
        %v8789 = vpack.c.b16 %v8710, %v8709
        %v8790 = vpack.c.b16 %v8712, %v8711
        %v8791 = vpack.c.b16 %v8714, %v8713
        %v8792 = vpack.c.b16 %v8716, %v8715
        %v8793 = vpack.c.b16 %v8718, %v8717
        %v8794 = vpack.c.b16 %v8720, %v8719
        %v8795 = vpack.c.b16 %v8722, %v8721
        %v8796 = vpack.c.b16 %v8724, %v8723
        %8869 = vmatprep.subr.bf16.mxu0 0
        %8870 = vmatpush1.bf16.msra.mxu0 %v8725
        %8871 = vmatprep.subr.bf16.mxu0 0
        %8872 = vmatpush1.bf16.msra.mxu0 %v8726
        %8873 = vmatprep.subr.bf16.mxu0 0
        %8874 = vmatpush1.bf16.msra.mxu0 %v8727
        %8875 = vmatprep.subr.bf16.mxu0 0
        %8876 = vmatpush1.bf16.msra.mxu0 %v8728
        %8877 = vmatprep.subr.bf16.mxu0 0
        %8878 = vmatpush1.bf16.msra.mxu0 %v8729
        %8879 = vmatprep.subr.bf16.mxu0 0
        %8880 = vmatpush1.bf16.msra.mxu0 %v8730
        %8881 = vmatprep.subr.bf16.mxu0 0
        %8882 = vmatpush1.bf16.msra.mxu0 %v8731
        %8883 = vmatprep.subr.bf16.mxu0 0
        %8884 = vmatpush1.bf16.msra.mxu0 %v8732
        %8885 = vmatprep.subr.bf16.mxu0 0
        %8886 = vmatpush1.bf16.msra.mxu0 %v8733
        %8887 = vmatprep.subr.bf16.mxu0 0
        %8888 = vmatpush1.bf16.msra.mxu0 %v8734
        %8889 = vmatprep.subr.bf16.mxu0 0
        %8890 = vmatpush1.bf16.msra.mxu0 %v8735
        %8891 = vmatprep.subr.bf16.mxu0 0
        %8892 = vmatpush1.bf16.msra.mxu0 %v8736
        %8893 = vmatprep.subr.bf16.mxu0 0
        %8894 = vmatpush1.bf16.msra.mxu0 %v8737
        %8895 = vmatprep.subr.bf16.mxu0 0
        %8896 = vmatpush1.bf16.msra.mxu0 %v8738
        %8897 = vmatprep.subr.bf16.mxu0 0
        %8898 = vmatpush1.bf16.msra.mxu0 %v8739
        %8899 = vmatprep.subr.bf16.mxu0 0
        %8900 = vmatpush1.bf16.msra.mxu0 %v8740
        %8901 = vmatprep.mubr.bf16.mxu0 %v8285
        %8902 = vmatmul.mubr.bf16.gmra.mrb[0].mxu0 %v8284
        %v8903 = vpop.f32.mrb[0].mxu0
        %v8904 = vadd.f32 0.0, %v8903
        %v8905 = vpop.f32.mrb[0].mxu0
        %v8906 = vpop.f32.mrb[0].mxu0
        %v8907 = vadd.f32 0.0, %v8906
        %v8908 = vpop.f32.mrb[0].mxu0
        %8909 = vdwg.mxu0
        %8910 = vmatprep.subr.bf16.mxu0 0
        %8911 = vmatpush1.bf16.msra.mxu0 %v8741
        %8912 = vmatprep.subr.bf16.mxu0 0
        %8913 = vmatpush1.bf16.msra.mxu0 %v8742
        %8914 = vmatprep.subr.bf16.mxu0 0
        %8915 = vmatpush1.bf16.msra.mxu0 %v8743
        %8916 = vmatprep.subr.bf16.mxu0 0
        %8917 = vmatpush1.bf16.msra.mxu0 %v8744
        %8918 = vmatprep.subr.bf16.mxu0 0
        %8919 = vmatpush1.bf16.msra.mxu0 %v8745
        %8920 = vmatprep.subr.bf16.mxu0 0
        %8921 = vmatpush1.bf16.msra.mxu0 %v8746
        %8922 = vmatprep.subr.bf16.mxu0 0
        %8923 = vmatpush1.bf16.msra.mxu0 %v8747
        %8924 = vmatprep.subr.bf16.mxu0 0
        %8925 = vmatpush1.bf16.msra.mxu0 %v8748
        %8926 = vmatprep.subr.bf16.mxu0 0
        %8927 = vmatpush1.bf16.msra.mxu0 %v8749
        %8928 = vmatprep.subr.bf16.mxu0 0
        %8929 = vmatpush1.bf16.msra.mxu0 %v8750
        %8930 = vmatprep.subr.bf16.mxu0 0
        %8931 = vmatpush1.bf16.msra.mxu0 %v8751
        %8932 = vmatprep.subr.bf16.mxu0 0
        %8933 = vmatpush1.bf16.msra.mxu0 %v8752
        %8934 = vmatprep.subr.bf16.mxu0 0
        %8935 = vmatpush1.bf16.msra.mxu0 %v8753
        %8936 = vmatprep.subr.bf16.mxu0 0
        %8937 = vmatpush1.bf16.msra.mxu0 %v8754
        %8938 = vmatprep.subr.bf16.mxu0 0
        %8939 = vmatpush1.bf16.msra.mxu0 %v8755
        %8940 = vmatprep.subr.bf16.mxu0 0
        %8941 = vmatpush1.bf16.msra.mxu0 %v8756
        %8942 = vmatprep.mubr.bf16.mxu0 %v8287
        %8943 = vmatmul.mubr.bf16.gmra.mrb[0].mxu0 %v8286
        %v8944 = vpop.f32.mrb[0].mxu0
        %v8945 = vadd.f32 %v8904, %v8944
        %v8946 = vpop.f32.mrb[0].mxu0
        %v8947 = vpop.f32.mrb[0].mxu0
        %v8948 = vadd.f32 %v8907, %v8947
        %v8949 = vpop.f32.mrb[0].mxu0
        %8950 = vdwg.mxu0
        %8951 = vmatprep.subr.bf16.mxu0 0
        %8952 = vmatpush1.bf16.msra.mxu0 %v8757
        %8953 = vmatprep.subr.bf16.mxu0 0
        %8954 = vmatpush1.bf16.msra.mxu0 %v8758
        %8955 = vmatprep.subr.bf16.mxu0 0
        %8956 = vmatpush1.bf16.msra.mxu0 %v8759
        %8957 = vmatprep.subr.bf16.mxu0 0
        %8958 = vmatpush1.bf16.msra.mxu0 %v8760
        %8959 = vmatprep.subr.bf16.mxu0 0
        %8960 = vmatpush1.bf16.msra.mxu0 %v8761
        %8961 = vmatprep.subr.bf16.mxu0 0
        %8962 = vmatpush1.bf16.msra.mxu0 %v8762
        %8963 = vmatprep.subr.bf16.mxu0 0
        %8964 = vmatpush1.bf16.msra.mxu0 %v8763
        %8965 = vmatprep.subr.bf16.mxu0 0
        %8966 = vmatpush1.bf16.msra.mxu0 %v8764
        %8967 = vmatprep.subr.bf16.mxu0 0
        %8968 = vmatpush1.bf16.msra.mxu0 %v8765
        %8969 = vmatprep.subr.bf16.mxu0 0
        %8970 = vmatpush1.bf16.msra.mxu0 %v8766
        %8971 = vmatprep.subr.bf16.mxu0 0
        %8972 = vmatpush1.bf16.msra.mxu0 %v8767
        %8973 = vmatprep.subr.bf16.mxu0 0
        %8974 = vmatpush1.bf16.msra.mxu0 %v8768
        %8975 = vmatprep.subr.bf16.mxu0 0
        %8976 = vmatpush1.bf16.msra.mxu0 %v8769
        %8977 = vmatprep.subr.bf16.mxu0 0
        %8978 = vmatpush1.bf16.msra.mxu0 %v8770
        %8979 = vmatprep.subr.bf16.mxu0 0
        %8980 = vmatpush1.bf16.msra.mxu0 %v8771
        %8981 = vmatprep.subr.bf16.mxu0 0
        %8982 = vmatpush1.bf16.msra.mxu0 %v8772
        %8983 = vmatprep.mubr.bf16.mxu0 %v8289
        %8984 = vmatmul.mubr.bf16.gmra.mrb[0].mxu0 %v8288
        %v8985 = vpop.f32.mrb[0].mxu0
        %v8986 = vadd.f32 %v8945, %v8985
        %v8987 = vpop.f32.mrb[0].mxu0
        %v8988 = vpop.f32.mrb[0].mxu0
        %v8989 = vadd.f32 %v8948, %v8988
        %v8990 = vpop.f32.mrb[0].mxu0
        %8991 = vdwg.mxu0
        %8992 = vmatprep.subr.bf16.mxu0 0
        %8993 = vmatpush1.bf16.msra.mxu0 %v8773
        %8994 = vmatprep.subr.bf16.mxu0 0
        %8995 = vmatpush1.bf16.msra.mxu0 %v8774
        %8996 = vmatprep.subr.bf16.mxu0 0
        %8997 = vmatpush1.bf16.msra.mxu0 %v8775
        %8998 = vmatprep.subr.bf16.mxu0 0
        %8999 = vmatpush1.bf16.msra.mxu0 %v8776
        %9000 = vmatprep.subr.bf16.mxu0 0
        %9001 = vmatpush1.bf16.msra.mxu0 %v8777
        %9002 = vmatprep.subr.bf16.mxu0 0
        %9003 = vmatpush1.bf16.msra.mxu0 %v8778
        %9004 = vmatprep.subr.bf16.mxu0 0
        %9005 = vmatpush1.bf16.msra.mxu0 %v8779
        %9006 = vmatprep.subr.bf16.mxu0 0
        %9007 = vmatpush1.bf16.msra.mxu0 %v8780
        %9008 = vmatprep.subr.bf16.mxu0 0
        %9009 = vmatpush1.bf16.msra.mxu0 %v8781
        %9010 = vmatprep.subr.bf16.mxu0 0
        %9011 = vmatpush1.bf16.msra.mxu0 %v8782
        %9012 = vmatprep.subr.bf16.mxu0 0
        %9013 = vmatpush1.bf16.msra.mxu0 %v8783
        %9014 = vmatprep.subr.bf16.mxu0 0
        %9015 = vmatpush1.bf16.msra.mxu0 %v8784
        %9016 = vmatprep.subr.bf16.mxu0 0
        %9017 = vmatpush1.bf16.msra.mxu0 %v8785
        %9018 = vmatprep.subr.bf16.mxu0 0
        %9019 = vmatpush1.bf16.msra.mxu0 %v8786
        %9020 = vmatprep.subr.bf16.mxu0 0
        %9021 = vmatpush1.bf16.msra.mxu0 %v8787
        %9022 = vmatprep.subr.bf16.mxu0 0
        %9023 = vmatpush1.bf16.msra.mxu0 %v8788
        %9024 = vmatprep.mubr.bf16.mxu0 %v8291
        %9025 = vmatmul.mubr.bf16.gmra.mrb[0].mxu0 %v8290
        %v9026 = vpop.f32.mrb[0].mxu0
        %v9027 = vadd.f32 %v8986, %v9026
        %v9028 = vpop.f32.mrb[0].mxu0
        %v9029 = vpop.f32.mrb[0].mxu0
        %v9030 = vadd.f32 %v8989, %v9029
        %v9031 = vpop.f32.mrb[0].mxu0
        %9032 = vdwg.mxu0
        %9033 = vmatprep.subr.bf16.mxu0 0
        %9034 = vmatpush1.bf16.msra.mxu0 %v8789
        %9035 = vmatprep.subr.bf16.mxu0 0
        %9036 = vmatpush1.bf16.msra.mxu0 %v8790
        %9037 = vmatprep.subr.bf16.mxu0 0
        %9038 = vmatpush1.bf16.msra.mxu0 %v8791
        %9039 = vmatprep.subr.bf16.mxu0 0
        %9040 = vmatpush1.bf16.msra.mxu0 %v8792
        %9041 = vmatprep.subr.bf16.mxu0 0
        %9042 = vmatpush1.bf16.msra.mxu0 %v8793
        %9043 = vmatprep.subr.bf16.mxu0 0
        %9044 = vmatpush1.bf16.msra.mxu0 %v8794
        %9045 = vmatprep.subr.bf16.mxu0 0
        %9046 = vmatpush1.bf16.msra.mxu0 %v8795
        %9047 = vmatprep.subr.bf16.mxu0 0
        %9048 = vmatpush1.bf16.msra.mxu0 %v8796
        %9049 = vmatprep.subr.bf16.mxu0 0
        %9050 = vmatpush1.bf16.msra.mxu0 0
        %9051 = vmatprep.subr.bf16.mxu0 0
        %9052 = vmatpush1.bf16.msra.mxu0 0
        %9053 = vmatprep.subr.bf16.mxu0 0
        %9054 = vmatpush1.bf16.msra.mxu0 0
        %9055 = vmatprep.subr.bf16.mxu0 0
        %9056 = vmatpush1.bf16.msra.mxu0 0
        %9057 = vmatprep.subr.bf16.mxu0 0
        %9058 = vmatpush1.bf16.msra.mxu0 0
        %9059 = vmatprep.subr.bf16.mxu0 0
        %9060 = vmatpush1.bf16.msra.mxu0 0
        %9061 = vmatprep.subr.bf16.mxu0 0
        %9062 = vmatpush1.bf16.msra.mxu0 0
        %9063 = vmatprep.subr.bf16.mxu0 0
        %9064 = vmatpush1.bf16.msra.mxu0 0
        %9065 = vmatprep.mubr.bf16.mxu0 0
        %9066 = vmatmul.mubr.bf16.gmra.mrb[0].mxu0 %v8292
        %v9067 = vpop.f32.mrb[0].mxu0
        %v9068 = vadd.f32 %v9027, %v9067
        %v9069 = vpop.f32.mrb[0].mxu0
        %v9070 = vpop.f32.mrb[0].mxu0
        %v9071 = vadd.f32 %v9030, %v9070
        %v9072 = vpop.f32.mrb[0].mxu0
        %9073 = vdwg.mxu0
        %v9074 = vld [vmem:[%s17] sm:$0x1]
        %v9076 = vlaneseq
        %v9077 = vshrl.u32 %v9076, 7
        %v9078 = vsub.s32 0, %v9077
        %v9079 = vrot.slane %v9074, %v9078
        %v9081 = vmul.f32 %v9068, %v9079
        %v9082 = vmul.f32 %v9071, %v9079
        %v9083 = vld [vmem:[%s18] sm:$0x1]
        %v9085 = vlaneseq
        %v9086 = vshrl.u32 %v9085, 7
        %v9087 = vsub.s32 0, %v9086
        %v9088 = vrot.slane %v9083, %v9087
        %v9090 = vadd.f32 %v9081, %v9088
        %v9091 = vadd.f32 %v9082, %v9088
        %v9092 = vmax.f32 %v9090, 0.0
        %v9093 = vmax.f32 %v9091, 0.0
        %v9096 = vcombine.high %v9092, %v9092
        %v9097 = vcombine.high %v9093, %v9093
        %vm9100 = vcmask 1043456
        %v9101 = vsel %vm9100, %v9092, -inf
        %v9102 = vsel %vm9100, %v9096, -inf
        %v9103 = vmax.f32 %v9101, %v9102
        %v9104 = vsel %vm9100, %v9093, -inf
        %v9105 = vsel %vm9100, %v9097, -inf
        %v9106 = vmax.f32 %v9104, %v9105
        %v9110 = vunpack.c.l.s4 1983009808
        %v9111 = vunpack.c.0.s8 %v9110
        %v9112 = vlaneseq
        %v9113 = vshrl.u32 %v9112, 7
        %v9114 = vsub.s32 %v9111, %v9113
        %v9115 = vrot.slane %v9103, %v9114
        %v9116 = vcombine.high %v9115, %v9115
        %v9118 = vunpack.c.l.s4 1983009808
        %v9119 = vunpack.c.0.s8 %v9118
        %v9120 = vlaneseq
        %v9121 = vshrl.u32 %v9120, 7
        %v9122 = vsub.s32 %v9119, %v9121
        %v9123 = vrot.slane %v9106, %v9122
        %v9124 = vcombine.high %v9123, %v9123
        %vm9129 = vcmask 1041408
        %v9130 = vsel %vm9129, %v9115, -inf
        %v9131 = vrot.slane %v9130, 4
        %v9132 = vmax.f32 %v9130, %v9131
        %v9133 = vrot.slane %v9132, 2
        %v9134 = vmax.f32 %v9132, %v9133
        %v9135 = vrot.slane %v9134, 1
        %v9136 = vmax.f32 %v9134, %v9135
        %v9137 = vsel %vm9129, %v9116, -inf
        %v9138 = vrot.slane %v9137, 4
        %v9139 = vmax.f32 %v9137, %v9138
        %v9140 = vrot.slane %v9139, 2
        %v9141 = vmax.f32 %v9139, %v9140
        %v9142 = vrot.slane %v9141, 1
        %v9143 = vmax.f32 %v9141, %v9142
        %v9144 = vsel %vm9129, %v9123, -inf
        %v9145 = vrot.slane %v9144, 4
        %v9146 = vmax.f32 %v9144, %v9145
        %v9147 = vrot.slane %v9146, 2
        %v9148 = vmax.f32 %v9146, %v9147
        %v9149 = vrot.slane %v9148, 1
        %v9150 = vmax.f32 %v9148, %v9149
        %v9151 = vsel %vm9129, %v9124, -inf
        %v9152 = vrot.slane %v9151, 4
        %v9153 = vmax.f32 %v9151, %v9152
        %v9154 = vrot.slane %v9153, 2
        %v9155 = vmax.f32 %v9153, %v9154
        %v9156 = vrot.slane %v9155, 1
        %v9157 = vmax.f32 %v9155, %v9156
        %v9158 = vpack.c.bf16 %v9136, %v9136
        %v9159 = vpack.c.bf16 %v9143, %v9143
        %v9160 = vpack.c.bf16 %v9150, %v9150
        %v9161 = vpack.c.bf16 %v9157, %v9157
        %v9162 = vld [vmem:[%s19] sm:$0xff]
        %v9163 = vld [vmem:[%s19 + $0x8] sm:$0xff]
        %v9164 = vld [vmem:[%s19 + $0x10] sm:$0xff]
        %v9165 = vld [vmem:[%s19 + $0x18] sm:$0xff]
        %v9166 = vld [vmem:[%s19 + $0x20] sm:$0xff]
        %v9167 = vld [vmem:[%s19 + $0x28] sm:$0xff]
        %v9168 = vld [vmem:[%s19 + $0x30] sm:$0xff]
        %v9169 = vld [vmem:[%s19 + $0x38] sm:$0xff]
        %v9170 = vld [vmem:[%s19 + $0x40] sm:$0xff]
        %v9171 = vld [vmem:[%s19 + $0x48] sm:$0xff]
        %v9172 = vld [vmem:[%s19 + $0x50] sm:$0xff]
        %v9173 = vld [vmem:[%s19 + $0x58] sm:$0xff]
        %v9174 = vld [vmem:[%s19 + $0x60] sm:$0xff]
        %v9175 = vld [vmem:[%s19 + $0x68] sm:$0xff]
        %v9176 = vld [vmem:[%s19 + $0x70] sm:$0xff]
        %v9177 = vld [vmem:[%s19 + $0x78] sm:$0xff]
        %v9178 = vld [vmem:[%s19 + $0x80] sm:$0xff]
        %v9179 = vld [vmem:[%s19 + $0x88] sm:$0xff]
        %v9180 = vld [vmem:[%s19 + $0x90] sm:$0xff]
        %v9181 = vld [vmem:[%s19 + $0x98] sm:$0xff]
        %v9182 = vld [vmem:[%s19 + $0xa0] sm:$0xff]
        %v9183 = vld [vmem:[%s19 + $0xa8] sm:$0xff]
        %v9184 = vld [vmem:[%s19 + $0xb0] sm:$0xff]
        %v9185 = vld [vmem:[%s19 + $0xb8] sm:$0xff]
        %v9186 = vld [vmem:[%s19 + $0xc0] sm:$0xff]
        %v9187 = vld [vmem:[%s19 + $0xc8] sm:$0xff]
        %v9188 = vld [vmem:[%s19 + $0xd0] sm:$0xff]
        %v9189 = vld [vmem:[%s19 + $0xd8] sm:$0xff]
        %v9190 = vld [vmem:[%s19 + $0xe0] sm:$0xff]
        %v9191 = vld [vmem:[%s19 + $0xe8] sm:$0xff]
        %v9192 = vld [vmem:[%s19 + $0xf0] sm:$0xff]
        %v9193 = vld [vmem:[%s19 + $0xf8] sm:$0xff]
        %v9194 = vld [vmem:[%s19 + $0x100] sm:$0xff]
        %v9195 = vld [vmem:[%s19 + $0x108] sm:$0xff]
        %v9196 = vld [vmem:[%s19 + $0x110] sm:$0xff]
        %v9197 = vld [vmem:[%s19 + $0x118] sm:$0xff]
        %v9198 = vld [vmem:[%s19 + $0x120] sm:$0xff]
        %v9199 = vld [vmem:[%s19 + $0x128] sm:$0xff]
        %v9200 = vld [vmem:[%s19 + $0x130] sm:$0xff]
        %v9201 = vld [vmem:[%s19 + $0x138] sm:$0xff]
        %v9202 = vld [vmem:[%s19 + $0x140] sm:$0xff]
        %v9203 = vld [vmem:[%s19 + $0x148] sm:$0xff]
        %v9204 = vld [vmem:[%s19 + $0x150] sm:$0xff]
        %v9205 = vld [vmem:[%s19 + $0x158] sm:$0xff]
        %v9206 = vld [vmem:[%s19 + $0x160] sm:$0xff]
        %v9207 = vld [vmem:[%s19 + $0x168] sm:$0xff]
        %v9208 = vld [vmem:[%s19 + $0x170] sm:$0xff]
        %v9209 = vld [vmem:[%s19 + $0x178] sm:$0xff]
        %v9210 = vld [vmem:[%s19 + $0x180] sm:$0xff]
        %v9211 = vld [vmem:[%s19 + $0x188] sm:$0xff]
        %v9212 = vld [vmem:[%s19 + $0x190] sm:$0xff]
        %v9213 = vld [vmem:[%s19 + $0x198] sm:$0xff]
        %v9214 = vld [vmem:[%s19 + $0x1a0] sm:$0xff]
        %v9215 = vld [vmem:[%s19 + $0x1a8] sm:$0xff]
        %v9216 = vld [vmem:[%s19 + $0x1b0] sm:$0xff]
        %v9217 = vld [vmem:[%s19 + $0x1b8] sm:$0xff]
        %v9218 = vld [vmem:[%s19 + $0x1c0] sm:$0xff]
        %v9219 = vld [vmem:[%s19 + $0x1c8] sm:$0xff]
        %v9220 = vld [vmem:[%s19 + $0x1d0] sm:$0xff]
        %v9221 = vld [vmem:[%s19 + $0x1d8] sm:$0xff]
        %v9222 = vld [vmem:[%s19 + $0x1e0] sm:$0xff]
        %v9223 = vld [vmem:[%s19 + $0x1e8] sm:$0xff]
        %v9224 = vld [vmem:[%s19 + $0x1f0] sm:$0xff]
        %v9225 = vld [vmem:[%s19 + $0x1f8] sm:$0xff]
        %v9226 = vld [vmem:[%s19 + $0x200] sm:$0xff]
        %v9227 = vld [vmem:[%s19 + $0x208] sm:$0xff]
        %v9228 = vld [vmem:[%s19 + $0x210] sm:$0xff]
        %v9229 = vld [vmem:[%s19 + $0x218] sm:$0xff]
        %v9230 = vld [vmem:[%s19 + $0x220] sm:$0xff]
        %v9231 = vld [vmem:[%s19 + $0x228] sm:$0xff]
        %v9232 = vld [vmem:[%s19 + $0x230] sm:$0xff]
        %v9233 = vld [vmem:[%s19 + $0x238] sm:$0xff]
        %v9234 = vld [vmem:[%s19 + $0x240] sm:$0xff]
        %v9235 = vld [vmem:[%s19 + $0x248] sm:$0xff]
        %v9236 = vld [vmem:[%s19 + $0x250] sm:$0xff]
        %v9237 = vld [vmem:[%s19 + $0x258] sm:$0xff]
        %v9238 = vld [vmem:[%s19 + $0x260] sm:$0xff]
        %v9239 = vld [vmem:[%s19 + $0x268] sm:$0xff]
        %v9240 = vld [vmem:[%s19 + $0x270] sm:$0xff]
        %v9241 = vld [vmem:[%s19 + $0x278] sm:$0xff]
        %v9242 = vld [vmem:[%s19 + $0x280] sm:$0xff]
        %v9243 = vld [vmem:[%s19 + $0x288] sm:$0xff]
        %v9244 = vld [vmem:[%s19 + $0x290] sm:$0xff]
        %v9245 = vld [vmem:[%s19 + $0x298] sm:$0xff]
        %v9246 = vld [vmem:[%s19 + $0x2a0] sm:$0xff]
        %v9247 = vld [vmem:[%s19 + $0x2a8] sm:$0xff]
        %v9248 = vld [vmem:[%s19 + $0x2b0] sm:$0xff]
        %v9249 = vld [vmem:[%s19 + $0x2b8] sm:$0xff]
        %v9250 = vld [vmem:[%s19 + $0x2c0] sm:$0xff]
        %v9251 = vld [vmem:[%s19 + $0x2c8] sm:$0xff]
        %v9252 = vld [vmem:[%s19 + $0x2d0] sm:$0xff]
        %v9253 = vld [vmem:[%s19 + $0x2d8] sm:$0xff]
        %v9254 = vld [vmem:[%s19 + $0x2e0] sm:$0xff]
        %v9255 = vld [vmem:[%s19 + $0x2e8] sm:$0xff]
        %v9256 = vld [vmem:[%s19 + $0x2f0] sm:$0xff]
        %v9257 = vld [vmem:[%s19 + $0x2f8] sm:$0xff]
        %v9258 = vld [vmem:[%s19 + $0x300] sm:$0xff]
        %v9259 = vld [vmem:[%s19 + $0x308] sm:$0xff]
        %v9260 = vld [vmem:[%s19 + $0x310] sm:$0xff]
        %v9261 = vld [vmem:[%s19 + $0x318] sm:$0xff]
        %v9262 = vld [vmem:[%s19 + $0x320] sm:$0xff]
        %v9263 = vld [vmem:[%s19 + $0x328] sm:$0xff]
        %v9264 = vld [vmem:[%s19 + $0x330] sm:$0xff]
        %v9265 = vld [vmem:[%s19 + $0x338] sm:$0xff]
        %v9266 = vld [vmem:[%s19 + $0x340] sm:$0xff]
        %v9267 = vld [vmem:[%s19 + $0x348] sm:$0xff]
        %v9268 = vld [vmem:[%s19 + $0x350] sm:$0xff]
        %v9269 = vld [vmem:[%s19 + $0x358] sm:$0xff]
        %v9270 = vld [vmem:[%s19 + $0x360] sm:$0xff]
        %v9271 = vld [vmem:[%s19 + $0x368] sm:$0xff]
        %v9272 = vld [vmem:[%s19 + $0x370] sm:$0xff]
        %v9273 = vld [vmem:[%s19 + $0x378] sm:$0xff]
        %v9274 = vld [vmem:[%s19 + $0x380] sm:$0xff]
        %v9275 = vld [vmem:[%s19 + $0x388] sm:$0xff]
        %v9276 = vld [vmem:[%s19 + $0x390] sm:$0xff]
        %v9277 = vld [vmem:[%s19 + $0x398] sm:$0xff]
        %v9278 = vld [vmem:[%s19 + $0x3a0] sm:$0xff]
        %v9279 = vld [vmem:[%s19 + $0x3a8] sm:$0xff]
        %v9280 = vld [vmem:[%s19 + $0x3b0] sm:$0xff]
        %v9281 = vld [vmem:[%s19 + $0x3b8] sm:$0xff]
        %v9282 = vld [vmem:[%s19 + $0x3c0] sm:$0xff]
        %v9283 = vld [vmem:[%s19 + $0x3c8] sm:$0xff]
        %v9284 = vld [vmem:[%s19 + $0x3d0] sm:$0xff]
        %v9285 = vld [vmem:[%s19 + $0x3d8] sm:$0xff]
        %v9286 = vld [vmem:[%s19 + $0x3e0] sm:$0xff]
        %v9287 = vld [vmem:[%s19 + $0x3e8] sm:$0xff]
        %v9288 = vld [vmem:[%s19 + $0x3f0] sm:$0xff]
        %v9289 = vld [vmem:[%s19 + $0x3f8] sm:$0xff]
        %v9418 = vunpack.c.l.b16 %v9162
        %v9419 = vunpack.c.h.b16 %v9162
        %v9420 = vunpack.c.l.b16 %v9163
        %v9421 = vunpack.c.h.b16 %v9163
        %v9422 = vunpack.c.l.b16 %v9164
        %v9423 = vunpack.c.h.b16 %v9164
        %v9424 = vunpack.c.l.b16 %v9165
        %v9425 = vunpack.c.h.b16 %v9165
        %v9426 = vunpack.c.l.b16 %v9166
        %v9427 = vunpack.c.h.b16 %v9166
        %v9428 = vunpack.c.l.b16 %v9167
        %v9429 = vunpack.c.h.b16 %v9167
        %v9430 = vunpack.c.l.b16 %v9168
        %v9431 = vunpack.c.h.b16 %v9168
        %v9432 = vunpack.c.l.b16 %v9169
        %v9433 = vunpack.c.h.b16 %v9169
        %v9434 = vunpack.c.l.b16 %v9170
        %v9435 = vunpack.c.h.b16 %v9170
        %v9436 = vunpack.c.l.b16 %v9171
        %v9437 = vunpack.c.h.b16 %v9171
        %v9438 = vunpack.c.l.b16 %v9172
        %v9439 = vunpack.c.h.b16 %v9172
        %v9440 = vunpack.c.l.b16 %v9173
        %v9441 = vunpack.c.h.b16 %v9173
        %v9442 = vunpack.c.l.b16 %v9174
        %v9443 = vunpack.c.h.b16 %v9174
        %v9444 = vunpack.c.l.b16 %v9175
        %v9445 = vunpack.c.h.b16 %v9175
        %v9446 = vunpack.c.l.b16 %v9176
        %v9447 = vunpack.c.h.b16 %v9176
        %v9448 = vunpack.c.l.b16 %v9177
        %v9449 = vunpack.c.h.b16 %v9177
        %v9450 = vunpack.c.l.b16 %v9178
        %v9451 = vunpack.c.h.b16 %v9178
        %v9452 = vunpack.c.l.b16 %v9179
        %v9453 = vunpack.c.h.b16 %v9179
        %v9454 = vunpack.c.l.b16 %v9180
        %v9455 = vunpack.c.h.b16 %v9180
        %v9456 = vunpack.c.l.b16 %v9181
        %v9457 = vunpack.c.h.b16 %v9181
        %v9458 = vunpack.c.l.b16 %v9182
        %v9459 = vunpack.c.h.b16 %v9182
        %v9460 = vunpack.c.l.b16 %v9183
        %v9461 = vunpack.c.h.b16 %v9183
        %v9462 = vunpack.c.l.b16 %v9184
        %v9463 = vunpack.c.h.b16 %v9184
        %v9464 = vunpack.c.l.b16 %v9185
        %v9465 = vunpack.c.h.b16 %v9185
        %v9466 = vunpack.c.l.b16 %v9186
        %v9467 = vunpack.c.h.b16 %v9186
        %v9468 = vunpack.c.l.b16 %v9187
        %v9469 = vunpack.c.h.b16 %v9187
        %v9470 = vunpack.c.l.b16 %v9188
        %v9471 = vunpack.c.h.b16 %v9188
        %v9472 = vunpack.c.l.b16 %v9189
        %v9473 = vunpack.c.h.b16 %v9189
        %v9474 = vunpack.c.l.b16 %v9190
        %v9475 = vunpack.c.h.b16 %v9190
        %v9476 = vunpack.c.l.b16 %v9191
        %v9477 = vunpack.c.h.b16 %v9191
        %v9478 = vunpack.c.l.b16 %v9192
        %v9479 = vunpack.c.h.b16 %v9192
        %v9480 = vunpack.c.l.b16 %v9193
        %v9481 = vunpack.c.h.b16 %v9193
        %v9482 = vunpack.c.l.b16 %v9194
        %v9483 = vunpack.c.h.b16 %v9194
        %v9484 = vunpack.c.l.b16 %v9195
        %v9485 = vunpack.c.h.b16 %v9195
        %v9486 = vunpack.c.l.b16 %v9196
        %v9487 = vunpack.c.h.b16 %v9196
        %v9488 = vunpack.c.l.b16 %v9197
        %v9489 = vunpack.c.h.b16 %v9197
        %v9490 = vunpack.c.l.b16 %v9198
        %v9491 = vunpack.c.h.b16 %v9198
        %v9492 = vunpack.c.l.b16 %v9199
        %v9493 = vunpack.c.h.b16 %v9199
        %v9494 = vunpack.c.l.b16 %v9200
        %v9495 = vunpack.c.h.b16 %v9200
        %v9496 = vunpack.c.l.b16 %v9201
        %v9497 = vunpack.c.h.b16 %v9201
        %v9498 = vunpack.c.l.b16 %v9202
        %v9499 = vunpack.c.h.b16 %v9202
        %v9500 = vunpack.c.l.b16 %v9203
        %v9501 = vunpack.c.h.b16 %v9203
        %v9502 = vunpack.c.l.b16 %v9204
        %v9503 = vunpack.c.h.b16 %v9204
        %v9504 = vunpack.c.l.b16 %v9205
        %v9505 = vunpack.c.h.b16 %v9205
        %v9506 = vunpack.c.l.b16 %v9206
        %v9507 = vunpack.c.h.b16 %v9206
        %v9508 = vunpack.c.l.b16 %v9207
        %v9509 = vunpack.c.h.b16 %v9207
        %v9510 = vunpack.c.l.b16 %v9208
        %v9511 = vunpack.c.h.b16 %v9208
        %v9512 = vunpack.c.l.b16 %v9209
        %v9513 = vunpack.c.h.b16 %v9209
        %v9514 = vunpack.c.l.b16 %v9210
        %v9515 = vunpack.c.h.b16 %v9210
        %v9516 = vunpack.c.l.b16 %v9211
        %v9517 = vunpack.c.h.b16 %v9211
        %v9518 = vunpack.c.l.b16 %v9212
        %v9519 = vunpack.c.h.b16 %v9212
        %v9520 = vunpack.c.l.b16 %v9213
        %v9521 = vunpack.c.h.b16 %v9213
        %v9522 = vunpack.c.l.b16 %v9214
        %v9523 = vunpack.c.h.b16 %v9214
        %v9524 = vunpack.c.l.b16 %v9215
        %v9525 = vunpack.c.h.b16 %v9215
        %v9526 = vunpack.c.l.b16 %v9216
        %v9527 = vunpack.c.h.b16 %v9216
        %v9528 = vunpack.c.l.b16 %v9217
        %v9529 = vunpack.c.h.b16 %v9217
        %v9530 = vunpack.c.l.b16 %v9218
        %v9531 = vunpack.c.h.b16 %v9218
        %v9532 = vunpack.c.l.b16 %v9219
        %v9533 = vunpack.c.h.b16 %v9219
        %v9534 = vunpack.c.l.b16 %v9220
        %v9535 = vunpack.c.h.b16 %v9220
        %v9536 = vunpack.c.l.b16 %v9221
        %v9537 = vunpack.c.h.b16 %v9221
        %v9538 = vunpack.c.l.b16 %v9222
        %v9539 = vunpack.c.h.b16 %v9222
        %v9540 = vunpack.c.l.b16 %v9223
        %v9541 = vunpack.c.h.b16 %v9223
        %v9542 = vunpack.c.l.b16 %v9224
        %v9543 = vunpack.c.h.b16 %v9224
        %v9544 = vunpack.c.l.b16 %v9225
        %v9545 = vunpack.c.h.b16 %v9225
        %v9546 = vunpack.c.l.b16 %v9226
        %v9547 = vunpack.c.h.b16 %v9226
        %v9548 = vunpack.c.l.b16 %v9227
        %v9549 = vunpack.c.h.b16 %v9227
        %v9550 = vunpack.c.l.b16 %v9228
        %v9551 = vunpack.c.h.b16 %v9228
        %v9552 = vunpack.c.l.b16 %v9229
        %v9553 = vunpack.c.h.b16 %v9229
        %v9554 = vunpack.c.l.b16 %v9230
        %v9555 = vunpack.c.h.b16 %v9230
        %v9556 = vunpack.c.l.b16 %v9231
        %v9557 = vunpack.c.h.b16 %v9231
        %v9558 = vunpack.c.l.b16 %v9232
        %v9559 = vunpack.c.h.b16 %v9232
        %v9560 = vunpack.c.l.b16 %v9233
        %v9561 = vunpack.c.h.b16 %v9233
        %v9562 = vunpack.c.l.b16 %v9234
        %v9563 = vunpack.c.h.b16 %v9234
        %v9564 = vunpack.c.l.b16 %v9235
        %v9565 = vunpack.c.h.b16 %v9235
        %v9566 = vunpack.c.l.b16 %v9236
        %v9567 = vunpack.c.h.b16 %v9236
        %v9568 = vunpack.c.l.b16 %v9237
        %v9569 = vunpack.c.h.b16 %v9237
        %v9570 = vunpack.c.l.b16 %v9238
        %v9571 = vunpack.c.h.b16 %v9238
        %v9572 = vunpack.c.l.b16 %v9239
        %v9573 = vunpack.c.h.b16 %v9239
        %v9574 = vunpack.c.l.b16 %v9240
        %v9575 = vunpack.c.h.b16 %v9240
        %v9576 = vunpack.c.l.b16 %v9241
        %v9577 = vunpack.c.h.b16 %v9241
        %v9578 = vunpack.c.l.b16 %v9242
        %v9579 = vunpack.c.h.b16 %v9242
        %v9580 = vunpack.c.l.b16 %v9243
        %v9581 = vunpack.c.h.b16 %v9243
        %v9582 = vunpack.c.l.b16 %v9244
        %v9583 = vunpack.c.h.b16 %v9244
        %v9584 = vunpack.c.l.b16 %v9245
        %v9585 = vunpack.c.h.b16 %v9245
        %v9586 = vunpack.c.l.b16 %v9246
        %v9587 = vunpack.c.h.b16 %v9246
        %v9588 = vunpack.c.l.b16 %v9247
        %v9589 = vunpack.c.h.b16 %v9247
        %v9590 = vunpack.c.l.b16 %v9248
        %v9591 = vunpack.c.h.b16 %v9248
        %v9592 = vunpack.c.l.b16 %v9249
        %v9593 = vunpack.c.h.b16 %v9249
        %v9594 = vunpack.c.l.b16 %v9250
        %v9595 = vunpack.c.h.b16 %v9250
        %v9596 = vunpack.c.l.b16 %v9251
        %v9597 = vunpack.c.h.b16 %v9251
        %v9598 = vunpack.c.l.b16 %v9252
        %v9599 = vunpack.c.h.b16 %v9252
        %v9600 = vunpack.c.l.b16 %v9253
        %v9601 = vunpack.c.h.b16 %v9253
        %v9602 = vunpack.c.l.b16 %v9254
        %v9603 = vunpack.c.h.b16 %v9254
        %v9604 = vunpack.c.l.b16 %v9255
        %v9605 = vunpack.c.h.b16 %v9255
        %v9606 = vunpack.c.l.b16 %v9256
        %v9607 = vunpack.c.h.b16 %v9256
        %v9608 = vunpack.c.l.b16 %v9257
        %v9609 = vunpack.c.h.b16 %v9257
        %v9610 = vunpack.c.l.b16 %v9258
        %v9611 = vunpack.c.h.b16 %v9258
        %v9612 = vunpack.c.l.b16 %v9259
        %v9613 = vunpack.c.h.b16 %v9259
        %v9614 = vunpack.c.l.b16 %v9260
        %v9615 = vunpack.c.h.b16 %v9260
        %v9616 = vunpack.c.l.b16 %v9261
        %v9617 = vunpack.c.h.b16 %v9261
        %v9618 = vunpack.c.l.b16 %v9262
        %v9619 = vunpack.c.h.b16 %v9262
        %v9620 = vunpack.c.l.b16 %v9263
        %v9621 = vunpack.c.h.b16 %v9263
        %v9622 = vunpack.c.l.b16 %v9264
        %v9623 = vunpack.c.h.b16 %v9264
        %v9624 = vunpack.c.l.b16 %v9265
        %v9625 = vunpack.c.h.b16 %v9265
        %v9626 = vunpack.c.l.b16 %v9266
        %v9627 = vunpack.c.h.b16 %v9266
        %v9628 = vunpack.c.l.b16 %v9267
        %v9629 = vunpack.c.h.b16 %v9267
        %v9630 = vunpack.c.l.b16 %v9268
        %v9631 = vunpack.c.h.b16 %v9268
        %v9632 = vunpack.c.l.b16 %v9269
        %v9633 = vunpack.c.h.b16 %v9269
        %v9634 = vunpack.c.l.b16 %v9270
        %v9635 = vunpack.c.h.b16 %v9270
        %v9636 = vunpack.c.l.b16 %v9271
        %v9637 = vunpack.c.h.b16 %v9271
        %v9638 = vunpack.c.l.b16 %v9272
        %v9639 = vunpack.c.h.b16 %v9272
        %v9640 = vunpack.c.l.b16 %v9273
        %v9641 = vunpack.c.h.b16 %v9273
        %v9642 = vunpack.c.l.b16 %v9274
        %v9643 = vunpack.c.h.b16 %v9274
        %v9644 = vunpack.c.l.b16 %v9275
        %v9645 = vunpack.c.h.b16 %v9275
        %v9646 = vunpack.c.l.b16 %v9276
        %v9647 = vunpack.c.h.b16 %v9276
        %v9648 = vunpack.c.l.b16 %v9277
        %v9649 = vunpack.c.h.b16 %v9277
        %v9650 = vunpack.c.l.b16 %v9278
        %v9651 = vunpack.c.h.b16 %v9278
        %v9652 = vunpack.c.l.b16 %v9279
        %v9653 = vunpack.c.h.b16 %v9279
        %v9654 = vunpack.c.l.b16 %v9280
        %v9655 = vunpack.c.h.b16 %v9280
        %v9656 = vunpack.c.l.b16 %v9281
        %v9657 = vunpack.c.h.b16 %v9281
        %v9658 = vunpack.c.l.b16 %v9282
        %v9659 = vunpack.c.h.b16 %v9282
        %v9660 = vunpack.c.l.b16 %v9283
        %v9661 = vunpack.c.h.b16 %v9283
        %v9662 = vunpack.c.l.b16 %v9284
        %v9663 = vunpack.c.h.b16 %v9284
        %v9664 = vunpack.c.l.b16 %v9285
        %v9665 = vunpack.c.h.b16 %v9285
        %v9666 = vunpack.c.l.b16 %v9286
        %v9667 = vunpack.c.h.b16 %v9286
        %v9668 = vunpack.c.l.b16 %v9287
        %v9669 = vunpack.c.h.b16 %v9287
        %v9670 = vunpack.c.l.b16 %v9288
        %v9671 = vunpack.c.h.b16 %v9288
        %v9672 = vunpack.c.l.b16 %v9289
        %v9673 = vunpack.c.h.b16 %v9289
        %v9674 = vpack.c.b16 %v9422, %v9418
        %v9675 = vpack.c.b16 %v9423, %v9419
        %v9676 = vpack.c.b16 %v9424, %v9420
        %v9677 = vpack.c.b16 %v9425, %v9421
        %v9678 = vpack.c.b16 %v9430, %v9426
        %v9679 = vpack.c.b16 %v9431, %v9427
        %v9680 = vpack.c.b16 %v9432, %v9428
        %v9681 = vpack.c.b16 %v9433, %v9429
        %v9682 = vpack.c.b16 %v9438, %v9434
        %v9683 = vpack.c.b16 %v9439, %v9435
        %v9684 = vpack.c.b16 %v9440, %v9436
        %v9685 = vpack.c.b16 %v9441, %v9437
        %v9686 = vpack.c.b16 %v9446, %v9442
        %v9687 = vpack.c.b16 %v9447, %v9443
        %v9688 = vpack.c.b16 %v9448, %v9444
        %v9689 = vpack.c.b16 %v9449, %v9445
        %v9690 = vpack.c.b16 %v9454, %v9450
        %v9691 = vpack.c.b16 %v9455, %v9451
        %v9692 = vpack.c.b16 %v9456, %v9452
        %v9693 = vpack.c.b16 %v9457, %v9453
        %v9694 = vpack.c.b16 %v9462, %v9458
        %v9695 = vpack.c.b16 %v9463, %v9459
        %v9696 = vpack.c.b16 %v9464, %v9460
        %v9697 = vpack.c.b16 %v9465, %v9461
        %v9698 = vpack.c.b16 %v9470, %v9466
        %v9699 = vpack.c.b16 %v9471, %v9467
        %v9700 = vpack.c.b16 %v9472, %v9468
        %v9701 = vpack.c.b16 %v9473, %v9469
        %v9702 = vpack.c.b16 %v9478, %v9474
        %v9703 = vpack.c.b16 %v9479, %v9475
        %v9704 = vpack.c.b16 %v9480, %v9476
        %v9705 = vpack.c.b16 %v9481, %v9477
        %v9706 = vpack.c.b16 %v9486, %v9482
        %v9707 = vpack.c.b16 %v9487, %v9483
        %v9708 = vpack.c.b16 %v9488, %v9484
        %v9709 = vpack.c.b16 %v9489, %v9485
        %v9710 = vpack.c.b16 %v9494, %v9490
        %v9711 = vpack.c.b16 %v9495, %v9491
        %v9712 = vpack.c.b16 %v9496, %v9492
        %v9713 = vpack.c.b16 %v9497, %v9493
        %v9714 = vpack.c.b16 %v9502, %v9498
        %v9715 = vpack.c.b16 %v9503, %v9499
        %v9716 = vpack.c.b16 %v9504, %v9500
        %v9717 = vpack.c.b16 %v9505, %v9501
        %v9718 = vpack.c.b16 %v9510, %v9506
        %v9719 = vpack.c.b16 %v9511, %v9507
        %v9720 = vpack.c.b16 %v9512, %v9508
        %v9721 = vpack.c.b16 %v9513, %v9509
        %v9722 = vpack.c.b16 %v9518, %v9514
        %v9723 = vpack.c.b16 %v9519, %v9515
        %v9724 = vpack.c.b16 %v9520, %v9516
        %v9725 = vpack.c.b16 %v9521, %v9517
        %v9726 = vpack.c.b16 %v9526, %v9522
        %v9727 = vpack.c.b16 %v9527, %v9523
        %v9728 = vpack.c.b16 %v9528, %v9524
        %v9729 = vpack.c.b16 %v9529, %v9525
        %v9730 = vpack.c.b16 %v9534, %v9530
        %v9731 = vpack.c.b16 %v9535, %v9531
        %v9732 = vpack.c.b16 %v9536, %v9532
        %v9733 = vpack.c.b16 %v9537, %v9533
        %v9734 = vpack.c.b16 %v9542, %v9538
        %v9735 = vpack.c.b16 %v9543, %v9539
        %v9736 = vpack.c.b16 %v9544, %v9540
        %v9737 = vpack.c.b16 %v9545, %v9541
        %v9738 = vpack.c.b16 %v9550, %v9546
        %v9739 = vpack.c.b16 %v9551, %v9547
        %v9740 = vpack.c.b16 %v9552, %v9548
        %v9741 = vpack.c.b16 %v9553, %v9549
        %v9742 = vpack.c.b16 %v9558, %v9554
        %v9743 = vpack.c.b16 %v9559, %v9555
        %v9744 = vpack.c.b16 %v9560, %v9556
        %v9745 = vpack.c.b16 %v9561, %v9557
        %v9746 = vpack.c.b16 %v9566, %v9562
        %v9747 = vpack.c.b16 %v9567, %v9563
        %v9748 = vpack.c.b16 %v9568, %v9564
        %v9749 = vpack.c.b16 %v9569, %v9565
        %v9750 = vpack.c.b16 %v9574, %v9570
        %v9751 = vpack.c.b16 %v9575, %v9571
        %v9752 = vpack.c.b16 %v9576, %v9572
        %v9753 = vpack.c.b16 %v9577, %v9573
        %v9754 = vpack.c.b16 %v9582, %v9578
        %v9755 = vpack.c.b16 %v9583, %v9579
        %v9756 = vpack.c.b16 %v9584, %v9580
        %v9757 = vpack.c.b16 %v9585, %v9581
        %v9758 = vpack.c.b16 %v9590, %v9586
        %v9759 = vpack.c.b16 %v9591, %v9587
        %v9760 = vpack.c.b16 %v9592, %v9588
        %v9761 = vpack.c.b16 %v9593, %v9589
        %v9762 = vpack.c.b16 %v9598, %v9594
        %v9763 = vpack.c.b16 %v9599, %v9595
        %v9764 = vpack.c.b16 %v9600, %v9596
        %v9765 = vpack.c.b16 %v9601, %v9597
        %v9766 = vpack.c.b16 %v9606, %v9602
        %v9767 = vpack.c.b16 %v9607, %v9603
        %v9768 = vpack.c.b16 %v9608, %v9604
        %v9769 = vpack.c.b16 %v9609, %v9605
        %v9770 = vpack.c.b16 %v9614, %v9610
        %v9771 = vpack.c.b16 %v9615, %v9611
        %v9772 = vpack.c.b16 %v9616, %v9612
        %v9773 = vpack.c.b16 %v9617, %v9613
        %v9774 = vpack.c.b16 %v9622, %v9618
        %v9775 = vpack.c.b16 %v9623, %v9619
        %v9776 = vpack.c.b16 %v9624, %v9620
        %v9777 = vpack.c.b16 %v9625, %v9621
        %v9778 = vpack.c.b16 %v9630, %v9626
        %v9779 = vpack.c.b16 %v9631, %v9627
        %v9780 = vpack.c.b16 %v9632, %v9628
        %v9781 = vpack.c.b16 %v9633, %v9629
        %v9782 = vpack.c.b16 %v9638, %v9634
        %v9783 = vpack.c.b16 %v9639, %v9635
        %v9784 = vpack.c.b16 %v9640, %v9636
        %v9785 = vpack.c.b16 %v9641, %v9637
        %v9786 = vpack.c.b16 %v9646, %v9642
        %v9787 = vpack.c.b16 %v9647, %v9643
        %v9788 = vpack.c.b16 %v9648, %v9644
        %v9789 = vpack.c.b16 %v9649, %v9645
        %v9790 = vpack.c.b16 %v9654, %v9650
        %v9791 = vpack.c.b16 %v9655, %v9651
        %v9792 = vpack.c.b16 %v9656, %v9652
        %v9793 = vpack.c.b16 %v9657, %v9653
        %v9794 = vpack.c.b16 %v9662, %v9658
        %v9795 = vpack.c.b16 %v9663, %v9659
        %v9796 = vpack.c.b16 %v9664, %v9660
        %v9797 = vpack.c.b16 %v9665, %v9661
        %v9798 = vpack.c.b16 %v9670, %v9666
        %v9799 = vpack.c.b16 %v9671, %v9667
        %v9800 = vpack.c.b16 %v9672, %v9668
        %v9801 = vpack.c.b16 %v9673, %v9669
        %9930 = vmatprep.subr.bf16.mxu0 %v9675
        %9931 = vmatpush1.bf16.msra.mxu0 %v9674
        %9932 = vmatprep.subr.bf16.mxu0 %v9679
        %9933 = vmatpush1.bf16.msra.mxu0 %v9678
        %9934 = vmatprep.subr.bf16.mxu0 %v9683
        %9935 = vmatpush1.bf16.msra.mxu0 %v9682
        %9936 = vmatprep.subr.bf16.mxu0 %v9687
        %9937 = vmatpush1.bf16.msra.mxu0 %v9686
        %9938 = vmatprep.subr.bf16.mxu0 %v9691
        %9939 = vmatpush1.bf16.msra.mxu0 %v9690
        %9940 = vmatprep.subr.bf16.mxu0 %v9695
        %9941 = vmatpush1.bf16.msra.mxu0 %v9694
        %9942 = vmatprep.subr.bf16.mxu0 %v9699
        %9943 = vmatpush1.bf16.msra.mxu0 %v9698
        %9944 = vmatprep.subr.bf16.mxu0 %v9703
        %9945 = vmatpush1.bf16.msra.mxu0 %v9702
        %9946 = vmatprep.subr.bf16.mxu0 %v9707
        %9947 = vmatpush1.bf16.msra.mxu0 %v9706
        %9948 = vmatprep.subr.bf16.mxu0 %v9711
        %9949 = vmatpush1.bf16.msra.mxu0 %v9710
        %9950 = vmatprep.subr.bf16.mxu0 %v9715
        %9951 = vmatpush1.bf16.msra.mxu0 %v9714
        %9952 = vmatprep.subr.bf16.mxu0 %v9719
        %9953 = vmatpush1.bf16.msra.mxu0 %v9718
        %9954 = vmatprep.subr.bf16.mxu0 %v9723
        %9955 = vmatpush1.bf16.msra.mxu0 %v9722
        %9956 = vmatprep.subr.bf16.mxu0 %v9727
        %9957 = vmatpush1.bf16.msra.mxu0 %v9726
        %9958 = vmatprep.subr.bf16.mxu0 %v9731
        %9959 = vmatpush1.bf16.msra.mxu0 %v9730
        %9960 = vmatprep.subr.bf16.mxu0 %v9735
        %9961 = vmatpush1.bf16.msra.mxu0 %v9734
        %9962 = vmatprep.mubr.bf16.mxu0 %v9159
        %9963 = vmatmul.mubr.bf16.gmra.mrb[0].mxu0 %v9158
        %v9964 = vpop.f32.mrb[0].mxu0
        %v9965 = vadd.f32 0.0, %v9964
        %v9966 = vpop.f32.mrb[0].mxu0
        %v9967 = vadd.f32 0.0, %v9966
        %v9968 = vpop.f32.mrb[0].mxu0
        %v9969 = vpop.f32.mrb[0].mxu0
        %9970 = vdwg.mxu0
        %9971 = vmatprep.subr.bf16.mxu0 %v9739
        %9972 = vmatpush1.bf16.msra.mxu0 %v9738
        %9973 = vmatprep.subr.bf16.mxu0 %v9743
        %9974 = vmatpush1.bf16.msra.mxu0 %v9742
        %9975 = vmatprep.subr.bf16.mxu0 %v9747
        %9976 = vmatpush1.bf16.msra.mxu0 %v9746
        %9977 = vmatprep.subr.bf16.mxu0 %v9751
        %9978 = vmatpush1.bf16.msra.mxu0 %v9750
        %9979 = vmatprep.subr.bf16.mxu0 %v9755
        %9980 = vmatpush1.bf16.msra.mxu0 %v9754
        %9981 = vmatprep.subr.bf16.mxu0 %v9759
        %9982 = vmatpush1.bf16.msra.mxu0 %v9758
        %9983 = vmatprep.subr.bf16.mxu0 %v9763
        %9984 = vmatpush1.bf16.msra.mxu0 %v9762
        %9985 = vmatprep.subr.bf16.mxu0 %v9767
        %9986 = vmatpush1.bf16.msra.mxu0 %v9766
        %9987 = vmatprep.subr.bf16.mxu0 %v9771
        %9988 = vmatpush1.bf16.msra.mxu0 %v9770
        %9989 = vmatprep.subr.bf16.mxu0 %v9775
        %9990 = vmatpush1.bf16.msra.mxu0 %v9774
        %9991 = vmatprep.subr.bf16.mxu0 %v9779
        %9992 = vmatpush1.bf16.msra.mxu0 %v9778
        %9993 = vmatprep.subr.bf16.mxu0 %v9783
        %9994 = vmatpush1.bf16.msra.mxu0 %v9782
        %9995 = vmatprep.subr.bf16.mxu0 %v9787
        %9996 = vmatpush1.bf16.msra.mxu0 %v9786
        %9997 = vmatprep.subr.bf16.mxu0 %v9791
        %9998 = vmatpush1.bf16.msra.mxu0 %v9790
        %9999 = vmatprep.subr.bf16.mxu0 %v9795
        %10000 = vmatpush1.bf16.msra.mxu0 %v9794
        %10001 = vmatprep.subr.bf16.mxu0 %v9799
        %10002 = vmatpush1.bf16.msra.mxu0 %v9798
        %10003 = vmatprep.mubr.bf16.mxu0 %v9161
        %10004 = vmatmul.mubr.bf16.gmra.mrb[0].mxu0 %v9160
        %v10005 = vpop.f32.mrb[0].mxu0
        %v10006 = vadd.f32 %v9965, %v10005
        %v10007 = vpop.f32.mrb[0].mxu0
        %v10008 = vadd.f32 %v9967, %v10007
        %v10009 = vpop.f32.mrb[0].mxu0
        %v10010 = vpop.f32.mrb[0].mxu0
        %10011 = vdwg.mxu0
        %10012 = vmatprep.subr.bf16.mxu0 %v9677
        %10013 = vmatpush1.bf16.msra.mxu0 %v9676
        %10014 = vmatprep.subr.bf16.mxu0 %v9681
        %10015 = vmatpush1.bf16.msra.mxu0 %v9680
        %10016 = vmatprep.subr.bf16.mxu0 %v9685
        %10017 = vmatpush1.bf16.msra.mxu0 %v9684
        %10018 = vmatprep.subr.bf16.mxu0 %v9689
        %10019 = vmatpush1.bf16.msra.mxu0 %v9688
        %10020 = vmatprep.subr.bf16.mxu0 %v9693
        %10021 = vmatpush1.bf16.msra.mxu0 %v9692
        %10022 = vmatprep.subr.bf16.mxu0 %v9697
        %10023 = vmatpush1.bf16.msra.mxu0 %v9696
        %10024 = vmatprep.subr.bf16.mxu0 %v9701
        %10025 = vmatpush1.bf16.msra.mxu0 %v9700
        %10026 = vmatprep.subr.bf16.mxu0 %v9705
        %10027 = vmatpush1.bf16.msra.mxu0 %v9704
        %10028 = vmatprep.subr.bf16.mxu0 %v9709
        %10029 = vmatpush1.bf16.msra.mxu0 %v9708
        %10030 = vmatprep.subr.bf16.mxu0 %v9713
        %10031 = vmatpush1.bf16.msra.mxu0 %v9712
        %10032 = vmatprep.subr.bf16.mxu0 %v9717
        %10033 = vmatpush1.bf16.msra.mxu0 %v9716
        %10034 = vmatprep.subr.bf16.mxu0 %v9721
        %10035 = vmatpush1.bf16.msra.mxu0 %v9720
        %10036 = vmatprep.subr.bf16.mxu0 %v9725
        %10037 = vmatpush1.bf16.msra.mxu0 %v9724
        %10038 = vmatprep.subr.bf16.mxu0 %v9729
        %10039 = vmatpush1.bf16.msra.mxu0 %v9728
        %10040 = vmatprep.subr.bf16.mxu0 %v9733
        %10041 = vmatpush1.bf16.msra.mxu0 %v9732
        %10042 = vmatprep.subr.bf16.mxu0 %v9737
        %10043 = vmatpush1.bf16.msra.mxu0 %v9736
        %10044 = vmatprep.mubr.bf16.mxu0 %v9159
        %10045 = vmatmul.mubr.bf16.gmra.mrb[0].mxu0 %v9158
        %v10046 = vpop.f32.mrb[0].mxu0
        %v10047 = vadd.f32 0.0, %v10046
        %v10048 = vpop.f32.mrb[0].mxu0
        %v10049 = vadd.f32 0.0, %v10048
        %v10050 = vpop.f32.mrb[0].mxu0
        %v10051 = vpop.f32.mrb[0].mxu0
        %10052 = vdwg.mxu0
        %10053 = vmatprep.subr.bf16.mxu0 %v9741
        %10054 = vmatpush1.bf16.msra.mxu0 %v9740
        %10055 = vmatprep.subr.bf16.mxu0 %v9745
        %10056 = vmatpush1.bf16.msra.mxu0 %v9744
        %10057 = vmatprep.subr.bf16.mxu0 %v9749
        %10058 = vmatpush1.bf16.msra.mxu0 %v9748
        %10059 = vmatprep.subr.bf16.mxu0 %v9753
        %10060 = vmatpush1.bf16.msra.mxu0 %v9752
        %10061 = vmatprep.subr.bf16.mxu0 %v9757
        %10062 = vmatpush1.bf16.msra.mxu0 %v9756
        %10063 = vmatprep.subr.bf16.mxu0 %v9761
        %10064 = vmatpush1.bf16.msra.mxu0 %v9760
        %10065 = vmatprep.subr.bf16.mxu0 %v9765
        %10066 = vmatpush1.bf16.msra.mxu0 %v9764
        %10067 = vmatprep.subr.bf16.mxu0 %v9769
        %10068 = vmatpush1.bf16.msra.mxu0 %v9768
        %10069 = vmatprep.subr.bf16.mxu0 %v9773
        %10070 = vmatpush1.bf16.msra.mxu0 %v9772
        %10071 = vmatprep.subr.bf16.mxu0 %v9777
        %10072 = vmatpush1.bf16.msra.mxu0 %v9776
        %10073 = vmatprep.subr.bf16.mxu0 %v9781
        %10074 = vmatpush1.bf16.msra.mxu0 %v9780
        %10075 = vmatprep.subr.bf16.mxu0 %v9785
        %10076 = vmatpush1.bf16.msra.mxu0 %v9784
        %10077 = vmatprep.subr.bf16.mxu0 %v9789
        %10078 = vmatpush1.bf16.msra.mxu0 %v9788
        %10079 = vmatprep.subr.bf16.mxu0 %v9793
        %10080 = vmatpush1.bf16.msra.mxu0 %v9792
        %10081 = vmatprep.subr.bf16.mxu0 %v9797
        %10082 = vmatpush1.bf16.msra.mxu0 %v9796
        %10083 = vmatprep.subr.bf16.mxu0 %v9801
        %10084 = vmatpush1.bf16.msra.mxu0 %v9800
        %10085 = vmatprep.mubr.bf16.mxu0 %v9161
        %10086 = vmatmul.mubr.bf16.gmra.mrb[0].mxu0 %v9160
        %v10087 = vpop.f32.mrb[0].mxu0
        %v10088 = vadd.f32 %v10047, %v10087
        %v10089 = vpop.f32.mrb[0].mxu0
        %v10090 = vadd.f32 %v10049, %v10089
        %v10091 = vpop.f32.mrb[0].mxu0
        %v10092 = vpop.f32.mrb[0].mxu0
        %10093 = vdwg.mxu0
        %v10094 = vld [vmem:[%s20] sm:$0xf]
        %v10096 = vlaneseq
        %v10097 = vshrl.u32 %v10096, 7
        %v10098 = vsub.s32 0, %v10097
        %v10099 = vrot.slane %v10094, %v10098
        %v10100 = vlaneseq
        %v10101 = vshrl.u32 %v10100, 7
        %v10102 = vsub.s32 1, %v10101
        %v10103 = vrot.slane %v10094, %v10102
        %v10104 = vlaneseq
        %v10105 = vshrl.u32 %v10104, 7
        %v10106 = vsub.s32 2, %v10105
        %v10107 = vrot.slane %v10094, %v10106
        %v10108 = vlaneseq
        %v10109 = vshrl.u32 %v10108, 7
        %v10110 = vsub.s32 3, %v10109
        %v10111 = vrot.slane %v10094, %v10110
        %v10116 = vmul.f32 %v10006, %v10099
        %v10117 = vmul.f32 %v10008, %v10103
        %v10118 = vmul.f32 %v10088, %v10107
        %v10119 = vmul.f32 %v10090, %v10111
        %v10120 = vld [vmem:[%s21] sm:$0xf]
        %v10122 = vlaneseq
        %v10123 = vshrl.u32 %v10122, 7
        %v10124 = vsub.s32 0, %v10123
        %v10125 = vrot.slane %v10120, %v10124
        %v10126 = vlaneseq
        %v10127 = vshrl.u32 %v10126, 7
        %v10128 = vsub.s32 1, %v10127
        %v10129 = vrot.slane %v10120, %v10128
        %v10130 = vlaneseq
        %v10131 = vshrl.u32 %v10130, 7
        %v10132 = vsub.s32 2, %v10131
        %v10133 = vrot.slane %v10120, %v10132
        %v10134 = vlaneseq
        %v10135 = vshrl.u32 %v10134, 7
        %v10136 = vsub.s32 3, %v10135
        %v10137 = vrot.slane %v10120, %v10136
        %v10142 = vadd.f32 %v10116, %v10125
        %v10143 = vadd.f32 %v10117, %v10129
        %v10144 = vadd.f32 %v10118, %v10133
        %v10145 = vadd.f32 %v10119, %v10137
        %v10146 = vmax.f32 %v10142, 0.0
        %v10147 = vmax.f32 %v10143, 0.0
        %v10148 = vmax.f32 %v10144, 0.0
        %v10149 = vmax.f32 %v10145, 0.0
        %v10150 = vld [vmem:[%s22] sm:$0xf]
        %v10152 = vlaneseq
        %v10153 = vshrl.u32 %v10152, 7
        %v10154 = vsub.s32 0, %v10153
        %v10155 = vrot.slane %v10150, %v10154
        %v10156 = vlaneseq
        %v10157 = vshrl.u32 %v10156, 7
        %v10158 = vsub.s32 1, %v10157
        %v10159 = vrot.slane %v10150, %v10158
        %v10160 = vlaneseq
        %v10161 = vshrl.u32 %v10160, 7
        %v10162 = vsub.s32 2, %v10161
        %v10163 = vrot.slane %v10150, %v10162
        %v10164 = vlaneseq
        %v10165 = vshrl.u32 %v10164, 7
        %v10166 = vsub.s32 3, %v10165
        %v10167 = vrot.slane %v10150, %v10166
        %v10172 = vmul.f32 %v10146, %v10155
        %v10173 = vmul.f32 %v10147, %v10159
        %v10174 = vmul.f32 %v10148, %v10163
        %v10175 = vmul.f32 %v10149, %v10167
        %vm10176 = vcmask 1040384
        %v10177 = vsel %vm10176, %v10172, 0.0
        %v10178 = vsel %vm10176, %v10173, 0.0
        %v10179 = vadd.f32 %v10177, %v10178
        %v10180 = vsel %vm10176, %v10174, 0.0
        %v10181 = vadd.f32 %v10179, %v10180
        %v10182 = vsel %vm10176, %v10175, 0.0
        %v10183 = vadd.f32 %v10181, %v10182
        %10184 = vadd.xlane.f32.xlu0 %v10183
        %v10185 = vpop.xlane.xlu0 %10184
        %v10186 = vld [vmem:[#allocation8] sm:$0x1]
        %v10187 = vadd.f32 %v10185, %v10186
        %v10188 = vsub.f32 0.0, %v10187
        %v10189 = vmul.f32 %v10188, 1.442695
        %v10190 = vpow.pop %v10189
        %v10191 = vadd.f32 %v10190, 1.0
        %v10192 = vrcp.pop %v10191
        %v10193 = vmul.f32 1.0, %v10192
        %vm10194 = vcmask 0
        %10195 = vst.msk [vmem:[%s750] sm:$0x1] %vm10194, %v10193
        %p10196 = scmp.lt.s32.totalorder %s38, 1
        %s10197 = scalar_select %p10196, %s38, 1
        %s10198 = scalar_lea.vmem %s24, %s10197
        // Predicated region
        $region121: #{meningioma_forward.1} parent=115 // pred_check
          %p10199 = pneg %p565
        $region122: #{meningioma_forward.1} parent=115 // pred_check_branch
          %10201 = sbr.rel (%p10199) target = $region124
        $region123: #{meningioma_forward.1} parent=115 // pred_region
          _
        $region124: #{meningioma_forward.1} parent=115 // pred_fallthru
          _
      $region116: #{meningioma_forward.1} parent=5 // pred_fallthru
        _
      %p10202 = scmp.le.s32.totalorder 2, %s33
      // Predicated region
      $region125: #{meningioma_forward.1} parent=5 // pred_check
        %p10203 = pneg %p10202
      $region126: #{meningioma_forward.1} parent=5 // pred_check_branch
        %10205 = sbr.rel (%p10203) target = $region128
      $region127: #{meningioma_forward.1} parent=5 // pred_region
        %s10206 = ssub.s32 %s33, 2
        // Predicated region
        $region129: #{meningioma_forward.1} parent=127 // pred_check
          %p10207 = pneg %p571
        $region130: #{meningioma_forward.1} parent=127 // pred_check_branch
          %10209 = sbr.rel (%p10207) target = $region132
        $region131: #{meningioma_forward.1} parent=127 // pred_region
          %p10210 = scmp.lt.s32.totalorder %s39, 1
          %s10211 = scalar_select %p10210, %s39, 1
          %s10212 = scalar_lea.vmem %s24, %s10211
        $region132: #{meningioma_forward.1} parent=127 // pred_fallthru
          _
      $region128: #{meningioma_forward.1} parent=5 // pred_fallthru
        _
    $region6: #{meningioma_forward.1} parent=1 // loop_footer
      %s37 = sadd.s32 1, %s33
    $region7: #{meningioma_forward.1} parent=1 // loop_footer_branch
      %32 = sbr.rel target = $region3
    $region8: #{meningioma_forward.1} parent=1 // loop_exit
      _
    %10213 = vsyncpa [#allocation10], 1
    %s10214 = scalar_lea.sflag [#allocation10], 1
    %10215 = vsyncpa %s10214, 1

</llo_original>
